<compile_context>
chip_gen: v5e
topology: v5e:2x2
jax: 0.10.0
libtpu: 0.0.40
codegen_flags: <defaults>
</compile_context>

<pallas_src>
import functools

import jax
import jax.numpy as jnp
import numpy as np
from jax.experimental import pallas as pl
from jax.experimental.pallas import tpu as pltpu

VMEM_SPEC = pl.BlockSpec(memory_space=pltpu.MemorySpace.VMEM)


def bf16_matmul(a, b):
    """MXU-native matmul: bf16 operands, f32 accumulation (used by kernel+ref)."""
    return jnp.dot(a.astype(jnp.bfloat16), b.astype(jnp.bfloat16),
                   preferred_element_type=jnp.float32)


# ----------------------------------------------------------------------------
# The single fused Pallas kernel
# ----------------------------------------------------------------------------
def _fused_forward_kernel(
    pos_ref, p1_ref,
    w1_ref, b1_ref, w2_ref, b2_ref, fcw_ref, fcb_ref,
    ewih_ref, ewhh_ref, eb_ref,
    spw1_ref, spb1_ref, spw2_ref, spb2_ref,
    dwp_ref, dws_ref, dwhh_ref, db_ref,
    outw_ref, outb_ref,
    out_ref,
    y1_ref,
    *, M, T, B, H, C, OH1, OW1, OH2, OW2):
    f32 = jnp.float32
    TB = T * B
    C1 = w1_ref.shape[1]          # conv1 output channels
    C2 = w2_ref.shape[1]          # conv2 output channels
    mm = bf16_matmul

    def lstm_cell(xg, h, c, whh, bias):
        g = xg + mm(h, whh) + bias                       # (B, 4H), 4H == 128 lanes
        i = jax.nn.sigmoid(g[:, 0:H])
        f = jax.nn.sigmoid(g[:, H:2 * H])
        gg = jnp.tanh(g[:, 2 * H:3 * H])
        o = jax.nn.sigmoid(g[:, 3 * H:4 * H])
        c_new = f * c + i * gg
        h_new = o * jnp.tanh(c_new)
        return h_new, c_new

    # -------- hoisted, loop-invariant weight loads (single vector loads) --------
    ewih, ewhh, eb = ewih_ref[...], ewhh_ref[...], eb_ref[...]
    w1, b1 = w1_ref[...], b1_ref[...]
    w2, b2 = w2_ref[...], b2_ref[...]
    fcw, fcb = fcw_ref[...], fcb_ref[...]
    spw1, spb1 = spw1_ref[...], spb1_ref[...]
    spw2, spb2 = spw2_ref[...], spb2_ref[...]
    dwp, dws = dwp_ref[...], dws_ref[...]
    dwhh, db = dwhh_ref[...], db_ref[...]
    outw, outb = outw_ref[...], outb_ref[...]

    # ---------------- encoder LSTM over the position history ----------------
    pos_all = pos_ref[...]                               # (M*B, 3), rows (t, b)
    xg_all = mm(pos_all, ewih)                           # input gates, batched
    h = jnp.zeros((B, H), f32)
    c = jnp.zeros((B, H), f32)
    for t in range(M):                                   # fully unrolled
        h, c = lstm_cell(xg_all[t * B:(t + 1) * B, :], h, c, ewhh, eb)

    # ---------- saliency CNN for ALL timesteps (VMEM resident) ----------
    # conv1: one matmul over every (oh, ow, t, b) patch.
    y1_ref[...] = jnp.maximum(mm(p1_ref[...], w1) + b1, 0.0)   # (OH1*OW1*TB, C1)

    # conv2 + ReLU + fc, accumulated tap-by-tap (k=3, stride=2, pad=1).  The
    # per-sample flatten never materializes: fc is a sum of per-position blocks.
    fc_acc = jnp.zeros((TB, C), f32)
    for oh in range(OH2):
        for ow in range(OW2):
            acc = jnp.zeros((TB, C2), f32)
            for di in range(3):
                r = 2 * oh + di - 1
                if r < 0 or r >= OH1:
                    continue                              # zero padding row
                for dj in range(3):
                    cc = 2 * ow + dj - 1
                    if cc < 0 or cc >= OW1:
                        continue                          # zero padding column
                    s = (r * OW1 + cc) * TB               # 8-row aligned slab
                    k = (di * 3 + dj) * C1
                    acc = acc + mm(y1_ref[s:s + TB, :], w2[k:k + C1, :])
            act = jnp.maximum(acc + b2, 0.0)              # (TB, C2)
            p = (oh * OW2 + ow) * C2
            fc_acc = fc_acc + mm(act, fcw[p:p + C2, :])
    sal_feat = fc_acc + fcb                               # (TB, C), rows (t, b)

    # ------------------------------ decoder ------------------------------
    # saliency contribution to the decoder input gates: batched over T.
    xgs_all = mm(sal_feat, dws)                           # (TB, 4H)
    prev = pos_all[(M - 1) * B:M * B, :]                  # last observed position
    for t in range(T):                                    # fully unrolled
        z = jnp.maximum(mm(prev, spw1) + spb1, 0.0)       # sense_pos MLP
        pf = mm(z, spw2) + spb2
        xg = mm(pf, dwp) + xgs_all[t * B:(t + 1) * B, :]
        h, c = lstm_cell(xg, h, c, dwhh, db)
        prev = prev + (mm(h, outw) + outb)                # toPosition([prev, delta])
        out_ref[t] = prev


# ----------------------------------------------------------------------------
# Wrapper: one pallas_call for the whole forward pass
# ----------------------------------------------------------------------------
def viewpoint_forward(pos, sal, params, m_window, h_window):
    """pos: (B, M, 3), sal: (B, T, 1, Hs, Ws) -> (B, T, 3)."""
    B, M, _ = pos.shape
    assert M == m_window
    T = h_window
    H = params["enc_whh"].shape[0]
    C = params["fc_w"].shape[1]
    C1 = params["conv1_w"].shape[0]
    C2 = params["conv2_w"].shape[0]
    Hs, Ws = sal.shape[-2:]
    OH1, OW1 = Hs // 2, Ws // 2
    OH2, OW2 = OH1 // 2, OW1 // 2
    TB = T * B

    # ---- wrapper glue (traced once, batched over all T timesteps) ----
    # conv1 im2col: rows ordered (oh, ow, t, b) so the kernel's conv2/fc taps
    # become contiguous, 8-row-aligned slices of the conv1 output in VMEM.
    sal_tb = jnp.transpose(sal[:, :, 0], (1, 0, 2, 3))            # (T, B, Hs, Ws)
    sal_p = jnp.pad(sal_tb, ((0, 0), (0, 0), (1, 1), (1, 1)))
    cols = [sal_p[:, :, di:di + 2 * OH1 - 1:2, dj:dj + 2 * OW1 - 1:2]
            for di in range(3) for dj in range(3)]
    patches1 = jnp.stack(cols, axis=-1)                           # (T,B,OH1,OW1,9)
    patches1 = jnp.transpose(patches1, (2, 3, 0, 1, 4)).reshape(OH1 * OW1 * TB, 9)

    # Weight re-layouts into statically sliceable, row-aligned blocks.
    w1r = params["conv1_w"].reshape(C1, 9).T                      # (9, C1)
    w2r = jnp.transpose(params["conv2_w"], (2, 3, 1, 0)).reshape(9 * C1, C2)
    fcwr = params["fc_w"].reshape(C2, OH2 * OW2, C)               # NCHW-flatten rows
    fcwr = jnp.transpose(fcwr, (1, 0, 2)).reshape(OH2 * OW2 * C2, C)
    dwp, dws = params["dec_wih"][:H], params["dec_wih"][H:]
    pos_tm = jnp.transpose(pos, (1, 0, 2)).reshape(M * B, 3)      # time-major rows

    kernel = functools.partial(
        _fused_forward_kernel, M=M, T=T, B=B, H=H, C=C,
        OH1=OH1, OW1=OW1, OH2=OH2, OW2=OW2)
    out_tm = pl.pallas_call(
        kernel,
        out_shape=jax.ShapeDtypeStruct((T, B, 3), jnp.float32),
        in_specs=[VMEM_SPEC] * 21,
        out_specs=VMEM_SPEC,
        scratch_shapes=[pltpu.VMEM((OH1 * OW1 * TB, C1), jnp.float32)],
        # Explicit VMEM budget (footprint << 1 MiB): valid on v5e/v6e (128 MiB
        # physical) and v7x (64 MiB physical).
        compiler_params=pltpu.CompilerParams(vmem_limit_bytes=16 * 1024 * 1024),
    )(pos_tm, patches1,
      w1r, params["conv1_b"], w2r, params["conv2_b"], fcwr, params["fc_b"],
      params["enc_wih"], params["enc_whh"], params["enc_b"],
      params["sp_w1"], params["sp_b1"], params["sp_w2"], params["sp_b2"],
      dwp, dws, params["dec_whh"], params["dec_b"],
      params["out_w"], params["out_b"])
    return jnp.transpose(out_tm, (1, 0, 2))                       # (B, T, 3)


# ----------------------------------------------------------------------------
# Deterministic parameter init (linear weights stored (in, out); conv weights
# and fc_w stored in the PyTorch layout: (Cout,Cin,kh,kw) / NCHW-flatten rows).
# ----------------------------------------------------------------------------
def init_params(key, salmap_shape, H=32, C=32, init_ch=16):
    ks = jax.random.split(key, 18)

    def w(k, shape, scale=0.1):
        return jax.random.normal(k, shape, jnp.float32) * scale

    fh, fw = salmap_shape[0] // 4, salmap_shape[1] // 4
    return {
        # encoder LSTM (PyTorch gate order i,f,g,o; b = b_ih + b_hh fused)
        "enc_wih": w(ks[0], (3, 4 * H)),
        "enc_whh": w(ks[1], (H, 4 * H)),
        "enc_b": w(ks[2], (1, 4 * H), 0.01),
        # sense_pos MLP
        "sp_w1": w(ks[3], (3, 2 * H)), "sp_b1": w(ks[4], (1, 2 * H), 0.01),
        "sp_w2": w(ks[5], (2 * H, H)), "sp_b2": w(ks[6], (1, H), 0.01),
        # SalConvs
        "conv1_w": w(ks[7], (init_ch, 1, 3, 3)),
        "conv1_b": w(ks[8], (1, init_ch), 0.01),
        "conv2_w": w(ks[9], (2 * init_ch, init_ch, 3, 3)),
        "conv2_b": w(ks[10], (1, 2 * init_ch), 0.01),
        "fc_w": w(ks[11], (2 * init_ch * fh * fw, C)),
        "fc_b": w(ks[12], (1, C), 0.01),
        # decoder LSTM (input = H + C)
        "dec_wih": w(ks[13], (H + C, 4 * H)),
        "dec_whh": w(ks[14], (H, 4 * H)),
        "dec_b": w(ks[15], (1, 4 * H), 0.01),
        # output layer
        "out_w": w(ks[16], (H, 3)), "out_b": w(ks[17], (1, 3), 0.01),
    }


# ----------------------------------------------------------------------------
# Pure-JAX reference (NCHW convs via im2col) for the correctness check
# ----------------------------------------------------------------------------
def _im2col_nchw(x, k=3, stride=2, pad=1):
    B_, Cc, Hh, Ww = x.shape
    xp = jnp.pad(x, ((0, 0), (0, 0), (pad, pad), (pad, pad)))
    OH = (Hh + 2 * pad - k) // stride + 1
    OW = (Ww + 2 * pad - k) // stride + 1
    cols = []
    for i in range(k):
        for j in range(k):
            cols.append(xp[:, :,
                           i:i + stride * (OH - 1) + 1:stride,
                           j:j + stride * (OW - 1) + 1:stride])
    p = jnp.stack(cols, axis=2)                          # (B, C, k*k, OH, OW)
    p = p.transpose(0, 3, 4, 1, 2).reshape(B_ * OH * OW, Cc * k * k)
    return p, OH, OW


def reference_forward(pos, sal, p, h_window):
    H = p["enc_whh"].shape[0]
    mm = bf16_matmul

    def lstm_step(xg, h, c, whh, b):
        gates = xg + mm(h, whh) + b
        i = jax.nn.sigmoid(gates[:, :H]); f = jax.nn.sigmoid(gates[:, H:2 * H])
        g = jnp.tanh(gates[:, 2 * H:3 * H]); o = jax.nn.sigmoid(gates[:, 3 * H:])
        c = f * c + i * g
        return o * jnp.tanh(c), c

    def ref_sal(sal_t):
        B_ = sal_t.shape[0]
        x, oh, ow = _im2col_nchw(sal_t)
        y = jnp.maximum(mm(x, p["conv1_w"].reshape(p["conv1_w"].shape[0], -1).T)
                        + p["conv1_b"], 0.0)
        y = y.reshape(B_, oh, ow, -1).transpose(0, 3, 1, 2)
        x2, oh2, ow2 = _im2col_nchw(y)
        y2 = jnp.maximum(mm(x2, p["conv2_w"].reshape(p["conv2_w"].shape[0], -1).T)
                         + p["conv2_b"], 0.0)
        y2 = y2.reshape(B_, oh2, ow2, -1).transpose(0, 3, 1, 2)
        return mm(y2.reshape(B_, -1), p["fc_w"]) + p["fc_b"]

    B_, M, _ = pos.shape
    h = jnp.zeros((B_, H)); c = jnp.zeros((B_, H))
    for t in range(M):
        h, c = lstm_step(mm(pos[:, t], p["enc_wih"]), h, c, p["enc_whh"], p["enc_b"])
    prev = pos[:, -1, :]
    outs = []
    for t in range(h_window):
        z = jnp.maximum(mm(prev, p["sp_w1"]) + p["sp_b1"], 0.0)
        pos_feat = mm(z, p["sp_w2"]) + p["sp_b2"]
        x = jnp.concatenate([pos_feat, ref_sal(sal[:, t])], axis=-1)
        h, c = lstm_step(mm(x, p["dec_wih"]), h, c, p["dec_whh"], p["dec_b"])
        prev = prev + (mm(h, p["out_w"]) + p["out_b"])
        outs.append(prev)
    return jnp.stack(outs, axis=1)


# ----------------------------------------------------------------------------
if __name__ == "__main__":
    B, M_WINDOW, H_WINDOW = 2, 4, 4
    SALMAP_SHAPE = (16, 16)
    LSTM_H, CNN_H = 32, 32           # 4*H = 128 -> one lane group per gate block

    key = jax.random.PRNGKey(0)
    k_pos, k_sal, k_par = jax.random.split(key, 3)

    pos = jax.random.normal(k_pos, (B, M_WINDOW, 3), jnp.float32)
    pos = pos / jnp.linalg.norm(pos, axis=-1, keepdims=True)        # unit viewpoints
    sal = jax.random.uniform(k_sal, (B, H_WINDOW, 1) + SALMAP_SHAPE, jnp.float32)
    params = init_params(k_par, SALMAP_SHAPE, H=LSTM_H, C=CNN_H, init_ch=16)

    fwd = jax.jit(functools.partial(viewpoint_forward,
                                    m_window=M_WINDOW, h_window=H_WINDOW))
    out = jax.block_until_ready(fwd(pos, sal, params))

    ref = reference_forward(pos, sal, params, H_WINDOW)
    np.testing.assert_allclose(np.asarray(out), np.asarray(ref),
                               atol=3e-3, rtol=3e-3)
    assert out.shape == (B, H_WINDOW, 3)
    print("KERNEL_OK")
</pallas_src>

<mosaic_0001>
module attributes {stable_mosaic.version = 11 : i64} {
  func.func @_fused_forward_kernel(%arg0: memref<8x3xf32, #tpu.memory_space<vmem>>, %arg1: memref<512x9xf32, #tpu.memory_space<vmem>>, %arg2: memref<9x16xf32, #tpu.memory_space<vmem>>, %arg3: memref<1x16xf32, #tpu.memory_space<vmem>>, %arg4: memref<144x32xf32, #tpu.memory_space<vmem>>, %arg5: memref<1x32xf32, #tpu.memory_space<vmem>>, %arg6: memref<512x32xf32, #tpu.memory_space<vmem>>, %arg7: memref<1x32xf32, #tpu.memory_space<vmem>>, %arg8: memref<3x128xf32, #tpu.memory_space<vmem>>, %arg9: memref<32x128xf32, #tpu.memory_space<vmem>>, %arg10: memref<1x128xf32, #tpu.memory_space<vmem>>, %arg11: memref<3x64xf32, #tpu.memory_space<vmem>>, %arg12: memref<1x64xf32, #tpu.memory_space<vmem>>, %arg13: memref<64x32xf32, #tpu.memory_space<vmem>>, %arg14: memref<1x32xf32, #tpu.memory_space<vmem>>, %arg15: memref<32x128xf32, #tpu.memory_space<vmem>>, %arg16: memref<32x128xf32, #tpu.memory_space<vmem>>, %arg17: memref<32x128xf32, #tpu.memory_space<vmem>>, %arg18: memref<1x128xf32, #tpu.memory_space<vmem>>, %arg19: memref<32x3xf32, #tpu.memory_space<vmem>>, %arg20: memref<1x3xf32, #tpu.memory_space<vmem>>, %arg21: memref<4x2x3xf32, #tpu.memory_space<vmem>>, %arg22: memref<512x16xf32, #tpu.memory_space<vmem>>) attributes {dimension_semantics = [], scalar_prefetch = 0 : i64, scratch_operands = 1 : i64, tpu.core_type = #tpu.core_type<tc>} {
    %c0 = arith.constant 0 : index
    %c0_0 = arith.constant 0 : index
    %0 = vector.load %arg8[%c0, %c0_0] : memref<3x128xf32, #tpu.memory_space<vmem>>, vector<3x128xf32>
    %c0_1 = arith.constant 0 : index
    %c0_2 = arith.constant 0 : index
    %1 = vector.load %arg9[%c0_1, %c0_2] : memref<32x128xf32, #tpu.memory_space<vmem>>, vector<32x128xf32>
    %c0_3 = arith.constant 0 : index
    %c0_4 = arith.constant 0 : index
    %2 = vector.load %arg10[%c0_3, %c0_4] : memref<1x128xf32, #tpu.memory_space<vmem>>, vector<1x128xf32>
    %c0_5 = arith.constant 0 : index
    %c0_6 = arith.constant 0 : index
    %3 = vector.load %arg2[%c0_5, %c0_6] : memref<9x16xf32, #tpu.memory_space<vmem>>, vector<9x16xf32>
    %c0_7 = arith.constant 0 : index
    %c0_8 = arith.constant 0 : index
    %4 = vector.load %arg3[%c0_7, %c0_8] : memref<1x16xf32, #tpu.memory_space<vmem>>, vector<1x16xf32>
    %c0_9 = arith.constant 0 : index
    %c0_10 = arith.constant 0 : index
    %5 = vector.load %arg4[%c0_9, %c0_10] : memref<144x32xf32, #tpu.memory_space<vmem>>, vector<144x32xf32>
    %c0_11 = arith.constant 0 : index
    %c0_12 = arith.constant 0 : index
    %6 = vector.load %arg5[%c0_11, %c0_12] : memref<1x32xf32, #tpu.memory_space<vmem>>, vector<1x32xf32>
    %c0_13 = arith.constant 0 : index
    %c0_14 = arith.constant 0 : index
    %7 = vector.load %arg6[%c0_13, %c0_14] : memref<512x32xf32, #tpu.memory_space<vmem>>, vector<512x32xf32>
    %c0_15 = arith.constant 0 : index
    %c0_16 = arith.constant 0 : index
    %8 = vector.load %arg7[%c0_15, %c0_16] : memref<1x32xf32, #tpu.memory_space<vmem>>, vector<1x32xf32>
    %c0_17 = arith.constant 0 : index
    %c0_18 = arith.constant 0 : index
    %9 = vector.load %arg11[%c0_17, %c0_18] : memref<3x64xf32, #tpu.memory_space<vmem>>, vector<3x64xf32>
    %c0_19 = arith.constant 0 : index
    %c0_20 = arith.constant 0 : index
    %10 = vector.load %arg12[%c0_19, %c0_20] : memref<1x64xf32, #tpu.memory_space<vmem>>, vector<1x64xf32>
    %c0_21 = arith.constant 0 : index
    %c0_22 = arith.constant 0 : index
    %11 = vector.load %arg13[%c0_21, %c0_22] : memref<64x32xf32, #tpu.memory_space<vmem>>, vector<64x32xf32>
    %c0_23 = arith.constant 0 : index
    %c0_24 = arith.constant 0 : index
    %12 = vector.load %arg14[%c0_23, %c0_24] : memref<1x32xf32, #tpu.memory_space<vmem>>, vector<1x32xf32>
    %c0_25 = arith.constant 0 : index
    %c0_26 = arith.constant 0 : index
    %13 = vector.load %arg15[%c0_25, %c0_26] : memref<32x128xf32, #tpu.memory_space<vmem>>, vector<32x128xf32>
    %c0_27 = arith.constant 0 : index
    %c0_28 = arith.constant 0 : index
    %14 = vector.load %arg16[%c0_27, %c0_28] : memref<32x128xf32, #tpu.memory_space<vmem>>, vector<32x128xf32>
    %c0_29 = arith.constant 0 : index
    %c0_30 = arith.constant 0 : index
    %15 = vector.load %arg17[%c0_29, %c0_30] : memref<32x128xf32, #tpu.memory_space<vmem>>, vector<32x128xf32>
    %c0_31 = arith.constant 0 : index
    %c0_32 = arith.constant 0 : index
    %16 = vector.load %arg18[%c0_31, %c0_32] : memref<1x128xf32, #tpu.memory_space<vmem>>, vector<1x128xf32>
    %c0_33 = arith.constant 0 : index
    %c0_34 = arith.constant 0 : index
    %17 = vector.load %arg19[%c0_33, %c0_34] : memref<32x3xf32, #tpu.memory_space<vmem>>, vector<32x3xf32>
    %c0_35 = arith.constant 0 : index
    %c0_36 = arith.constant 0 : index
    %18 = vector.load %arg20[%c0_35, %c0_36] : memref<1x3xf32, #tpu.memory_space<vmem>>, vector<1x3xf32>
    %c0_37 = arith.constant 0 : index
    %c0_38 = arith.constant 0 : index
    %19 = vector.load %arg0[%c0_37, %c0_38] : memref<8x3xf32, #tpu.memory_space<vmem>>, vector<8x3xf32>
    %20 = arith.truncf %19 : vector<8x3xf32> to vector<8x3xbf16>
    %21 = arith.truncf %0 : vector<3x128xf32> to vector<3x128xbf16>
    %cst = arith.constant dense<0.000000e+00> : vector<8x128xf32>
    %22 = tpu.matmul %20, %21, %cst {dimension_numbers = #tpu.dot_dimension_numbers<[1], [0], [0], [1], [0, 0, 1, 1], [], []>} : vector<8x3xbf16>, vector<3x128xbf16>, vector<8x128xf32> -> vector<8x128xf32>
    %cst_39 = arith.constant 0.000000e+00 : f32
    %23 = vector.broadcast %cst_39 : f32 to vector<2x32xf32>
    %cst_40 = arith.constant 0.000000e+00 : f32
    %24 = vector.broadcast %cst_40 : f32 to vector<2x32xf32>
    %25 = vector.extract_strided_slice %22 {offsets = [0, 0], sizes = [2, 128], strides = [1, 1]} : vector<8x128xf32> to vector<2x128xf32>
    %26 = arith.truncf %23 : vector<2x32xf32> to vector<2x32xbf16>
    %27 = arith.truncf %1 : vector<32x128xf32> to vector<32x128xbf16>
    %cst_41 = arith.constant dense<0.000000e+00> : vector<2x128xf32>
    %28 = tpu.matmul %26, %27, %cst_41 {dimension_numbers = #tpu.dot_dimension_numbers<[1], [0], [0], [1], [0, 0, 1, 1], [], []>} : vector<2x32xbf16>, vector<32x128xbf16>, vector<2x128xf32> -> vector<2x128xf32>
    %29 = arith.addf %25, %28 : vector<2x128xf32>
    %30 = vector.broadcast %2 : vector<1x128xf32> to vector<2x128xf32>
    %31 = arith.addf %29, %30 : vector<2x128xf32>
    %32 = vector.extract_strided_slice %31 {offsets = [0, 0], sizes = [2, 32], strides = [1, 1]} : vector<2x128xf32> to vector<2x32xf32>
    %33 = arith.negf %32 : vector<2x32xf32>
    %34 = math.exp %33 : vector<2x32xf32>
    %cst_42 = arith.constant 1.000000e+00 : f32
    %35 = vector.broadcast %cst_42 : f32 to vector<2x32xf32>
    %36 = arith.addf %35, %34 : vector<2x32xf32>
    %37 = arith.divf %35, %36 : vector<2x32xf32>
    %38 = vector.extract_strided_slice %31 {offsets = [0, 32], sizes = [2, 32], strides = [1, 1]} : vector<2x128xf32> to vector<2x32xf32>
    %39 = arith.negf %38 : vector<2x32xf32>
    %40 = math.exp %39 : vector<2x32xf32>
    %cst_43 = arith.constant 1.000000e+00 : f32
    %41 = vector.broadcast %cst_43 : f32 to vector<2x32xf32>
    %42 = arith.addf %41, %40 : vector<2x32xf32>
    %43 = arith.divf %41, %42 : vector<2x32xf32>
    %44 = vector.extract_strided_slice %31 {offsets = [0, 64], sizes = [2, 32], strides = [1, 1]} : vector<2x128xf32> to vector<2x32xf32>
    %45 = math.tanh %44 : vector<2x32xf32>
    %46 = vector.extract_strided_slice %31 {offsets = [0, 96], sizes = [2, 32], strides = [1, 1]} : vector<2x128xf32> to vector<2x32xf32>
    %47 = arith.negf %46 : vector<2x32xf32>
    %48 = math.exp %47 : vector<2x32xf32>
    %cst_44 = arith.constant 1.000000e+00 : f32
    %49 = vector.broadcast %cst_44 : f32 to vector<2x32xf32>
    %50 = arith.addf %49, %48 : vector<2x32xf32>
    %51 = arith.divf %49, %50 : vector<2x32xf32>
    %52 = arith.mulf %43, %24 : vector<2x32xf32>
    %53 = arith.mulf %37, %45 : vector<2x32xf32>
    %54 = arith.addf %52, %53 : vector<2x32xf32>
    %55 = math.tanh %54 : vector<2x32xf32>
    %56 = arith.mulf %51, %55 : vector<2x32xf32>
    %57 = vector.extract_strided_slice %22 {offsets = [2, 0], sizes = [2, 128], strides = [1, 1]} : vector<8x128xf32> to vector<2x128xf32>
    %58 = arith.truncf %56 : vector<2x32xf32> to vector<2x32xbf16>
    %59 = arith.truncf %1 : vector<32x128xf32> to vector<32x128xbf16>
    %cst_45 = arith.constant dense<0.000000e+00> : vector<2x128xf32>
    %60 = tpu.matmul %58, %59, %cst_45 {dimension_numbers = #tpu.dot_dimension_numbers<[1], [0], [0], [1], [0, 0, 1, 1], [], []>} : vector<2x32xbf16>, vector<32x128xbf16>, vector<2x128xf32> -> vector<2x128xf32>
    %61 = arith.addf %57, %60 : vector<2x128xf32>
    %62 = vector.broadcast %2 : vector<1x128xf32> to vector<2x128xf32>
    %63 = arith.addf %61, %62 : vector<2x128xf32>
    %64 = vector.extract_strided_slice %63 {offsets = [0, 0], sizes = [2, 32], strides = [1, 1]} : vector<2x128xf32> to vector<2x32xf32>
    %65 = arith.negf %64 : vector<2x32xf32>
    %66 = math.exp %65 : vector<2x32xf32>
    %cst_46 = arith.constant 1.000000e+00 : f32
    %67 = vector.broadcast %cst_46 : f32 to vector<2x32xf32>
    %68 = arith.addf %67, %66 : vector<2x32xf32>
    %69 = arith.divf %67, %68 : vector<2x32xf32>
    %70 = vector.extract_strided_slice %63 {offsets = [0, 32], sizes = [2, 32], strides = [1, 1]} : vector<2x128xf32> to vector<2x32xf32>
    %71 = arith.negf %70 : vector<2x32xf32>
    %72 = math.exp %71 : vector<2x32xf32>
    %cst_47 = arith.constant 1.000000e+00 : f32
    %73 = vector.broadcast %cst_47 : f32 to vector<2x32xf32>
    %74 = arith.addf %73, %72 : vector<2x32xf32>
    %75 = arith.divf %73, %74 : vector<2x32xf32>
    %76 = vector.extract_strided_slice %63 {offsets = [0, 64], sizes = [2, 32], strides = [1, 1]} : vector<2x128xf32> to vector<2x32xf32>
    %77 = math.tanh %76 : vector<2x32xf32>
    %78 = vector.extract_strided_slice %63 {offsets = [0, 96], sizes = [2, 32], strides = [1, 1]} : vector<2x128xf32> to vector<2x32xf32>
    %79 = arith.negf %78 : vector<2x32xf32>
    %80 = math.exp %79 : vector<2x32xf32>
    %cst_48 = arith.constant 1.000000e+00 : f32
    %81 = vector.broadcast %cst_48 : f32 to vector<2x32xf32>
    %82 = arith.addf %81, %80 : vector<2x32xf32>
    %83 = arith.divf %81, %82 : vector<2x32xf32>
    %84 = arith.mulf %75, %54 : vector<2x32xf32>
    %85 = arith.mulf %69, %77 : vector<2x32xf32>
    %86 = arith.addf %84, %85 : vector<2x32xf32>
    %87 = math.tanh %86 : vector<2x32xf32>
    %88 = arith.mulf %83, %87 : vector<2x32xf32>
    %89 = vector.extract_strided_slice %22 {offsets = [4, 0], sizes = [2, 128], strides = [1, 1]} : vector<8x128xf32> to vector<2x128xf32>
    %90 = arith.truncf %88 : vector<2x32xf32> to vector<2x32xbf16>
    %91 = arith.truncf %1 : vector<32x128xf32> to vector<32x128xbf16>
    %cst_49 = arith.constant dense<0.000000e+00> : vector<2x128xf32>
    %92 = tpu.matmul %90, %91, %cst_49 {dimension_numbers = #tpu.dot_dimension_numbers<[1], [0], [0], [1], [0, 0, 1, 1], [], []>} : vector<2x32xbf16>, vector<32x128xbf16>, vector<2x128xf32> -> vector<2x128xf32>
    %93 = arith.addf %89, %92 : vector<2x128xf32>
    %94 = vector.broadcast %2 : vector<1x128xf32> to vector<2x128xf32>
    %95 = arith.addf %93, %94 : vector<2x128xf32>
    %96 = vector.extract_strided_slice %95 {offsets = [0, 0], sizes = [2, 32], strides = [1, 1]} : vector<2x128xf32> to vector<2x32xf32>
    %97 = arith.negf %96 : vector<2x32xf32>
    %98 = math.exp %97 : vector<2x32xf32>
    %cst_50 = arith.constant 1.000000e+00 : f32
    %99 = vector.broadcast %cst_50 : f32 to vector<2x32xf32>
    %100 = arith.addf %99, %98 : vector<2x32xf32>
    %101 = arith.divf %99, %100 : vector<2x32xf32>
    %102 = vector.extract_strided_slice %95 {offsets = [0, 32], sizes = [2, 32], strides = [1, 1]} : vector<2x128xf32> to vector<2x32xf32>
    %103 = arith.negf %102 : vector<2x32xf32>
    %104 = math.exp %103 : vector<2x32xf32>
    %cst_51 = arith.constant 1.000000e+00 : f32
    %105 = vector.broadcast %cst_51 : f32 to vector<2x32xf32>
    %106 = arith.addf %105, %104 : vector<2x32xf32>
    %107 = arith.divf %105, %106 : vector<2x32xf32>
    %108 = vector.extract_strided_slice %95 {offsets = [0, 64], sizes = [2, 32], strides = [1, 1]} : vector<2x128xf32> to vector<2x32xf32>
    %109 = math.tanh %108 : vector<2x32xf32>
    %110 = vector.extract_strided_slice %95 {offsets = [0, 96], sizes = [2, 32], strides = [1, 1]} : vector<2x128xf32> to vector<2x32xf32>
    %111 = arith.negf %110 : vector<2x32xf32>
    %112 = math.exp %111 : vector<2x32xf32>
    %cst_52 = arith.constant 1.000000e+00 : f32
    %113 = vector.broadcast %cst_52 : f32 to vector<2x32xf32>
    %114 = arith.addf %113, %112 : vector<2x32xf32>
    %115 = arith.divf %113, %114 : vector<2x32xf32>
    %116 = arith.mulf %107, %86 : vector<2x32xf32>
    %117 = arith.mulf %101, %109 : vector<2x32xf32>
    %118 = arith.addf %116, %117 : vector<2x32xf32>
    %119 = math.tanh %118 : vector<2x32xf32>
    %120 = arith.mulf %115, %119 : vector<2x32xf32>
    %121 = vector.extract_strided_slice %22 {offsets = [6, 0], sizes = [2, 128], strides = [1, 1]} : vector<8x128xf32> to vector<2x128xf32>
    %122 = arith.truncf %120 : vector<2x32xf32> to vector<2x32xbf16>
    %123 = arith.truncf %1 : vector<32x128xf32> to vector<32x128xbf16>
    %cst_53 = arith.constant dense<0.000000e+00> : vector<2x128xf32>
    %124 = tpu.matmul %122, %123, %cst_53 {dimension_numbers = #tpu.dot_dimension_numbers<[1], [0], [0], [1], [0, 0, 1, 1], [], []>} : vector<2x32xbf16>, vector<32x128xbf16>, vector<2x128xf32> -> vector<2x128xf32>
    %125 = arith.addf %121, %124 : vector<2x128xf32>
    %126 = vector.broadcast %2 : vector<1x128xf32> to vector<2x128xf32>
    %127 = arith.addf %125, %126 : vector<2x128xf32>
    %128 = vector.extract_strided_slice %127 {offsets = [0, 0], sizes = [2, 32], strides = [1, 1]} : vector<2x128xf32> to vector<2x32xf32>
    %129 = arith.negf %128 : vector<2x32xf32>
    %130 = math.exp %129 : vector<2x32xf32>
    %cst_54 = arith.constant 1.000000e+00 : f32
    %131 = vector.broadcast %cst_54 : f32 to vector<2x32xf32>
    %132 = arith.addf %131, %130 : vector<2x32xf32>
    %133 = arith.divf %131, %132 : vector<2x32xf32>
    %134 = vector.extract_strided_slice %127 {offsets = [0, 32], sizes = [2, 32], strides = [1, 1]} : vector<2x128xf32> to vector<2x32xf32>
    %135 = arith.negf %134 : vector<2x32xf32>
    %136 = math.exp %135 : vector<2x32xf32>
    %cst_55 = arith.constant 1.000000e+00 : f32
    %137 = vector.broadcast %cst_55 : f32 to vector<2x32xf32>
    %138 = arith.addf %137, %136 : vector<2x32xf32>
    %139 = arith.divf %137, %138 : vector<2x32xf32>
    %140 = vector.extract_strided_slice %127 {offsets = [0, 64], sizes = [2, 32], strides = [1, 1]} : vector<2x128xf32> to vector<2x32xf32>
    %141 = math.tanh %140 : vector<2x32xf32>
    %142 = vector.extract_strided_slice %127 {offsets = [0, 96], sizes = [2, 32], strides = [1, 1]} : vector<2x128xf32> to vector<2x32xf32>
    %143 = arith.negf %142 : vector<2x32xf32>
    %144 = math.exp %143 : vector<2x32xf32>
    %cst_56 = arith.constant 1.000000e+00 : f32
    %145 = vector.broadcast %cst_56 : f32 to vector<2x32xf32>
    %146 = arith.addf %145, %144 : vector<2x32xf32>
    %147 = arith.divf %145, %146 : vector<2x32xf32>
    %148 = arith.mulf %139, %118 : vector<2x32xf32>
    %149 = arith.mulf %133, %141 : vector<2x32xf32>
    %150 = arith.addf %148, %149 : vector<2x32xf32>
    %151 = math.tanh %150 : vector<2x32xf32>
    %152 = arith.mulf %147, %151 : vector<2x32xf32>
    %c0_57 = arith.constant 0 : index
    %c0_58 = arith.constant 0 : index
    %153 = vector.load %arg1[%c0_57, %c0_58] : memref<512x9xf32, #tpu.memory_space<vmem>>, vector<512x9xf32>
    %154 = arith.truncf %153 : vector<512x9xf32> to vector<512x9xbf16>
    %155 = arith.truncf %3 : vector<9x16xf32> to vector<9x16xbf16>
    %cst_59 = arith.constant dense<0.000000e+00> : vector<512x16xf32>
    %156 = tpu.matmul %154, %155, %cst_59 {dimension_numbers = #tpu.dot_dimension_numbers<[1], [0], [0], [1], [0, 0, 1, 1], [], []>} : vector<512x9xbf16>, vector<9x16xbf16>, vector<512x16xf32> -> vector<512x16xf32>
    %157 = vector.broadcast %4 : vector<1x16xf32> to vector<512x16xf32>
    %158 = arith.addf %156, %157 : vector<512x16xf32>
    %cst_60 = arith.constant 0.000000e+00 : f32
    %159 = vector.broadcast %cst_60 : f32 to vector<512x16xf32>
    %160 = arith.maximumf %158, %159 : vector<512x16xf32>
    %c0_61 = arith.constant 0 : index
    %c0_62 = arith.constant 0 : index
    %161 = vector.load %arg22[%c0_61, %c0_62] : memref<512x16xf32, #tpu.memory_space<vmem>>, vector<512x16xf32>
    tpu.vector_store %arg22[%c0_61, %c0_62], %160 {strides = array<i32>} : memref<512x16xf32, #tpu.memory_space<vmem>>, vector<512x16xf32>,
    %cst_63 = arith.constant 0.000000e+00 : f32
    %162 = vector.broadcast %cst_63 : f32 to vector<8x32xf32>
    %cst_64 = arith.constant 0.000000e+00 : f32
    %163 = vector.broadcast %cst_64 : f32 to vector<8x32xf32>
    %c0_65 = arith.constant 0 : index
    %c0_66 = arith.constant 0 : index
    %164 = vector.load %arg22[%c0_65, %c0_66] : memref<512x16xf32, #tpu.memory_space<vmem>>, vector<8x16xf32>
    %165 = vector.extract_strided_slice %5 {offsets = [64, 0], sizes = [16, 32], strides = [1, 1]} : vector<144x32xf32> to vector<16x32xf32>
    %166 = arith.truncf %164 : vector<8x16xf32> to vector<8x16xbf16>
    %167 = arith.truncf %165 : vector<16x32xf32> to vector<16x32xbf16>
    %cst_67 = arith.constant dense<0.000000e+00> : vector<8x32xf32>
    %168 = tpu.matmul %166, %167, %cst_67 {dimension_numbers = #tpu.dot_dimension_numbers<[1], [0], [0], [1], [0, 0, 1, 1], [], []>} : vector<8x16xbf16>, vector<16x32xbf16>, vector<8x32xf32> -> vector<8x32xf32>
    %169 = arith.addf %163, %168 : vector<8x32xf32>
    %c8 = arith.constant 8 : index
    %c0_68 = arith.constant 0 : index
    %170 = vector.load %arg22[%c8, %c0_68] : memref<512x16xf32, #tpu.memory_space<vmem>>, vector<8x16xf32>
    %171 = vector.extract_strided_slice %5 {offsets = [80, 0], sizes = [16, 32], strides = [1, 1]} : vector<144x32xf32> to vector<16x32xf32>
    %172 = arith.truncf %170 : vector<8x16xf32> to vector<8x16xbf16>
    %173 = arith.truncf %171 : vector<16x32xf32> to vector<16x32xbf16>
    %cst_69 = arith.constant dense<0.000000e+00> : vector<8x32xf32>
    %174 = tpu.matmul %172, %173, %cst_69 {dimension_numbers = #tpu.dot_dimension_numbers<[1], [0], [0], [1], [0, 0, 1, 1], [], []>} : vector<8x16xbf16>, vector<16x32xbf16>, vector<8x32xf32> -> vector<8x32xf32>
    %175 = arith.addf %169, %174 : vector<8x32xf32>
    %c64 = arith.constant 64 : index
    %c0_70 = arith.constant 0 : index
    %176 = vector.load %arg22[%c64, %c0_70] : memref<512x16xf32, #tpu.memory_space<vmem>>, vector<8x16xf32>
    %177 = vector.extract_strided_slice %5 {offsets = [112, 0], sizes = [16, 32], strides = [1, 1]} : vector<144x32xf32> to vector<16x32xf32>
    %178 = arith.truncf %176 : vector<8x16xf32> to vector<8x16xbf16>
    %179 = arith.truncf %177 : vector<16x32xf32> to vector<16x32xbf16>
    %cst_71 = arith.constant dense<0.000000e+00> : vector<8x32xf32>
    %180 = tpu.matmul %178, %179, %cst_71 {dimension_numbers = #tpu.dot_dimension_numbers<[1], [0], [0], [1], [0, 0, 1, 1], [], []>} : vector<8x16xbf16>, vector<16x32xbf16>, vector<8x32xf32> -> vector<8x32xf32>
    %181 = arith.addf %175, %180 : vector<8x32xf32>
    %c72 = arith.constant 72 : index
    %c0_72 = arith.constant 0 : index
    %182 = vector.load %arg22[%c72, %c0_72] : memref<512x16xf32, #tpu.memory_space<vmem>>, vector<8x16xf32>
    %183 = vector.extract_strided_slice %5 {offsets = [128, 0], sizes = [16, 32], strides = [1, 1]} : vector<144x32xf32> to vector<16x32xf32>
    %184 = arith.truncf %182 : vector<8x16xf32> to vector<8x16xbf16>
    %185 = arith.truncf %183 : vector<16x32xf32> to vector<16x32xbf16>
    %cst_73 = arith.constant dense<0.000000e+00> : vector<8x32xf32>
    %186 = tpu.matmul %184, %185, %cst_73 {dimension_numbers = #tpu.dot_dimension_numbers<[1], [0], [0], [1], [0, 0, 1, 1], [], []>} : vector<8x16xbf16>, vector<16x32xbf16>, vector<8x32xf32> -> vector<8x32xf32>
    %187 = arith.addf %181, %186 : vector<8x32xf32>
    %188 = vector.broadcast %6 : vector<1x32xf32> to vector<8x32xf32>
    %189 = arith.addf %187, %188 : vector<8x32xf32>
    %cst_74 = arith.constant 0.000000e+00 : f32
    %190 = vector.broadcast %cst_74 : f32 to vector<8x32xf32>
    %191 = arith.maximumf %189, %190 : vector<8x32xf32>
    %192 = vector.extract_strided_slice %7 {offsets = [0, 0], sizes = [32, 32], strides = [1, 1]} : vector<512x32xf32> to vector<32x32xf32>
    %193 = arith.truncf %191 : vector<8x32xf32> to vector<8x32xbf16>
    %194 = arith.truncf %192 : vector<32x32xf32> to vector<32x32xbf16>
    %cst_75 = arith.constant dense<0.000000e+00> : vector<8x32xf32>
    %195 = tpu.matmul %193, %194, %cst_75 {dimension_numbers = #tpu.dot_dimension_numbers<[1], [0], [0], [1], [0, 0, 1, 1], [], []>} : vector<8x32xbf16>, vector<32x32xbf16>, vector<8x32xf32> -> vector<8x32xf32>
    %196 = arith.addf %162, %195 : vector<8x32xf32>
    %cst_76 = arith.constant 0.000000e+00 : f32
    %197 = vector.broadcast %cst_76 : f32 to vector<8x32xf32>
    %c8_77 = arith.constant 8 : index
    %c0_78 = arith.constant 0 : index
    %198 = vector.load %arg22[%c8_77, %c0_78] : memref<512x16xf32, #tpu.memory_space<vmem>>, vector<8x16xf32>
    %199 = vector.extract_strided_slice %5 {offsets = [48, 0], sizes = [16, 32], strides = [1, 1]} : vector<144x32xf32> to vector<16x32xf32>
    %200 = arith.truncf %198 : vector<8x16xf32> to vector<8x16xbf16>
    %201 = arith.truncf %199 : vector<16x32xf32> to vector<16x32xbf16>
    %cst_79 = arith.constant dense<0.000000e+00> : vector<8x32xf32>
    %202 = tpu.matmul %200, %201, %cst_79 {dimension_numbers = #tpu.dot_dimension_numbers<[1], [0], [0], [1], [0, 0, 1, 1], [], []>} : vector<8x16xbf16>, vector<16x32xbf16>, vector<8x32xf32> -> vector<8x32xf32>
    %203 = arith.addf %197, %202 : vector<8x32xf32>
    %c16 = arith.constant 16 : index
    %c0_80 = arith.constant 0 : index
    %204 = vector.load %arg22[%c16, %c0_80] : memref<512x16xf32, #tpu.memory_space<vmem>>, vector<8x16xf32>
    %205 = vector.extract_strided_slice %5 {offsets = [64, 0], sizes = [16, 32], strides = [1, 1]} : vector<144x32xf32> to vector<16x32xf32>
    %206 = arith.truncf %204 : vector<8x16xf32> to vector<8x16xbf16>
    %207 = arith.truncf %205 : vector<16x32xf32> to vector<16x32xbf16>
    %cst_81 = arith.constant dense<0.000000e+00> : vector<8x32xf32>
    %208 = tpu.matmul %206, %207, %cst_81 {dimension_numbers = #tpu.dot_dimension_numbers<[1], [0], [0], [1], [0, 0, 1, 1], [], []>} : vector<8x16xbf16>, vector<16x32xbf16>, vector<8x32xf32> -> vector<8x32xf32>
    %209 = arith.addf %203, %208 : vector<8x32xf32>
    %c24 = arith.constant 24 : index
    %c0_82 = arith.constant 0 : index
    %210 = vector.load %arg22[%c24, %c0_82] : memref<512x16xf32, #tpu.memory_space<vmem>>, vector<8x16xf32>
    %211 = vector.extract_strided_slice %5 {offsets = [80, 0], sizes = [16, 32], strides = [1, 1]} : vector<144x32xf32> to vector<16x32xf32>
    %212 = arith.truncf %210 : vector<8x16xf32> to vector<8x16xbf16>
    %213 = arith.truncf %211 : vector<16x32xf32> to vector<16x32xbf16>
    %cst_83 = arith.constant dense<0.000000e+00> : vector<8x32xf32>
    %214 = tpu.matmul %212, %213, %cst_83 {dimension_numbers = #tpu.dot_dimension_numbers<[1], [0], [0], [1], [0, 0, 1, 1], [], []>} : vector<8x16xbf16>, vector<16x32xbf16>, vector<8x32xf32> -> vector<8x32xf32>
    %215 = arith.addf %209, %214 : vector<8x32xf32>
    %c72_84 = arith.constant 72 : index
    %c0_85 = arith.constant 0 : index
    %216 = vector.load %arg22[%c72_84, %c0_85] : memref<512x16xf32, #tpu.memory_space<vmem>>, vector<8x16xf32>
    %217 = vector.extract_strided_slice %5 {offsets = [96, 0], sizes = [16, 32], strides = [1, 1]} : vector<144x32xf32> to vector<16x32xf32>
    %218 = arith.truncf %216 : vector<8x16xf32> to vector<8x16xbf16>
    %219 = arith.truncf %217 : vector<16x32xf32> to vector<16x32xbf16>
    %cst_86 = arith.constant dense<0.000000e+00> : vector<8x32xf32>
    %220 = tpu.matmul %218, %219, %cst_86 {dimension_numbers = #tpu.dot_dimension_numbers<[1], [0], [0], [1], [0, 0, 1, 1], [], []>} : vector<8x16xbf16>, vector<16x32xbf16>, vector<8x32xf32> -> vector<8x32xf32>
    %221 = arith.addf %215, %220 : vector<8x32xf32>
    %c80 = arith.constant 80 : index
    %c0_87 = arith.constant 0 : index
    %222 = vector.load %arg22[%c80, %c0_87] : memref<512x16xf32, #tpu.memory_space<vmem>>, vector<8x16xf32>
    %223 = vector.extract_strided_slice %5 {offsets = [112, 0], sizes = [16, 32], strides = [1, 1]} : vector<144x32xf32> to vector<16x32xf32>
    %224 = arith.truncf %222 : vector<8x16xf32> to vector<8x16xbf16>
    %225 = arith.truncf %223 : vector<16x32xf32> to vector<16x32xbf16>
    %cst_88 = arith.constant dense<0.000000e+00> : vector<8x32xf32>
    %226 = tpu.matmul %224, %225, %cst_88 {dimension_numbers = #tpu.dot_dimension_numbers<[1], [0], [0], [1], [0, 0, 1, 1], [], []>} : vector<8x16xbf16>, vector<16x32xbf16>, vector<8x32xf32> -> vector<8x32xf32>
    %227 = arith.addf %221, %226 : vector<8x32xf32>
    %c88 = arith.constant 88 : index
    %c0_89 = arith.constant 0 : index
    %228 = vector.load %arg22[%c88, %c0_89] : memref<512x16xf32, #tpu.memory_space<vmem>>, vector<8x16xf32>
    %229 = vector.extract_strided_slice %5 {offsets = [128, 0], sizes = [16, 32], strides = [1, 1]} : vector<144x32xf32> to vector<16x32xf32>
    %230 = arith.truncf %228 : vector<8x16xf32> to vector<8x16xbf16>
    %231 = arith.truncf %229 : vector<16x32xf32> to vector<16x32xbf16>
    %cst_90 = arith.constant dense<0.000000e+00> : vector<8x32xf32>
    %232 = tpu.matmul %230, %231, %cst_90 {dimension_numbers = #tpu.dot_dimension_numbers<[1], [0], [0], [1], [0, 0, 1, 1], [], []>} : vector<8x16xbf16>, vector<16x32xbf16>, vector<8x32xf32> -> vector<8x32xf32>
    %233 = arith.addf %227, %232 : vector<8x32xf32>
    %234 = vector.broadcast %6 : vector<1x32xf32> to vector<8x32xf32>
    %235 = arith.addf %233, %234 : vector<8x32xf32>
    %cst_91 = arith.constant 0.000000e+00 : f32
    %236 = vector.broadcast %cst_91 : f32 to vector<8x32xf32>
    %237 = arith.maximumf %235, %236 : vector<8x32xf32>
    %238 = vector.extract_strided_slice %7 {offsets = [32, 0], sizes = [32, 32], strides = [1, 1]} : vector<512x32xf32> to vector<32x32xf32>
    %239 = arith.truncf %237 : vector<8x32xf32> to vector<8x32xbf16>
    %240 = arith.truncf %238 : vector<32x32xf32> to vector<32x32xbf16>
    %cst_92 = arith.constant dense<0.000000e+00> : vector<8x32xf32>
    %241 = tpu.matmul %239, %240, %cst_92 {dimension_numbers = #tpu.dot_dimension_numbers<[1], [0], [0], [1], [0, 0, 1, 1], [], []>} : vector<8x32xbf16>, vector<32x32xbf16>, vector<8x32xf32> -> vector<8x32xf32>
    %242 = arith.addf %196, %241 : vector<8x32xf32>
    %cst_93 = arith.constant 0.000000e+00 : f32
    %243 = vector.broadcast %cst_93 : f32 to vector<8x32xf32>
    %c24_94 = arith.constant 24 : index
    %c0_95 = arith.constant 0 : index
    %244 = vector.load %arg22[%c24_94, %c0_95] : memref<512x16xf32, #tpu.memory_space<vmem>>, vector<8x16xf32>
    %245 = vector.extract_strided_slice %5 {offsets = [48, 0], sizes = [16, 32], strides = [1, 1]} : vector<144x32xf32> to vector<16x32xf32>
    %246 = arith.truncf %244 : vector<8x16xf32> to vector<8x16xbf16>
    %247 = arith.truncf %245 : vector<16x32xf32> to vector<16x32xbf16>
    %cst_96 = arith.constant dense<0.000000e+00> : vector<8x32xf32>
    %248 = tpu.matmul %246, %247, %cst_96 {dimension_numbers = #tpu.dot_dimension_numbers<[1], [0], [0], [1], [0, 0, 1, 1], [], []>} : vector<8x16xbf16>, vector<16x32xbf16>, vector<8x32xf32> -> vector<8x32xf32>
    %249 = arith.addf %243, %248 : vector<8x32xf32>
    %c32 = arith.constant 32 : index
    %c0_97 = arith.constant 0 : index
    %250 = vector.load %arg22[%c32, %c0_97] : memref<512x16xf32, #tpu.memory_space<vmem>>, vector<8x16xf32>
    %251 = vector.extract_strided_slice %5 {offsets = [64, 0], sizes = [16, 32], strides = [1, 1]} : vector<144x32xf32> to vector<16x32xf32>
    %252 = arith.truncf %250 : vector<8x16xf32> to vector<8x16xbf16>
    %253 = arith.truncf %251 : vector<16x32xf32> to vector<16x32xbf16>
    %cst_98 = arith.constant dense<0.000000e+00> : vector<8x32xf32>
    %254 = tpu.matmul %252, %253, %cst_98 {dimension_numbers = #tpu.dot_dimension_numbers<[1], [0], [0], [1], [0, 0, 1, 1], [], []>} : vector<8x16xbf16>, vector<16x32xbf16>, vector<8x32xf32> -> vector<8x32xf32>
    %255 = arith.addf %249, %254 : vector<8x32xf32>
    %c40 = arith.constant 40 : index
    %c0_99 = arith.constant 0 : index
    %256 = vector.load %arg22[%c40, %c0_99] : memref<512x16xf32, #tpu.memory_space<vmem>>, vector<8x16xf32>
    %257 = vector.extract_strided_slice %5 {offsets = [80, 0], sizes = [16, 32], strides = [1, 1]} : vector<144x32xf32> to vector<16x32xf32>
    %258 = arith.truncf %256 : vector<8x16xf32> to vector<8x16xbf16>
    %259 = arith.truncf %257 : vector<16x32xf32> to vector<16x32xbf16>
    %cst_100 = arith.constant dense<0.000000e+00> : vector<8x32xf32>
    %260 = tpu.matmul %258, %259, %cst_100 {dimension_numbers = #tpu.dot_dimension_numbers<[1], [0], [0], [1], [0, 0, 1, 1], [], []>} : vector<8x16xbf16>, vector<16x32xbf16>, vector<8x32xf32> -> vector<8x32xf32>
    %261 = arith.addf %255, %260 : vector<8x32xf32>
    %c88_101 = arith.constant 88 : index
    %c0_102 = arith.constant 0 : index
    %262 = vector.load %arg22[%c88_101, %c0_102] : memref<512x16xf32, #tpu.memory_space<vmem>>, vector<8x16xf32>
    %263 = vector.extract_strided_slice %5 {offsets = [96, 0], sizes = [16, 32], strides = [1, 1]} : vector<144x32xf32> to vector<16x32xf32>
    %264 = arith.truncf %262 : vector<8x16xf32> to vector<8x16xbf16>
    %265 = arith.truncf %263 : vector<16x32xf32> to vector<16x32xbf16>
    %cst_103 = arith.constant dense<0.000000e+00> : vector<8x32xf32>
    %266 = tpu.matmul %264, %265, %cst_103 {dimension_numbers = #tpu.dot_dimension_numbers<[1], [0], [0], [1], [0, 0, 1, 1], [], []>} : vector<8x16xbf16>, vector<16x32xbf16>, vector<8x32xf32> -> vector<8x32xf32>
    %267 = arith.addf %261, %266 : vector<8x32xf32>
    %c96 = arith.constant 96 : index
    %c0_104 = arith.constant 0 : index
    %268 = vector.load %arg22[%c96, %c0_104] : memref<512x16xf32, #tpu.memory_space<vmem>>, vector<8x16xf32>
    %269 = vector.extract_strided_slice %5 {offsets = [112, 0], sizes = [16, 32], strides = [1, 1]} : vector<144x32xf32> to vector<16x32xf32>
    %270 = arith.truncf %268 : vector<8x16xf32> to vector<8x16xbf16>
    %271 = arith.truncf %269 : vector<16x32xf32> to vector<16x32xbf16>
    %cst_105 = arith.constant dense<0.000000e+00> : vector<8x32xf32>
    %272 = tpu.matmul %270, %271, %cst_105 {dimension_numbers = #tpu.dot_dimension_numbers<[1], [0], [0], [1], [0, 0, 1, 1], [], []>} : vector<8x16xbf16>, vector<16x32xbf16>, vector<8x32xf32> -> vector<8x32xf32>
    %273 = arith.addf %267, %272 : vector<8x32xf32>
    %c104 = arith.constant 104 : index
    %c0_106 = arith.constant 0 : index
    %274 = vector.load %arg22[%c104, %c0_106] : memref<512x16xf32, #tpu.memory_space<vmem>>, vector<8x16xf32>
    %275 = vector.extract_strided_slice %5 {offsets = [128, 0], sizes = [16, 32], strides = [1, 1]} : vector<144x32xf32> to vector<16x32xf32>
    %276 = arith.truncf %274 : vector<8x16xf32> to vector<8x16xbf16>
    %277 = arith.truncf %275 : vector<16x32xf32> to vector<16x32xbf16>
    %cst_107 = arith.constant dense<0.000000e+00> : vector<8x32xf32>
    %278 = tpu.matmul %276, %277, %cst_107 {dimension_numbers = #tpu.dot_dimension_numbers<[1], [0], [0], [1], [0, 0, 1, 1], [], []>} : vector<8x16xbf16>, vector<16x32xbf16>, vector<8x32xf32> -> vector<8x32xf32>
    %279 = arith.addf %273, %278 : vector<8x32xf32>
    %280 = vector.broadcast %6 : vector<1x32xf32> to vector<8x32xf32>
    %281 = arith.addf %279, %280 : vector<8x32xf32>
    %cst_108 = arith.constant 0.000000e+00 : f32
    %282 = vector.broadcast %cst_108 : f32 to vector<8x32xf32>
    %283 = arith.maximumf %281, %282 : vector<8x32xf32>
    %284 = vector.extract_strided_slice %7 {offsets = [64, 0], sizes = [32, 32], strides = [1, 1]} : vector<512x32xf32> to vector<32x32xf32>
    %285 = arith.truncf %283 : vector<8x32xf32> to vector<8x32xbf16>
    %286 = arith.truncf %284 : vector<32x32xf32> to vector<32x32xbf16>
    %cst_109 = arith.constant dense<0.000000e+00> : vector<8x32xf32>
    %287 = tpu.matmul %285, %286, %cst_109 {dimension_numbers = #tpu.dot_dimension_numbers<[1], [0], [0], [1], [0, 0, 1, 1], [], []>} : vector<8x32xbf16>, vector<32x32xbf16>, vector<8x32xf32> -> vector<8x32xf32>
    %288 = arith.addf %242, %287 : vector<8x32xf32>
    %cst_110 = arith.constant 0.000000e+00 : f32
    %289 = vector.broadcast %cst_110 : f32 to vector<8x32xf32>
    %c40_111 = arith.constant 40 : index
    %c0_112 = arith.constant 0 : index
    %290 = vector.load %arg22[%c40_111, %c0_112] : memref<512x16xf32, #tpu.memory_space<vmem>>, vector<8x16xf32>
    %291 = vector.extract_strided_slice %5 {offsets = [48, 0], sizes = [16, 32], strides = [1, 1]} : vector<144x32xf32> to vector<16x32xf32>
    %292 = arith.truncf %290 : vector<8x16xf32> to vector<8x16xbf16>
    %293 = arith.truncf %291 : vector<16x32xf32> to vector<16x32xbf16>
    %cst_113 = arith.constant dense<0.000000e+00> : vector<8x32xf32>
    %294 = tpu.matmul %292, %293, %cst_113 {dimension_numbers = #tpu.dot_dimension_numbers<[1], [0], [0], [1], [0, 0, 1, 1], [], []>} : vector<8x16xbf16>, vector<16x32xbf16>, vector<8x32xf32> -> vector<8x32xf32>
    %295 = arith.addf %289, %294 : vector<8x32xf32>
    %c48 = arith.constant 48 : index
    %c0_114 = arith.constant 0 : index
    %296 = vector.load %arg22[%c48, %c0_114] : memref<512x16xf32, #tpu.memory_space<vmem>>, vector<8x16xf32>
    %297 = vector.extract_strided_slice %5 {offsets = [64, 0], sizes = [16, 32], strides = [1, 1]} : vector<144x32xf32> to vector<16x32xf32>
    %298 = arith.truncf %296 : vector<8x16xf32> to vector<8x16xbf16>
    %299 = arith.truncf %297 : vector<16x32xf32> to vector<16x32xbf16>
    %cst_115 = arith.constant dense<0.000000e+00> : vector<8x32xf32>
    %300 = tpu.matmul %298, %299, %cst_115 {dimension_numbers = #tpu.dot_dimension_numbers<[1], [0], [0], [1], [0, 0, 1, 1], [], []>} : vector<8x16xbf16>, vector<16x32xbf16>, vector<8x32xf32> -> vector<8x32xf32>
    %301 = arith.addf %295, %300 : vector<8x32xf32>
    %c56 = arith.constant 56 : index
    %c0_116 = arith.constant 0 : index
    %302 = vector.load %arg22[%c56, %c0_116] : memref<512x16xf32, #tpu.memory_space<vmem>>, vector<8x16xf32>
    %303 = vector.extract_strided_slice %5 {offsets = [80, 0], sizes = [16, 32], strides = [1, 1]} : vector<144x32xf32> to vector<16x32xf32>
    %304 = arith.truncf %302 : vector<8x16xf32> to vector<8x16xbf16>
    %305 = arith.truncf %303 : vector<16x32xf32> to vector<16x32xbf16>
    %cst_117 = arith.constant dense<0.000000e+00> : vector<8x32xf32>
    %306 = tpu.matmul %304, %305, %cst_117 {dimension_numbers = #tpu.dot_dimension_numbers<[1], [0], [0], [1], [0, 0, 1, 1], [], []>} : vector<8x16xbf16>, vector<16x32xbf16>, vector<8x32xf32> -> vector<8x32xf32>
    %307 = arith.addf %301, %306 : vector<8x32xf32>
    %c104_118 = arith.constant 104 : index
    %c0_119 = arith.constant 0 : index
    %308 = vector.load %arg22[%c104_118, %c0_119] : memref<512x16xf32, #tpu.memory_space<vmem>>, vector<8x16xf32>
    %309 = vector.extract_strided_slice %5 {offsets = [96, 0], sizes = [16, 32], strides = [1, 1]} : vector<144x32xf32> to vector<16x32xf32>
    %310 = arith.truncf %308 : vector<8x16xf32> to vector<8x16xbf16>
    %311 = arith.truncf %309 : vector<16x32xf32> to vector<16x32xbf16>
    %cst_120 = arith.constant dense<0.000000e+00> : vector<8x32xf32>
    %312 = tpu.matmul %310, %311, %cst_120 {dimension_numbers = #tpu.dot_dimension_numbers<[1], [0], [0], [1], [0, 0, 1, 1], [], []>} : vector<8x16xbf16>, vector<16x32xbf16>, vector<8x32xf32> -> vector<8x32xf32>
    %313 = arith.addf %307, %312 : vector<8x32xf32>
    %c112 = arith.constant 112 : index
    %c0_121 = arith.constant 0 : index
    %314 = vector.load %arg22[%c112, %c0_121] : memref<512x16xf32, #tpu.memory_space<vmem>>, vector<8x16xf32>
    %315 = vector.extract_strided_slice %5 {offsets = [112, 0], sizes = [16, 32], strides = [1, 1]} : vector<144x32xf32> to vector<16x32xf32>
    %316 = arith.truncf %314 : vector<8x16xf32> to vector<8x16xbf16>
    %317 = arith.truncf %315 : vector<16x32xf32> to vector<16x32xbf16>
    %cst_122 = arith.constant dense<0.000000e+00> : vector<8x32xf32>
    %318 = tpu.matmul %316, %317, %cst_122 {dimension_numbers = #tpu.dot_dimension_numbers<[1], [0], [0], [1], [0, 0, 1, 1], [], []>} : vector<8x16xbf16>, vector<16x32xbf16>, vector<8x32xf32> -> vector<8x32xf32>
    %319 = arith.addf %313, %318 : vector<8x32xf32>
    %c120 = arith.constant 120 : index
    %c0_123 = arith.constant 0 : index
    %320 = vector.load %arg22[%c120, %c0_123] : memref<512x16xf32, #tpu.memory_space<vmem>>, vector<8x16xf32>
    %321 = vector.extract_strided_slice %5 {offsets = [128, 0], sizes = [16, 32], strides = [1, 1]} : vector<144x32xf32> to vector<16x32xf32>
    %322 = arith.truncf %320 : vector<8x16xf32> to vector<8x16xbf16>
    %323 = arith.truncf %321 : vector<16x32xf32> to vector<16x32xbf16>
    %cst_124 = arith.constant dense<0.000000e+00> : vector<8x32xf32>
    %324 = tpu.matmul %322, %323, %cst_124 {dimension_numbers = #tpu.dot_dimension_numbers<[1], [0], [0], [1], [0, 0, 1, 1], [], []>} : vector<8x16xbf16>, vector<16x32xbf16>, vector<8x32xf32> -> vector<8x32xf32>
    %325 = arith.addf %319, %324 : vector<8x32xf32>
    %326 = vector.broadcast %6 : vector<1x32xf32> to vector<8x32xf32>
    %327 = arith.addf %325, %326 : vector<8x32xf32>
    %cst_125 = arith.constant 0.000000e+00 : f32
    %328 = vector.broadcast %cst_125 : f32 to vector<8x32xf32>
    %329 = arith.maximumf %327, %328 : vector<8x32xf32>
    %330 = vector.extract_strided_slice %7 {offsets = [96, 0], sizes = [32, 32], strides = [1, 1]} : vector<512x32xf32> to vector<32x32xf32>
    %331 = arith.truncf %329 : vector<8x32xf32> to vector<8x32xbf16>
    %332 = arith.truncf %330 : vector<32x32xf32> to vector<32x32xbf16>
    %cst_126 = arith.constant dense<0.000000e+00> : vector<8x32xf32>
    %333 = tpu.matmul %331, %332, %cst_126 {dimension_numbers = #tpu.dot_dimension_numbers<[1], [0], [0], [1], [0, 0, 1, 1], [], []>} : vector<8x32xbf16>, vector<32x32xbf16>, vector<8x32xf32> -> vector<8x32xf32>
    %334 = arith.addf %288, %333 : vector<8x32xf32>
    %cst_127 = arith.constant 0.000000e+00 : f32
    %335 = vector.broadcast %cst_127 : f32 to vector<8x32xf32>
    %c64_128 = arith.constant 64 : index
    %c0_129 = arith.constant 0 : index
    %336 = vector.load %arg22[%c64_128, %c0_129] : memref<512x16xf32, #tpu.memory_space<vmem>>, vector<8x16xf32>
    %337 = vector.extract_strided_slice %5 {offsets = [16, 0], sizes = [16, 32], strides = [1, 1]} : vector<144x32xf32> to vector<16x32xf32>
    %338 = arith.truncf %336 : vector<8x16xf32> to vector<8x16xbf16>
    %339 = arith.truncf %337 : vector<16x32xf32> to vector<16x32xbf16>
    %cst_130 = arith.constant dense<0.000000e+00> : vector<8x32xf32>
    %340 = tpu.matmul %338, %339, %cst_130 {dimension_numbers = #tpu.dot_dimension_numbers<[1], [0], [0], [1], [0, 0, 1, 1], [], []>} : vector<8x16xbf16>, vector<16x32xbf16>, vector<8x32xf32> -> vector<8x32xf32>
    %341 = arith.addf %335, %340 : vector<8x32xf32>
    %c72_131 = arith.constant 72 : index
    %c0_132 = arith.constant 0 : index
    %342 = vector.load %arg22[%c72_131, %c0_132] : memref<512x16xf32, #tpu.memory_space<vmem>>, vector<8x16xf32>
    %343 = vector.extract_strided_slice %5 {offsets = [32, 0], sizes = [16, 32], strides = [1, 1]} : vector<144x32xf32> to vector<16x32xf32>
    %344 = arith.truncf %342 : vector<8x16xf32> to vector<8x16xbf16>
    %345 = arith.truncf %343 : vector<16x32xf32> to vector<16x32xbf16>
    %cst_133 = arith.constant dense<0.000000e+00> : vector<8x32xf32>
    %346 = tpu.matmul %344, %345, %cst_133 {dimension_numbers = #tpu.dot_dimension_numbers<[1], [0], [0], [1], [0, 0, 1, 1], [], []>} : vector<8x16xbf16>, vector<16x32xbf16>, vector<8x32xf32> -> vector<8x32xf32>
    %347 = arith.addf %341, %346 : vector<8x32xf32>
    %c128 = arith.constant 128 : index
    %c0_134 = arith.constant 0 : index
    %348 = vector.load %arg22[%c128, %c0_134] : memref<512x16xf32, #tpu.memory_space<vmem>>, vector<8x16xf32>
    %349 = vector.extract_strided_slice %5 {offsets = [64, 0], sizes = [16, 32], strides = [1, 1]} : vector<144x32xf32> to vector<16x32xf32>
    %350 = arith.truncf %348 : vector<8x16xf32> to vector<8x16xbf16>
    %351 = arith.truncf %349 : vector<16x32xf32> to vector<16x32xbf16>
    %cst_135 = arith.constant dense<0.000000e+00> : vector<8x32xf32>
    %352 = tpu.matmul %350, %351, %cst_135 {dimension_numbers = #tpu.dot_dimension_numbers<[1], [0], [0], [1], [0, 0, 1, 1], [], []>} : vector<8x16xbf16>, vector<16x32xbf16>, vector<8x32xf32> -> vector<8x32xf32>
    %353 = arith.addf %347, %352 : vector<8x32xf32>
    %c136 = arith.constant 136 : index
    %c0_136 = arith.constant 0 : index
    %354 = vector.load %arg22[%c136, %c0_136] : memref<512x16xf32, #tpu.memory_space<vmem>>, vector<8x16xf32>
    %355 = vector.extract_strided_slice %5 {offsets = [80, 0], sizes = [16, 32], strides = [1, 1]} : vector<144x32xf32> to vector<16x32xf32>
    %356 = arith.truncf %354 : vector<8x16xf32> to vector<8x16xbf16>
    %357 = arith.truncf %355 : vector<16x32xf32> to vector<16x32xbf16>
    %cst_137 = arith.constant dense<0.000000e+00> : vector<8x32xf32>
    %358 = tpu.matmul %356, %357, %cst_137 {dimension_numbers = #tpu.dot_dimension_numbers<[1], [0], [0], [1], [0, 0, 1, 1], [], []>} : vector<8x16xbf16>, vector<16x32xbf16>, vector<8x32xf32> -> vector<8x32xf32>
    %359 = arith.addf %353, %358 : vector<8x32xf32>
    %c192 = arith.constant 192 : index
    %c0_138 = arith.constant 0 : index
    %360 = vector.load %arg22[%c192, %c0_138] : memref<512x16xf32, #tpu.memory_space<vmem>>, vector<8x16xf32>
    %361 = vector.extract_strided_slice %5 {offsets = [112, 0], sizes = [16, 32], strides = [1, 1]} : vector<144x32xf32> to vector<16x32xf32>
    %362 = arith.truncf %360 : vector<8x16xf32> to vector<8x16xbf16>
    %363 = arith.truncf %361 : vector<16x32xf32> to vector<16x32xbf16>
    %cst_139 = arith.constant dense<0.000000e+00> : vector<8x32xf32>
    %364 = tpu.matmul %362, %363, %cst_139 {dimension_numbers = #tpu.dot_dimension_numbers<[1], [0], [0], [1], [0, 0, 1, 1], [], []>} : vector<8x16xbf16>, vector<16x32xbf16>, vector<8x32xf32> -> vector<8x32xf32>
    %365 = arith.addf %359, %364 : vector<8x32xf32>
    %c200 = arith.constant 200 : index
    %c0_140 = arith.constant 0 : index
    %366 = vector.load %arg22[%c200, %c0_140] : memref<512x16xf32, #tpu.memory_space<vmem>>, vector<8x16xf32>
    %367 = vector.extract_strided_slice %5 {offsets = [128, 0], sizes = [16, 32], strides = [1, 1]} : vector<144x32xf32> to vector<16x32xf32>
    %368 = arith.truncf %366 : vector<8x16xf32> to vector<8x16xbf16>
    %369 = arith.truncf %367 : vector<16x32xf32> to vector<16x32xbf16>
    %cst_141 = arith.constant dense<0.000000e+00> : vector<8x32xf32>
    %370 = tpu.matmul %368, %369, %cst_141 {dimension_numbers = #tpu.dot_dimension_numbers<[1], [0], [0], [1], [0, 0, 1, 1], [], []>} : vector<8x16xbf16>, vector<16x32xbf16>, vector<8x32xf32> -> vector<8x32xf32>
    %371 = arith.addf %365, %370 : vector<8x32xf32>
    %372 = vector.broadcast %6 : vector<1x32xf32> to vector<8x32xf32>
    %373 = arith.addf %371, %372 : vector<8x32xf32>
    %cst_142 = arith.constant 0.000000e+00 : f32
    %374 = vector.broadcast %cst_142 : f32 to vector<8x32xf32>
    %375 = arith.maximumf %373, %374 : vector<8x32xf32>
    %376 = vector.extract_strided_slice %7 {offsets = [128, 0], sizes = [32, 32], strides = [1, 1]} : vector<512x32xf32> to vector<32x32xf32>
    %377 = arith.truncf %375 : vector<8x32xf32> to vector<8x32xbf16>
    %378 = arith.truncf %376 : vector<32x32xf32> to vector<32x32xbf16>
    %cst_143 = arith.constant dense<0.000000e+00> : vector<8x32xf32>
    %379 = tpu.matmul %377, %378, %cst_143 {dimension_numbers = #tpu.dot_dimension_numbers<[1], [0], [0], [1], [0, 0, 1, 1], [], []>} : vector<8x32xbf16>, vector<32x32xbf16>, vector<8x32xf32> -> vector<8x32xf32>
    %380 = arith.addf %334, %379 : vector<8x32xf32>
    %cst_144 = arith.constant 0.000000e+00 : f32
    %381 = vector.broadcast %cst_144 : f32 to vector<8x32xf32>
    %c72_145 = arith.constant 72 : index
    %c0_146 = arith.constant 0 : index
    %382 = vector.load %arg22[%c72_145, %c0_146] : memref<512x16xf32, #tpu.memory_space<vmem>>, vector<8x16xf32>
    %383 = vector.extract_strided_slice %5 {offsets = [0, 0], sizes = [16, 32], strides = [1, 1]} : vector<144x32xf32> to vector<16x32xf32>
    %384 = arith.truncf %382 : vector<8x16xf32> to vector<8x16xbf16>
    %385 = arith.truncf %383 : vector<16x32xf32> to vector<16x32xbf16>
    %cst_147 = arith.constant dense<0.000000e+00> : vector<8x32xf32>
    %386 = tpu.matmul %384, %385, %cst_147 {dimension_numbers = #tpu.dot_dimension_numbers<[1], [0], [0], [1], [0, 0, 1, 1], [], []>} : vector<8x16xbf16>, vector<16x32xbf16>, vector<8x32xf32> -> vector<8x32xf32>
    %387 = arith.addf %381, %386 : vector<8x32xf32>
    %c80_148 = arith.constant 80 : index
    %c0_149 = arith.constant 0 : index
    %388 = vector.load %arg22[%c80_148, %c0_149] : memref<512x16xf32, #tpu.memory_space<vmem>>, vector<8x16xf32>
    %389 = vector.extract_strided_slice %5 {offsets = [16, 0], sizes = [16, 32], strides = [1, 1]} : vector<144x32xf32> to vector<16x32xf32>
    %390 = arith.truncf %388 : vector<8x16xf32> to vector<8x16xbf16>
    %391 = arith.truncf %389 : vector<16x32xf32> to vector<16x32xbf16>
    %cst_150 = arith.constant dense<0.000000e+00> : vector<8x32xf32>
    %392 = tpu.matmul %390, %391, %cst_150 {dimension_numbers = #tpu.dot_dimension_numbers<[1], [0], [0], [1], [0, 0, 1, 1], [], []>} : vector<8x16xbf16>, vector<16x32xbf16>, vector<8x32xf32> -> vector<8x32xf32>
    %393 = arith.addf %387, %392 : vector<8x32xf32>
    %c88_151 = arith.constant 88 : index
    %c0_152 = arith.constant 0 : index
    %394 = vector.load %arg22[%c88_151, %c0_152] : memref<512x16xf32, #tpu.memory_space<vmem>>, vector<8x16xf32>
    %395 = vector.extract_strided_slice %5 {offsets = [32, 0], sizes = [16, 32], strides = [1, 1]} : vector<144x32xf32> to vector<16x32xf32>
    %396 = arith.truncf %394 : vector<8x16xf32> to vector<8x16xbf16>
    %397 = arith.truncf %395 : vector<16x32xf32> to vector<16x32xbf16>
    %cst_153 = arith.constant dense<0.000000e+00> : vector<8x32xf32>
    %398 = tpu.matmul %396, %397, %cst_153 {dimension_numbers = #tpu.dot_dimension_numbers<[1], [0], [0], [1], [0, 0, 1, 1], [], []>} : vector<8x16xbf16>, vector<16x32xbf16>, vector<8x32xf32> -> vector<8x32xf32>
    %399 = arith.addf %393, %398 : vector<8x32xf32>
    %c136_154 = arith.constant 136 : index
    %c0_155 = arith.constant 0 : index
    %400 = vector.load %arg22[%c136_154, %c0_155] : memref<512x16xf32, #tpu.memory_space<vmem>>, vector<8x16xf32>
    %401 = vector.extract_strided_slice %5 {offsets = [48, 0], sizes = [16, 32], strides = [1, 1]} : vector<144x32xf32> to vector<16x32xf32>
    %402 = arith.truncf %400 : vector<8x16xf32> to vector<8x16xbf16>
    %403 = arith.truncf %401 : vector<16x32xf32> to vector<16x32xbf16>
    %cst_156 = arith.constant dense<0.000000e+00> : vector<8x32xf32>
    %404 = tpu.matmul %402, %403, %cst_156 {dimension_numbers = #tpu.dot_dimension_numbers<[1], [0], [0], [1], [0, 0, 1, 1], [], []>} : vector<8x16xbf16>, vector<16x32xbf16>, vector<8x32xf32> -> vector<8x32xf32>
    %405 = arith.addf %399, %404 : vector<8x32xf32>
    %c144 = arith.constant 144 : index
    %c0_157 = arith.constant 0 : index
    %406 = vector.load %arg22[%c144, %c0_157] : memref<512x16xf32, #tpu.memory_space<vmem>>, vector<8x16xf32>
    %407 = vector.extract_strided_slice %5 {offsets = [64, 0], sizes = [16, 32], strides = [1, 1]} : vector<144x32xf32> to vector<16x32xf32>
    %408 = arith.truncf %406 : vector<8x16xf32> to vector<8x16xbf16>
    %409 = arith.truncf %407 : vector<16x32xf32> to vector<16x32xbf16>
    %cst_158 = arith.constant dense<0.000000e+00> : vector<8x32xf32>
    %410 = tpu.matmul %408, %409, %cst_158 {dimension_numbers = #tpu.dot_dimension_numbers<[1], [0], [0], [1], [0, 0, 1, 1], [], []>} : vector<8x16xbf16>, vector<16x32xbf16>, vector<8x32xf32> -> vector<8x32xf32>
    %411 = arith.addf %405, %410 : vector<8x32xf32>
    %c152 = arith.constant 152 : index
    %c0_159 = arith.constant 0 : index
    %412 = vector.load %arg22[%c152, %c0_159] : memref<512x16xf32, #tpu.memory_space<vmem>>, vector<8x16xf32>
    %413 = vector.extract_strided_slice %5 {offsets = [80, 0], sizes = [16, 32], strides = [1, 1]} : vector<144x32xf32> to vector<16x32xf32>
    %414 = arith.truncf %412 : vector<8x16xf32> to vector<8x16xbf16>
    %415 = arith.truncf %413 : vector<16x32xf32> to vector<16x32xbf16>
    %cst_160 = arith.constant dense<0.000000e+00> : vector<8x32xf32>
    %416 = tpu.matmul %414, %415, %cst_160 {dimension_numbers = #tpu.dot_dimension_numbers<[1], [0], [0], [1], [0, 0, 1, 1], [], []>} : vector<8x16xbf16>, vector<16x32xbf16>, vector<8x32xf32> -> vector<8x32xf32>
    %417 = arith.addf %411, %416 : vector<8x32xf32>
    %c200_161 = arith.constant 200 : index
    %c0_162 = arith.constant 0 : index
    %418 = vector.load %arg22[%c200_161, %c0_162] : memref<512x16xf32, #tpu.memory_space<vmem>>, vector<8x16xf32>
    %419 = vector.extract_strided_slice %5 {offsets = [96, 0], sizes = [16, 32], strides = [1, 1]} : vector<144x32xf32> to vector<16x32xf32>
    %420 = arith.truncf %418 : vector<8x16xf32> to vector<8x16xbf16>
    %421 = arith.truncf %419 : vector<16x32xf32> to vector<16x32xbf16>
    %cst_163 = arith.constant dense<0.000000e+00> : vector<8x32xf32>
    %422 = tpu.matmul %420, %421, %cst_163 {dimension_numbers = #tpu.dot_dimension_numbers<[1], [0], [0], [1], [0, 0, 1, 1], [], []>} : vector<8x16xbf16>, vector<16x32xbf16>, vector<8x32xf32> -> vector<8x32xf32>
    %423 = arith.addf %417, %422 : vector<8x32xf32>
    %c208 = arith.constant 208 : index
    %c0_164 = arith.constant 0 : index
    %424 = vector.load %arg22[%c208, %c0_164] : memref<512x16xf32, #tpu.memory_space<vmem>>, vector<8x16xf32>
    %425 = vector.extract_strided_slice %5 {offsets = [112, 0], sizes = [16, 32], strides = [1, 1]} : vector<144x32xf32> to vector<16x32xf32>
    %426 = arith.truncf %424 : vector<8x16xf32> to vector<8x16xbf16>
    %427 = arith.truncf %425 : vector<16x32xf32> to vector<16x32xbf16>
    %cst_165 = arith.constant dense<0.000000e+00> : vector<8x32xf32>
    %428 = tpu.matmul %426, %427, %cst_165 {dimension_numbers = #tpu.dot_dimension_numbers<[1], [0], [0], [1], [0, 0, 1, 1], [], []>} : vector<8x16xbf16>, vector<16x32xbf16>, vector<8x32xf32> -> vector<8x32xf32>
    %429 = arith.addf %423, %428 : vector<8x32xf32>
    %c216 = arith.constant 216 : index
    %c0_166 = arith.constant 0 : index
    %430 = vector.load %arg22[%c216, %c0_166] : memref<512x16xf32, #tpu.memory_space<vmem>>, vector<8x16xf32>
    %431 = vector.extract_strided_slice %5 {offsets = [128, 0], sizes = [16, 32], strides = [1, 1]} : vector<144x32xf32> to vector<16x32xf32>
    %432 = arith.truncf %430 : vector<8x16xf32> to vector<8x16xbf16>
    %433 = arith.truncf %431 : vector<16x32xf32> to vector<16x32xbf16>
    %cst_167 = arith.constant dense<0.000000e+00> : vector<8x32xf32>
    %434 = tpu.matmul %432, %433, %cst_167 {dimension_numbers = #tpu.dot_dimension_numbers<[1], [0], [0], [1], [0, 0, 1, 1], [], []>} : vector<8x16xbf16>, vector<16x32xbf16>, vector<8x32xf32> -> vector<8x32xf32>
    %435 = arith.addf %429, %434 : vector<8x32xf32>
    %436 = vector.broadcast %6 : vector<1x32xf32> to vector<8x32xf32>
    %437 = arith.addf %435, %436 : vector<8x32xf32>
    %cst_168 = arith.constant 0.000000e+00 : f32
    %438 = vector.broadcast %cst_168 : f32 to vector<8x32xf32>
    %439 = arith.maximumf %437, %438 : vector<8x32xf32>
    %440 = vector.extract_strided_slice %7 {offsets = [160, 0], sizes = [32, 32], strides = [1, 1]} : vector<512x32xf32> to vector<32x32xf32>
    %441 = arith.truncf %439 : vector<8x32xf32> to vector<8x32xbf16>
    %442 = arith.truncf %440 : vector<32x32xf32> to vector<32x32xbf16>
    %cst_169 = arith.constant dense<0.000000e+00> : vector<8x32xf32>
    %443 = tpu.matmul %441, %442, %cst_169 {dimension_numbers = #tpu.dot_dimension_numbers<[1], [0], [0], [1], [0, 0, 1, 1], [], []>} : vector<8x32xbf16>, vector<32x32xbf16>, vector<8x32xf32> -> vector<8x32xf32>
    %444 = arith.addf %380, %443 : vector<8x32xf32>
    %cst_170 = arith.constant 0.000000e+00 : f32
    %445 = vector.broadcast %cst_170 : f32 to vector<8x32xf32>
    %c88_171 = arith.constant 88 : index
    %c0_172 = arith.constant 0 : index
    %446 = vector.load %arg22[%c88_171, %c0_172] : memref<512x16xf32, #tpu.memory_space<vmem>>, vector<8x16xf32>
    %447 = vector.extract_strided_slice %5 {offsets = [0, 0], sizes = [16, 32], strides = [1, 1]} : vector<144x32xf32> to vector<16x32xf32>
    %448 = arith.truncf %446 : vector<8x16xf32> to vector<8x16xbf16>
    %449 = arith.truncf %447 : vector<16x32xf32> to vector<16x32xbf16>
    %cst_173 = arith.constant dense<0.000000e+00> : vector<8x32xf32>
    %450 = tpu.matmul %448, %449, %cst_173 {dimension_numbers = #tpu.dot_dimension_numbers<[1], [0], [0], [1], [0, 0, 1, 1], [], []>} : vector<8x16xbf16>, vector<16x32xbf16>, vector<8x32xf32> -> vector<8x32xf32>
    %451 = arith.addf %445, %450 : vector<8x32xf32>
    %c96_174 = arith.constant 96 : index
    %c0_175 = arith.constant 0 : index
    %452 = vector.load %arg22[%c96_174, %c0_175] : memref<512x16xf32, #tpu.memory_space<vmem>>, vector<8x16xf32>
    %453 = vector.extract_strided_slice %5 {offsets = [16, 0], sizes = [16, 32], strides = [1, 1]} : vector<144x32xf32> to vector<16x32xf32>
    %454 = arith.truncf %452 : vector<8x16xf32> to vector<8x16xbf16>
    %455 = arith.truncf %453 : vector<16x32xf32> to vector<16x32xbf16>
    %cst_176 = arith.constant dense<0.000000e+00> : vector<8x32xf32>
    %456 = tpu.matmul %454, %455, %cst_176 {dimension_numbers = #tpu.dot_dimension_numbers<[1], [0], [0], [1], [0, 0, 1, 1], [], []>} : vector<8x16xbf16>, vector<16x32xbf16>, vector<8x32xf32> -> vector<8x32xf32>
    %457 = arith.addf %451, %456 : vector<8x32xf32>
    %c104_177 = arith.constant 104 : index
    %c0_178 = arith.constant 0 : index
    %458 = vector.load %arg22[%c104_177, %c0_178] : memref<512x16xf32, #tpu.memory_space<vmem>>, vector<8x16xf32>
    %459 = vector.extract_strided_slice %5 {offsets = [32, 0], sizes = [16, 32], strides = [1, 1]} : vector<144x32xf32> to vector<16x32xf32>
    %460 = arith.truncf %458 : vector<8x16xf32> to vector<8x16xbf16>
    %461 = arith.truncf %459 : vector<16x32xf32> to vector<16x32xbf16>
    %cst_179 = arith.constant dense<0.000000e+00> : vector<8x32xf32>
    %462 = tpu.matmul %460, %461, %cst_179 {dimension_numbers = #tpu.dot_dimension_numbers<[1], [0], [0], [1], [0, 0, 1, 1], [], []>} : vector<8x16xbf16>, vector<16x32xbf16>, vector<8x32xf32> -> vector<8x32xf32>
    %463 = arith.addf %457, %462 : vector<8x32xf32>
    %c152_180 = arith.constant 152 : index
    %c0_181 = arith.constant 0 : index
    %464 = vector.load %arg22[%c152_180, %c0_181] : memref<512x16xf32, #tpu.memory_space<vmem>>, vector<8x16xf32>
    %465 = vector.extract_strided_slice %5 {offsets = [48, 0], sizes = [16, 32], strides = [1, 1]} : vector<144x32xf32> to vector<16x32xf32>
    %466 = arith.truncf %464 : vector<8x16xf32> to vector<8x16xbf16>
    %467 = arith.truncf %465 : vector<16x32xf32> to vector<16x32xbf16>
    %cst_182 = arith.constant dense<0.000000e+00> : vector<8x32xf32>
    %468 = tpu.matmul %466, %467, %cst_182 {dimension_numbers = #tpu.dot_dimension_numbers<[1], [0], [0], [1], [0, 0, 1, 1], [], []>} : vector<8x16xbf16>, vector<16x32xbf16>, vector<8x32xf32> -> vector<8x32xf32>
    %469 = arith.addf %463, %468 : vector<8x32xf32>
    %c160 = arith.constant 160 : index
    %c0_183 = arith.constant 0 : index
    %470 = vector.load %arg22[%c160, %c0_183] : memref<512x16xf32, #tpu.memory_space<vmem>>, vector<8x16xf32>
    %471 = vector.extract_strided_slice %5 {offsets = [64, 0], sizes = [16, 32], strides = [1, 1]} : vector<144x32xf32> to vector<16x32xf32>
    %472 = arith.truncf %470 : vector<8x16xf32> to vector<8x16xbf16>
    %473 = arith.truncf %471 : vector<16x32xf32> to vector<16x32xbf16>
    %cst_184 = arith.constant dense<0.000000e+00> : vector<8x32xf32>
    %474 = tpu.matmul %472, %473, %cst_184 {dimension_numbers = #tpu.dot_dimension_numbers<[1], [0], [0], [1], [0, 0, 1, 1], [], []>} : vector<8x16xbf16>, vector<16x32xbf16>, vector<8x32xf32> -> vector<8x32xf32>
    %475 = arith.addf %469, %474 : vector<8x32xf32>
    %c168 = arith.constant 168 : index
    %c0_185 = arith.constant 0 : index
    %476 = vector.load %arg22[%c168, %c0_185] : memref<512x16xf32, #tpu.memory_space<vmem>>, vector<8x16xf32>
    %477 = vector.extract_strided_slice %5 {offsets = [80, 0], sizes = [16, 32], strides = [1, 1]} : vector<144x32xf32> to vector<16x32xf32>
    %478 = arith.truncf %476 : vector<8x16xf32> to vector<8x16xbf16>
    %479 = arith.truncf %477 : vector<16x32xf32> to vector<16x32xbf16>
    %cst_186 = arith.constant dense<0.000000e+00> : vector<8x32xf32>
    %480 = tpu.matmul %478, %479, %cst_186 {dimension_numbers = #tpu.dot_dimension_numbers<[1], [0], [0], [1], [0, 0, 1, 1], [], []>} : vector<8x16xbf16>, vector<16x32xbf16>, vector<8x32xf32> -> vector<8x32xf32>
    %481 = arith.addf %475, %480 : vector<8x32xf32>
    %c216_187 = arith.constant 216 : index
    %c0_188 = arith.constant 0 : index
    %482 = vector.load %arg22[%c216_187, %c0_188] : memref<512x16xf32, #tpu.memory_space<vmem>>, vector<8x16xf32>
    %483 = vector.extract_strided_slice %5 {offsets = [96, 0], sizes = [16, 32], strides = [1, 1]} : vector<144x32xf32> to vector<16x32xf32>
    %484 = arith.truncf %482 : vector<8x16xf32> to vector<8x16xbf16>
    %485 = arith.truncf %483 : vector<16x32xf32> to vector<16x32xbf16>
    %cst_189 = arith.constant dense<0.000000e+00> : vector<8x32xf32>
    %486 = tpu.matmul %484, %485, %cst_189 {dimension_numbers = #tpu.dot_dimension_numbers<[1], [0], [0], [1], [0, 0, 1, 1], [], []>} : vector<8x16xbf16>, vector<16x32xbf16>, vector<8x32xf32> -> vector<8x32xf32>
    %487 = arith.addf %481, %486 : vector<8x32xf32>
    %c224 = arith.constant 224 : index
    %c0_190 = arith.constant 0 : index
    %488 = vector.load %arg22[%c224, %c0_190] : memref<512x16xf32, #tpu.memory_space<vmem>>, vector<8x16xf32>
    %489 = vector.extract_strided_slice %5 {offsets = [112, 0], sizes = [16, 32], strides = [1, 1]} : vector<144x32xf32> to vector<16x32xf32>
    %490 = arith.truncf %488 : vector<8x16xf32> to vector<8x16xbf16>
    %491 = arith.truncf %489 : vector<16x32xf32> to vector<16x32xbf16>
    %cst_191 = arith.constant dense<0.000000e+00> : vector<8x32xf32>
    %492 = tpu.matmul %490, %491, %cst_191 {dimension_numbers = #tpu.dot_dimension_numbers<[1], [0], [0], [1], [0, 0, 1, 1], [], []>} : vector<8x16xbf16>, vector<16x32xbf16>, vector<8x32xf32> -> vector<8x32xf32>
    %493 = arith.addf %487, %492 : vector<8x32xf32>
    %c232 = arith.constant 232 : index
    %c0_192 = arith.constant 0 : index
    %494 = vector.load %arg22[%c232, %c0_192] : memref<512x16xf32, #tpu.memory_space<vmem>>, vector<8x16xf32>
    %495 = vector.extract_strided_slice %5 {offsets = [128, 0], sizes = [16, 32], strides = [1, 1]} : vector<144x32xf32> to vector<16x32xf32>
    %496 = arith.truncf %494 : vector<8x16xf32> to vector<8x16xbf16>
    %497 = arith.truncf %495 : vector<16x32xf32> to vector<16x32xbf16>
    %cst_193 = arith.constant dense<0.000000e+00> : vector<8x32xf32>
    %498 = tpu.matmul %496, %497, %cst_193 {dimension_numbers = #tpu.dot_dimension_numbers<[1], [0], [0], [1], [0, 0, 1, 1], [], []>} : vector<8x16xbf16>, vector<16x32xbf16>, vector<8x32xf32> -> vector<8x32xf32>
    %499 = arith.addf %493, %498 : vector<8x32xf32>
    %500 = vector.broadcast %6 : vector<1x32xf32> to vector<8x32xf32>
    %501 = arith.addf %499, %500 : vector<8x32xf32>
    %cst_194 = arith.constant 0.000000e+00 : f32
    %502 = vector.broadcast %cst_194 : f32 to vector<8x32xf32>
    %503 = arith.maximumf %501, %502 : vector<8x32xf32>
    %504 = vector.extract_strided_slice %7 {offsets = [192, 0], sizes = [32, 32], strides = [1, 1]} : vector<512x32xf32> to vector<32x32xf32>
    %505 = arith.truncf %503 : vector<8x32xf32> to vector<8x32xbf16>
    %506 = arith.truncf %504 : vector<32x32xf32> to vector<32x32xbf16>
    %cst_195 = arith.constant dense<0.000000e+00> : vector<8x32xf32>
    %507 = tpu.matmul %505, %506, %cst_195 {dimension_numbers = #tpu.dot_dimension_numbers<[1], [0], [0], [1], [0, 0, 1, 1], [], []>} : vector<8x32xbf16>, vector<32x32xbf16>, vector<8x32xf32> -> vector<8x32xf32>
    %508 = arith.addf %444, %507 : vector<8x32xf32>
    %cst_196 = arith.constant 0.000000e+00 : f32
    %509 = vector.broadcast %cst_196 : f32 to vector<8x32xf32>
    %c104_197 = arith.constant 104 : index
    %c0_198 = arith.constant 0 : index
    %510 = vector.load %arg22[%c104_197, %c0_198] : memref<512x16xf32, #tpu.memory_space<vmem>>, vector<8x16xf32>
    %511 = vector.extract_strided_slice %5 {offsets = [0, 0], sizes = [16, 32], strides = [1, 1]} : vector<144x32xf32> to vector<16x32xf32>
    %512 = arith.truncf %510 : vector<8x16xf32> to vector<8x16xbf16>
    %513 = arith.truncf %511 : vector<16x32xf32> to vector<16x32xbf16>
    %cst_199 = arith.constant dense<0.000000e+00> : vector<8x32xf32>
    %514 = tpu.matmul %512, %513, %cst_199 {dimension_numbers = #tpu.dot_dimension_numbers<[1], [0], [0], [1], [0, 0, 1, 1], [], []>} : vector<8x16xbf16>, vector<16x32xbf16>, vector<8x32xf32> -> vector<8x32xf32>
    %515 = arith.addf %509, %514 : vector<8x32xf32>
    %c112_200 = arith.constant 112 : index
    %c0_201 = arith.constant 0 : index
    %516 = vector.load %arg22[%c112_200, %c0_201] : memref<512x16xf32, #tpu.memory_space<vmem>>, vector<8x16xf32>
    %517 = vector.extract_strided_slice %5 {offsets = [16, 0], sizes = [16, 32], strides = [1, 1]} : vector<144x32xf32> to vector<16x32xf32>
    %518 = arith.truncf %516 : vector<8x16xf32> to vector<8x16xbf16>
    %519 = arith.truncf %517 : vector<16x32xf32> to vector<16x32xbf16>
    %cst_202 = arith.constant dense<0.000000e+00> : vector<8x32xf32>
    %520 = tpu.matmul %518, %519, %cst_202 {dimension_numbers = #tpu.dot_dimension_numbers<[1], [0], [0], [1], [0, 0, 1, 1], [], []>} : vector<8x16xbf16>, vector<16x32xbf16>, vector<8x32xf32> -> vector<8x32xf32>
    %521 = arith.addf %515, %520 : vector<8x32xf32>
    %c120_203 = arith.constant 120 : index
    %c0_204 = arith.constant 0 : index
    %522 = vector.load %arg22[%c120_203, %c0_204] : memref<512x16xf32, #tpu.memory_space<vmem>>, vector<8x16xf32>
    %523 = vector.extract_strided_slice %5 {offsets = [32, 0], sizes = [16, 32], strides = [1, 1]} : vector<144x32xf32> to vector<16x32xf32>
    %524 = arith.truncf %522 : vector<8x16xf32> to vector<8x16xbf16>
    %525 = arith.truncf %523 : vector<16x32xf32> to vector<16x32xbf16>
    %cst_205 = arith.constant dense<0.000000e+00> : vector<8x32xf32>
    %526 = tpu.matmul %524, %525, %cst_205 {dimension_numbers = #tpu.dot_dimension_numbers<[1], [0], [0], [1], [0, 0, 1, 1], [], []>} : vector<8x16xbf16>, vector<16x32xbf16>, vector<8x32xf32> -> vector<8x32xf32>
    %527 = arith.addf %521, %526 : vector<8x32xf32>
    %c168_206 = arith.constant 168 : index
    %c0_207 = arith.constant 0 : index
    %528 = vector.load %arg22[%c168_206, %c0_207] : memref<512x16xf32, #tpu.memory_space<vmem>>, vector<8x16xf32>
    %529 = vector.extract_strided_slice %5 {offsets = [48, 0], sizes = [16, 32], strides = [1, 1]} : vector<144x32xf32> to vector<16x32xf32>
    %530 = arith.truncf %528 : vector<8x16xf32> to vector<8x16xbf16>
    %531 = arith.truncf %529 : vector<16x32xf32> to vector<16x32xbf16>
    %cst_208 = arith.constant dense<0.000000e+00> : vector<8x32xf32>
    %532 = tpu.matmul %530, %531, %cst_208 {dimension_numbers = #tpu.dot_dimension_numbers<[1], [0], [0], [1], [0, 0, 1, 1], [], []>} : vector<8x16xbf16>, vector<16x32xbf16>, vector<8x32xf32> -> vector<8x32xf32>
    %533 = arith.addf %527, %532 : vector<8x32xf32>
    %c176 = arith.constant 176 : index
    %c0_209 = arith.constant 0 : index
    %534 = vector.load %arg22[%c176, %c0_209] : memref<512x16xf32, #tpu.memory_space<vmem>>, vector<8x16xf32>
    %535 = vector.extract_strided_slice %5 {offsets = [64, 0], sizes = [16, 32], strides = [1, 1]} : vector<144x32xf32> to vector<16x32xf32>
    %536 = arith.truncf %534 : vector<8x16xf32> to vector<8x16xbf16>
    %537 = arith.truncf %535 : vector<16x32xf32> to vector<16x32xbf16>
    %cst_210 = arith.constant dense<0.000000e+00> : vector<8x32xf32>
    %538 = tpu.matmul %536, %537, %cst_210 {dimension_numbers = #tpu.dot_dimension_numbers<[1], [0], [0], [1], [0, 0, 1, 1], [], []>} : vector<8x16xbf16>, vector<16x32xbf16>, vector<8x32xf32> -> vector<8x32xf32>
    %539 = arith.addf %533, %538 : vector<8x32xf32>
    %c184 = arith.constant 184 : index
    %c0_211 = arith.constant 0 : index
    %540 = vector.load %arg22[%c184, %c0_211] : memref<512x16xf32, #tpu.memory_space<vmem>>, vector<8x16xf32>
    %541 = vector.extract_strided_slice %5 {offsets = [80, 0], sizes = [16, 32], strides = [1, 1]} : vector<144x32xf32> to vector<16x32xf32>
    %542 = arith.truncf %540 : vector<8x16xf32> to vector<8x16xbf16>
    %543 = arith.truncf %541 : vector<16x32xf32> to vector<16x32xbf16>
    %cst_212 = arith.constant dense<0.000000e+00> : vector<8x32xf32>
    %544 = tpu.matmul %542, %543, %cst_212 {dimension_numbers = #tpu.dot_dimension_numbers<[1], [0], [0], [1], [0, 0, 1, 1], [], []>} : vector<8x16xbf16>, vector<16x32xbf16>, vector<8x32xf32> -> vector<8x32xf32>
    %545 = arith.addf %539, %544 : vector<8x32xf32>
    %c232_213 = arith.constant 232 : index
    %c0_214 = arith.constant 0 : index
    %546 = vector.load %arg22[%c232_213, %c0_214] : memref<512x16xf32, #tpu.memory_space<vmem>>, vector<8x16xf32>
    %547 = vector.extract_strided_slice %5 {offsets = [96, 0], sizes = [16, 32], strides = [1, 1]} : vector<144x32xf32> to vector<16x32xf32>
    %548 = arith.truncf %546 : vector<8x16xf32> to vector<8x16xbf16>
    %549 = arith.truncf %547 : vector<16x32xf32> to vector<16x32xbf16>
    %cst_215 = arith.constant dense<0.000000e+00> : vector<8x32xf32>
    %550 = tpu.matmul %548, %549, %cst_215 {dimension_numbers = #tpu.dot_dimension_numbers<[1], [0], [0], [1], [0, 0, 1, 1], [], []>} : vector<8x16xbf16>, vector<16x32xbf16>, vector<8x32xf32> -> vector<8x32xf32>
    %551 = arith.addf %545, %550 : vector<8x32xf32>
    %c240 = arith.constant 240 : index
    %c0_216 = arith.constant 0 : index
    %552 = vector.load %arg22[%c240, %c0_216] : memref<512x16xf32, #tpu.memory_space<vmem>>, vector<8x16xf32>
    %553 = vector.extract_strided_slice %5 {offsets = [112, 0], sizes = [16, 32], strides = [1, 1]} : vector<144x32xf32> to vector<16x32xf32>
    %554 = arith.truncf %552 : vector<8x16xf32> to vector<8x16xbf16>
    %555 = arith.truncf %553 : vector<16x32xf32> to vector<16x32xbf16>
    %cst_217 = arith.constant dense<0.000000e+00> : vector<8x32xf32>
    %556 = tpu.matmul %554, %555, %cst_217 {dimension_numbers = #tpu.dot_dimension_numbers<[1], [0], [0], [1], [0, 0, 1, 1], [], []>} : vector<8x16xbf16>, vector<16x32xbf16>, vector<8x32xf32> -> vector<8x32xf32>
    %557 = arith.addf %551, %556 : vector<8x32xf32>
    %c248 = arith.constant 248 : index
    %c0_218 = arith.constant 0 : index
    %558 = vector.load %arg22[%c248, %c0_218] : memref<512x16xf32, #tpu.memory_space<vmem>>, vector<8x16xf32>
    %559 = vector.extract_strided_slice %5 {offsets = [128, 0], sizes = [16, 32], strides = [1, 1]} : vector<144x32xf32> to vector<16x32xf32>
    %560 = arith.truncf %558 : vector<8x16xf32> to vector<8x16xbf16>
    %561 = arith.truncf %559 : vector<16x32xf32> to vector<16x32xbf16>
    %cst_219 = arith.constant dense<0.000000e+00> : vector<8x32xf32>
    %562 = tpu.matmul %560, %561, %cst_219 {dimension_numbers = #tpu.dot_dimension_numbers<[1], [0], [0], [1], [0, 0, 1, 1], [], []>} : vector<8x16xbf16>, vector<16x32xbf16>, vector<8x32xf32> -> vector<8x32xf32>
    %563 = arith.addf %557, %562 : vector<8x32xf32>
    %564 = vector.broadcast %6 : vector<1x32xf32> to vector<8x32xf32>
    %565 = arith.addf %563, %564 : vector<8x32xf32>
    %cst_220 = arith.constant 0.000000e+00 : f32
    %566 = vector.broadcast %cst_220 : f32 to vector<8x32xf32>
    %567 = arith.maximumf %565, %566 : vector<8x32xf32>
    %568 = vector.extract_strided_slice %7 {offsets = [224, 0], sizes = [32, 32], strides = [1, 1]} : vector<512x32xf32> to vector<32x32xf32>
    %569 = arith.truncf %567 : vector<8x32xf32> to vector<8x32xbf16>
    %570 = arith.truncf %568 : vector<32x32xf32> to vector<32x32xbf16>
    %cst_221 = arith.constant dense<0.000000e+00> : vector<8x32xf32>
    %571 = tpu.matmul %569, %570, %cst_221 {dimension_numbers = #tpu.dot_dimension_numbers<[1], [0], [0], [1], [0, 0, 1, 1], [], []>} : vector<8x32xbf16>, vector<32x32xbf16>, vector<8x32xf32> -> vector<8x32xf32>
    %572 = arith.addf %508, %571 : vector<8x32xf32>
    %cst_222 = arith.constant 0.000000e+00 : f32
    %573 = vector.broadcast %cst_222 : f32 to vector<8x32xf32>
    %c192_223 = arith.constant 192 : index
    %c0_224 = arith.constant 0 : index
    %574 = vector.load %arg22[%c192_223, %c0_224] : memref<512x16xf32, #tpu.memory_space<vmem>>, vector<8x16xf32>
    %575 = vector.extract_strided_slice %5 {offsets = [16, 0], sizes = [16, 32], strides = [1, 1]} : vector<144x32xf32> to vector<16x32xf32>
    %576 = arith.truncf %574 : vector<8x16xf32> to vector<8x16xbf16>
    %577 = arith.truncf %575 : vector<16x32xf32> to vector<16x32xbf16>
    %cst_225 = arith.constant dense<0.000000e+00> : vector<8x32xf32>
    %578 = tpu.matmul %576, %577, %cst_225 {dimension_numbers = #tpu.dot_dimension_numbers<[1], [0], [0], [1], [0, 0, 1, 1], [], []>} : vector<8x16xbf16>, vector<16x32xbf16>, vector<8x32xf32> -> vector<8x32xf32>
    %579 = arith.addf %573, %578 : vector<8x32xf32>
    %c200_226 = arith.constant 200 : index
    %c0_227 = arith.constant 0 : index
    %580 = vector.load %arg22[%c200_226, %c0_227] : memref<512x16xf32, #tpu.memory_space<vmem>>, vector<8x16xf32>
    %581 = vector.extract_strided_slice %5 {offsets = [32, 0], sizes = [16, 32], strides = [1, 1]} : vector<144x32xf32> to vector<16x32xf32>
    %582 = arith.truncf %580 : vector<8x16xf32> to vector<8x16xbf16>
    %583 = arith.truncf %581 : vector<16x32xf32> to vector<16x32xbf16>
    %cst_228 = arith.constant dense<0.000000e+00> : vector<8x32xf32>
    %584 = tpu.matmul %582, %583, %cst_228 {dimension_numbers = #tpu.dot_dimension_numbers<[1], [0], [0], [1], [0, 0, 1, 1], [], []>} : vector<8x16xbf16>, vector<16x32xbf16>, vector<8x32xf32> -> vector<8x32xf32>
    %585 = arith.addf %579, %584 : vector<8x32xf32>
    %c256 = arith.constant 256 : index
    %c0_229 = arith.constant 0 : index
    %586 = vector.load %arg22[%c256, %c0_229] : memref<512x16xf32, #tpu.memory_space<vmem>>, vector<8x16xf32>
    %587 = vector.extract_strided_slice %5 {offsets = [64, 0], sizes = [16, 32], strides = [1, 1]} : vector<144x32xf32> to vector<16x32xf32>
    %588 = arith.truncf %586 : vector<8x16xf32> to vector<8x16xbf16>
    %589 = arith.truncf %587 : vector<16x32xf32> to vector<16x32xbf16>
    %cst_230 = arith.constant dense<0.000000e+00> : vector<8x32xf32>
    %590 = tpu.matmul %588, %589, %cst_230 {dimension_numbers = #tpu.dot_dimension_numbers<[1], [0], [0], [1], [0, 0, 1, 1], [], []>} : vector<8x16xbf16>, vector<16x32xbf16>, vector<8x32xf32> -> vector<8x32xf32>
    %591 = arith.addf %585, %590 : vector<8x32xf32>
    %c264 = arith.constant 264 : index
    %c0_231 = arith.constant 0 : index
    %592 = vector.load %arg22[%c264, %c0_231] : memref<512x16xf32, #tpu.memory_space<vmem>>, vector<8x16xf32>
    %593 = vector.extract_strided_slice %5 {offsets = [80, 0], sizes = [16, 32], strides = [1, 1]} : vector<144x32xf32> to vector<16x32xf32>
    %594 = arith.truncf %592 : vector<8x16xf32> to vector<8x16xbf16>
    %595 = arith.truncf %593 : vector<16x32xf32> to vector<16x32xbf16>
    %cst_232 = arith.constant dense<0.000000e+00> : vector<8x32xf32>
    %596 = tpu.matmul %594, %595, %cst_232 {dimension_numbers = #tpu.dot_dimension_numbers<[1], [0], [0], [1], [0, 0, 1, 1], [], []>} : vector<8x16xbf16>, vector<16x32xbf16>, vector<8x32xf32> -> vector<8x32xf32>
    %597 = arith.addf %591, %596 : vector<8x32xf32>
    %c320 = arith.constant 320 : index
    %c0_233 = arith.constant 0 : index
    %598 = vector.load %arg22[%c320, %c0_233] : memref<512x16xf32, #tpu.memory_space<vmem>>, vector<8x16xf32>
    %599 = vector.extract_strided_slice %5 {offsets = [112, 0], sizes = [16, 32], strides = [1, 1]} : vector<144x32xf32> to vector<16x32xf32>
    %600 = arith.truncf %598 : vector<8x16xf32> to vector<8x16xbf16>
    %601 = arith.truncf %599 : vector<16x32xf32> to vector<16x32xbf16>
    %cst_234 = arith.constant dense<0.000000e+00> : vector<8x32xf32>
    %602 = tpu.matmul %600, %601, %cst_234 {dimension_numbers = #tpu.dot_dimension_numbers<[1], [0], [0], [1], [0, 0, 1, 1], [], []>} : vector<8x16xbf16>, vector<16x32xbf16>, vector<8x32xf32> -> vector<8x32xf32>
    %603 = arith.addf %597, %602 : vector<8x32xf32>
    %c328 = arith.constant 328 : index
    %c0_235 = arith.constant 0 : index
    %604 = vector.load %arg22[%c328, %c0_235] : memref<512x16xf32, #tpu.memory_space<vmem>>, vector<8x16xf32>
    %605 = vector.extract_strided_slice %5 {offsets = [128, 0], sizes = [16, 32], strides = [1, 1]} : vector<144x32xf32> to vector<16x32xf32>
    %606 = arith.truncf %604 : vector<8x16xf32> to vector<8x16xbf16>
    %607 = arith.truncf %605 : vector<16x32xf32> to vector<16x32xbf16>
    %cst_236 = arith.constant dense<0.000000e+00> : vector<8x32xf32>
    %608 = tpu.matmul %606, %607, %cst_236 {dimension_numbers = #tpu.dot_dimension_numbers<[1], [0], [0], [1], [0, 0, 1, 1], [], []>} : vector<8x16xbf16>, vector<16x32xbf16>, vector<8x32xf32> -> vector<8x32xf32>
    %609 = arith.addf %603, %608 : vector<8x32xf32>
    %610 = vector.broadcast %6 : vector<1x32xf32> to vector<8x32xf32>
    %611 = arith.addf %609, %610 : vector<8x32xf32>
    %cst_237 = arith.constant 0.000000e+00 : f32
    %612 = vector.broadcast %cst_237 : f32 to vector<8x32xf32>
    %613 = arith.maximumf %611, %612 : vector<8x32xf32>
    %614 = vector.extract_strided_slice %7 {offsets = [256, 0], sizes = [32, 32], strides = [1, 1]} : vector<512x32xf32> to vector<32x32xf32>
    %615 = arith.truncf %613 : vector<8x32xf32> to vector<8x32xbf16>
    %616 = arith.truncf %614 : vector<32x32xf32> to vector<32x32xbf16>
    %cst_238 = arith.constant dense<0.000000e+00> : vector<8x32xf32>
    %617 = tpu.matmul %615, %616, %cst_238 {dimension_numbers = #tpu.dot_dimension_numbers<[1], [0], [0], [1], [0, 0, 1, 1], [], []>} : vector<8x32xbf16>, vector<32x32xbf16>, vector<8x32xf32> -> vector<8x32xf32>
    %618 = arith.addf %572, %617 : vector<8x32xf32>
    %cst_239 = arith.constant 0.000000e+00 : f32
    %619 = vector.broadcast %cst_239 : f32 to vector<8x32xf32>
    %c200_240 = arith.constant 200 : index
    %c0_241 = arith.constant 0 : index
    %620 = vector.load %arg22[%c200_240, %c0_241] : memref<512x16xf32, #tpu.memory_space<vmem>>, vector<8x16xf32>
    %621 = vector.extract_strided_slice %5 {offsets = [0, 0], sizes = [16, 32], strides = [1, 1]} : vector<144x32xf32> to vector<16x32xf32>
    %622 = arith.truncf %620 : vector<8x16xf32> to vector<8x16xbf16>
    %623 = arith.truncf %621 : vector<16x32xf32> to vector<16x32xbf16>
    %cst_242 = arith.constant dense<0.000000e+00> : vector<8x32xf32>
    %624 = tpu.matmul %622, %623, %cst_242 {dimension_numbers = #tpu.dot_dimension_numbers<[1], [0], [0], [1], [0, 0, 1, 1], [], []>} : vector<8x16xbf16>, vector<16x32xbf16>, vector<8x32xf32> -> vector<8x32xf32>
    %625 = arith.addf %619, %624 : vector<8x32xf32>
    %c208_243 = arith.constant 208 : index
    %c0_244 = arith.constant 0 : index
    %626 = vector.load %arg22[%c208_243, %c0_244] : memref<512x16xf32, #tpu.memory_space<vmem>>, vector<8x16xf32>
    %627 = vector.extract_strided_slice %5 {offsets = [16, 0], sizes = [16, 32], strides = [1, 1]} : vector<144x32xf32> to vector<16x32xf32>
    %628 = arith.truncf %626 : vector<8x16xf32> to vector<8x16xbf16>
    %629 = arith.truncf %627 : vector<16x32xf32> to vector<16x32xbf16>
    %cst_245 = arith.constant dense<0.000000e+00> : vector<8x32xf32>
    %630 = tpu.matmul %628, %629, %cst_245 {dimension_numbers = #tpu.dot_dimension_numbers<[1], [0], [0], [1], [0, 0, 1, 1], [], []>} : vector<8x16xbf16>, vector<16x32xbf16>, vector<8x32xf32> -> vector<8x32xf32>
    %631 = arith.addf %625, %630 : vector<8x32xf32>
    %c216_246 = arith.constant 216 : index
    %c0_247 = arith.constant 0 : index
    %632 = vector.load %arg22[%c216_246, %c0_247] : memref<512x16xf32, #tpu.memory_space<vmem>>, vector<8x16xf32>
    %633 = vector.extract_strided_slice %5 {offsets = [32, 0], sizes = [16, 32], strides = [1, 1]} : vector<144x32xf32> to vector<16x32xf32>
    %634 = arith.truncf %632 : vector<8x16xf32> to vector<8x16xbf16>
    %635 = arith.truncf %633 : vector<16x32xf32> to vector<16x32xbf16>
    %cst_248 = arith.constant dense<0.000000e+00> : vector<8x32xf32>
    %636 = tpu.matmul %634, %635, %cst_248 {dimension_numbers = #tpu.dot_dimension_numbers<[1], [0], [0], [1], [0, 0, 1, 1], [], []>} : vector<8x16xbf16>, vector<16x32xbf16>, vector<8x32xf32> -> vector<8x32xf32>
    %637 = arith.addf %631, %636 : vector<8x32xf32>
    %c264_249 = arith.constant 264 : index
    %c0_250 = arith.constant 0 : index
    %638 = vector.load %arg22[%c264_249, %c0_250] : memref<512x16xf32, #tpu.memory_space<vmem>>, vector<8x16xf32>
    %639 = vector.extract_strided_slice %5 {offsets = [48, 0], sizes = [16, 32], strides = [1, 1]} : vector<144x32xf32> to vector<16x32xf32>
    %640 = arith.truncf %638 : vector<8x16xf32> to vector<8x16xbf16>
    %641 = arith.truncf %639 : vector<16x32xf32> to vector<16x32xbf16>
    %cst_251 = arith.constant dense<0.000000e+00> : vector<8x32xf32>
    %642 = tpu.matmul %640, %641, %cst_251 {dimension_numbers = #tpu.dot_dimension_numbers<[1], [0], [0], [1], [0, 0, 1, 1], [], []>} : vector<8x16xbf16>, vector<16x32xbf16>, vector<8x32xf32> -> vector<8x32xf32>
    %643 = arith.addf %637, %642 : vector<8x32xf32>
    %c272 = arith.constant 272 : index
    %c0_252 = arith.constant 0 : index
    %644 = vector.load %arg22[%c272, %c0_252] : memref<512x16xf32, #tpu.memory_space<vmem>>, vector<8x16xf32>
    %645 = vector.extract_strided_slice %5 {offsets = [64, 0], sizes = [16, 32], strides = [1, 1]} : vector<144x32xf32> to vector<16x32xf32>
    %646 = arith.truncf %644 : vector<8x16xf32> to vector<8x16xbf16>
    %647 = arith.truncf %645 : vector<16x32xf32> to vector<16x32xbf16>
    %cst_253 = arith.constant dense<0.000000e+00> : vector<8x32xf32>
    %648 = tpu.matmul %646, %647, %cst_253 {dimension_numbers = #tpu.dot_dimension_numbers<[1], [0], [0], [1], [0, 0, 1, 1], [], []>} : vector<8x16xbf16>, vector<16x32xbf16>, vector<8x32xf32> -> vector<8x32xf32>
    %649 = arith.addf %643, %648 : vector<8x32xf32>
    %c280 = arith.constant 280 : index
    %c0_254 = arith.constant 0 : index
    %650 = vector.load %arg22[%c280, %c0_254] : memref<512x16xf32, #tpu.memory_space<vmem>>, vector<8x16xf32>
    %651 = vector.extract_strided_slice %5 {offsets = [80, 0], sizes = [16, 32], strides = [1, 1]} : vector<144x32xf32> to vector<16x32xf32>
    %652 = arith.truncf %650 : vector<8x16xf32> to vector<8x16xbf16>
    %653 = arith.truncf %651 : vector<16x32xf32> to vector<16x32xbf16>
    %cst_255 = arith.constant dense<0.000000e+00> : vector<8x32xf32>
    %654 = tpu.matmul %652, %653, %cst_255 {dimension_numbers = #tpu.dot_dimension_numbers<[1], [0], [0], [1], [0, 0, 1, 1], [], []>} : vector<8x16xbf16>, vector<16x32xbf16>, vector<8x32xf32> -> vector<8x32xf32>
    %655 = arith.addf %649, %654 : vector<8x32xf32>
    %c328_256 = arith.constant 328 : index
    %c0_257 = arith.constant 0 : index
    %656 = vector.load %arg22[%c328_256, %c0_257] : memref<512x16xf32, #tpu.memory_space<vmem>>, vector<8x16xf32>
    %657 = vector.extract_strided_slice %5 {offsets = [96, 0], sizes = [16, 32], strides = [1, 1]} : vector<144x32xf32> to vector<16x32xf32>
    %658 = arith.truncf %656 : vector<8x16xf32> to vector<8x16xbf16>
    %659 = arith.truncf %657 : vector<16x32xf32> to vector<16x32xbf16>
    %cst_258 = arith.constant dense<0.000000e+00> : vector<8x32xf32>
    %660 = tpu.matmul %658, %659, %cst_258 {dimension_numbers = #tpu.dot_dimension_numbers<[1], [0], [0], [1], [0, 0, 1, 1], [], []>} : vector<8x16xbf16>, vector<16x32xbf16>, vector<8x32xf32> -> vector<8x32xf32>
    %661 = arith.addf %655, %660 : vector<8x32xf32>
    %c336 = arith.constant 336 : index
    %c0_259 = arith.constant 0 : index
    %662 = vector.load %arg22[%c336, %c0_259] : memref<512x16xf32, #tpu.memory_space<vmem>>, vector<8x16xf32>
    %663 = vector.extract_strided_slice %5 {offsets = [112, 0], sizes = [16, 32], strides = [1, 1]} : vector<144x32xf32> to vector<16x32xf32>
    %664 = arith.truncf %662 : vector<8x16xf32> to vector<8x16xbf16>
    %665 = arith.truncf %663 : vector<16x32xf32> to vector<16x32xbf16>
    %cst_260 = arith.constant dense<0.000000e+00> : vector<8x32xf32>
    %666 = tpu.matmul %664, %665, %cst_260 {dimension_numbers = #tpu.dot_dimension_numbers<[1], [0], [0], [1], [0, 0, 1, 1], [], []>} : vector<8x16xbf16>, vector<16x32xbf16>, vector<8x32xf32> -> vector<8x32xf32>
    %667 = arith.addf %661, %666 : vector<8x32xf32>
    %c344 = arith.constant 344 : index
    %c0_261 = arith.constant 0 : index
    %668 = vector.load %arg22[%c344, %c0_261] : memref<512x16xf32, #tpu.memory_space<vmem>>, vector<8x16xf32>
    %669 = vector.extract_strided_slice %5 {offsets = [128, 0], sizes = [16, 32], strides = [1, 1]} : vector<144x32xf32> to vector<16x32xf32>
    %670 = arith.truncf %668 : vector<8x16xf32> to vector<8x16xbf16>
    %671 = arith.truncf %669 : vector<16x32xf32> to vector<16x32xbf16>
    %cst_262 = arith.constant dense<0.000000e+00> : vector<8x32xf32>
    %672 = tpu.matmul %670, %671, %cst_262 {dimension_numbers = #tpu.dot_dimension_numbers<[1], [0], [0], [1], [0, 0, 1, 1], [], []>} : vector<8x16xbf16>, vector<16x32xbf16>, vector<8x32xf32> -> vector<8x32xf32>
    %673 = arith.addf %667, %672 : vector<8x32xf32>
    %674 = vector.broadcast %6 : vector<1x32xf32> to vector<8x32xf32>
    %675 = arith.addf %673, %674 : vector<8x32xf32>
    %cst_263 = arith.constant 0.000000e+00 : f32
    %676 = vector.broadcast %cst_263 : f32 to vector<8x32xf32>
    %677 = arith.maximumf %675, %676 : vector<8x32xf32>
    %678 = vector.extract_strided_slice %7 {offsets = [288, 0], sizes = [32, 32], strides = [1, 1]} : vector<512x32xf32> to vector<32x32xf32>
    %679 = arith.truncf %677 : vector<8x32xf32> to vector<8x32xbf16>
    %680 = arith.truncf %678 : vector<32x32xf32> to vector<32x32xbf16>
    %cst_264 = arith.constant dense<0.000000e+00> : vector<8x32xf32>
    %681 = tpu.matmul %679, %680, %cst_264 {dimension_numbers = #tpu.dot_dimension_numbers<[1], [0], [0], [1], [0, 0, 1, 1], [], []>} : vector<8x32xbf16>, vector<32x32xbf16>, vector<8x32xf32> -> vector<8x32xf32>
    %682 = arith.addf %618, %681 : vector<8x32xf32>
    %cst_265 = arith.constant 0.000000e+00 : f32
    %683 = vector.broadcast %cst_265 : f32 to vector<8x32xf32>
    %c216_266 = arith.constant 216 : index
    %c0_267 = arith.constant 0 : index
    %684 = vector.load %arg22[%c216_266, %c0_267] : memref<512x16xf32, #tpu.memory_space<vmem>>, vector<8x16xf32>
    %685 = vector.extract_strided_slice %5 {offsets = [0, 0], sizes = [16, 32], strides = [1, 1]} : vector<144x32xf32> to vector<16x32xf32>
    %686 = arith.truncf %684 : vector<8x16xf32> to vector<8x16xbf16>
    %687 = arith.truncf %685 : vector<16x32xf32> to vector<16x32xbf16>
    %cst_268 = arith.constant dense<0.000000e+00> : vector<8x32xf32>
    %688 = tpu.matmul %686, %687, %cst_268 {dimension_numbers = #tpu.dot_dimension_numbers<[1], [0], [0], [1], [0, 0, 1, 1], [], []>} : vector<8x16xbf16>, vector<16x32xbf16>, vector<8x32xf32> -> vector<8x32xf32>
    %689 = arith.addf %683, %688 : vector<8x32xf32>
    %c224_269 = arith.constant 224 : index
    %c0_270 = arith.constant 0 : index
    %690 = vector.load %arg22[%c224_269, %c0_270] : memref<512x16xf32, #tpu.memory_space<vmem>>, vector<8x16xf32>
    %691 = vector.extract_strided_slice %5 {offsets = [16, 0], sizes = [16, 32], strides = [1, 1]} : vector<144x32xf32> to vector<16x32xf32>
    %692 = arith.truncf %690 : vector<8x16xf32> to vector<8x16xbf16>
    %693 = arith.truncf %691 : vector<16x32xf32> to vector<16x32xbf16>
    %cst_271 = arith.constant dense<0.000000e+00> : vector<8x32xf32>
    %694 = tpu.matmul %692, %693, %cst_271 {dimension_numbers = #tpu.dot_dimension_numbers<[1], [0], [0], [1], [0, 0, 1, 1], [], []>} : vector<8x16xbf16>, vector<16x32xbf16>, vector<8x32xf32> -> vector<8x32xf32>
    %695 = arith.addf %689, %694 : vector<8x32xf32>
    %c232_272 = arith.constant 232 : index
    %c0_273 = arith.constant 0 : index
    %696 = vector.load %arg22[%c232_272, %c0_273] : memref<512x16xf32, #tpu.memory_space<vmem>>, vector<8x16xf32>
    %697 = vector.extract_strided_slice %5 {offsets = [32, 0], sizes = [16, 32], strides = [1, 1]} : vector<144x32xf32> to vector<16x32xf32>
    %698 = arith.truncf %696 : vector<8x16xf32> to vector<8x16xbf16>
    %699 = arith.truncf %697 : vector<16x32xf32> to vector<16x32xbf16>
    %cst_274 = arith.constant dense<0.000000e+00> : vector<8x32xf32>
    %700 = tpu.matmul %698, %699, %cst_274 {dimension_numbers = #tpu.dot_dimension_numbers<[1], [0], [0], [1], [0, 0, 1, 1], [], []>} : vector<8x16xbf16>, vector<16x32xbf16>, vector<8x32xf32> -> vector<8x32xf32>
    %701 = arith.addf %695, %700 : vector<8x32xf32>
    %c280_275 = arith.constant 280 : index
    %c0_276 = arith.constant 0 : index
    %702 = vector.load %arg22[%c280_275, %c0_276] : memref<512x16xf32, #tpu.memory_space<vmem>>, vector<8x16xf32>
    %703 = vector.extract_strided_slice %5 {offsets = [48, 0], sizes = [16, 32], strides = [1, 1]} : vector<144x32xf32> to vector<16x32xf32>
    %704 = arith.truncf %702 : vector<8x16xf32> to vector<8x16xbf16>
    %705 = arith.truncf %703 : vector<16x32xf32> to vector<16x32xbf16>
    %cst_277 = arith.constant dense<0.000000e+00> : vector<8x32xf32>
    %706 = tpu.matmul %704, %705, %cst_277 {dimension_numbers = #tpu.dot_dimension_numbers<[1], [0], [0], [1], [0, 0, 1, 1], [], []>} : vector<8x16xbf16>, vector<16x32xbf16>, vector<8x32xf32> -> vector<8x32xf32>
    %707 = arith.addf %701, %706 : vector<8x32xf32>
    %c288 = arith.constant 288 : index
    %c0_278 = arith.constant 0 : index
    %708 = vector.load %arg22[%c288, %c0_278] : memref<512x16xf32, #tpu.memory_space<vmem>>, vector<8x16xf32>
    %709 = vector.extract_strided_slice %5 {offsets = [64, 0], sizes = [16, 32], strides = [1, 1]} : vector<144x32xf32> to vector<16x32xf32>
    %710 = arith.truncf %708 : vector<8x16xf32> to vector<8x16xbf16>
    %711 = arith.truncf %709 : vector<16x32xf32> to vector<16x32xbf16>
    %cst_279 = arith.constant dense<0.000000e+00> : vector<8x32xf32>
    %712 = tpu.matmul %710, %711, %cst_279 {dimension_numbers = #tpu.dot_dimension_numbers<[1], [0], [0], [1], [0, 0, 1, 1], [], []>} : vector<8x16xbf16>, vector<16x32xbf16>, vector<8x32xf32> -> vector<8x32xf32>
    %713 = arith.addf %707, %712 : vector<8x32xf32>
    %c296 = arith.constant 296 : index
    %c0_280 = arith.constant 0 : index
    %714 = vector.load %arg22[%c296, %c0_280] : memref<512x16xf32, #tpu.memory_space<vmem>>, vector<8x16xf32>
    %715 = vector.extract_strided_slice %5 {offsets = [80, 0], sizes = [16, 32], strides = [1, 1]} : vector<144x32xf32> to vector<16x32xf32>
    %716 = arith.truncf %714 : vector<8x16xf32> to vector<8x16xbf16>
    %717 = arith.truncf %715 : vector<16x32xf32> to vector<16x32xbf16>
    %cst_281 = arith.constant dense<0.000000e+00> : vector<8x32xf32>
    %718 = tpu.matmul %716, %717, %cst_281 {dimension_numbers = #tpu.dot_dimension_numbers<[1], [0], [0], [1], [0, 0, 1, 1], [], []>} : vector<8x16xbf16>, vector<16x32xbf16>, vector<8x32xf32> -> vector<8x32xf32>
    %719 = arith.addf %713, %718 : vector<8x32xf32>
    %c344_282 = arith.constant 344 : index
    %c0_283 = arith.constant 0 : index
    %720 = vector.load %arg22[%c344_282, %c0_283] : memref<512x16xf32, #tpu.memory_space<vmem>>, vector<8x16xf32>
    %721 = vector.extract_strided_slice %5 {offsets = [96, 0], sizes = [16, 32], strides = [1, 1]} : vector<144x32xf32> to vector<16x32xf32>
    %722 = arith.truncf %720 : vector<8x16xf32> to vector<8x16xbf16>
    %723 = arith.truncf %721 : vector<16x32xf32> to vector<16x32xbf16>
    %cst_284 = arith.constant dense<0.000000e+00> : vector<8x32xf32>
    %724 = tpu.matmul %722, %723, %cst_284 {dimension_numbers = #tpu.dot_dimension_numbers<[1], [0], [0], [1], [0, 0, 1, 1], [], []>} : vector<8x16xbf16>, vector<16x32xbf16>, vector<8x32xf32> -> vector<8x32xf32>
    %725 = arith.addf %719, %724 : vector<8x32xf32>
    %c352 = arith.constant 352 : index
    %c0_285 = arith.constant 0 : index
    %726 = vector.load %arg22[%c352, %c0_285] : memref<512x16xf32, #tpu.memory_space<vmem>>, vector<8x16xf32>
    %727 = vector.extract_strided_slice %5 {offsets = [112, 0], sizes = [16, 32], strides = [1, 1]} : vector<144x32xf32> to vector<16x32xf32>
    %728 = arith.truncf %726 : vector<8x16xf32> to vector<8x16xbf16>
    %729 = arith.truncf %727 : vector<16x32xf32> to vector<16x32xbf16>
    %cst_286 = arith.constant dense<0.000000e+00> : vector<8x32xf32>
    %730 = tpu.matmul %728, %729, %cst_286 {dimension_numbers = #tpu.dot_dimension_numbers<[1], [0], [0], [1], [0, 0, 1, 1], [], []>} : vector<8x16xbf16>, vector<16x32xbf16>, vector<8x32xf32> -> vector<8x32xf32>
    %731 = arith.addf %725, %730 : vector<8x32xf32>
    %c360 = arith.constant 360 : index
    %c0_287 = arith.constant 0 : index
    %732 = vector.load %arg22[%c360, %c0_287] : memref<512x16xf32, #tpu.memory_space<vmem>>, vector<8x16xf32>
    %733 = vector.extract_strided_slice %5 {offsets = [128, 0], sizes = [16, 32], strides = [1, 1]} : vector<144x32xf32> to vector<16x32xf32>
    %734 = arith.truncf %732 : vector<8x16xf32> to vector<8x16xbf16>
    %735 = arith.truncf %733 : vector<16x32xf32> to vector<16x32xbf16>
    %cst_288 = arith.constant dense<0.000000e+00> : vector<8x32xf32>
    %736 = tpu.matmul %734, %735, %cst_288 {dimension_numbers = #tpu.dot_dimension_numbers<[1], [0], [0], [1], [0, 0, 1, 1], [], []>} : vector<8x16xbf16>, vector<16x32xbf16>, vector<8x32xf32> -> vector<8x32xf32>
    %737 = arith.addf %731, %736 : vector<8x32xf32>
    %738 = vector.broadcast %6 : vector<1x32xf32> to vector<8x32xf32>
    %739 = arith.addf %737, %738 : vector<8x32xf32>
    %cst_289 = arith.constant 0.000000e+00 : f32
    %740 = vector.broadcast %cst_289 : f32 to vector<8x32xf32>
    %741 = arith.maximumf %739, %740 : vector<8x32xf32>
    %742 = vector.extract_strided_slice %7 {offsets = [320, 0], sizes = [32, 32], strides = [1, 1]} : vector<512x32xf32> to vector<32x32xf32>
    %743 = arith.truncf %741 : vector<8x32xf32> to vector<8x32xbf16>
    %744 = arith.truncf %742 : vector<32x32xf32> to vector<32x32xbf16>
    %cst_290 = arith.constant dense<0.000000e+00> : vector<8x32xf32>
    %745 = tpu.matmul %743, %744, %cst_290 {dimension_numbers = #tpu.dot_dimension_numbers<[1], [0], [0], [1], [0, 0, 1, 1], [], []>} : vector<8x32xbf16>, vector<32x32xbf16>, vector<8x32xf32> -> vector<8x32xf32>
    %746 = arith.addf %682, %745 : vector<8x32xf32>
    %cst_291 = arith.constant 0.000000e+00 : f32
    %747 = vector.broadcast %cst_291 : f32 to vector<8x32xf32>
    %c232_292 = arith.constant 232 : index
    %c0_293 = arith.constant 0 : index
    %748 = vector.load %arg22[%c232_292, %c0_293] : memref<512x16xf32, #tpu.memory_space<vmem>>, vector<8x16xf32>
    %749 = vector.extract_strided_slice %5 {offsets = [0, 0], sizes = [16, 32], strides = [1, 1]} : vector<144x32xf32> to vector<16x32xf32>
    %750 = arith.truncf %748 : vector<8x16xf32> to vector<8x16xbf16>
    %751 = arith.truncf %749 : vector<16x32xf32> to vector<16x32xbf16>
    %cst_294 = arith.constant dense<0.000000e+00> : vector<8x32xf32>
    %752 = tpu.matmul %750, %751, %cst_294 {dimension_numbers = #tpu.dot_dimension_numbers<[1], [0], [0], [1], [0, 0, 1, 1], [], []>} : vector<8x16xbf16>, vector<16x32xbf16>, vector<8x32xf32> -> vector<8x32xf32>
    %753 = arith.addf %747, %752 : vector<8x32xf32>
    %c240_295 = arith.constant 240 : index
    %c0_296 = arith.constant 0 : index
    %754 = vector.load %arg22[%c240_295, %c0_296] : memref<512x16xf32, #tpu.memory_space<vmem>>, vector<8x16xf32>
    %755 = vector.extract_strided_slice %5 {offsets = [16, 0], sizes = [16, 32], strides = [1, 1]} : vector<144x32xf32> to vector<16x32xf32>
    %756 = arith.truncf %754 : vector<8x16xf32> to vector<8x16xbf16>
    %757 = arith.truncf %755 : vector<16x32xf32> to vector<16x32xbf16>
    %cst_297 = arith.constant dense<0.000000e+00> : vector<8x32xf32>
    %758 = tpu.matmul %756, %757, %cst_297 {dimension_numbers = #tpu.dot_dimension_numbers<[1], [0], [0], [1], [0, 0, 1, 1], [], []>} : vector<8x16xbf16>, vector<16x32xbf16>, vector<8x32xf32> -> vector<8x32xf32>
    %759 = arith.addf %753, %758 : vector<8x32xf32>
    %c248_298 = arith.constant 248 : index
    %c0_299 = arith.constant 0 : index
    %760 = vector.load %arg22[%c248_298, %c0_299] : memref<512x16xf32, #tpu.memory_space<vmem>>, vector<8x16xf32>
    %761 = vector.extract_strided_slice %5 {offsets = [32, 0], sizes = [16, 32], strides = [1, 1]} : vector<144x32xf32> to vector<16x32xf32>
    %762 = arith.truncf %760 : vector<8x16xf32> to vector<8x16xbf16>
    %763 = arith.truncf %761 : vector<16x32xf32> to vector<16x32xbf16>
    %cst_300 = arith.constant dense<0.000000e+00> : vector<8x32xf32>
    %764 = tpu.matmul %762, %763, %cst_300 {dimension_numbers = #tpu.dot_dimension_numbers<[1], [0], [0], [1], [0, 0, 1, 1], [], []>} : vector<8x16xbf16>, vector<16x32xbf16>, vector<8x32xf32> -> vector<8x32xf32>
    %765 = arith.addf %759, %764 : vector<8x32xf32>
    %c296_301 = arith.constant 296 : index
    %c0_302 = arith.constant 0 : index
    %766 = vector.load %arg22[%c296_301, %c0_302] : memref<512x16xf32, #tpu.memory_space<vmem>>, vector<8x16xf32>
    %767 = vector.extract_strided_slice %5 {offsets = [48, 0], sizes = [16, 32], strides = [1, 1]} : vector<144x32xf32> to vector<16x32xf32>
    %768 = arith.truncf %766 : vector<8x16xf32> to vector<8x16xbf16>
    %769 = arith.truncf %767 : vector<16x32xf32> to vector<16x32xbf16>
    %cst_303 = arith.constant dense<0.000000e+00> : vector<8x32xf32>
    %770 = tpu.matmul %768, %769, %cst_303 {dimension_numbers = #tpu.dot_dimension_numbers<[1], [0], [0], [1], [0, 0, 1, 1], [], []>} : vector<8x16xbf16>, vector<16x32xbf16>, vector<8x32xf32> -> vector<8x32xf32>
    %771 = arith.addf %765, %770 : vector<8x32xf32>
    %c304 = arith.constant 304 : index
    %c0_304 = arith.constant 0 : index
    %772 = vector.load %arg22[%c304, %c0_304] : memref<512x16xf32, #tpu.memory_space<vmem>>, vector<8x16xf32>
    %773 = vector.extract_strided_slice %5 {offsets = [64, 0], sizes = [16, 32], strides = [1, 1]} : vector<144x32xf32> to vector<16x32xf32>
    %774 = arith.truncf %772 : vector<8x16xf32> to vector<8x16xbf16>
    %775 = arith.truncf %773 : vector<16x32xf32> to vector<16x32xbf16>
    %cst_305 = arith.constant dense<0.000000e+00> : vector<8x32xf32>
    %776 = tpu.matmul %774, %775, %cst_305 {dimension_numbers = #tpu.dot_dimension_numbers<[1], [0], [0], [1], [0, 0, 1, 1], [], []>} : vector<8x16xbf16>, vector<16x32xbf16>, vector<8x32xf32> -> vector<8x32xf32>
    %777 = arith.addf %771, %776 : vector<8x32xf32>
    %c312 = arith.constant 312 : index
    %c0_306 = arith.constant 0 : index
    %778 = vector.load %arg22[%c312, %c0_306] : memref<512x16xf32, #tpu.memory_space<vmem>>, vector<8x16xf32>
    %779 = vector.extract_strided_slice %5 {offsets = [80, 0], sizes = [16, 32], strides = [1, 1]} : vector<144x32xf32> to vector<16x32xf32>
    %780 = arith.truncf %778 : vector<8x16xf32> to vector<8x16xbf16>
    %781 = arith.truncf %779 : vector<16x32xf32> to vector<16x32xbf16>
    %cst_307 = arith.constant dense<0.000000e+00> : vector<8x32xf32>
    %782 = tpu.matmul %780, %781, %cst_307 {dimension_numbers = #tpu.dot_dimension_numbers<[1], [0], [0], [1], [0, 0, 1, 1], [], []>} : vector<8x16xbf16>, vector<16x32xbf16>, vector<8x32xf32> -> vector<8x32xf32>
    %783 = arith.addf %777, %782 : vector<8x32xf32>
    %c360_308 = arith.constant 360 : index
    %c0_309 = arith.constant 0 : index
    %784 = vector.load %arg22[%c360_308, %c0_309] : memref<512x16xf32, #tpu.memory_space<vmem>>, vector<8x16xf32>
    %785 = vector.extract_strided_slice %5 {offsets = [96, 0], sizes = [16, 32], strides = [1, 1]} : vector<144x32xf32> to vector<16x32xf32>
    %786 = arith.truncf %784 : vector<8x16xf32> to vector<8x16xbf16>
    %787 = arith.truncf %785 : vector<16x32xf32> to vector<16x32xbf16>
    %cst_310 = arith.constant dense<0.000000e+00> : vector<8x32xf32>
    %788 = tpu.matmul %786, %787, %cst_310 {dimension_numbers = #tpu.dot_dimension_numbers<[1], [0], [0], [1], [0, 0, 1, 1], [], []>} : vector<8x16xbf16>, vector<16x32xbf16>, vector<8x32xf32> -> vector<8x32xf32>
    %789 = arith.addf %783, %788 : vector<8x32xf32>
    %c368 = arith.constant 368 : index
    %c0_311 = arith.constant 0 : index
    %790 = vector.load %arg22[%c368, %c0_311] : memref<512x16xf32, #tpu.memory_space<vmem>>, vector<8x16xf32>
    %791 = vector.extract_strided_slice %5 {offsets = [112, 0], sizes = [16, 32], strides = [1, 1]} : vector<144x32xf32> to vector<16x32xf32>
    %792 = arith.truncf %790 : vector<8x16xf32> to vector<8x16xbf16>
    %793 = arith.truncf %791 : vector<16x32xf32> to vector<16x32xbf16>
    %cst_312 = arith.constant dense<0.000000e+00> : vector<8x32xf32>
    %794 = tpu.matmul %792, %793, %cst_312 {dimension_numbers = #tpu.dot_dimension_numbers<[1], [0], [0], [1], [0, 0, 1, 1], [], []>} : vector<8x16xbf16>, vector<16x32xbf16>, vector<8x32xf32> -> vector<8x32xf32>
    %795 = arith.addf %789, %794 : vector<8x32xf32>
    %c376 = arith.constant 376 : index
    %c0_313 = arith.constant 0 : index
    %796 = vector.load %arg22[%c376, %c0_313] : memref<512x16xf32, #tpu.memory_space<vmem>>, vector<8x16xf32>
    %797 = vector.extract_strided_slice %5 {offsets = [128, 0], sizes = [16, 32], strides = [1, 1]} : vector<144x32xf32> to vector<16x32xf32>
    %798 = arith.truncf %796 : vector<8x16xf32> to vector<8x16xbf16>
    %799 = arith.truncf %797 : vector<16x32xf32> to vector<16x32xbf16>
    %cst_314 = arith.constant dense<0.000000e+00> : vector<8x32xf32>
    %800 = tpu.matmul %798, %799, %cst_314 {dimension_numbers = #tpu.dot_dimension_numbers<[1], [0], [0], [1], [0, 0, 1, 1], [], []>} : vector<8x16xbf16>, vector<16x32xbf16>, vector<8x32xf32> -> vector<8x32xf32>
    %801 = arith.addf %795, %800 : vector<8x32xf32>
    %802 = vector.broadcast %6 : vector<1x32xf32> to vector<8x32xf32>
    %803 = arith.addf %801, %802 : vector<8x32xf32>
    %cst_315 = arith.constant 0.000000e+00 : f32
    %804 = vector.broadcast %cst_315 : f32 to vector<8x32xf32>
    %805 = arith.maximumf %803, %804 : vector<8x32xf32>
    %806 = vector.extract_strided_slice %7 {offsets = [352, 0], sizes = [32, 32], strides = [1, 1]} : vector<512x32xf32> to vector<32x32xf32>
    %807 = arith.truncf %805 : vector<8x32xf32> to vector<8x32xbf16>
    %808 = arith.truncf %806 : vector<32x32xf32> to vector<32x32xbf16>
    %cst_316 = arith.constant dense<0.000000e+00> : vector<8x32xf32>
    %809 = tpu.matmul %807, %808, %cst_316 {dimension_numbers = #tpu.dot_dimension_numbers<[1], [0], [0], [1], [0, 0, 1, 1], [], []>} : vector<8x32xbf16>, vector<32x32xbf16>, vector<8x32xf32> -> vector<8x32xf32>
    %810 = arith.addf %746, %809 : vector<8x32xf32>
    %cst_317 = arith.constant 0.000000e+00 : f32
    %811 = vector.broadcast %cst_317 : f32 to vector<8x32xf32>
    %c320_318 = arith.constant 320 : index
    %c0_319 = arith.constant 0 : index
    %812 = vector.load %arg22[%c320_318, %c0_319] : memref<512x16xf32, #tpu.memory_space<vmem>>, vector<8x16xf32>
    %813 = vector.extract_strided_slice %5 {offsets = [16, 0], sizes = [16, 32], strides = [1, 1]} : vector<144x32xf32> to vector<16x32xf32>
    %814 = arith.truncf %812 : vector<8x16xf32> to vector<8x16xbf16>
    %815 = arith.truncf %813 : vector<16x32xf32> to vector<16x32xbf16>
    %cst_320 = arith.constant dense<0.000000e+00> : vector<8x32xf32>
    %816 = tpu.matmul %814, %815, %cst_320 {dimension_numbers = #tpu.dot_dimension_numbers<[1], [0], [0], [1], [0, 0, 1, 1], [], []>} : vector<8x16xbf16>, vector<16x32xbf16>, vector<8x32xf32> -> vector<8x32xf32>
    %817 = arith.addf %811, %816 : vector<8x32xf32>
    %c328_321 = arith.constant 328 : index
    %c0_322 = arith.constant 0 : index
    %818 = vector.load %arg22[%c328_321, %c0_322] : memref<512x16xf32, #tpu.memory_space<vmem>>, vector<8x16xf32>
    %819 = vector.extract_strided_slice %5 {offsets = [32, 0], sizes = [16, 32], strides = [1, 1]} : vector<144x32xf32> to vector<16x32xf32>
    %820 = arith.truncf %818 : vector<8x16xf32> to vector<8x16xbf16>
    %821 = arith.truncf %819 : vector<16x32xf32> to vector<16x32xbf16>
    %cst_323 = arith.constant dense<0.000000e+00> : vector<8x32xf32>
    %822 = tpu.matmul %820, %821, %cst_323 {dimension_numbers = #tpu.dot_dimension_numbers<[1], [0], [0], [1], [0, 0, 1, 1], [], []>} : vector<8x16xbf16>, vector<16x32xbf16>, vector<8x32xf32> -> vector<8x32xf32>
    %823 = arith.addf %817, %822 : vector<8x32xf32>
    %c384 = arith.constant 384 : index
    %c0_324 = arith.constant 0 : index
    %824 = vector.load %arg22[%c384, %c0_324] : memref<512x16xf32, #tpu.memory_space<vmem>>, vector<8x16xf32>
    %825 = vector.extract_strided_slice %5 {offsets = [64, 0], sizes = [16, 32], strides = [1, 1]} : vector<144x32xf32> to vector<16x32xf32>
    %826 = arith.truncf %824 : vector<8x16xf32> to vector<8x16xbf16>
    %827 = arith.truncf %825 : vector<16x32xf32> to vector<16x32xbf16>
    %cst_325 = arith.constant dense<0.000000e+00> : vector<8x32xf32>
    %828 = tpu.matmul %826, %827, %cst_325 {dimension_numbers = #tpu.dot_dimension_numbers<[1], [0], [0], [1], [0, 0, 1, 1], [], []>} : vector<8x16xbf16>, vector<16x32xbf16>, vector<8x32xf32> -> vector<8x32xf32>
    %829 = arith.addf %823, %828 : vector<8x32xf32>
    %c392 = arith.constant 392 : index
    %c0_326 = arith.constant 0 : index
    %830 = vector.load %arg22[%c392, %c0_326] : memref<512x16xf32, #tpu.memory_space<vmem>>, vector<8x16xf32>
    %831 = vector.extract_strided_slice %5 {offsets = [80, 0], sizes = [16, 32], strides = [1, 1]} : vector<144x32xf32> to vector<16x32xf32>
    %832 = arith.truncf %830 : vector<8x16xf32> to vector<8x16xbf16>
    %833 = arith.truncf %831 : vector<16x32xf32> to vector<16x32xbf16>
    %cst_327 = arith.constant dense<0.000000e+00> : vector<8x32xf32>
    %834 = tpu.matmul %832, %833, %cst_327 {dimension_numbers = #tpu.dot_dimension_numbers<[1], [0], [0], [1], [0, 0, 1, 1], [], []>} : vector<8x16xbf16>, vector<16x32xbf16>, vector<8x32xf32> -> vector<8x32xf32>
    %835 = arith.addf %829, %834 : vector<8x32xf32>
    %c448 = arith.constant 448 : index
    %c0_328 = arith.constant 0 : index
    %836 = vector.load %arg22[%c448, %c0_328] : memref<512x16xf32, #tpu.memory_space<vmem>>, vector<8x16xf32>
    %837 = vector.extract_strided_slice %5 {offsets = [112, 0], sizes = [16, 32], strides = [1, 1]} : vector<144x32xf32> to vector<16x32xf32>
    %838 = arith.truncf %836 : vector<8x16xf32> to vector<8x16xbf16>
    %839 = arith.truncf %837 : vector<16x32xf32> to vector<16x32xbf16>
    %cst_329 = arith.constant dense<0.000000e+00> : vector<8x32xf32>
    %840 = tpu.matmul %838, %839, %cst_329 {dimension_numbers = #tpu.dot_dimension_numbers<[1], [0], [0], [1], [0, 0, 1, 1], [], []>} : vector<8x16xbf16>, vector<16x32xbf16>, vector<8x32xf32> -> vector<8x32xf32>
    %841 = arith.addf %835, %840 : vector<8x32xf32>
    %c456 = arith.constant 456 : index
    %c0_330 = arith.constant 0 : index
    %842 = vector.load %arg22[%c456, %c0_330] : memref<512x16xf32, #tpu.memory_space<vmem>>, vector<8x16xf32>
    %843 = vector.extract_strided_slice %5 {offsets = [128, 0], sizes = [16, 32], strides = [1, 1]} : vector<144x32xf32> to vector<16x32xf32>
    %844 = arith.truncf %842 : vector<8x16xf32> to vector<8x16xbf16>
    %845 = arith.truncf %843 : vector<16x32xf32> to vector<16x32xbf16>
    %cst_331 = arith.constant dense<0.000000e+00> : vector<8x32xf32>
    %846 = tpu.matmul %844, %845, %cst_331 {dimension_numbers = #tpu.dot_dimension_numbers<[1], [0], [0], [1], [0, 0, 1, 1], [], []>} : vector<8x16xbf16>, vector<16x32xbf16>, vector<8x32xf32> -> vector<8x32xf32>
    %847 = arith.addf %841, %846 : vector<8x32xf32>
    %848 = vector.broadcast %6 : vector<1x32xf32> to vector<8x32xf32>
    %849 = arith.addf %847, %848 : vector<8x32xf32>
    %cst_332 = arith.constant 0.000000e+00 : f32
    %850 = vector.broadcast %cst_332 : f32 to vector<8x32xf32>
    %851 = arith.maximumf %849, %850 : vector<8x32xf32>
    %852 = vector.extract_strided_slice %7 {offsets = [384, 0], sizes = [32, 32], strides = [1, 1]} : vector<512x32xf32> to vector<32x32xf32>
    %853 = arith.truncf %851 : vector<8x32xf32> to vector<8x32xbf16>
    %854 = arith.truncf %852 : vector<32x32xf32> to vector<32x32xbf16>
    %cst_333 = arith.constant dense<0.000000e+00> : vector<8x32xf32>
    %855 = tpu.matmul %853, %854, %cst_333 {dimension_numbers = #tpu.dot_dimension_numbers<[1], [0], [0], [1], [0, 0, 1, 1], [], []>} : vector<8x32xbf16>, vector<32x32xbf16>, vector<8x32xf32> -> vector<8x32xf32>
    %856 = arith.addf %810, %855 : vector<8x32xf32>
    %cst_334 = arith.constant 0.000000e+00 : f32
    %857 = vector.broadcast %cst_334 : f32 to vector<8x32xf32>
    %c328_335 = arith.constant 328 : index
    %c0_336 = arith.constant 0 : index
    %858 = vector.load %arg22[%c328_335, %c0_336] : memref<512x16xf32, #tpu.memory_space<vmem>>, vector<8x16xf32>
    %859 = vector.extract_strided_slice %5 {offsets = [0, 0], sizes = [16, 32], strides = [1, 1]} : vector<144x32xf32> to vector<16x32xf32>
    %860 = arith.truncf %858 : vector<8x16xf32> to vector<8x16xbf16>
    %861 = arith.truncf %859 : vector<16x32xf32> to vector<16x32xbf16>
    %cst_337 = arith.constant dense<0.000000e+00> : vector<8x32xf32>
    %862 = tpu.matmul %860, %861, %cst_337 {dimension_numbers = #tpu.dot_dimension_numbers<[1], [0], [0], [1], [0, 0, 1, 1], [], []>} : vector<8x16xbf16>, vector<16x32xbf16>, vector<8x32xf32> -> vector<8x32xf32>
    %863 = arith.addf %857, %862 : vector<8x32xf32>
    %c336_338 = arith.constant 336 : index
    %c0_339 = arith.constant 0 : index
    %864 = vector.load %arg22[%c336_338, %c0_339] : memref<512x16xf32, #tpu.memory_space<vmem>>, vector<8x16xf32>
    %865 = vector.extract_strided_slice %5 {offsets = [16, 0], sizes = [16, 32], strides = [1, 1]} : vector<144x32xf32> to vector<16x32xf32>
    %866 = arith.truncf %864 : vector<8x16xf32> to vector<8x16xbf16>
    %867 = arith.truncf %865 : vector<16x32xf32> to vector<16x32xbf16>
    %cst_340 = arith.constant dense<0.000000e+00> : vector<8x32xf32>
    %868 = tpu.matmul %866, %867, %cst_340 {dimension_numbers = #tpu.dot_dimension_numbers<[1], [0], [0], [1], [0, 0, 1, 1], [], []>} : vector<8x16xbf16>, vector<16x32xbf16>, vector<8x32xf32> -> vector<8x32xf32>
    %869 = arith.addf %863, %868 : vector<8x32xf32>
    %c344_341 = arith.constant 344 : index
    %c0_342 = arith.constant 0 : index
    %870 = vector.load %arg22[%c344_341, %c0_342] : memref<512x16xf32, #tpu.memory_space<vmem>>, vector<8x16xf32>
    %871 = vector.extract_strided_slice %5 {offsets = [32, 0], sizes = [16, 32], strides = [1, 1]} : vector<144x32xf32> to vector<16x32xf32>
    %872 = arith.truncf %870 : vector<8x16xf32> to vector<8x16xbf16>
    %873 = arith.truncf %871 : vector<16x32xf32> to vector<16x32xbf16>
    %cst_343 = arith.constant dense<0.000000e+00> : vector<8x32xf32>
    %874 = tpu.matmul %872, %873, %cst_343 {dimension_numbers = #tpu.dot_dimension_numbers<[1], [0], [0], [1], [0, 0, 1, 1], [], []>} : vector<8x16xbf16>, vector<16x32xbf16>, vector<8x32xf32> -> vector<8x32xf32>
    %875 = arith.addf %869, %874 : vector<8x32xf32>
    %c392_344 = arith.constant 392 : index
    %c0_345 = arith.constant 0 : index
    %876 = vector.load %arg22[%c392_344, %c0_345] : memref<512x16xf32, #tpu.memory_space<vmem>>, vector<8x16xf32>
    %877 = vector.extract_strided_slice %5 {offsets = [48, 0], sizes = [16, 32], strides = [1, 1]} : vector<144x32xf32> to vector<16x32xf32>
    %878 = arith.truncf %876 : vector<8x16xf32> to vector<8x16xbf16>
    %879 = arith.truncf %877 : vector<16x32xf32> to vector<16x32xbf16>
    %cst_346 = arith.constant dense<0.000000e+00> : vector<8x32xf32>
    %880 = tpu.matmul %878, %879, %cst_346 {dimension_numbers = #tpu.dot_dimension_numbers<[1], [0], [0], [1], [0, 0, 1, 1], [], []>} : vector<8x16xbf16>, vector<16x32xbf16>, vector<8x32xf32> -> vector<8x32xf32>
    %881 = arith.addf %875, %880 : vector<8x32xf32>
    %c400 = arith.constant 400 : index
    %c0_347 = arith.constant 0 : index
    %882 = vector.load %arg22[%c400, %c0_347] : memref<512x16xf32, #tpu.memory_space<vmem>>, vector<8x16xf32>
    %883 = vector.extract_strided_slice %5 {offsets = [64, 0], sizes = [16, 32], strides = [1, 1]} : vector<144x32xf32> to vector<16x32xf32>
    %884 = arith.truncf %882 : vector<8x16xf32> to vector<8x16xbf16>
    %885 = arith.truncf %883 : vector<16x32xf32> to vector<16x32xbf16>
    %cst_348 = arith.constant dense<0.000000e+00> : vector<8x32xf32>
    %886 = tpu.matmul %884, %885, %cst_348 {dimension_numbers = #tpu.dot_dimension_numbers<[1], [0], [0], [1], [0, 0, 1, 1], [], []>} : vector<8x16xbf16>, vector<16x32xbf16>, vector<8x32xf32> -> vector<8x32xf32>
    %887 = arith.addf %881, %886 : vector<8x32xf32>
    %c408 = arith.constant 408 : index
    %c0_349 = arith.constant 0 : index
    %888 = vector.load %arg22[%c408, %c0_349] : memref<512x16xf32, #tpu.memory_space<vmem>>, vector<8x16xf32>
    %889 = vector.extract_strided_slice %5 {offsets = [80, 0], sizes = [16, 32], strides = [1, 1]} : vector<144x32xf32> to vector<16x32xf32>
    %890 = arith.truncf %888 : vector<8x16xf32> to vector<8x16xbf16>
    %891 = arith.truncf %889 : vector<16x32xf32> to vector<16x32xbf16>
    %cst_350 = arith.constant dense<0.000000e+00> : vector<8x32xf32>
    %892 = tpu.matmul %890, %891, %cst_350 {dimension_numbers = #tpu.dot_dimension_numbers<[1], [0], [0], [1], [0, 0, 1, 1], [], []>} : vector<8x16xbf16>, vector<16x32xbf16>, vector<8x32xf32> -> vector<8x32xf32>
    %893 = arith.addf %887, %892 : vector<8x32xf32>
    %c456_351 = arith.constant 456 : index
    %c0_352 = arith.constant 0 : index
    %894 = vector.load %arg22[%c456_351, %c0_352] : memref<512x16xf32, #tpu.memory_space<vmem>>, vector<8x16xf32>
    %895 = vector.extract_strided_slice %5 {offsets = [96, 0], sizes = [16, 32], strides = [1, 1]} : vector<144x32xf32> to vector<16x32xf32>
    %896 = arith.truncf %894 : vector<8x16xf32> to vector<8x16xbf16>
    %897 = arith.truncf %895 : vector<16x32xf32> to vector<16x32xbf16>
    %cst_353 = arith.constant dense<0.000000e+00> : vector<8x32xf32>
    %898 = tpu.matmul %896, %897, %cst_353 {dimension_numbers = #tpu.dot_dimension_numbers<[1], [0], [0], [1], [0, 0, 1, 1], [], []>} : vector<8x16xbf16>, vector<16x32xbf16>, vector<8x32xf32> -> vector<8x32xf32>
    %899 = arith.addf %893, %898 : vector<8x32xf32>
    %c464 = arith.constant 464 : index
    %c0_354 = arith.constant 0 : index
    %900 = vector.load %arg22[%c464, %c0_354] : memref<512x16xf32, #tpu.memory_space<vmem>>, vector<8x16xf32>
    %901 = vector.extract_strided_slice %5 {offsets = [112, 0], sizes = [16, 32], strides = [1, 1]} : vector<144x32xf32> to vector<16x32xf32>
    %902 = arith.truncf %900 : vector<8x16xf32> to vector<8x16xbf16>
    %903 = arith.truncf %901 : vector<16x32xf32> to vector<16x32xbf16>
    %cst_355 = arith.constant dense<0.000000e+00> : vector<8x32xf32>
    %904 = tpu.matmul %902, %903, %cst_355 {dimension_numbers = #tpu.dot_dimension_numbers<[1], [0], [0], [1], [0, 0, 1, 1], [], []>} : vector<8x16xbf16>, vector<16x32xbf16>, vector<8x32xf32> -> vector<8x32xf32>
    %905 = arith.addf %899, %904 : vector<8x32xf32>
    %c472 = arith.constant 472 : index
    %c0_356 = arith.constant 0 : index
    %906 = vector.load %arg22[%c472, %c0_356] : memref<512x16xf32, #tpu.memory_space<vmem>>, vector<8x16xf32>
    %907 = vector.extract_strided_slice %5 {offsets = [128, 0], sizes = [16, 32], strides = [1, 1]} : vector<144x32xf32> to vector<16x32xf32>
    %908 = arith.truncf %906 : vector<8x16xf32> to vector<8x16xbf16>
    %909 = arith.truncf %907 : vector<16x32xf32> to vector<16x32xbf16>
    %cst_357 = arith.constant dense<0.000000e+00> : vector<8x32xf32>
    %910 = tpu.matmul %908, %909, %cst_357 {dimension_numbers = #tpu.dot_dimension_numbers<[1], [0], [0], [1], [0, 0, 1, 1], [], []>} : vector<8x16xbf16>, vector<16x32xbf16>, vector<8x32xf32> -> vector<8x32xf32>
    %911 = arith.addf %905, %910 : vector<8x32xf32>
    %912 = vector.broadcast %6 : vector<1x32xf32> to vector<8x32xf32>
    %913 = arith.addf %911, %912 : vector<8x32xf32>
    %cst_358 = arith.constant 0.000000e+00 : f32
    %914 = vector.broadcast %cst_358 : f32 to vector<8x32xf32>
    %915 = arith.maximumf %913, %914 : vector<8x32xf32>
    %916 = vector.extract_strided_slice %7 {offsets = [416, 0], sizes = [32, 32], strides = [1, 1]} : vector<512x32xf32> to vector<32x32xf32>
    %917 = arith.truncf %915 : vector<8x32xf32> to vector<8x32xbf16>
    %918 = arith.truncf %916 : vector<32x32xf32> to vector<32x32xbf16>
    %cst_359 = arith.constant dense<0.000000e+00> : vector<8x32xf32>
    %919 = tpu.matmul %917, %918, %cst_359 {dimension_numbers = #tpu.dot_dimension_numbers<[1], [0], [0], [1], [0, 0, 1, 1], [], []>} : vector<8x32xbf16>, vector<32x32xbf16>, vector<8x32xf32> -> vector<8x32xf32>
    %920 = arith.addf %856, %919 : vector<8x32xf32>
    %cst_360 = arith.constant 0.000000e+00 : f32
    %921 = vector.broadcast %cst_360 : f32 to vector<8x32xf32>
    %c344_361 = arith.constant 344 : index
    %c0_362 = arith.constant 0 : index
    %922 = vector.load %arg22[%c344_361, %c0_362] : memref<512x16xf32, #tpu.memory_space<vmem>>, vector<8x16xf32>
    %923 = vector.extract_strided_slice %5 {offsets = [0, 0], sizes = [16, 32], strides = [1, 1]} : vector<144x32xf32> to vector<16x32xf32>
    %924 = arith.truncf %922 : vector<8x16xf32> to vector<8x16xbf16>
    %925 = arith.truncf %923 : vector<16x32xf32> to vector<16x32xbf16>
    %cst_363 = arith.constant dense<0.000000e+00> : vector<8x32xf32>
    %926 = tpu.matmul %924, %925, %cst_363 {dimension_numbers = #tpu.dot_dimension_numbers<[1], [0], [0], [1], [0, 0, 1, 1], [], []>} : vector<8x16xbf16>, vector<16x32xbf16>, vector<8x32xf32> -> vector<8x32xf32>
    %927 = arith.addf %921, %926 : vector<8x32xf32>
    %c352_364 = arith.constant 352 : index
    %c0_365 = arith.constant 0 : index
    %928 = vector.load %arg22[%c352_364, %c0_365] : memref<512x16xf32, #tpu.memory_space<vmem>>, vector<8x16xf32>
    %929 = vector.extract_strided_slice %5 {offsets = [16, 0], sizes = [16, 32], strides = [1, 1]} : vector<144x32xf32> to vector<16x32xf32>
    %930 = arith.truncf %928 : vector<8x16xf32> to vector<8x16xbf16>
    %931 = arith.truncf %929 : vector<16x32xf32> to vector<16x32xbf16>
    %cst_366 = arith.constant dense<0.000000e+00> : vector<8x32xf32>
    %932 = tpu.matmul %930, %931, %cst_366 {dimension_numbers = #tpu.dot_dimension_numbers<[1], [0], [0], [1], [0, 0, 1, 1], [], []>} : vector<8x16xbf16>, vector<16x32xbf16>, vector<8x32xf32> -> vector<8x32xf32>
    %933 = arith.addf %927, %932 : vector<8x32xf32>
    %c360_367 = arith.constant 360 : index
    %c0_368 = arith.constant 0 : index
    %934 = vector.load %arg22[%c360_367, %c0_368] : memref<512x16xf32, #tpu.memory_space<vmem>>, vector<8x16xf32>
    %935 = vector.extract_strided_slice %5 {offsets = [32, 0], sizes = [16, 32], strides = [1, 1]} : vector<144x32xf32> to vector<16x32xf32>
    %936 = arith.truncf %934 : vector<8x16xf32> to vector<8x16xbf16>
    %937 = arith.truncf %935 : vector<16x32xf32> to vector<16x32xbf16>
    %cst_369 = arith.constant dense<0.000000e+00> : vector<8x32xf32>
    %938 = tpu.matmul %936, %937, %cst_369 {dimension_numbers = #tpu.dot_dimension_numbers<[1], [0], [0], [1], [0, 0, 1, 1], [], []>} : vector<8x16xbf16>, vector<16x32xbf16>, vector<8x32xf32> -> vector<8x32xf32>
    %939 = arith.addf %933, %938 : vector<8x32xf32>
    %c408_370 = arith.constant 408 : index
    %c0_371 = arith.constant 0 : index
    %940 = vector.load %arg22[%c408_370, %c0_371] : memref<512x16xf32, #tpu.memory_space<vmem>>, vector<8x16xf32>
    %941 = vector.extract_strided_slice %5 {offsets = [48, 0], sizes = [16, 32], strides = [1, 1]} : vector<144x32xf32> to vector<16x32xf32>
    %942 = arith.truncf %940 : vector<8x16xf32> to vector<8x16xbf16>
    %943 = arith.truncf %941 : vector<16x32xf32> to vector<16x32xbf16>
    %cst_372 = arith.constant dense<0.000000e+00> : vector<8x32xf32>
    %944 = tpu.matmul %942, %943, %cst_372 {dimension_numbers = #tpu.dot_dimension_numbers<[1], [0], [0], [1], [0, 0, 1, 1], [], []>} : vector<8x16xbf16>, vector<16x32xbf16>, vector<8x32xf32> -> vector<8x32xf32>
    %945 = arith.addf %939, %944 : vector<8x32xf32>
    %c416 = arith.constant 416 : index
    %c0_373 = arith.constant 0 : index
    %946 = vector.load %arg22[%c416, %c0_373] : memref<512x16xf32, #tpu.memory_space<vmem>>, vector<8x16xf32>
    %947 = vector.extract_strided_slice %5 {offsets = [64, 0], sizes = [16, 32], strides = [1, 1]} : vector<144x32xf32> to vector<16x32xf32>
    %948 = arith.truncf %946 : vector<8x16xf32> to vector<8x16xbf16>
    %949 = arith.truncf %947 : vector<16x32xf32> to vector<16x32xbf16>
    %cst_374 = arith.constant dense<0.000000e+00> : vector<8x32xf32>
    %950 = tpu.matmul %948, %949, %cst_374 {dimension_numbers = #tpu.dot_dimension_numbers<[1], [0], [0], [1], [0, 0, 1, 1], [], []>} : vector<8x16xbf16>, vector<16x32xbf16>, vector<8x32xf32> -> vector<8x32xf32>
    %951 = arith.addf %945, %950 : vector<8x32xf32>
    %c424 = arith.constant 424 : index
    %c0_375 = arith.constant 0 : index
    %952 = vector.load %arg22[%c424, %c0_375] : memref<512x16xf32, #tpu.memory_space<vmem>>, vector<8x16xf32>
    %953 = vector.extract_strided_slice %5 {offsets = [80, 0], sizes = [16, 32], strides = [1, 1]} : vector<144x32xf32> to vector<16x32xf32>
    %954 = arith.truncf %952 : vector<8x16xf32> to vector<8x16xbf16>
    %955 = arith.truncf %953 : vector<16x32xf32> to vector<16x32xbf16>
    %cst_376 = arith.constant dense<0.000000e+00> : vector<8x32xf32>
    %956 = tpu.matmul %954, %955, %cst_376 {dimension_numbers = #tpu.dot_dimension_numbers<[1], [0], [0], [1], [0, 0, 1, 1], [], []>} : vector<8x16xbf16>, vector<16x32xbf16>, vector<8x32xf32> -> vector<8x32xf32>
    %957 = arith.addf %951, %956 : vector<8x32xf32>
    %c472_377 = arith.constant 472 : index
    %c0_378 = arith.constant 0 : index
    %958 = vector.load %arg22[%c472_377, %c0_378] : memref<512x16xf32, #tpu.memory_space<vmem>>, vector<8x16xf32>
    %959 = vector.extract_strided_slice %5 {offsets = [96, 0], sizes = [16, 32], strides = [1, 1]} : vector<144x32xf32> to vector<16x32xf32>
    %960 = arith.truncf %958 : vector<8x16xf32> to vector<8x16xbf16>
    %961 = arith.truncf %959 : vector<16x32xf32> to vector<16x32xbf16>
    %cst_379 = arith.constant dense<0.000000e+00> : vector<8x32xf32>
    %962 = tpu.matmul %960, %961, %cst_379 {dimension_numbers = #tpu.dot_dimension_numbers<[1], [0], [0], [1], [0, 0, 1, 1], [], []>} : vector<8x16xbf16>, vector<16x32xbf16>, vector<8x32xf32> -> vector<8x32xf32>
    %963 = arith.addf %957, %962 : vector<8x32xf32>
    %c480 = arith.constant 480 : index
    %c0_380 = arith.constant 0 : index
    %964 = vector.load %arg22[%c480, %c0_380] : memref<512x16xf32, #tpu.memory_space<vmem>>, vector<8x16xf32>
    %965 = vector.extract_strided_slice %5 {offsets = [112, 0], sizes = [16, 32], strides = [1, 1]} : vector<144x32xf32> to vector<16x32xf32>
    %966 = arith.truncf %964 : vector<8x16xf32> to vector<8x16xbf16>
    %967 = arith.truncf %965 : vector<16x32xf32> to vector<16x32xbf16>
    %cst_381 = arith.constant dense<0.000000e+00> : vector<8x32xf32>
    %968 = tpu.matmul %966, %967, %cst_381 {dimension_numbers = #tpu.dot_dimension_numbers<[1], [0], [0], [1], [0, 0, 1, 1], [], []>} : vector<8x16xbf16>, vector<16x32xbf16>, vector<8x32xf32> -> vector<8x32xf32>
    %969 = arith.addf %963, %968 : vector<8x32xf32>
    %c488 = arith.constant 488 : index
    %c0_382 = arith.constant 0 : index
    %970 = vector.load %arg22[%c488, %c0_382] : memref<512x16xf32, #tpu.memory_space<vmem>>, vector<8x16xf32>
    %971 = vector.extract_strided_slice %5 {offsets = [128, 0], sizes = [16, 32], strides = [1, 1]} : vector<144x32xf32> to vector<16x32xf32>
    %972 = arith.truncf %970 : vector<8x16xf32> to vector<8x16xbf16>
    %973 = arith.truncf %971 : vector<16x32xf32> to vector<16x32xbf16>
    %cst_383 = arith.constant dense<0.000000e+00> : vector<8x32xf32>
    %974 = tpu.matmul %972, %973, %cst_383 {dimension_numbers = #tpu.dot_dimension_numbers<[1], [0], [0], [1], [0, 0, 1, 1], [], []>} : vector<8x16xbf16>, vector<16x32xbf16>, vector<8x32xf32> -> vector<8x32xf32>
    %975 = arith.addf %969, %974 : vector<8x32xf32>
    %976 = vector.broadcast %6 : vector<1x32xf32> to vector<8x32xf32>
    %977 = arith.addf %975, %976 : vector<8x32xf32>
    %cst_384 = arith.constant 0.000000e+00 : f32
    %978 = vector.broadcast %cst_384 : f32 to vector<8x32xf32>
    %979 = arith.maximumf %977, %978 : vector<8x32xf32>
    %980 = vector.extract_strided_slice %7 {offsets = [448, 0], sizes = [32, 32], strides = [1, 1]} : vector<512x32xf32> to vector<32x32xf32>
    %981 = arith.truncf %979 : vector<8x32xf32> to vector<8x32xbf16>
    %982 = arith.truncf %980 : vector<32x32xf32> to vector<32x32xbf16>
    %cst_385 = arith.constant dense<0.000000e+00> : vector<8x32xf32>
    %983 = tpu.matmul %981, %982, %cst_385 {dimension_numbers = #tpu.dot_dimension_numbers<[1], [0], [0], [1], [0, 0, 1, 1], [], []>} : vector<8x32xbf16>, vector<32x32xbf16>, vector<8x32xf32> -> vector<8x32xf32>
    %984 = arith.addf %920, %983 : vector<8x32xf32>
    %cst_386 = arith.constant 0.000000e+00 : f32
    %985 = vector.broadcast %cst_386 : f32 to vector<8x32xf32>
    %c360_387 = arith.constant 360 : index
    %c0_388 = arith.constant 0 : index
    %986 = vector.load %arg22[%c360_387, %c0_388] : memref<512x16xf32, #tpu.memory_space<vmem>>, vector<8x16xf32>
    %987 = vector.extract_strided_slice %5 {offsets = [0, 0], sizes = [16, 32], strides = [1, 1]} : vector<144x32xf32> to vector<16x32xf32>
    %988 = arith.truncf %986 : vector<8x16xf32> to vector<8x16xbf16>
    %989 = arith.truncf %987 : vector<16x32xf32> to vector<16x32xbf16>
    %cst_389 = arith.constant dense<0.000000e+00> : vector<8x32xf32>
    %990 = tpu.matmul %988, %989, %cst_389 {dimension_numbers = #tpu.dot_dimension_numbers<[1], [0], [0], [1], [0, 0, 1, 1], [], []>} : vector<8x16xbf16>, vector<16x32xbf16>, vector<8x32xf32> -> vector<8x32xf32>
    %991 = arith.addf %985, %990 : vector<8x32xf32>
    %c368_390 = arith.constant 368 : index
    %c0_391 = arith.constant 0 : index
    %992 = vector.load %arg22[%c368_390, %c0_391] : memref<512x16xf32, #tpu.memory_space<vmem>>, vector<8x16xf32>
    %993 = vector.extract_strided_slice %5 {offsets = [16, 0], sizes = [16, 32], strides = [1, 1]} : vector<144x32xf32> to vector<16x32xf32>
    %994 = arith.truncf %992 : vector<8x16xf32> to vector<8x16xbf16>
    %995 = arith.truncf %993 : vector<16x32xf32> to vector<16x32xbf16>
    %cst_392 = arith.constant dense<0.000000e+00> : vector<8x32xf32>
    %996 = tpu.matmul %994, %995, %cst_392 {dimension_numbers = #tpu.dot_dimension_numbers<[1], [0], [0], [1], [0, 0, 1, 1], [], []>} : vector<8x16xbf16>, vector<16x32xbf16>, vector<8x32xf32> -> vector<8x32xf32>
    %997 = arith.addf %991, %996 : vector<8x32xf32>
    %c376_393 = arith.constant 376 : index
    %c0_394 = arith.constant 0 : index
    %998 = vector.load %arg22[%c376_393, %c0_394] : memref<512x16xf32, #tpu.memory_space<vmem>>, vector<8x16xf32>
    %999 = vector.extract_strided_slice %5 {offsets = [32, 0], sizes = [16, 32], strides = [1, 1]} : vector<144x32xf32> to vector<16x32xf32>
    %1000 = arith.truncf %998 : vector<8x16xf32> to vector<8x16xbf16>
    %1001 = arith.truncf %999 : vector<16x32xf32> to vector<16x32xbf16>
    %cst_395 = arith.constant dense<0.000000e+00> : vector<8x32xf32>
    %1002 = tpu.matmul %1000, %1001, %cst_395 {dimension_numbers = #tpu.dot_dimension_numbers<[1], [0], [0], [1], [0, 0, 1, 1], [], []>} : vector<8x16xbf16>, vector<16x32xbf16>, vector<8x32xf32> -> vector<8x32xf32>
    %1003 = arith.addf %997, %1002 : vector<8x32xf32>
    %c424_396 = arith.constant 424 : index
    %c0_397 = arith.constant 0 : index
    %1004 = vector.load %arg22[%c424_396, %c0_397] : memref<512x16xf32, #tpu.memory_space<vmem>>, vector<8x16xf32>
    %1005 = vector.extract_strided_slice %5 {offsets = [48, 0], sizes = [16, 32], strides = [1, 1]} : vector<144x32xf32> to vector<16x32xf32>
    %1006 = arith.truncf %1004 : vector<8x16xf32> to vector<8x16xbf16>
    %1007 = arith.truncf %1005 : vector<16x32xf32> to vector<16x32xbf16>
    %cst_398 = arith.constant dense<0.000000e+00> : vector<8x32xf32>
    %1008 = tpu.matmul %1006, %1007, %cst_398 {dimension_numbers = #tpu.dot_dimension_numbers<[1], [0], [0], [1], [0, 0, 1, 1], [], []>} : vector<8x16xbf16>, vector<16x32xbf16>, vector<8x32xf32> -> vector<8x32xf32>
    %1009 = arith.addf %1003, %1008 : vector<8x32xf32>
    %c432 = arith.constant 432 : index
    %c0_399 = arith.constant 0 : index
    %1010 = vector.load %arg22[%c432, %c0_399] : memref<512x16xf32, #tpu.memory_space<vmem>>, vector<8x16xf32>
    %1011 = vector.extract_strided_slice %5 {offsets = [64, 0], sizes = [16, 32], strides = [1, 1]} : vector<144x32xf32> to vector<16x32xf32>
    %1012 = arith.truncf %1010 : vector<8x16xf32> to vector<8x16xbf16>
    %1013 = arith.truncf %1011 : vector<16x32xf32> to vector<16x32xbf16>
    %cst_400 = arith.constant dense<0.000000e+00> : vector<8x32xf32>
    %1014 = tpu.matmul %1012, %1013, %cst_400 {dimension_numbers = #tpu.dot_dimension_numbers<[1], [0], [0], [1], [0, 0, 1, 1], [], []>} : vector<8x16xbf16>, vector<16x32xbf16>, vector<8x32xf32> -> vector<8x32xf32>
    %1015 = arith.addf %1009, %1014 : vector<8x32xf32>
    %c440 = arith.constant 440 : index
    %c0_401 = arith.constant 0 : index
    %1016 = vector.load %arg22[%c440, %c0_401] : memref<512x16xf32, #tpu.memory_space<vmem>>, vector<8x16xf32>
    %1017 = vector.extract_strided_slice %5 {offsets = [80, 0], sizes = [16, 32], strides = [1, 1]} : vector<144x32xf32> to vector<16x32xf32>
    %1018 = arith.truncf %1016 : vector<8x16xf32> to vector<8x16xbf16>
    %1019 = arith.truncf %1017 : vector<16x32xf32> to vector<16x32xbf16>
    %cst_402 = arith.constant dense<0.000000e+00> : vector<8x32xf32>
    %1020 = tpu.matmul %1018, %1019, %cst_402 {dimension_numbers = #tpu.dot_dimension_numbers<[1], [0], [0], [1], [0, 0, 1, 1], [], []>} : vector<8x16xbf16>, vector<16x32xbf16>, vector<8x32xf32> -> vector<8x32xf32>
    %1021 = arith.addf %1015, %1020 : vector<8x32xf32>
    %c488_403 = arith.constant 488 : index
    %c0_404 = arith.constant 0 : index
    %1022 = vector.load %arg22[%c488_403, %c0_404] : memref<512x16xf32, #tpu.memory_space<vmem>>, vector<8x16xf32>
    %1023 = vector.extract_strided_slice %5 {offsets = [96, 0], sizes = [16, 32], strides = [1, 1]} : vector<144x32xf32> to vector<16x32xf32>
    %1024 = arith.truncf %1022 : vector<8x16xf32> to vector<8x16xbf16>
    %1025 = arith.truncf %1023 : vector<16x32xf32> to vector<16x32xbf16>
    %cst_405 = arith.constant dense<0.000000e+00> : vector<8x32xf32>
    %1026 = tpu.matmul %1024, %1025, %cst_405 {dimension_numbers = #tpu.dot_dimension_numbers<[1], [0], [0], [1], [0, 0, 1, 1], [], []>} : vector<8x16xbf16>, vector<16x32xbf16>, vector<8x32xf32> -> vector<8x32xf32>
    %1027 = arith.addf %1021, %1026 : vector<8x32xf32>
    %c496 = arith.constant 496 : index
    %c0_406 = arith.constant 0 : index
    %1028 = vector.load %arg22[%c496, %c0_406] : memref<512x16xf32, #tpu.memory_space<vmem>>, vector<8x16xf32>
    %1029 = vector.extract_strided_slice %5 {offsets = [112, 0], sizes = [16, 32], strides = [1, 1]} : vector<144x32xf32> to vector<16x32xf32>
    %1030 = arith.truncf %1028 : vector<8x16xf32> to vector<8x16xbf16>
    %1031 = arith.truncf %1029 : vector<16x32xf32> to vector<16x32xbf16>
    %cst_407 = arith.constant dense<0.000000e+00> : vector<8x32xf32>
    %1032 = tpu.matmul %1030, %1031, %cst_407 {dimension_numbers = #tpu.dot_dimension_numbers<[1], [0], [0], [1], [0, 0, 1, 1], [], []>} : vector<8x16xbf16>, vector<16x32xbf16>, vector<8x32xf32> -> vector<8x32xf32>
    %1033 = arith.addf %1027, %1032 : vector<8x32xf32>
    %c504 = arith.constant 504 : index
    %c0_408 = arith.constant 0 : index
    %1034 = vector.load %arg22[%c504, %c0_408] : memref<512x16xf32, #tpu.memory_space<vmem>>, vector<8x16xf32>
    %1035 = vector.extract_strided_slice %5 {offsets = [128, 0], sizes = [16, 32], strides = [1, 1]} : vector<144x32xf32> to vector<16x32xf32>
    %1036 = arith.truncf %1034 : vector<8x16xf32> to vector<8x16xbf16>
    %1037 = arith.truncf %1035 : vector<16x32xf32> to vector<16x32xbf16>
    %cst_409 = arith.constant dense<0.000000e+00> : vector<8x32xf32>
    %1038 = tpu.matmul %1036, %1037, %cst_409 {dimension_numbers = #tpu.dot_dimension_numbers<[1], [0], [0], [1], [0, 0, 1, 1], [], []>} : vector<8x16xbf16>, vector<16x32xbf16>, vector<8x32xf32> -> vector<8x32xf32>
    %1039 = arith.addf %1033, %1038 : vector<8x32xf32>
    %1040 = vector.broadcast %6 : vector<1x32xf32> to vector<8x32xf32>
    %1041 = arith.addf %1039, %1040 : vector<8x32xf32>
    %cst_410 = arith.constant 0.000000e+00 : f32
    %1042 = vector.broadcast %cst_410 : f32 to vector<8x32xf32>
    %1043 = arith.maximumf %1041, %1042 : vector<8x32xf32>
    %1044 = vector.extract_strided_slice %7 {offsets = [480, 0], sizes = [32, 32], strides = [1, 1]} : vector<512x32xf32> to vector<32x32xf32>
    %1045 = arith.truncf %1043 : vector<8x32xf32> to vector<8x32xbf16>
    %1046 = arith.truncf %1044 : vector<32x32xf32> to vector<32x32xbf16>
    %cst_411 = arith.constant dense<0.000000e+00> : vector<8x32xf32>
    %1047 = tpu.matmul %1045, %1046, %cst_411 {dimension_numbers = #tpu.dot_dimension_numbers<[1], [0], [0], [1], [0, 0, 1, 1], [], []>} : vector<8x32xbf16>, vector<32x32xbf16>, vector<8x32xf32> -> vector<8x32xf32>
    %1048 = arith.addf %984, %1047 : vector<8x32xf32>
    %1049 = vector.broadcast %8 : vector<1x32xf32> to vector<8x32xf32>
    %1050 = arith.addf %1048, %1049 : vector<8x32xf32>
    %1051 = arith.truncf %1050 : vector<8x32xf32> to vector<8x32xbf16>
    %1052 = arith.truncf %14 : vector<32x128xf32> to vector<32x128xbf16>
    %cst_412 = arith.constant dense<0.000000e+00> : vector<8x128xf32>
    %1053 = tpu.matmul %1051, %1052, %cst_412 {dimension_numbers = #tpu.dot_dimension_numbers<[1], [0], [0], [1], [0, 0, 1, 1], [], []>} : vector<8x32xbf16>, vector<32x128xbf16>, vector<8x128xf32> -> vector<8x128xf32>
    %1054 = vector.extract_strided_slice %19 {offsets = [6, 0], sizes = [2, 3], strides = [1, 1]} : vector<8x3xf32> to vector<2x3xf32>
    %1055 = arith.truncf %1054 : vector<2x3xf32> to vector<2x3xbf16>
    %1056 = arith.truncf %9 : vector<3x64xf32> to vector<3x64xbf16>
    %cst_413 = arith.constant dense<0.000000e+00> : vector<2x64xf32>
    %1057 = tpu.matmul %1055, %1056, %cst_413 {dimension_numbers = #tpu.dot_dimension_numbers<[1], [0], [0], [1], [0, 0, 1, 1], [], []>} : vector<2x3xbf16>, vector<3x64xbf16>, vector<2x64xf32> -> vector<2x64xf32>
    %1058 = vector.broadcast %10 : vector<1x64xf32> to vector<2x64xf32>
    %1059 = arith.addf %1057, %1058 : vector<2x64xf32>
    %cst_414 = arith.constant 0.000000e+00 : f32
    %1060 = vector.broadcast %cst_414 : f32 to vector<2x64xf32>
    %1061 = arith.maximumf %1059, %1060 : vector<2x64xf32>
    %1062 = arith.truncf %1061 : vector<2x64xf32> to vector<2x64xbf16>
    %1063 = arith.truncf %11 : vector<64x32xf32> to vector<64x32xbf16>
    %cst_415 = arith.constant dense<0.000000e+00> : vector<2x32xf32>
    %1064 = tpu.matmul %1062, %1063, %cst_415 {dimension_numbers = #tpu.dot_dimension_numbers<[1], [0], [0], [1], [0, 0, 1, 1], [], []>} : vector<2x64xbf16>, vector<64x32xbf16>, vector<2x32xf32> -> vector<2x32xf32>
    %1065 = vector.broadcast %12 : vector<1x32xf32> to vector<2x32xf32>
    %1066 = arith.addf %1064, %1065 : vector<2x32xf32>
    %1067 = arith.truncf %1066 : vector<2x32xf32> to vector<2x32xbf16>
    %1068 = arith.truncf %13 : vector<32x128xf32> to vector<32x128xbf16>
    %cst_416 = arith.constant dense<0.000000e+00> : vector<2x128xf32>
    %1069 = tpu.matmul %1067, %1068, %cst_416 {dimension_numbers = #tpu.dot_dimension_numbers<[1], [0], [0], [1], [0, 0, 1, 1], [], []>} : vector<2x32xbf16>, vector<32x128xbf16>, vector<2x128xf32> -> vector<2x128xf32>
    %1070 = vector.extract_strided_slice %1053 {offsets = [0, 0], sizes = [2, 128], strides = [1, 1]} : vector<8x128xf32> to vector<2x128xf32>
    %1071 = arith.addf %1069, %1070 : vector<2x128xf32>
    %1072 = arith.truncf %152 : vector<2x32xf32> to vector<2x32xbf16>
    %1073 = arith.truncf %15 : vector<32x128xf32> to vector<32x128xbf16>
    %cst_417 = arith.constant dense<0.000000e+00> : vector<2x128xf32>
    %1074 = tpu.matmul %1072, %1073, %cst_417 {dimension_numbers = #tpu.dot_dimension_numbers<[1], [0], [0], [1], [0, 0, 1, 1], [], []>} : vector<2x32xbf16>, vector<32x128xbf16>, vector<2x128xf32> -> vector<2x128xf32>
    %1075 = arith.addf %1071, %1074 : vector<2x128xf32>
    %1076 = vector.broadcast %16 : vector<1x128xf32> to vector<2x128xf32>
    %1077 = arith.addf %1075, %1076 : vector<2x128xf32>
    %1078 = vector.extract_strided_slice %1077 {offsets = [0, 0], sizes = [2, 32], strides = [1, 1]} : vector<2x128xf32> to vector<2x32xf32>
    %1079 = arith.negf %1078 : vector<2x32xf32>
    %1080 = math.exp %1079 : vector<2x32xf32>
    %cst_418 = arith.constant 1.000000e+00 : f32
    %1081 = vector.broadcast %cst_418 : f32 to vector<2x32xf32>
    %1082 = arith.addf %1081, %1080 : vector<2x32xf32>
    %1083 = arith.divf %1081, %1082 : vector<2x32xf32>
    %1084 = vector.extract_strided_slice %1077 {offsets = [0, 32], sizes = [2, 32], strides = [1, 1]} : vector<2x128xf32> to vector<2x32xf32>
    %1085 = arith.negf %1084 : vector<2x32xf32>
    %1086 = math.exp %1085 : vector<2x32xf32>
    %cst_419 = arith.constant 1.000000e+00 : f32
    %1087 = vector.broadcast %cst_419 : f32 to vector<2x32xf32>
    %1088 = arith.addf %1087, %1086 : vector<2x32xf32>
    %1089 = arith.divf %1087, %1088 : vector<2x32xf32>
    %1090 = vector.extract_strided_slice %1077 {offsets = [0, 64], sizes = [2, 32], strides = [1, 1]} : vector<2x128xf32> to vector<2x32xf32>
    %1091 = math.tanh %1090 : vector<2x32xf32>
    %1092 = vector.extract_strided_slice %1077 {offsets = [0, 96], sizes = [2, 32], strides = [1, 1]} : vector<2x128xf32> to vector<2x32xf32>
    %1093 = arith.negf %1092 : vector<2x32xf32>
    %1094 = math.exp %1093 : vector<2x32xf32>
    %cst_420 = arith.constant 1.000000e+00 : f32
    %1095 = vector.broadcast %cst_420 : f32 to vector<2x32xf32>
    %1096 = arith.addf %1095, %1094 : vector<2x32xf32>
    %1097 = arith.divf %1095, %1096 : vector<2x32xf32>
    %1098 = arith.mulf %1089, %150 : vector<2x32xf32>
    %1099 = arith.mulf %1083, %1091 : vector<2x32xf32>
    %1100 = arith.addf %1098, %1099 : vector<2x32xf32>
    %1101 = math.tanh %1100 : vector<2x32xf32>
    %1102 = arith.mulf %1097, %1101 : vector<2x32xf32>
    %1103 = arith.truncf %1102 : vector<2x32xf32> to vector<2x32xbf16>
    %1104 = arith.truncf %17 : vector<32x3xf32> to vector<32x3xbf16>
    %cst_421 = arith.constant dense<0.000000e+00> : vector<2x3xf32>
    %1105 = tpu.matmul %1103, %1104, %cst_421 {dimension_numbers = #tpu.dot_dimension_numbers<[1], [0], [0], [1], [0, 0, 1, 1], [], []>} : vector<2x32xbf16>, vector<32x3xbf16>, vector<2x3xf32> -> vector<2x3xf32>
    %1106 = vector.broadcast %18 : vector<1x3xf32> to vector<2x3xf32>
    %1107 = arith.addf %1105, %1106 : vector<2x3xf32>
    %1108 = arith.addf %1054, %1107 : vector<2x3xf32>
    %c0_422 = arith.constant 0 : index
    %c0_423 = arith.constant 0 : index
    %c0_424 = arith.constant 0 : index
    %1109 = vector.load %arg21[%c0_422, %c0_423, %c0_424] : memref<4x2x3xf32, #tpu.memory_space<vmem>>, vector<1x2x3xf32>
    %1110 = vector.shape_cast %1109 : vector<1x2x3xf32> to vector<2x3xf32>
    %1111 = vector.shape_cast %1108 : vector<2x3xf32> to vector<1x2x3xf32>
    tpu.vector_store %arg21[%c0_422, %c0_423, %c0_424], %1111 {strides = array<i32>} : memref<4x2x3xf32, #tpu.memory_space<vmem>>, vector<1x2x3xf32>,
    %1112 = arith.truncf %1108 : vector<2x3xf32> to vector<2x3xbf16>
    %1113 = arith.truncf %9 : vector<3x64xf32> to vector<3x64xbf16>
    %cst_425 = arith.constant dense<0.000000e+00> : vector<2x64xf32>
    %1114 = tpu.matmul %1112, %1113, %cst_425 {dimension_numbers = #tpu.dot_dimension_numbers<[1], [0], [0], [1], [0, 0, 1, 1], [], []>} : vector<2x3xbf16>, vector<3x64xbf16>, vector<2x64xf32> -> vector<2x64xf32>
    %1115 = vector.broadcast %10 : vector<1x64xf32> to vector<2x64xf32>
    %1116 = arith.addf %1114, %1115 : vector<2x64xf32>
    %cst_426 = arith.constant 0.000000e+00 : f32
    %1117 = vector.broadcast %cst_426 : f32 to vector<2x64xf32>
    %1118 = arith.maximumf %1116, %1117 : vector<2x64xf32>
    %1119 = arith.truncf %1118 : vector<2x64xf32> to vector<2x64xbf16>
    %1120 = arith.truncf %11 : vector<64x32xf32> to vector<64x32xbf16>
    %cst_427 = arith.constant dense<0.000000e+00> : vector<2x32xf32>
    %1121 = tpu.matmul %1119, %1120, %cst_427 {dimension_numbers = #tpu.dot_dimension_numbers<[1], [0], [0], [1], [0, 0, 1, 1], [], []>} : vector<2x64xbf16>, vector<64x32xbf16>, vector<2x32xf32> -> vector<2x32xf32>
    %1122 = vector.broadcast %12 : vector<1x32xf32> to vector<2x32xf32>
    %1123 = arith.addf %1121, %1122 : vector<2x32xf32>
    %1124 = arith.truncf %1123 : vector<2x32xf32> to vector<2x32xbf16>
    %1125 = arith.truncf %13 : vector<32x128xf32> to vector<32x128xbf16>
    %cst_428 = arith.constant dense<0.000000e+00> : vector<2x128xf32>
    %1126 = tpu.matmul %1124, %1125, %cst_428 {dimension_numbers = #tpu.dot_dimension_numbers<[1], [0], [0], [1], [0, 0, 1, 1], [], []>} : vector<2x32xbf16>, vector<32x128xbf16>, vector<2x128xf32> -> vector<2x128xf32>
    %1127 = vector.extract_strided_slice %1053 {offsets = [2, 0], sizes = [2, 128], strides = [1, 1]} : vector<8x128xf32> to vector<2x128xf32>
    %1128 = arith.addf %1126, %1127 : vector<2x128xf32>
    %1129 = arith.truncf %1102 : vector<2x32xf32> to vector<2x32xbf16>
    %1130 = arith.truncf %15 : vector<32x128xf32> to vector<32x128xbf16>
    %cst_429 = arith.constant dense<0.000000e+00> : vector<2x128xf32>
    %1131 = tpu.matmul %1129, %1130, %cst_429 {dimension_numbers = #tpu.dot_dimension_numbers<[1], [0], [0], [1], [0, 0, 1, 1], [], []>} : vector<2x32xbf16>, vector<32x128xbf16>, vector<2x128xf32> -> vector<2x128xf32>
    %1132 = arith.addf %1128, %1131 : vector<2x128xf32>
    %1133 = vector.broadcast %16 : vector<1x128xf32> to vector<2x128xf32>
    %1134 = arith.addf %1132, %1133 : vector<2x128xf32>
    %1135 = vector.extract_strided_slice %1134 {offsets = [0, 0], sizes = [2, 32], strides = [1, 1]} : vector<2x128xf32> to vector<2x32xf32>
    %1136 = arith.negf %1135 : vector<2x32xf32>
    %1137 = math.exp %1136 : vector<2x32xf32>
    %cst_430 = arith.constant 1.000000e+00 : f32
    %1138 = vector.broadcast %cst_430 : f32 to vector<2x32xf32>
    %1139 = arith.addf %1138, %1137 : vector<2x32xf32>
    %1140 = arith.divf %1138, %1139 : vector<2x32xf32>
    %1141 = vector.extract_strided_slice %1134 {offsets = [0, 32], sizes = [2, 32], strides = [1, 1]} : vector<2x128xf32> to vector<2x32xf32>
    %1142 = arith.negf %1141 : vector<2x32xf32>
    %1143 = math.exp %1142 : vector<2x32xf32>
    %cst_431 = arith.constant 1.000000e+00 : f32
    %1144 = vector.broadcast %cst_431 : f32 to vector<2x32xf32>
    %1145 = arith.addf %1144, %1143 : vector<2x32xf32>
    %1146 = arith.divf %1144, %1145 : vector<2x32xf32>
    %1147 = vector.extract_strided_slice %1134 {offsets = [0, 64], sizes = [2, 32], strides = [1, 1]} : vector<2x128xf32> to vector<2x32xf32>
    %1148 = math.tanh %1147 : vector<2x32xf32>
    %1149 = vector.extract_strided_slice %1134 {offsets = [0, 96], sizes = [2, 32], strides = [1, 1]} : vector<2x128xf32> to vector<2x32xf32>
    %1150 = arith.negf %1149 : vector<2x32xf32>
    %1151 = math.exp %1150 : vector<2x32xf32>
    %cst_432 = arith.constant 1.000000e+00 : f32
    %1152 = vector.broadcast %cst_432 : f32 to vector<2x32xf32>
    %1153 = arith.addf %1152, %1151 : vector<2x32xf32>
    %1154 = arith.divf %1152, %1153 : vector<2x32xf32>
    %1155 = arith.mulf %1146, %1100 : vector<2x32xf32>
    %1156 = arith.mulf %1140, %1148 : vector<2x32xf32>
    %1157 = arith.addf %1155, %1156 : vector<2x32xf32>
    %1158 = math.tanh %1157 : vector<2x32xf32>
    %1159 = arith.mulf %1154, %1158 : vector<2x32xf32>
    %1160 = arith.truncf %1159 : vector<2x32xf32> to vector<2x32xbf16>
    %1161 = arith.truncf %17 : vector<32x3xf32> to vector<32x3xbf16>
    %cst_433 = arith.constant dense<0.000000e+00> : vector<2x3xf32>
    %1162 = tpu.matmul %1160, %1161, %cst_433 {dimension_numbers = #tpu.dot_dimension_numbers<[1], [0], [0], [1], [0, 0, 1, 1], [], []>} : vector<2x32xbf16>, vector<32x3xbf16>, vector<2x3xf32> -> vector<2x3xf32>
    %1163 = vector.broadcast %18 : vector<1x3xf32> to vector<2x3xf32>
    %1164 = arith.addf %1162, %1163 : vector<2x3xf32>
    %1165 = arith.addf %1108, %1164 : vector<2x3xf32>
    %c1 = arith.constant 1 : index
    %c0_434 = arith.constant 0 : index
    %c0_435 = arith.constant 0 : index
    %1166 = vector.load %arg21[%c1, %c0_434, %c0_435] : memref<4x2x3xf32, #tpu.memory_space<vmem>>, vector<1x2x3xf32>
    %1167 = vector.shape_cast %1166 : vector<1x2x3xf32> to vector<2x3xf32>
    %1168 = vector.shape_cast %1165 : vector<2x3xf32> to vector<1x2x3xf32>
    tpu.vector_store %arg21[%c1, %c0_434, %c0_435], %1168 {strides = array<i32>} : memref<4x2x3xf32, #tpu.memory_space<vmem>>, vector<1x2x3xf32>,
    %1169 = arith.truncf %1165 : vector<2x3xf32> to vector<2x3xbf16>
    %1170 = arith.truncf %9 : vector<3x64xf32> to vector<3x64xbf16>
    %cst_436 = arith.constant dense<0.000000e+00> : vector<2x64xf32>
    %1171 = tpu.matmul %1169, %1170, %cst_436 {dimension_numbers = #tpu.dot_dimension_numbers<[1], [0], [0], [1], [0, 0, 1, 1], [], []>} : vector<2x3xbf16>, vector<3x64xbf16>, vector<2x64xf32> -> vector<2x64xf32>
    %1172 = vector.broadcast %10 : vector<1x64xf32> to vector<2x64xf32>
    %1173 = arith.addf %1171, %1172 : vector<2x64xf32>
    %cst_437 = arith.constant 0.000000e+00 : f32
    %1174 = vector.broadcast %cst_437 : f32 to vector<2x64xf32>
    %1175 = arith.maximumf %1173, %1174 : vector<2x64xf32>
    %1176 = arith.truncf %1175 : vector<2x64xf32> to vector<2x64xbf16>
    %1177 = arith.truncf %11 : vector<64x32xf32> to vector<64x32xbf16>
    %cst_438 = arith.constant dense<0.000000e+00> : vector<2x32xf32>
    %1178 = tpu.matmul %1176, %1177, %cst_438 {dimension_numbers = #tpu.dot_dimension_numbers<[1], [0], [0], [1], [0, 0, 1, 1], [], []>} : vector<2x64xbf16>, vector<64x32xbf16>, vector<2x32xf32> -> vector<2x32xf32>
    %1179 = vector.broadcast %12 : vector<1x32xf32> to vector<2x32xf32>
    %1180 = arith.addf %1178, %1179 : vector<2x32xf32>
    %1181 = arith.truncf %1180 : vector<2x32xf32> to vector<2x32xbf16>
    %1182 = arith.truncf %13 : vector<32x128xf32> to vector<32x128xbf16>
    %cst_439 = arith.constant dense<0.000000e+00> : vector<2x128xf32>
    %1183 = tpu.matmul %1181, %1182, %cst_439 {dimension_numbers = #tpu.dot_dimension_numbers<[1], [0], [0], [1], [0, 0, 1, 1], [], []>} : vector<2x32xbf16>, vector<32x128xbf16>, vector<2x128xf32> -> vector<2x128xf32>
    %1184 = vector.extract_strided_slice %1053 {offsets = [4, 0], sizes = [2, 128], strides = [1, 1]} : vector<8x128xf32> to vector<2x128xf32>
    %1185 = arith.addf %1183, %1184 : vector<2x128xf32>
    %1186 = arith.truncf %1159 : vector<2x32xf32> to vector<2x32xbf16>
    %1187 = arith.truncf %15 : vector<32x128xf32> to vector<32x128xbf16>
    %cst_440 = arith.constant dense<0.000000e+00> : vector<2x128xf32>
    %1188 = tpu.matmul %1186, %1187, %cst_440 {dimension_numbers = #tpu.dot_dimension_numbers<[1], [0], [0], [1], [0, 0, 1, 1], [], []>} : vector<2x32xbf16>, vector<32x128xbf16>, vector<2x128xf32> -> vector<2x128xf32>
    %1189 = arith.addf %1185, %1188 : vector<2x128xf32>
    %1190 = vector.broadcast %16 : vector<1x128xf32> to vector<2x128xf32>
    %1191 = arith.addf %1189, %1190 : vector<2x128xf32>
    %1192 = vector.extract_strided_slice %1191 {offsets = [0, 0], sizes = [2, 32], strides = [1, 1]} : vector<2x128xf32> to vector<2x32xf32>
    %1193 = arith.negf %1192 : vector<2x32xf32>
    %1194 = math.exp %1193 : vector<2x32xf32>
    %cst_441 = arith.constant 1.000000e+00 : f32
    %1195 = vector.broadcast %cst_441 : f32 to vector<2x32xf32>
    %1196 = arith.addf %1195, %1194 : vector<2x32xf32>
    %1197 = arith.divf %1195, %1196 : vector<2x32xf32>
    %1198 = vector.extract_strided_slice %1191 {offsets = [0, 32], sizes = [2, 32], strides = [1, 1]} : vector<2x128xf32> to vector<2x32xf32>
    %1199 = arith.negf %1198 : vector<2x32xf32>
    %1200 = math.exp %1199 : vector<2x32xf32>
    %cst_442 = arith.constant 1.000000e+00 : f32
    %1201 = vector.broadcast %cst_442 : f32 to vector<2x32xf32>
    %1202 = arith.addf %1201, %1200 : vector<2x32xf32>
    %1203 = arith.divf %1201, %1202 : vector<2x32xf32>
    %1204 = vector.extract_strided_slice %1191 {offsets = [0, 64], sizes = [2, 32], strides = [1, 1]} : vector<2x128xf32> to vector<2x32xf32>
    %1205 = math.tanh %1204 : vector<2x32xf32>
    %1206 = vector.extract_strided_slice %1191 {offsets = [0, 96], sizes = [2, 32], strides = [1, 1]} : vector<2x128xf32> to vector<2x32xf32>
    %1207 = arith.negf %1206 : vector<2x32xf32>
    %1208 = math.exp %1207 : vector<2x32xf32>
    %cst_443 = arith.constant 1.000000e+00 : f32
    %1209 = vector.broadcast %cst_443 : f32 to vector<2x32xf32>
    %1210 = arith.addf %1209, %1208 : vector<2x32xf32>
    %1211 = arith.divf %1209, %1210 : vector<2x32xf32>
    %1212 = arith.mulf %1203, %1157 : vector<2x32xf32>
    %1213 = arith.mulf %1197, %1205 : vector<2x32xf32>
    %1214 = arith.addf %1212, %1213 : vector<2x32xf32>
    %1215 = math.tanh %1214 : vector<2x32xf32>
    %1216 = arith.mulf %1211, %1215 : vector<2x32xf32>
    %1217 = arith.truncf %1216 : vector<2x32xf32> to vector<2x32xbf16>
    %1218 = arith.truncf %17 : vector<32x3xf32> to vector<32x3xbf16>
    %cst_444 = arith.constant dense<0.000000e+00> : vector<2x3xf32>
    %1219 = tpu.matmul %1217, %1218, %cst_444 {dimension_numbers = #tpu.dot_dimension_numbers<[1], [0], [0], [1], [0, 0, 1, 1], [], []>} : vector<2x32xbf16>, vector<32x3xbf16>, vector<2x3xf32> -> vector<2x3xf32>
    %1220 = vector.broadcast %18 : vector<1x3xf32> to vector<2x3xf32>
    %1221 = arith.addf %1219, %1220 : vector<2x3xf32>
    %1222 = arith.addf %1165, %1221 : vector<2x3xf32>
    %c2 = arith.constant 2 : index
    %c0_445 = arith.constant 0 : index
    %c0_446 = arith.constant 0 : index
    %1223 = vector.load %arg21[%c2, %c0_445, %c0_446] : memref<4x2x3xf32, #tpu.memory_space<vmem>>, vector<1x2x3xf32>
    %1224 = vector.shape_cast %1223 : vector<1x2x3xf32> to vector<2x3xf32>
    %1225 = vector.shape_cast %1222 : vector<2x3xf32> to vector<1x2x3xf32>
    tpu.vector_store %arg21[%c2, %c0_445, %c0_446], %1225 {strides = array<i32>} : memref<4x2x3xf32, #tpu.memory_space<vmem>>, vector<1x2x3xf32>,
    %1226 = arith.truncf %1222 : vector<2x3xf32> to vector<2x3xbf16>
    %1227 = arith.truncf %9 : vector<3x64xf32> to vector<3x64xbf16>
    %cst_447 = arith.constant dense<0.000000e+00> : vector<2x64xf32>
    %1228 = tpu.matmul %1226, %1227, %cst_447 {dimension_numbers = #tpu.dot_dimension_numbers<[1], [0], [0], [1], [0, 0, 1, 1], [], []>} : vector<2x3xbf16>, vector<3x64xbf16>, vector<2x64xf32> -> vector<2x64xf32>
    %1229 = vector.broadcast %10 : vector<1x64xf32> to vector<2x64xf32>
    %1230 = arith.addf %1228, %1229 : vector<2x64xf32>
    %cst_448 = arith.constant 0.000000e+00 : f32
    %1231 = vector.broadcast %cst_448 : f32 to vector<2x64xf32>
    %1232 = arith.maximumf %1230, %1231 : vector<2x64xf32>
    %1233 = arith.truncf %1232 : vector<2x64xf32> to vector<2x64xbf16>
    %1234 = arith.truncf %11 : vector<64x32xf32> to vector<64x32xbf16>
    %cst_449 = arith.constant dense<0.000000e+00> : vector<2x32xf32>
    %1235 = tpu.matmul %1233, %1234, %cst_449 {dimension_numbers = #tpu.dot_dimension_numbers<[1], [0], [0], [1], [0, 0, 1, 1], [], []>} : vector<2x64xbf16>, vector<64x32xbf16>, vector<2x32xf32> -> vector<2x32xf32>
    %1236 = vector.broadcast %12 : vector<1x32xf32> to vector<2x32xf32>
    %1237 = arith.addf %1235, %1236 : vector<2x32xf32>
    %1238 = arith.truncf %1237 : vector<2x32xf32> to vector<2x32xbf16>
    %1239 = arith.truncf %13 : vector<32x128xf32> to vector<32x128xbf16>
    %cst_450 = arith.constant dense<0.000000e+00> : vector<2x128xf32>
    %1240 = tpu.matmul %1238, %1239, %cst_450 {dimension_numbers = #tpu.dot_dimension_numbers<[1], [0], [0], [1], [0, 0, 1, 1], [], []>} : vector<2x32xbf16>, vector<32x128xbf16>, vector<2x128xf32> -> vector<2x128xf32>
    %1241 = vector.extract_strided_slice %1053 {offsets = [6, 0], sizes = [2, 128], strides = [1, 1]} : vector<8x128xf32> to vector<2x128xf32>
    %1242 = arith.addf %1240, %1241 : vector<2x128xf32>
    %1243 = arith.truncf %1216 : vector<2x32xf32> to vector<2x32xbf16>
    %1244 = arith.truncf %15 : vector<32x128xf32> to vector<32x128xbf16>
    %cst_451 = arith.constant dense<0.000000e+00> : vector<2x128xf32>
    %1245 = tpu.matmul %1243, %1244, %cst_451 {dimension_numbers = #tpu.dot_dimension_numbers<[1], [0], [0], [1], [0, 0, 1, 1], [], []>} : vector<2x32xbf16>, vector<32x128xbf16>, vector<2x128xf32> -> vector<2x128xf32>
    %1246 = arith.addf %1242, %1245 : vector<2x128xf32>
    %1247 = vector.broadcast %16 : vector<1x128xf32> to vector<2x128xf32>
    %1248 = arith.addf %1246, %1247 : vector<2x128xf32>
    %1249 = vector.extract_strided_slice %1248 {offsets = [0, 0], sizes = [2, 32], strides = [1, 1]} : vector<2x128xf32> to vector<2x32xf32>
    %1250 = arith.negf %1249 : vector<2x32xf32>
    %1251 = math.exp %1250 : vector<2x32xf32>
    %cst_452 = arith.constant 1.000000e+00 : f32
    %1252 = vector.broadcast %cst_452 : f32 to vector<2x32xf32>
    %1253 = arith.addf %1252, %1251 : vector<2x32xf32>
    %1254 = arith.divf %1252, %1253 : vector<2x32xf32>
    %1255 = vector.extract_strided_slice %1248 {offsets = [0, 32], sizes = [2, 32], strides = [1, 1]} : vector<2x128xf32> to vector<2x32xf32>
    %1256 = arith.negf %1255 : vector<2x32xf32>
    %1257 = math.exp %1256 : vector<2x32xf32>
    %cst_453 = arith.constant 1.000000e+00 : f32
    %1258 = vector.broadcast %cst_453 : f32 to vector<2x32xf32>
    %1259 = arith.addf %1258, %1257 : vector<2x32xf32>
    %1260 = arith.divf %1258, %1259 : vector<2x32xf32>
    %1261 = vector.extract_strided_slice %1248 {offsets = [0, 64], sizes = [2, 32], strides = [1, 1]} : vector<2x128xf32> to vector<2x32xf32>
    %1262 = math.tanh %1261 : vector<2x32xf32>
    %1263 = vector.extract_strided_slice %1248 {offsets = [0, 96], sizes = [2, 32], strides = [1, 1]} : vector<2x128xf32> to vector<2x32xf32>
    %1264 = arith.negf %1263 : vector<2x32xf32>
    %1265 = math.exp %1264 : vector<2x32xf32>
    %cst_454 = arith.constant 1.000000e+00 : f32
    %1266 = vector.broadcast %cst_454 : f32 to vector<2x32xf32>
    %1267 = arith.addf %1266, %1265 : vector<2x32xf32>
    %1268 = arith.divf %1266, %1267 : vector<2x32xf32>
    %1269 = arith.mulf %1260, %1214 : vector<2x32xf32>
    %1270 = arith.mulf %1254, %1262 : vector<2x32xf32>
    %1271 = arith.addf %1269, %1270 : vector<2x32xf32>
    %1272 = math.tanh %1271 : vector<2x32xf32>
    %1273 = arith.mulf %1268, %1272 : vector<2x32xf32>
    %1274 = arith.truncf %1273 : vector<2x32xf32> to vector<2x32xbf16>
    %1275 = arith.truncf %17 : vector<32x3xf32> to vector<32x3xbf16>
    %cst_455 = arith.constant dense<0.000000e+00> : vector<2x3xf32>
    %1276 = tpu.matmul %1274, %1275, %cst_455 {dimension_numbers = #tpu.dot_dimension_numbers<[1], [0], [0], [1], [0, 0, 1, 1], [], []>} : vector<2x32xbf16>, vector<32x3xbf16>, vector<2x3xf32> -> vector<2x3xf32>
    %1277 = vector.broadcast %18 : vector<1x3xf32> to vector<2x3xf32>
    %1278 = arith.addf %1276, %1277 : vector<2x3xf32>
    %1279 = arith.addf %1222, %1278 : vector<2x3xf32>
    %c3 = arith.constant 3 : index
    %c0_456 = arith.constant 0 : index
    %c0_457 = arith.constant 0 : index
    %1280 = vector.load %arg21[%c3, %c0_456, %c0_457] : memref<4x2x3xf32, #tpu.memory_space<vmem>>, vector<1x2x3xf32>
    %1281 = vector.shape_cast %1280 : vector<1x2x3xf32> to vector<2x3xf32>
    %1282 = vector.shape_cast %1279 : vector<2x3xf32> to vector<1x2x3xf32>
    tpu.vector_store %arg21[%c3, %c0_456, %c0_457], %1282 {strides = array<i32>} : memref<4x2x3xf32, #tpu.memory_space<vmem>>, vector<1x2x3xf32>,
    return
  }
}

</mosaic_0001>

<llo_original>
// kernel: viewpoint_forward.1
$region0: #{viewpoint_forward.1}
  #allocation0 [shape = 'u32[]', space=smem, size = 0x4, offset = 0x4, fixed_abs, tag = 'smem constant byte address 0x4 - core index']
  #allocation1 [shape = 'u32[72,128]{1,0:T(1,128)}', space=vmem, size = 0x9000, scoped, tag = 'internal scratch']
  #allocation2 [shape = 'f32[512,16]{1,0:T(8,128)}', space=vmem, size = 0x40000, scoped, tag = 'scratch operand']
  %s0 = inlined_call_operand.vmem [shape: f32[8,3], index: 0, kind: input, shape index: {}]
  %s1 = inlined_call_operand.vmem [shape: f32[512,9], index: 1, kind: input, shape index: {}]
  %s2 = inlined_call_operand.vmem [shape: f32[9,16], index: 2, kind: input, shape index: {}]
  %s3 = inlined_call_operand.vmem [shape: f32[1,16], index: 3, kind: input, shape index: {}]
  %s4 = inlined_call_operand.vmem [shape: f32[144,32], index: 4, kind: input, shape index: {}]
  %s5 = inlined_call_operand.vmem [shape: f32[1,32], index: 5, kind: input, shape index: {}]
  %s6 = inlined_call_operand.vmem [shape: f32[512,32], index: 6, kind: input, shape index: {}]
  %s7 = inlined_call_operand.vmem [shape: f32[1,32], index: 7, kind: input, shape index: {}]
  %s8 = inlined_call_operand.vmem [shape: f32[3,128], index: 8, kind: input, shape index: {}]
  %s9 = inlined_call_operand.vmem [shape: f32[32,128], index: 9, kind: input, shape index: {}]
  %s10 = inlined_call_operand.vmem [shape: f32[1,128], index: 10, kind: input, shape index: {}]
  %s11 = inlined_call_operand.vmem [shape: f32[3,64], index: 11, kind: input, shape index: {}]
  %s12 = inlined_call_operand.vmem [shape: f32[1,64], index: 12, kind: input, shape index: {}]
  %s13 = inlined_call_operand.vmem [shape: f32[64,32], index: 13, kind: input, shape index: {}]
  %s14 = inlined_call_operand.vmem [shape: f32[1,32], index: 14, kind: input, shape index: {}]
  %s15 = inlined_call_operand.vmem [shape: f32[32,128], index: 15, kind: input, shape index: {}]
  %s16 = inlined_call_operand.vmem [shape: f32[32,128], index: 16, kind: input, shape index: {}]
  %s17 = inlined_call_operand.vmem [shape: f32[32,128], index: 17, kind: input, shape index: {}]
  %s18 = inlined_call_operand.vmem [shape: f32[1,128], index: 18, kind: input, shape index: {}]
  %s19 = inlined_call_operand.vmem [shape: f32[32,3], index: 19, kind: input, shape index: {}]
  %s20 = inlined_call_operand.vmem [shape: f32[1,3], index: 20, kind: input, shape index: {}]
  %s21 = inlined_call_operand.vmem [shape: f32[4,2,3], index: 21, kind: output, shape index: {}]
  %s22 = sld [smem:[#allocation0]]
  $region94: #{viewpoint_forward.1} parent=0
    _
  %s24 = ssub.s32 1, %s22
  %s25 = scalar_select 0, %s24, %s22
  // Predicated region
  $region2: #{viewpoint_forward.1} parent=0 // pred_check
    _
  $region3: #{viewpoint_forward.1} parent=0 // pred_check_branch
    %27 = sbr.rel (0) target = $region5
  $region4: #{viewpoint_forward.1} parent=0 // pred_region
    _
  $region5: #{viewpoint_forward.1} parent=0 // pred_fallthru
    _
  // Predicated region
  $region6: #{viewpoint_forward.1} parent=0 // pred_check
    _
  $region7: #{viewpoint_forward.1} parent=0 // pred_check_branch
    %29 = sbr.rel (0) target = $region9
  $region8: #{viewpoint_forward.1} parent=0 // pred_region
    _
  $region9: #{viewpoint_forward.1} parent=0 // pred_fallthru
    _
  // Predicated region
  $region10: #{viewpoint_forward.1} parent=0 // pred_check
    _
  $region11: #{viewpoint_forward.1} parent=0 // pred_check_branch
    %31 = sbr.rel (0) target = $region13
  $region12: #{viewpoint_forward.1} parent=0 // pred_region
    _
  $region13: #{viewpoint_forward.1} parent=0 // pred_fallthru
    _
  // Predicated region
  $region14: #{viewpoint_forward.1} parent=0 // pred_check
    _
  $region15: #{viewpoint_forward.1} parent=0 // pred_check_branch
    %33 = sbr.rel (0) target = $region17
  $region16: #{viewpoint_forward.1} parent=0 // pred_region
    _
  $region17: #{viewpoint_forward.1} parent=0 // pred_fallthru
    _
  // Predicated region
  $region18: #{viewpoint_forward.1} parent=0 // pred_check
    _
  $region19: #{viewpoint_forward.1} parent=0 // pred_check_branch
    %35 = sbr.rel (0) target = $region21
  $region20: #{viewpoint_forward.1} parent=0 // pred_region
    _
  $region21: #{viewpoint_forward.1} parent=0 // pred_fallthru
    _
  // Predicated region
  $region22: #{viewpoint_forward.1} parent=0 // pred_check
    _
  $region23: #{viewpoint_forward.1} parent=0 // pred_check_branch
    %37 = sbr.rel (0) target = $region25
  $region24: #{viewpoint_forward.1} parent=0 // pred_region
    _
  $region25: #{viewpoint_forward.1} parent=0 // pred_fallthru
    _
  // Predicated region
  $region26: #{viewpoint_forward.1} parent=0 // pred_check
    _
  $region27: #{viewpoint_forward.1} parent=0 // pred_check_branch
    %39 = sbr.rel (0) target = $region29
  $region28: #{viewpoint_forward.1} parent=0 // pred_region
    _
  $region29: #{viewpoint_forward.1} parent=0 // pred_fallthru
    _
  // Predicated region
  $region30: #{viewpoint_forward.1} parent=0 // pred_check
    _
  $region31: #{viewpoint_forward.1} parent=0 // pred_check_branch
    %41 = sbr.rel (0) target = $region33
  $region32: #{viewpoint_forward.1} parent=0 // pred_region
    _
  $region33: #{viewpoint_forward.1} parent=0 // pred_fallthru
    _
  // Predicated region
  $region34: #{viewpoint_forward.1} parent=0 // pred_check
    _
  $region35: #{viewpoint_forward.1} parent=0 // pred_check_branch
    %43 = sbr.rel (0) target = $region37
  $region36: #{viewpoint_forward.1} parent=0 // pred_region
    _
  $region37: #{viewpoint_forward.1} parent=0 // pred_fallthru
    _
  // Predicated region
  $region38: #{viewpoint_forward.1} parent=0 // pred_check
    _
  $region39: #{viewpoint_forward.1} parent=0 // pred_check_branch
    %45 = sbr.rel (0) target = $region41
  $region40: #{viewpoint_forward.1} parent=0 // pred_region
    _
  $region41: #{viewpoint_forward.1} parent=0 // pred_fallthru
    _
  // Predicated region
  $region42: #{viewpoint_forward.1} parent=0 // pred_check
    _
  $region43: #{viewpoint_forward.1} parent=0 // pred_check_branch
    %47 = sbr.rel (0) target = $region45
  $region44: #{viewpoint_forward.1} parent=0 // pred_region
    _
  $region45: #{viewpoint_forward.1} parent=0 // pred_fallthru
    _
  // Predicated region
  $region46: #{viewpoint_forward.1} parent=0 // pred_check
    _
  $region47: #{viewpoint_forward.1} parent=0 // pred_check_branch
    %49 = sbr.rel (0) target = $region49
  $region48: #{viewpoint_forward.1} parent=0 // pred_region
    _
  $region49: #{viewpoint_forward.1} parent=0 // pred_fallthru
    _
  // Predicated region
  $region50: #{viewpoint_forward.1} parent=0 // pred_check
    _
  $region51: #{viewpoint_forward.1} parent=0 // pred_check_branch
    %51 = sbr.rel (0) target = $region53
  $region52: #{viewpoint_forward.1} parent=0 // pred_region
    _
  $region53: #{viewpoint_forward.1} parent=0 // pred_fallthru
    _
  // Predicated region
  $region54: #{viewpoint_forward.1} parent=0 // pred_check
    _
  $region55: #{viewpoint_forward.1} parent=0 // pred_check_branch
    %53 = sbr.rel (0) target = $region57
  $region56: #{viewpoint_forward.1} parent=0 // pred_region
    _
  $region57: #{viewpoint_forward.1} parent=0 // pred_fallthru
    _
  // Predicated region
  $region58: #{viewpoint_forward.1} parent=0 // pred_check
    _
  $region59: #{viewpoint_forward.1} parent=0 // pred_check_branch
    %55 = sbr.rel (0) target = $region61
  $region60: #{viewpoint_forward.1} parent=0 // pred_region
    _
  $region61: #{viewpoint_forward.1} parent=0 // pred_fallthru
    _
  // Predicated region
  $region62: #{viewpoint_forward.1} parent=0 // pred_check
    _
  $region63: #{viewpoint_forward.1} parent=0 // pred_check_branch
    %57 = sbr.rel (0) target = $region65
  $region64: #{viewpoint_forward.1} parent=0 // pred_region
    _
  $region65: #{viewpoint_forward.1} parent=0 // pred_fallthru
    _
  // Predicated region
  $region66: #{viewpoint_forward.1} parent=0 // pred_check
    _
  $region67: #{viewpoint_forward.1} parent=0 // pred_check_branch
    %59 = sbr.rel (0) target = $region69
  $region68: #{viewpoint_forward.1} parent=0 // pred_region
    _
  $region69: #{viewpoint_forward.1} parent=0 // pred_fallthru
    _
  // Predicated region
  $region70: #{viewpoint_forward.1} parent=0 // pred_check
    _
  $region71: #{viewpoint_forward.1} parent=0 // pred_check_branch
    %61 = sbr.rel (0) target = $region73
  $region72: #{viewpoint_forward.1} parent=0 // pred_region
    _
  $region73: #{viewpoint_forward.1} parent=0 // pred_fallthru
    _
  // Predicated region
  $region74: #{viewpoint_forward.1} parent=0 // pred_check
    _
  $region75: #{viewpoint_forward.1} parent=0 // pred_check_branch
    %63 = sbr.rel (0) target = $region77
  $region76: #{viewpoint_forward.1} parent=0 // pred_region
    _
  $region77: #{viewpoint_forward.1} parent=0 // pred_fallthru
    _
  // Predicated region
  $region78: #{viewpoint_forward.1} parent=0 // pred_check
    _
  $region79: #{viewpoint_forward.1} parent=0 // pred_check_branch
    %65 = sbr.rel (0) target = $region81
  $region80: #{viewpoint_forward.1} parent=0 // pred_region
    _
  $region81: #{viewpoint_forward.1} parent=0 // pred_fallthru
    _
  // Predicated region
  $region82: #{viewpoint_forward.1} parent=0 // pred_check
    _
  $region83: #{viewpoint_forward.1} parent=0 // pred_check_branch
    %67 = sbr.rel (0) target = $region85
  $region84: #{viewpoint_forward.1} parent=0 // pred_region
    _
  $region85: #{viewpoint_forward.1} parent=0 // pred_fallthru
    _
  %v69 = vld [vmem:[%s8] sm:$0x7]
  %v70 = vld [vmem:[%s9] sm:$0xff]
  %v71 = vld [vmem:[%s9 + $0x8] sm:$0xff]
  %v72 = vld [vmem:[%s9 + $0x10] sm:$0xff]
  %v73 = vld [vmem:[%s9 + $0x18] sm:$0xff]
  %v74 = vld [vmem:[%s10] sm:$0x1]
  %v75 = vld [vmem:[%s2] sm:$0xff]
  %v76 = vld [vmem:[%s2 + $0x8] sm:$0x1]
  %v77 = vld [vmem:[%s3] sm:$0x1]
  %v78 = vld [vmem:[%s4] sm:$0xff]
  %v79 = vld [vmem:[%s4 + $0x8] sm:$0xff]
  %v80 = vld [vmem:[%s4 + $0x10] sm:$0xff]
  %v81 = vld [vmem:[%s4 + $0x18] sm:$0xff]
  %v82 = vld [vmem:[%s4 + $0x20] sm:$0xff]
  %v83 = vld [vmem:[%s4 + $0x28] sm:$0xff]
  %v84 = vld [vmem:[%s4 + $0x30] sm:$0xff]
  %v85 = vld [vmem:[%s4 + $0x38] sm:$0xff]
  %v86 = vld [vmem:[%s4 + $0x40] sm:$0xff]
  %v87 = vld [vmem:[%s4 + $0x48] sm:$0xff]
  %v88 = vld [vmem:[%s4 + $0x50] sm:$0xff]
  %v89 = vld [vmem:[%s4 + $0x58] sm:$0xff]
  %v90 = vld [vmem:[%s4 + $0x60] sm:$0xff]
  %v91 = vld [vmem:[%s4 + $0x68] sm:$0xff]
  %v92 = vld [vmem:[%s4 + $0x70] sm:$0xff]
  %v93 = vld [vmem:[%s4 + $0x78] sm:$0xff]
  %v94 = vld [vmem:[%s4 + $0x80] sm:$0xff]
  %v95 = vld [vmem:[%s4 + $0x88] sm:$0xff]
  %v96 = vld [vmem:[%s5] sm:$0x1]
  %v97 = vld [vmem:[%s6] sm:$0xff]
  %v98 = vld [vmem:[%s6 + $0x8] sm:$0xff]
  %v99 = vld [vmem:[%s6 + $0x10] sm:$0xff]
  %v100 = vld [vmem:[%s6 + $0x18] sm:$0xff]
  %v101 = vld [vmem:[%s6 + $0x20] sm:$0xff]
  %v102 = vld [vmem:[%s6 + $0x28] sm:$0xff]
  %v103 = vld [vmem:[%s6 + $0x30] sm:$0xff]
  %v104 = vld [vmem:[%s6 + $0x38] sm:$0xff]
  %v105 = vld [vmem:[%s6 + $0x40] sm:$0xff]
  %v106 = vld [vmem:[%s6 + $0x48] sm:$0xff]
  %v107 = vld [vmem:[%s6 + $0x50] sm:$0xff]
  %v108 = vld [vmem:[%s6 + $0x58] sm:$0xff]
  %v109 = vld [vmem:[%s6 + $0x60] sm:$0xff]
  %v110 = vld [vmem:[%s6 + $0x68] sm:$0xff]
  %v111 = vld [vmem:[%s6 + $0x70] sm:$0xff]
  %v112 = vld [vmem:[%s6 + $0x78] sm:$0xff]
  %v113 = vld [vmem:[%s6 + $0x80] sm:$0xff]
  %v114 = vld [vmem:[%s6 + $0x88] sm:$0xff]
  %v115 = vld [vmem:[%s6 + $0x90] sm:$0xff]
  %v116 = vld [vmem:[%s6 + $0x98] sm:$0xff]
  %v117 = vld [vmem:[%s6 + $0xa0] sm:$0xff]
  %v118 = vld [vmem:[%s6 + $0xa8] sm:$0xff]
  %v119 = vld [vmem:[%s6 + $0xb0] sm:$0xff]
  %v120 = vld [vmem:[%s6 + $0xb8] sm:$0xff]
  %v121 = vld [vmem:[%s6 + $0xc0] sm:$0xff]
  %v122 = vld [vmem:[%s6 + $0xc8] sm:$0xff]
  %v123 = vld [vmem:[%s6 + $0xd0] sm:$0xff]
  %v124 = vld [vmem:[%s6 + $0xd8] sm:$0xff]
  %v125 = vld [vmem:[%s6 + $0xe0] sm:$0xff]
  %v126 = vld [vmem:[%s6 + $0xe8] sm:$0xff]
  %v127 = vld [vmem:[%s6 + $0xf0] sm:$0xff]
  %v128 = vld [vmem:[%s6 + $0xf8] sm:$0xff]
  %v129 = vld [vmem:[%s6 + $0x100] sm:$0xff]
  %v130 = vld [vmem:[%s6 + $0x108] sm:$0xff]
  %v131 = vld [vmem:[%s6 + $0x110] sm:$0xff]
  %v132 = vld [vmem:[%s6 + $0x118] sm:$0xff]
  %v133 = vld [vmem:[%s6 + $0x120] sm:$0xff]
  %v134 = vld [vmem:[%s6 + $0x128] sm:$0xff]
  %v135 = vld [vmem:[%s6 + $0x130] sm:$0xff]
  %v136 = vld [vmem:[%s6 + $0x138] sm:$0xff]
  %v137 = vld [vmem:[%s6 + $0x140] sm:$0xff]
  %v138 = vld [vmem:[%s6 + $0x148] sm:$0xff]
  %v139 = vld [vmem:[%s6 + $0x150] sm:$0xff]
  %v140 = vld [vmem:[%s6 + $0x158] sm:$0xff]
  %v141 = vld [vmem:[%s6 + $0x160] sm:$0xff]
  %v142 = vld [vmem:[%s6 + $0x168] sm:$0xff]
  %v143 = vld [vmem:[%s6 + $0x170] sm:$0xff]
  %v144 = vld [vmem:[%s6 + $0x178] sm:$0xff]
  %v145 = vld [vmem:[%s6 + $0x180] sm:$0xff]
  %v146 = vld [vmem:[%s6 + $0x188] sm:$0xff]
  %v147 = vld [vmem:[%s6 + $0x190] sm:$0xff]
  %v148 = vld [vmem:[%s6 + $0x198] sm:$0xff]
  %v149 = vld [vmem:[%s6 + $0x1a0] sm:$0xff]
  %v150 = vld [vmem:[%s6 + $0x1a8] sm:$0xff]
  %v151 = vld [vmem:[%s6 + $0x1b0] sm:$0xff]
  %v152 = vld [vmem:[%s6 + $0x1b8] sm:$0xff]
  %v153 = vld [vmem:[%s6 + $0x1c0] sm:$0xff]
  %v154 = vld [vmem:[%s6 + $0x1c8] sm:$0xff]
  %v155 = vld [vmem:[%s6 + $0x1d0] sm:$0xff]
  %v156 = vld [vmem:[%s6 + $0x1d8] sm:$0xff]
  %v157 = vld [vmem:[%s6 + $0x1e0] sm:$0xff]
  %v158 = vld [vmem:[%s6 + $0x1e8] sm:$0xff]
  %v159 = vld [vmem:[%s6 + $0x1f0] sm:$0xff]
  %v160 = vld [vmem:[%s6 + $0x1f8] sm:$0xff]
  %v161 = vld [vmem:[%s7] sm:$0x1]
  %v162 = vld [vmem:[%s11] sm:$0x7]
  %v163 = vld [vmem:[%s12] sm:$0x1]
  %v164 = vld [vmem:[%s13] sm:$0xff]
  %v165 = vld [vmem:[%s13 + $0x8] sm:$0xff]
  %v166 = vld [vmem:[%s13 + $0x10] sm:$0xff]
  %v167 = vld [vmem:[%s13 + $0x18] sm:$0xff]
  %v168 = vld [vmem:[%s13 + $0x20] sm:$0xff]
  %v169 = vld [vmem:[%s13 + $0x28] sm:$0xff]
  %v170 = vld [vmem:[%s13 + $0x30] sm:$0xff]
  %v171 = vld [vmem:[%s13 + $0x38] sm:$0xff]
  %v172 = vld [vmem:[%s14] sm:$0x1]
  %v173 = vld [vmem:[%s15] sm:$0xff]
  %v174 = vld [vmem:[%s15 + $0x8] sm:$0xff]
  %v175 = vld [vmem:[%s15 + $0x10] sm:$0xff]
  %v176 = vld [vmem:[%s15 + $0x18] sm:$0xff]
  %v177 = vld [vmem:[%s16] sm:$0xff]
  %v178 = vld [vmem:[%s16 + $0x8] sm:$0xff]
  %v179 = vld [vmem:[%s16 + $0x10] sm:$0xff]
  %v180 = vld [vmem:[%s16 + $0x18] sm:$0xff]
  %v181 = vld [vmem:[%s17] sm:$0xff]
  %v182 = vld [vmem:[%s17 + $0x8] sm:$0xff]
  %v183 = vld [vmem:[%s17 + $0x10] sm:$0xff]
  %v184 = vld [vmem:[%s17 + $0x18] sm:$0xff]
  %v185 = vld [vmem:[%s18] sm:$0x1]
  %v186 = vld [vmem:[%s19] sm:$0xff]
  %v187 = vld [vmem:[%s19 + $0x8] sm:$0xff]
  %v188 = vld [vmem:[%s19 + $0x10] sm:$0xff]
  %v189 = vld [vmem:[%s19 + $0x18] sm:$0xff]
  %v190 = vld [vmem:[%s20] sm:$0x1]
  %v191 = vld [vmem:[%s0] sm:$0xff]
  %v192 = vpack.c.bf16 %v191, %v191
  %v193 = vpack.c.bf16 %v69, %v69
  %vm194 = vcmask 23552
  %v196 = vsel %vm194, %v192, 0
  %vm198 = vcmask 1040384
  %vm199 = vcmask 1041408
  %v200 = vsel %vm198, 4294967295, 65535
  %v201 = vsel %vm199, %v200, 0
  %v203 = vand.u32 %v193, %v201
  %205 = vmatpush.bf16.msra.mxu0 0
  %206 = vmatpush.bf16.msra.mxu0 0
  %207 = vmatpush.bf16.msra.mxu0 0
  %208 = vmatpush.bf16.msra.mxu0 0
  %209 = vmatpush.bf16.msra.mxu0 0
  %210 = vmatpush.bf16.msra.mxu0 0
  %211 = vmatpush.bf16.msra.mxu0 0
  %212 = vmatpush.bf16.msra.mxu0 %v203
  %213 = vmatmul.bf16.gmra.mxu0 %v196
  %v214 = vpop.f32.mrf.mxu0
  %v215 = vadd.f32 0.0, %v214
  %v216 = vpop.f32.mrf.mxu0
  %217 = vdwg.mxu0
  %v218 = vpack.c.bf16 %v71, %v70
  %v219 = vpack.c.bf16 %v73, %v72
  %vm220 = vcmask 261120
  %v222 = vsel %vm220, 0, 0
  %224 = vmatpush.bf16.msra.mxu0 0
  %225 = vmatpush.bf16.msra.mxu0 0
  %226 = vmatpush.bf16.msra.mxu0 0
  %227 = vmatpush.bf16.msra.mxu0 0
  %228 = vmatpush.bf16.msra.mxu0 0
  %229 = vmatpush.bf16.msra.mxu0 0
  %230 = vmatpush.bf16.msra.mxu0 %v219
  %231 = vmatpush.bf16.msra.mxu0 %v218
  %232 = vmatmul.bf16.gmra.mxu0 %v222
  %v233 = vpop.f32.mrf.mxu0
  %v234 = vadd.f32 0.0, %v233
  %v235 = vpop.f32.mrf.mxu0
  %236 = vdwg.mxu0
  %v237 = vadd.f32 %v215, %v234
  %v239 = vperm.slane %v74, 0
  %v241 = vadd.f32 %v237, %v239
  %v242 = vxor.u32 %v241, 2147483648
  %v243 = vmul.f32 %v242, 1.442695
  %v244 = vpow.pop %v243
  %v245 = vadd.f32 %v244, 1.0
  %v246 = vrcp.pop %v245
  %v247 = vmul.f32 %v245, %v246
  %v248 = vsub.f32 1.0, %v247
  %v249 = vmul.f32 %v246, %v248
  %v250 = vadd.f32 %v246, %v249
  %vm251 = vweird.f32 %v245
  %vm252 = vweird.f32 %v246
  %vm253 = vmor %vm251, %vm252
  %v254 = vsel %vm253, %v246, %v250
  %v255 = vand.u32 2147483647, %v245
  %vm256 = vcmp.eq.f32.partialorder %v255, 8.507059e+37
  %v257 = vand.u32 %v245, 2147483648
  %v258 = vor.u32 1.1754944e-38, %v257
  %v259 = vsel %vm256, %v258, %v254
  %v260 = vmul.f32 1.0, %v259
  %v261 = vtanh.pop %v241
  %v262 = vmul.f32 %v260, 0.0
  %264 = vrot.lane.b32.xlu0 %v261, 64
  %v265 = vpop.permute.xlu0 %264
  %v267 = vmul.f32 %v260, %v265
  %269 = vrot.lane.b32.xlu0 %v267, 32
  %v270 = vpop.permute.xlu0 %269
  %v272 = vadd.f32 %v262, %v270
  %v273 = vtanh.pop %v272
  %275 = vrot.lane.b32.xlu0 %v273, 64
  %v276 = vpop.permute.xlu0 %275
  %v278 = vmul.f32 %v260, %v276
  %v279 = vpack.c.bf16 %v278, %v278
  %281 = vrot.lane.b32.xlu0 %v279, 32
  %v282 = vpop.permute.xlu0 %281
  %v284 = vsel %vm220, %v282, 0
  %286 = vmatpush.bf16.msra.mxu0 0
  %287 = vmatpush.bf16.msra.mxu0 0
  %288 = vmatpush.bf16.msra.mxu0 0
  %289 = vmatpush.bf16.msra.mxu0 0
  %290 = vmatpush.bf16.msra.mxu0 0
  %291 = vmatpush.bf16.msra.mxu0 0
  %292 = vmatpush.bf16.msra.mxu0 %v219
  %293 = vmatpush.bf16.msra.mxu0 %v218
  %294 = vmatmul.bf16.gmra.mxu0 %v284
  %v295 = vpop.f32.mrf.mxu0
  %v296 = vadd.f32 0.0, %v295
  %v297 = vpop.f32.mrf.mxu0
  %298 = vdwg.mxu0
  %v300 = vrot.slane %v296, 6
  %v302 = vadd.f32 %v215, %v300
  %v303 = vadd.f32 %v302, %v239
  %v304 = vxor.u32 %v303, 2147483648
  %v305 = vmul.f32 %v304, 1.442695
  %v306 = vpow.pop %v305
  %v307 = vadd.f32 %v306, 1.0
  %v308 = vrcp.pop %v307
  %v309 = vmul.f32 %v307, %v308
  %v310 = vsub.f32 1.0, %v309
  %v311 = vmul.f32 %v308, %v310
  %v312 = vadd.f32 %v308, %v311
  %vm313 = vweird.f32 %v307
  %vm314 = vweird.f32 %v308
  %vm315 = vmor %vm313, %vm314
  %v316 = vsel %vm315, %v308, %v312
  %v317 = vand.u32 2147483647, %v307
  %vm318 = vcmp.eq.f32.partialorder %v317, 8.507059e+37
  %v319 = vand.u32 %v307, 2147483648
  %v320 = vor.u32 1.1754944e-38, %v319
  %v321 = vsel %vm318, %v320, %v316
  %v322 = vmul.f32 1.0, %v321
  %v323 = vtanh.pop %v303
  %v325 = vrot.slane %v272, 6
  %v327 = vmul.f32 %v322, %v325
  %329 = vrot.lane.b32.xlu0 %v323, 64
  %v330 = vpop.permute.xlu0 %329
  %v332 = vmul.f32 %v322, %v330
  %334 = vrot.lane.b32.xlu0 %v332, 32
  %v335 = vpop.permute.xlu0 %334
  %v337 = vadd.f32 %v327, %v335
  %v338 = vtanh.pop %v337
  %340 = vrot.lane.b32.xlu0 %v338, 64
  %v341 = vpop.permute.xlu0 %340
  %v343 = vmul.f32 %v322, %v341
  %v344 = vpack.c.bf16 %v343, %v343
  %v346 = vrot.slane %v344, 1
  %347 = vrot.lane.b32.xlu0 %v346, 32
  %v348 = vpop.permute.xlu0 %347
  %v350 = vsel %vm220, %v348, 0
  %352 = vmatpush.bf16.msra.mxu0 0
  %353 = vmatpush.bf16.msra.mxu0 0
  %354 = vmatpush.bf16.msra.mxu0 0
  %355 = vmatpush.bf16.msra.mxu0 0
  %356 = vmatpush.bf16.msra.mxu0 0
  %357 = vmatpush.bf16.msra.mxu0 0
  %358 = vmatpush.bf16.msra.mxu0 %v219
  %359 = vmatpush.bf16.msra.mxu0 %v218
  %360 = vmatmul.bf16.gmra.mxu0 %v350
  %v361 = vpop.f32.mrf.mxu0
  %v362 = vadd.f32 0.0, %v361
  %v363 = vpop.f32.mrf.mxu0
  %364 = vdwg.mxu0
  %v366 = vrot.slane %v362, 4
  %v368 = vadd.f32 %v215, %v366
  %v369 = vadd.f32 %v368, %v239
  %v370 = vxor.u32 %v369, 2147483648
  %v371 = vmul.f32 %v370, 1.442695
  %v372 = vpow.pop %v371
  %v373 = vadd.f32 %v372, 1.0
  %v374 = vrcp.pop %v373
  %v375 = vmul.f32 %v373, %v374
  %v376 = vsub.f32 1.0, %v375
  %v377 = vmul.f32 %v374, %v376
  %v378 = vadd.f32 %v374, %v377
  %vm379 = vweird.f32 %v373
  %vm380 = vweird.f32 %v374
  %vm381 = vmor %vm379, %vm380
  %v382 = vsel %vm381, %v374, %v378
  %v383 = vand.u32 2147483647, %v373
  %vm384 = vcmp.eq.f32.partialorder %v383, 8.507059e+37
  %v385 = vand.u32 %v373, 2147483648
  %v386 = vor.u32 1.1754944e-38, %v385
  %v387 = vsel %vm384, %v386, %v382
  %v388 = vmul.f32 1.0, %v387
  %v389 = vtanh.pop %v369
  %v391 = vrot.slane %v337, 6
  %v393 = vmul.f32 %v388, %v391
  %395 = vrot.lane.b32.xlu0 %v389, 64
  %v396 = vpop.permute.xlu0 %395
  %v398 = vmul.f32 %v388, %v396
  %400 = vrot.lane.b32.xlu0 %v398, 32
  %v401 = vpop.permute.xlu0 %400
  %v403 = vadd.f32 %v393, %v401
  %v404 = vtanh.pop %v403
  %406 = vrot.lane.b32.xlu0 %v404, 64
  %v407 = vpop.permute.xlu0 %406
  %v409 = vmul.f32 %v388, %v407
  %v410 = vpack.c.bf16 %v409, %v409
  %v412 = vrot.slane %v410, 2
  %413 = vrot.lane.b32.xlu0 %v412, 32
  %v414 = vpop.permute.xlu0 %413
  %v416 = vsel %vm220, %v414, 0
  %418 = vmatpush.bf16.msra.mxu0 0
  %419 = vmatpush.bf16.msra.mxu0 0
  %420 = vmatpush.bf16.msra.mxu0 0
  %421 = vmatpush.bf16.msra.mxu0 0
  %422 = vmatpush.bf16.msra.mxu0 0
  %423 = vmatpush.bf16.msra.mxu0 0
  %424 = vmatpush.bf16.msra.mxu0 %v219
  %425 = vmatpush.bf16.msra.mxu0 %v218
  %426 = vmatmul.bf16.gmra.mxu0 %v416
  %v427 = vpop.f32.mrf.mxu0
  %v428 = vadd.f32 0.0, %v427
  %v429 = vpop.f32.mrf.mxu0
  %430 = vdwg.mxu0
  %v432 = vrot.slane %v428, 2
  %v434 = vadd.f32 %v215, %v432
  %v435 = vadd.f32 %v434, %v239
  %v436 = vxor.u32 %v435, 2147483648
  %v437 = vmul.f32 %v436, 1.442695
  %v438 = vpow.pop %v437
  %v439 = vadd.f32 %v438, 1.0
  %v440 = vrcp.pop %v439
  %v441 = vmul.f32 %v439, %v440
  %v442 = vsub.f32 1.0, %v441
  %v443 = vmul.f32 %v440, %v442
  %v444 = vadd.f32 %v440, %v443
  %vm445 = vweird.f32 %v439
  %vm446 = vweird.f32 %v440
  %vm447 = vmor %vm445, %vm446
  %v448 = vsel %vm447, %v440, %v444
  %v449 = vand.u32 2147483647, %v439
  %vm450 = vcmp.eq.f32.partialorder %v449, 8.507059e+37
  %v451 = vand.u32 %v439, 2147483648
  %v452 = vor.u32 1.1754944e-38, %v451
  %v453 = vsel %vm450, %v452, %v448
  %v454 = vmul.f32 1.0, %v453
  %v455 = vtanh.pop %v435
  %v457 = vrot.slane %v403, 6
  %v459 = vmul.f32 %v454, %v457
  %461 = vrot.lane.b32.xlu0 %v455, 64
  %v462 = vpop.permute.xlu0 %461
  %v464 = vmul.f32 %v454, %v462
  %466 = vrot.lane.b32.xlu0 %v464, 32
  %v467 = vpop.permute.xlu0 %466
  %v469 = vadd.f32 %v459, %v467
  %v470 = vtanh.pop %v469
  %472 = vrot.lane.b32.xlu0 %v470, 64
  %v473 = vpop.permute.xlu0 %472
  %v475 = vmul.f32 %v454, %v473
  %v476 = vld [vmem:[%s1] sm:$0xff]
  %v477 = vld [vmem:[%s1 + $0x8] sm:$0xff]
  %v478 = vld [vmem:[%s1 + $0x10] sm:$0xff]
  %v479 = vld [vmem:[%s1 + $0x18] sm:$0xff]
  %v480 = vld [vmem:[%s1 + $0x20] sm:$0xff]
  %v481 = vld [vmem:[%s1 + $0x28] sm:$0xff]
  %v482 = vld [vmem:[%s1 + $0x30] sm:$0xff]
  %v483 = vld [vmem:[%s1 + $0x38] sm:$0xff]
  %v484 = vld [vmem:[%s1 + $0x40] sm:$0xff]
  %v485 = vld [vmem:[%s1 + $0x48] sm:$0xff]
  %v486 = vld [vmem:[%s1 + $0x50] sm:$0xff]
  %v487 = vld [vmem:[%s1 + $0x58] sm:$0xff]
  %v488 = vld [vmem:[%s1 + $0x60] sm:$0xff]
  %v489 = vld [vmem:[%s1 + $0x68] sm:$0xff]
  %v490 = vld [vmem:[%s1 + $0x70] sm:$0xff]
  %v491 = vld [vmem:[%s1 + $0x78] sm:$0xff]
  %v492 = vld [vmem:[%s1 + $0x80] sm:$0xff]
  %v493 = vld [vmem:[%s1 + $0x88] sm:$0xff]
  %v494 = vld [vmem:[%s1 + $0x90] sm:$0xff]
  %v495 = vld [vmem:[%s1 + $0x98] sm:$0xff]
  %v496 = vld [vmem:[%s1 + $0xa0] sm:$0xff]
  %v497 = vld [vmem:[%s1 + $0xa8] sm:$0xff]
  %v498 = vld [vmem:[%s1 + $0xb0] sm:$0xff]
  %v499 = vld [vmem:[%s1 + $0xb8] sm:$0xff]
  %v500 = vld [vmem:[%s1 + $0xc0] sm:$0xff]
  %v501 = vld [vmem:[%s1 + $0xc8] sm:$0xff]
  %v502 = vld [vmem:[%s1 + $0xd0] sm:$0xff]
  %v503 = vld [vmem:[%s1 + $0xd8] sm:$0xff]
  %v504 = vld [vmem:[%s1 + $0xe0] sm:$0xff]
  %v505 = vld [vmem:[%s1 + $0xe8] sm:$0xff]
  %v506 = vld [vmem:[%s1 + $0xf0] sm:$0xff]
  %v507 = vld [vmem:[%s1 + $0xf8] sm:$0xff]
  %v508 = vld [vmem:[%s1 + $0x100] sm:$0xff]
  %v509 = vld [vmem:[%s1 + $0x108] sm:$0xff]
  %v510 = vld [vmem:[%s1 + $0x110] sm:$0xff]
  %v511 = vld [vmem:[%s1 + $0x118] sm:$0xff]
  %v512 = vld [vmem:[%s1 + $0x120] sm:$0xff]
  %v513 = vld [vmem:[%s1 + $0x128] sm:$0xff]
  %v514 = vld [vmem:[%s1 + $0x130] sm:$0xff]
  %v515 = vld [vmem:[%s1 + $0x138] sm:$0xff]
  %v516 = vld [vmem:[%s1 + $0x140] sm:$0xff]
  %v517 = vld [vmem:[%s1 + $0x148] sm:$0xff]
  %v518 = vld [vmem:[%s1 + $0x150] sm:$0xff]
  %v519 = vld [vmem:[%s1 + $0x158] sm:$0xff]
  %v520 = vld [vmem:[%s1 + $0x160] sm:$0xff]
  %v521 = vld [vmem:[%s1 + $0x168] sm:$0xff]
  %v522 = vld [vmem:[%s1 + $0x170] sm:$0xff]
  %v523 = vld [vmem:[%s1 + $0x178] sm:$0xff]
  %v524 = vld [vmem:[%s1 + $0x180] sm:$0xff]
  %v525 = vld [vmem:[%s1 + $0x188] sm:$0xff]
  %v526 = vld [vmem:[%s1 + $0x190] sm:$0xff]
  %v527 = vld [vmem:[%s1 + $0x198] sm:$0xff]
  %v528 = vld [vmem:[%s1 + $0x1a0] sm:$0xff]
  %v529 = vld [vmem:[%s1 + $0x1a8] sm:$0xff]
  %v530 = vld [vmem:[%s1 + $0x1b0] sm:$0xff]
  %v531 = vld [vmem:[%s1 + $0x1b8] sm:$0xff]
  %v532 = vld [vmem:[%s1 + $0x1c0] sm:$0xff]
  %v533 = vld [vmem:[%s1 + $0x1c8] sm:$0xff]
  %v534 = vld [vmem:[%s1 + $0x1d0] sm:$0xff]
  %v535 = vld [vmem:[%s1 + $0x1d8] sm:$0xff]
  %v536 = vld [vmem:[%s1 + $0x1e0] sm:$0xff]
  %v537 = vld [vmem:[%s1 + $0x1e8] sm:$0xff]
  %v538 = vld [vmem:[%s1 + $0x1f0] sm:$0xff]
  %v539 = vld [vmem:[%s1 + $0x1f8] sm:$0xff]
  %v540 = vpack.c.bf16 %v477, %v476
  %v541 = vpack.c.bf16 %v479, %v478
  %v542 = vpack.c.bf16 %v481, %v480
  %v543 = vpack.c.bf16 %v483, %v482
  %v544 = vpack.c.bf16 %v485, %v484
  %v545 = vpack.c.bf16 %v487, %v486
  %v546 = vpack.c.bf16 %v489, %v488
  %v547 = vpack.c.bf16 %v491, %v490
  %v548 = vpack.c.bf16 %v493, %v492
  %v549 = vpack.c.bf16 %v495, %v494
  %v550 = vpack.c.bf16 %v497, %v496
  %v551 = vpack.c.bf16 %v499, %v498
  %v552 = vpack.c.bf16 %v501, %v500
  %v553 = vpack.c.bf16 %v503, %v502
  %v554 = vpack.c.bf16 %v505, %v504
  %v555 = vpack.c.bf16 %v507, %v506
  %v556 = vpack.c.bf16 %v509, %v508
  %v557 = vpack.c.bf16 %v511, %v510
  %v558 = vpack.c.bf16 %v513, %v512
  %v559 = vpack.c.bf16 %v515, %v514
  %v560 = vpack.c.bf16 %v517, %v516
  %v561 = vpack.c.bf16 %v519, %v518
  %v562 = vpack.c.bf16 %v521, %v520
  %v563 = vpack.c.bf16 %v523, %v522
  %v564 = vpack.c.bf16 %v525, %v524
  %v565 = vpack.c.bf16 %v527, %v526
  %v566 = vpack.c.bf16 %v529, %v528
  %v567 = vpack.c.bf16 %v531, %v530
  %v568 = vpack.c.bf16 %v533, %v532
  %v569 = vpack.c.bf16 %v535, %v534
  %v570 = vpack.c.bf16 %v537, %v536
  %v571 = vpack.c.bf16 %v539, %v538
  %v572 = vpack.c.bf16 %v76, %v75
  %v574 = vperm.slane %v77, 0
  %vm576 = vcmask 72704
  %v578 = vsel %vm576, %v540, 0
  %v581 = vsel %vm576, %v541, 0
  %v584 = vsel %vm576, %v542, 0
  %v587 = vsel %vm576, %v543, 0
  %v590 = vsel %vm576, %v544, 0
  %v593 = vsel %vm576, %v545, 0
  %v596 = vsel %vm576, %v546, 0
  %v599 = vsel %vm576, %v547, 0
  %v602 = vsel %vm576, %v548, 0
  %v605 = vsel %vm576, %v549, 0
  %v608 = vsel %vm576, %v550, 0
  %v611 = vsel %vm576, %v551, 0
  %v614 = vsel %vm576, %v552, 0
  %v617 = vsel %vm576, %v553, 0
  %v620 = vsel %vm576, %v554, 0
  %v623 = vsel %vm576, %v555, 0
  %v626 = vsel %vm576, %v556, 0
  %v629 = vsel %vm576, %v557, 0
  %v632 = vsel %vm576, %v558, 0
  %v635 = vsel %vm576, %v559, 0
  %v638 = vsel %vm576, %v560, 0
  %v641 = vsel %vm576, %v561, 0
  %v644 = vsel %vm576, %v562, 0
  %v647 = vsel %vm576, %v563, 0
  %v650 = vsel %vm576, %v564, 0
  %v653 = vsel %vm576, %v565, 0
  %v656 = vsel %vm576, %v566, 0
  %v659 = vsel %vm576, %v567, 0
  %v662 = vsel %vm576, %v568, 0
  %v665 = vsel %vm576, %v569, 0
  %v668 = vsel %vm576, %v570, 0
  %v671 = vsel %vm576, %v571, 0
  %vm673 = vcmask 1043456
  %vm674 = vcmask 1044480
  %v675 = vsel %vm673, 4294967295, 65535
  %v676 = vsel %vm674, %v675, 0
  %v678 = vand.u32 %v572, %v676
  %680 = vmatpush.bf16.msra.mxu0 0
  %681 = vmatpush.bf16.msra.mxu0 0
  %682 = vmatpush.bf16.msra.mxu0 0
  %683 = vmatpush.bf16.msra.mxu0 0
  %684 = vmatpush.bf16.msra.mxu0 0
  %685 = vmatpush.bf16.msra.mxu0 0
  %686 = vmatpush.bf16.msra.mxu0 0
  %687 = vmatpush.bf16.msra.mxu0 %v678
  %688 = vmatmul.bf16.gmra.mxu0 %v578
  %v689 = vpop.f32.mrf.mxu0
  %v690 = vadd.f32 %v574, %v689
  %v691 = vpop.f32.mrf.mxu0
  %v692 = vadd.f32 %v574, %v691
  %693 = vmatmul.bf16.gmra.mxu0 %v581
  %v694 = vpop.f32.mrf.mxu0
  %v695 = vadd.f32 %v574, %v694
  %v696 = vpop.f32.mrf.mxu0
  %v697 = vadd.f32 %v574, %v696
  %698 = vmatmul.bf16.gmra.mxu0 %v584
  %v699 = vpop.f32.mrf.mxu0
  %v700 = vadd.f32 %v574, %v699
  %v701 = vpop.f32.mrf.mxu0
  %v702 = vadd.f32 %v574, %v701
  %703 = vmatmul.bf16.gmra.mxu0 %v587
  %v704 = vpop.f32.mrf.mxu0
  %v705 = vadd.f32 %v574, %v704
  %v706 = vpop.f32.mrf.mxu0
  %v707 = vadd.f32 %v574, %v706
  %708 = vmatmul.bf16.gmra.mxu0 %v590
  %v709 = vpop.f32.mrf.mxu0
  %v710 = vadd.f32 %v574, %v709
  %v711 = vpop.f32.mrf.mxu0
  %v712 = vadd.f32 %v574, %v711
  %713 = vmatmul.bf16.gmra.mxu0 %v593
  %v714 = vpop.f32.mrf.mxu0
  %v715 = vadd.f32 %v574, %v714
  %v716 = vpop.f32.mrf.mxu0
  %v717 = vadd.f32 %v574, %v716
  %718 = vmatmul.bf16.gmra.mxu0 %v596
  %v719 = vpop.f32.mrf.mxu0
  %v720 = vadd.f32 %v574, %v719
  %v721 = vpop.f32.mrf.mxu0
  %v722 = vadd.f32 %v574, %v721
  %723 = vmatmul.bf16.gmra.mxu0 %v599
  %v724 = vpop.f32.mrf.mxu0
  %v725 = vadd.f32 %v574, %v724
  %v726 = vpop.f32.mrf.mxu0
  %v727 = vadd.f32 %v574, %v726
  %728 = vmatmul.bf16.gmra.mxu0 %v602
  %v729 = vpop.f32.mrf.mxu0
  %v730 = vadd.f32 %v574, %v729
  %v731 = vpop.f32.mrf.mxu0
  %v732 = vadd.f32 %v574, %v731
  %733 = vmatmul.bf16.gmra.mxu0 %v605
  %v734 = vpop.f32.mrf.mxu0
  %v735 = vadd.f32 %v574, %v734
  %v736 = vpop.f32.mrf.mxu0
  %v737 = vadd.f32 %v574, %v736
  %738 = vmatmul.bf16.gmra.mxu0 %v608
  %v739 = vpop.f32.mrf.mxu0
  %v740 = vadd.f32 %v574, %v739
  %v741 = vpop.f32.mrf.mxu0
  %v742 = vadd.f32 %v574, %v741
  %743 = vmatmul.bf16.gmra.mxu0 %v611
  %v744 = vpop.f32.mrf.mxu0
  %v745 = vadd.f32 %v574, %v744
  %v746 = vpop.f32.mrf.mxu0
  %v747 = vadd.f32 %v574, %v746
  %748 = vmatmul.bf16.gmra.mxu0 %v614
  %v749 = vpop.f32.mrf.mxu0
  %v750 = vadd.f32 %v574, %v749
  %v751 = vpop.f32.mrf.mxu0
  %v752 = vadd.f32 %v574, %v751
  %753 = vmatmul.bf16.gmra.mxu0 %v617
  %v754 = vpop.f32.mrf.mxu0
  %v755 = vadd.f32 %v574, %v754
  %v756 = vpop.f32.mrf.mxu0
  %v757 = vadd.f32 %v574, %v756
  %758 = vmatmul.bf16.gmra.mxu0 %v620
  %v759 = vpop.f32.mrf.mxu0
  %v760 = vadd.f32 %v574, %v759
  %v761 = vpop.f32.mrf.mxu0
  %v762 = vadd.f32 %v574, %v761
  %763 = vmatmul.bf16.gmra.mxu0 %v623
  %v764 = vpop.f32.mrf.mxu0
  %v765 = vadd.f32 %v574, %v764
  %v766 = vpop.f32.mrf.mxu0
  %v767 = vadd.f32 %v574, %v766
  %768 = vmatmul.bf16.gmra.mxu0 %v626
  %v769 = vpop.f32.mrf.mxu0
  %v770 = vadd.f32 %v574, %v769
  %v771 = vpop.f32.mrf.mxu0
  %v772 = vadd.f32 %v574, %v771
  %773 = vmatmul.bf16.gmra.mxu0 %v629
  %v774 = vpop.f32.mrf.mxu0
  %v775 = vadd.f32 %v574, %v774
  %v776 = vpop.f32.mrf.mxu0
  %v777 = vadd.f32 %v574, %v776
  %778 = vmatmul.bf16.gmra.mxu0 %v632
  %v779 = vpop.f32.mrf.mxu0
  %v780 = vadd.f32 %v574, %v779
  %v781 = vpop.f32.mrf.mxu0
  %v782 = vadd.f32 %v574, %v781
  %783 = vmatmul.bf16.gmra.mxu0 %v635
  %v784 = vpop.f32.mrf.mxu0
  %v785 = vadd.f32 %v574, %v784
  %v786 = vpop.f32.mrf.mxu0
  %v787 = vadd.f32 %v574, %v786
  %788 = vmatmul.bf16.gmra.mxu0 %v638
  %v789 = vpop.f32.mrf.mxu0
  %v790 = vadd.f32 %v574, %v789
  %v791 = vpop.f32.mrf.mxu0
  %v792 = vadd.f32 %v574, %v791
  %793 = vmatmul.bf16.gmra.mxu0 %v641
  %v794 = vpop.f32.mrf.mxu0
  %v795 = vadd.f32 %v574, %v794
  %v796 = vpop.f32.mrf.mxu0
  %v797 = vadd.f32 %v574, %v796
  %798 = vmatmul.bf16.gmra.mxu0 %v644
  %v799 = vpop.f32.mrf.mxu0
  %v800 = vadd.f32 %v574, %v799
  %v801 = vpop.f32.mrf.mxu0
  %v802 = vadd.f32 %v574, %v801
  %803 = vmatmul.bf16.gmra.mxu0 %v647
  %v804 = vpop.f32.mrf.mxu0
  %v805 = vadd.f32 %v574, %v804
  %v806 = vpop.f32.mrf.mxu0
  %v807 = vadd.f32 %v574, %v806
  %808 = vmatmul.bf16.gmra.mxu0 %v650
  %v809 = vpop.f32.mrf.mxu0
  %v810 = vadd.f32 %v574, %v809
  %v811 = vpop.f32.mrf.mxu0
  %v812 = vadd.f32 %v574, %v811
  %813 = vmatmul.bf16.gmra.mxu0 %v653
  %v814 = vpop.f32.mrf.mxu0
  %v815 = vadd.f32 %v574, %v814
  %v816 = vpop.f32.mrf.mxu0
  %v817 = vadd.f32 %v574, %v816
  %818 = vmatmul.bf16.gmra.mxu0 %v656
  %v819 = vpop.f32.mrf.mxu0
  %v820 = vadd.f32 %v574, %v819
  %v821 = vpop.f32.mrf.mxu0
  %v822 = vadd.f32 %v574, %v821
  %823 = vmatmul.bf16.gmra.mxu0 %v659
  %v824 = vpop.f32.mrf.mxu0
  %v825 = vadd.f32 %v574, %v824
  %v826 = vpop.f32.mrf.mxu0
  %v827 = vadd.f32 %v574, %v826
  %828 = vmatmul.bf16.gmra.mxu0 %v662
  %v829 = vpop.f32.mrf.mxu0
  %v830 = vadd.f32 %v574, %v829
  %v831 = vpop.f32.mrf.mxu0
  %v832 = vadd.f32 %v574, %v831
  %833 = vmatmul.bf16.gmra.mxu0 %v665
  %v834 = vpop.f32.mrf.mxu0
  %v835 = vadd.f32 %v574, %v834
  %v836 = vpop.f32.mrf.mxu0
  %v837 = vadd.f32 %v574, %v836
  %838 = vmatmul.bf16.gmra.mxu0 %v668
  %v839 = vpop.f32.mrf.mxu0
  %v840 = vadd.f32 %v574, %v839
  %v841 = vpop.f32.mrf.mxu0
  %v842 = vadd.f32 %v574, %v841
  %843 = vmatmul.bf16.gmra.mxu0 %v671
  %v844 = vpop.f32.mrf.mxu0
  %v845 = vadd.f32 %v574, %v844
  %v846 = vpop.f32.mrf.mxu0
  %v847 = vadd.f32 %v574, %v846
  %848 = vdwg.mxu0
  %v849 = vmax.f32 %v690, 0.0
  %v850 = vmax.f32 %v692, 0.0
  %v851 = vmax.f32 %v695, 0.0
  %v852 = vmax.f32 %v697, 0.0
  %v853 = vmax.f32 %v700, 0.0
  %v854 = vmax.f32 %v702, 0.0
  %v855 = vmax.f32 %v705, 0.0
  %v856 = vmax.f32 %v707, 0.0
  %v857 = vmax.f32 %v710, 0.0
  %v858 = vmax.f32 %v712, 0.0
  %v859 = vmax.f32 %v715, 0.0
  %v860 = vmax.f32 %v717, 0.0
  %v861 = vmax.f32 %v720, 0.0
  %v862 = vmax.f32 %v722, 0.0
  %v863 = vmax.f32 %v725, 0.0
  %v864 = vmax.f32 %v727, 0.0
  %v865 = vmax.f32 %v730, 0.0
  %v866 = vmax.f32 %v732, 0.0
  %v867 = vmax.f32 %v735, 0.0
  %v868 = vmax.f32 %v737, 0.0
  %v869 = vmax.f32 %v740, 0.0
  %v870 = vmax.f32 %v742, 0.0
  %v871 = vmax.f32 %v745, 0.0
  %v872 = vmax.f32 %v747, 0.0
  %v873 = vmax.f32 %v750, 0.0
  %v874 = vmax.f32 %v752, 0.0
  %v875 = vmax.f32 %v755, 0.0
  %v876 = vmax.f32 %v757, 0.0
  %v877 = vmax.f32 %v760, 0.0
  %v878 = vmax.f32 %v762, 0.0
  %v879 = vmax.f32 %v765, 0.0
  %v880 = vmax.f32 %v767, 0.0
  %v881 = vmax.f32 %v770, 0.0
  %v882 = vmax.f32 %v772, 0.0
  %v883 = vmax.f32 %v775, 0.0
  %v884 = vmax.f32 %v777, 0.0
  %v885 = vmax.f32 %v780, 0.0
  %v886 = vmax.f32 %v782, 0.0
  %v887 = vmax.f32 %v785, 0.0
  %v888 = vmax.f32 %v787, 0.0
  %v889 = vmax.f32 %v790, 0.0
  %v890 = vmax.f32 %v792, 0.0
  %v891 = vmax.f32 %v795, 0.0
  %v892 = vmax.f32 %v797, 0.0
  %v893 = vmax.f32 %v800, 0.0
  %v894 = vmax.f32 %v802, 0.0
  %v895 = vmax.f32 %v805, 0.0
  %v896 = vmax.f32 %v807, 0.0
  %v897 = vmax.f32 %v810, 0.0
  %v898 = vmax.f32 %v812, 0.0
  %v899 = vmax.f32 %v815, 0.0
  %v900 = vmax.f32 %v817, 0.0
  %v901 = vmax.f32 %v820, 0.0
  %v902 = vmax.f32 %v822, 0.0
  %v903 = vmax.f32 %v825, 0.0
  %v904 = vmax.f32 %v827, 0.0
  %v905 = vmax.f32 %v830, 0.0
  %v906 = vmax.f32 %v832, 0.0
  %v907 = vmax.f32 %v835, 0.0
  %v908 = vmax.f32 %v837, 0.0
  %v909 = vmax.f32 %v840, 0.0
  %v910 = vmax.f32 %v842, 0.0
  %v911 = vmax.f32 %v845, 0.0
  %v912 = vmax.f32 %v847, 0.0
  %vm913 = vcmask 130048
  %914 = vst.msk [vmem:[#allocation2] sm:$0xff] %vm913, %v849
  %915 = vst.msk [vmem:[#allocation2 + $0x8] sm:$0xff] %vm913, %v850
  %916 = vst.msk [vmem:[#allocation2 + $0x10] sm:$0xff] %vm913, %v851
  %917 = vst.msk [vmem:[#allocation2 + $0x18] sm:$0xff] %vm913, %v852
  %918 = vst.msk [vmem:[#allocation2 + $0x20] sm:$0xff] %vm913, %v853
  %919 = vst.msk [vmem:[#allocation2 + $0x28] sm:$0xff] %vm913, %v854
  %920 = vst.msk [vmem:[#allocation2 + $0x30] sm:$0xff] %vm913, %v855
  %921 = vst.msk [vmem:[#allocation2 + $0x38] sm:$0xff] %vm913, %v856
  %922 = vst.msk [vmem:[#allocation2 + $0x40] sm:$0xff] %vm913, %v857
  %923 = vst.msk [vmem:[#allocation2 + $0x48] sm:$0xff] %vm913, %v858
  %924 = vst.msk [vmem:[#allocation2 + $0x50] sm:$0xff] %vm913, %v859
  %925 = vst.msk [vmem:[#allocation2 + $0x58] sm:$0xff] %vm913, %v860
  %926 = vst.msk [vmem:[#allocation2 + $0x60] sm:$0xff] %vm913, %v861
  %927 = vst.msk [vmem:[#allocation2 + $0x68] sm:$0xff] %vm913, %v862
  %928 = vst.msk [vmem:[#allocation2 + $0x70] sm:$0xff] %vm913, %v863
  %929 = vst.msk [vmem:[#allocation2 + $0x78] sm:$0xff] %vm913, %v864
  %930 = vst.msk [vmem:[#allocation2 + $0x80] sm:$0xff] %vm913, %v865
  %931 = vst.msk [vmem:[#allocation2 + $0x88] sm:$0xff] %vm913, %v866
  %932 = vst.msk [vmem:[#allocation2 + $0x90] sm:$0xff] %vm913, %v867
  %933 = vst.msk [vmem:[#allocation2 + $0x98] sm:$0xff] %vm913, %v868
  %934 = vst.msk [vmem:[#allocation2 + $0xa0] sm:$0xff] %vm913, %v869
  %935 = vst.msk [vmem:[#allocation2 + $0xa8] sm:$0xff] %vm913, %v870
  %936 = vst.msk [vmem:[#allocation2 + $0xb0] sm:$0xff] %vm913, %v871
  %937 = vst.msk [vmem:[#allocation2 + $0xb8] sm:$0xff] %vm913, %v872
  %938 = vst.msk [vmem:[#allocation2 + $0xc0] sm:$0xff] %vm913, %v873
  %939 = vst.msk [vmem:[#allocation2 + $0xc8] sm:$0xff] %vm913, %v874
  %940 = vst.msk [vmem:[#allocation2 + $0xd0] sm:$0xff] %vm913, %v875
  %941 = vst.msk [vmem:[#allocation2 + $0xd8] sm:$0xff] %vm913, %v876
  %942 = vst.msk [vmem:[#allocation2 + $0xe0] sm:$0xff] %vm913, %v877
  %943 = vst.msk [vmem:[#allocation2 + $0xe8] sm:$0xff] %vm913, %v878
  %944 = vst.msk [vmem:[#allocation2 + $0xf0] sm:$0xff] %vm913, %v879
  %945 = vst.msk [vmem:[#allocation2 + $0xf8] sm:$0xff] %vm913, %v880
  %946 = vst.msk [vmem:[#allocation2 + $0x100] sm:$0xff] %vm913, %v881
  %947 = vst.msk [vmem:[#allocation2 + $0x108] sm:$0xff] %vm913, %v882
  %948 = vst.msk [vmem:[#allocation2 + $0x110] sm:$0xff] %vm913, %v883
  %949 = vst.msk [vmem:[#allocation2 + $0x118] sm:$0xff] %vm913, %v884
  %950 = vst.msk [vmem:[#allocation2 + $0x120] sm:$0xff] %vm913, %v885
  %951 = vst.msk [vmem:[#allocation2 + $0x128] sm:$0xff] %vm913, %v886
  %952 = vst.msk [vmem:[#allocation2 + $0x130] sm:$0xff] %vm913, %v887
  %953 = vst.msk [vmem:[#allocation2 + $0x138] sm:$0xff] %vm913, %v888
  %954 = vst.msk [vmem:[#allocation2 + $0x140] sm:$0xff] %vm913, %v889
  %955 = vst.msk [vmem:[#allocation2 + $0x148] sm:$0xff] %vm913, %v890
  %956 = vst.msk [vmem:[#allocation2 + $0x150] sm:$0xff] %vm913, %v891
  %957 = vst.msk [vmem:[#allocation2 + $0x158] sm:$0xff] %vm913, %v892
  %958 = vst.msk [vmem:[#allocation2 + $0x160] sm:$0xff] %vm913, %v893
  %959 = vst.msk [vmem:[#allocation2 + $0x168] sm:$0xff] %vm913, %v894
  %960 = vst.msk [vmem:[#allocation2 + $0x170] sm:$0xff] %vm913, %v895
  %961 = vst.msk [vmem:[#allocation2 + $0x178] sm:$0xff] %vm913, %v896
  %962 = vst.msk [vmem:[#allocation2 + $0x180] sm:$0xff] %vm913, %v897
  %963 = vst.msk [vmem:[#allocation2 + $0x188] sm:$0xff] %vm913, %v898
  %964 = vst.msk [vmem:[#allocation2 + $0x190] sm:$0xff] %vm913, %v899
  %965 = vst.msk [vmem:[#allocation2 + $0x198] sm:$0xff] %vm913, %v900
  %966 = vst.msk [vmem:[#allocation2 + $0x1a0] sm:$0xff] %vm913, %v901
  %967 = vst.msk [vmem:[#allocation2 + $0x1a8] sm:$0xff] %vm913, %v902
  %968 = vst.msk [vmem:[#allocation2 + $0x1b0] sm:$0xff] %vm913, %v903
  %969 = vst.msk [vmem:[#allocation2 + $0x1b8] sm:$0xff] %vm913, %v904
  %970 = vst.msk [vmem:[#allocation2 + $0x1c0] sm:$0xff] %vm913, %v905
  %971 = vst.msk [vmem:[#allocation2 + $0x1c8] sm:$0xff] %vm913, %v906
  %972 = vst.msk [vmem:[#allocation2 + $0x1d0] sm:$0xff] %vm913, %v907
  %973 = vst.msk [vmem:[#allocation2 + $0x1d8] sm:$0xff] %vm913, %v908
  %974 = vst.msk [vmem:[#allocation2 + $0x1e0] sm:$0xff] %vm913, %v909
  %975 = vst.msk [vmem:[#allocation2 + $0x1e8] sm:$0xff] %vm913, %v910
  %976 = vst.msk [vmem:[#allocation2 + $0x1f0] sm:$0xff] %vm913, %v911
  %977 = vst.msk [vmem:[#allocation2 + $0x1f8] sm:$0xff] %vm913, %v912
  %v978 = vld [vmem:[#allocation2] sm:$0xff]
  %v979 = vpack.c.bf16 %v978, %v978
  %v980 = vpack.c.bf16 %v87, %v86
  %v981 = vld [vmem:[#allocation2 + $0x8] sm:$0xff]
  %v982 = vpack.c.bf16 %v981, %v981
  %v983 = vpack.c.bf16 %v89, %v88
  %v985 = vsel %vm913, %v982, 0
  %987 = vmatpush.bf16.msra.mxu0 0
  %988 = vmatpush.bf16.msra.mxu0 0
  %989 = vmatpush.bf16.msra.mxu0 0
  %990 = vmatpush.bf16.msra.mxu0 0
  %991 = vmatpush.bf16.msra.mxu0 0
  %992 = vmatpush.bf16.msra.mxu0 0
  %993 = vmatpush.bf16.msra.mxu0 0
  %994 = vmatpush.bf16.msra.mxu0 %v983
  %995 = vmatmul.bf16.gmra.mxu0 %v985
  %v996 = vpop.f32.mrf.mxu0
  %v997 = vadd.f32 0.0, %v996
  %v998 = vpop.f32.mrf.mxu0
  %999 = vdwg.mxu0
  %v1001 = vsel %vm913, %v979, 0
  %1003 = vmatpush.bf16.msra.mxu0 0
  %1004 = vmatpush.bf16.msra.mxu0 0
  %1005 = vmatpush.bf16.msra.mxu0 0
  %1006 = vmatpush.bf16.msra.mxu0 0
  %1007 = vmatpush.bf16.msra.mxu0 0
  %1008 = vmatpush.bf16.msra.mxu0 0
  %1009 = vmatpush.bf16.msra.mxu0 0
  %1010 = vmatpush.bf16.msra.mxu0 %v980
  %1011 = vmatmul.bf16.gmra.mxu0 %v1001
  %v1012 = vpop.f32.mrf.mxu0
  %v1013 = vadd.f32 %v997, %v1012
  %v1014 = vpop.f32.mrf.mxu0
  %1015 = vdwg.mxu0
  %v1016 = vld [vmem:[#allocation2 + $0x40] sm:$0xff]
  %v1017 = vpack.c.bf16 %v1016, %v1016
  %v1018 = vpack.c.bf16 %v93, %v92
  %v1020 = vsel %vm913, %v1017, 0
  %1022 = vmatpush.bf16.msra.mxu0 0
  %1023 = vmatpush.bf16.msra.mxu0 0
  %1024 = vmatpush.bf16.msra.mxu0 0
  %1025 = vmatpush.bf16.msra.mxu0 0
  %1026 = vmatpush.bf16.msra.mxu0 0
  %1027 = vmatpush.bf16.msra.mxu0 0
  %1028 = vmatpush.bf16.msra.mxu0 0
  %1029 = vmatpush.bf16.msra.mxu0 %v1018
  %1030 = vmatmul.bf16.gmra.mxu0 %v1020
  %v1031 = vpop.f32.mrf.mxu0
  %v1032 = vadd.f32 0.0, %v1031
  %v1033 = vpop.f32.mrf.mxu0
  %1034 = vdwg.mxu0
  %v1035 = vadd.f32 %v1013, %v1032
  %v1036 = vld [vmem:[#allocation2 + $0x48] sm:$0xff]
  %v1037 = vpack.c.bf16 %v1036, %v1036
  %v1038 = vpack.c.bf16 %v95, %v94
  %v1040 = vsel %vm913, %v1037, 0
  %1042 = vmatpush.bf16.msra.mxu0 0
  %1043 = vmatpush.bf16.msra.mxu0 0
  %1044 = vmatpush.bf16.msra.mxu0 0
  %1045 = vmatpush.bf16.msra.mxu0 0
  %1046 = vmatpush.bf16.msra.mxu0 0
  %1047 = vmatpush.bf16.msra.mxu0 0
  %1048 = vmatpush.bf16.msra.mxu0 0
  %1049 = vmatpush.bf16.msra.mxu0 %v1038
  %1050 = vmatmul.bf16.gmra.mxu0 %v1040
  %v1051 = vpop.f32.mrf.mxu0
  %v1052 = vadd.f32 0.0, %v1051
  %v1053 = vpop.f32.mrf.mxu0
  %1054 = vdwg.mxu0
  %v1055 = vadd.f32 %v1035, %v1052
  %v1057 = vperm.slane %v96, 0
  %v1059 = vadd.f32 %v1055, %v1057
  %v1060 = vmax.f32 %v1059, 0.0
  %v1061 = vpack.c.bf16 %v1060, %v1060
  %v1062 = vpack.c.bf16 %v98, %v97
  %v1063 = vpack.c.bf16 %v100, %v99
  %v1064 = vpack.c.bf16 %v85, %v84
  %v1065 = vld [vmem:[#allocation2 + $0x10] sm:$0xff]
  %v1066 = vpack.c.bf16 %v1065, %v1065
  %v1068 = vsel %vm913, %v1066, 0
  %1070 = vmatpush.bf16.msra.mxu0 0
  %1071 = vmatpush.bf16.msra.mxu0 0
  %1072 = vmatpush.bf16.msra.mxu0 0
  %1073 = vmatpush.bf16.msra.mxu0 0
  %1074 = vmatpush.bf16.msra.mxu0 0
  %1075 = vmatpush.bf16.msra.mxu0 0
  %1076 = vmatpush.bf16.msra.mxu0 0
  %1077 = vmatpush.bf16.msra.mxu0 %v980
  %1078 = vmatmul.bf16.gmra.mxu0 %v1068
  %v1079 = vpop.f32.mrf.mxu0
  %v1080 = vadd.f32 0.0, %v1079
  %v1081 = vpop.f32.mrf.mxu0
  %1082 = vdwg.mxu0
  %1083 = vmatpush.bf16.msra.mxu0 0
  %1084 = vmatpush.bf16.msra.mxu0 0
  %1085 = vmatpush.bf16.msra.mxu0 0
  %1086 = vmatpush.bf16.msra.mxu0 0
  %1087 = vmatpush.bf16.msra.mxu0 0
  %1088 = vmatpush.bf16.msra.mxu0 0
  %1089 = vmatpush.bf16.msra.mxu0 0
  %1090 = vmatpush.bf16.msra.mxu0 %v1064
  %1091 = vmatmul.bf16.gmra.mxu0 %v985
  %v1092 = vpop.f32.mrf.mxu0
  %v1093 = vadd.f32 %v1080, %v1092
  %v1094 = vpop.f32.mrf.mxu0
  %1095 = vdwg.mxu0
  %v1096 = vld [vmem:[#allocation2 + $0x18] sm:$0xff]
  %v1097 = vpack.c.bf16 %v1096, %v1096
  %v1099 = vsel %vm913, %v1097, 0
  %1101 = vmatpush.bf16.msra.mxu0 0
  %1102 = vmatpush.bf16.msra.mxu0 0
  %1103 = vmatpush.bf16.msra.mxu0 0
  %1104 = vmatpush.bf16.msra.mxu0 0
  %1105 = vmatpush.bf16.msra.mxu0 0
  %1106 = vmatpush.bf16.msra.mxu0 0
  %1107 = vmatpush.bf16.msra.mxu0 0
  %1108 = vmatpush.bf16.msra.mxu0 %v983
  %1109 = vmatmul.bf16.gmra.mxu0 %v1099
  %v1110 = vpop.f32.mrf.mxu0
  %v1111 = vadd.f32 0.0, %v1110
  %v1112 = vpop.f32.mrf.mxu0
  %1113 = vdwg.mxu0
  %v1114 = vadd.f32 %v1093, %v1111
  %v1115 = vpack.c.bf16 %v91, %v90
  %1116 = vmatpush.bf16.msra.mxu0 0
  %1117 = vmatpush.bf16.msra.mxu0 0
  %1118 = vmatpush.bf16.msra.mxu0 0
  %1119 = vmatpush.bf16.msra.mxu0 0
  %1120 = vmatpush.bf16.msra.mxu0 0
  %1121 = vmatpush.bf16.msra.mxu0 0
  %1122 = vmatpush.bf16.msra.mxu0 0
  %1123 = vmatpush.bf16.msra.mxu0 %v1115
  %1124 = vmatmul.bf16.gmra.mxu0 %v1040
  %v1125 = vpop.f32.mrf.mxu0
  %v1126 = vadd.f32 0.0, %v1125
  %v1127 = vpop.f32.mrf.mxu0
  %1128 = vdwg.mxu0
  %v1129 = vadd.f32 %v1114, %v1126
  %v1130 = vld [vmem:[#allocation2 + $0x50] sm:$0xff]
  %v1131 = vpack.c.bf16 %v1130, %v1130
  %v1133 = vsel %vm913, %v1131, 0
  %1135 = vmatpush.bf16.msra.mxu0 0
  %1136 = vmatpush.bf16.msra.mxu0 0
  %1137 = vmatpush.bf16.msra.mxu0 0
  %1138 = vmatpush.bf16.msra.mxu0 0
  %1139 = vmatpush.bf16.msra.mxu0 0
  %1140 = vmatpush.bf16.msra.mxu0 0
  %1141 = vmatpush.bf16.msra.mxu0 0
  %1142 = vmatpush.bf16.msra.mxu0 %v1018
  %1143 = vmatmul.bf16.gmra.mxu0 %v1133
  %v1144 = vpop.f32.mrf.mxu0
  %v1145 = vadd.f32 0.0, %v1144
  %v1146 = vpop.f32.mrf.mxu0
  %1147 = vdwg.mxu0
  %v1148 = vadd.f32 %v1129, %v1145
  %v1149 = vld [vmem:[#allocation2 + $0x58] sm:$0xff]
  %v1150 = vpack.c.bf16 %v1149, %v1149
  %v1152 = vsel %vm913, %v1150, 0
  %1154 = vmatpush.bf16.msra.mxu0 0
  %1155 = vmatpush.bf16.msra.mxu0 0
  %1156 = vmatpush.bf16.msra.mxu0 0
  %1157 = vmatpush.bf16.msra.mxu0 0
  %1158 = vmatpush.bf16.msra.mxu0 0
  %1159 = vmatpush.bf16.msra.mxu0 0
  %1160 = vmatpush.bf16.msra.mxu0 0
  %1161 = vmatpush.bf16.msra.mxu0 %v1038
  %1162 = vmatmul.bf16.gmra.mxu0 %v1152
  %v1163 = vpop.f32.mrf.mxu0
  %v1164 = vadd.f32 0.0, %v1163
  %v1165 = vpop.f32.mrf.mxu0
  %1166 = vdwg.mxu0
  %v1167 = vadd.f32 %v1148, %v1164
  %v1168 = vadd.f32 %v1167, %v1057
  %v1169 = vmax.f32 %v1168, 0.0
  %v1170 = vpack.c.bf16 %v1169, %v1169
  %v1171 = vpack.c.bf16 %v102, %v101
  %v1172 = vpack.c.bf16 %v104, %v103
  %v1174 = vsel %vm220, %v1170, 0
  %1176 = vmatpush.bf16.msra.mxu0 0
  %1177 = vmatpush.bf16.msra.mxu0 0
  %1178 = vmatpush.bf16.msra.mxu0 0
  %1179 = vmatpush.bf16.msra.mxu0 0
  %1180 = vmatpush.bf16.msra.mxu0 0
  %1181 = vmatpush.bf16.msra.mxu0 0
  %1182 = vmatpush.bf16.msra.mxu0 %v1172
  %1183 = vmatpush.bf16.msra.mxu0 %v1171
  %1184 = vmatmul.bf16.gmra.mxu0 %v1174
  %v1185 = vpop.f32.mrf.mxu0
  %v1186 = vadd.f32 0.0, %v1185
  %v1187 = vpop.f32.mrf.mxu0
  %1188 = vdwg.mxu0
  %v1190 = vsel %vm220, %v1061, 0
  %1192 = vmatpush.bf16.msra.mxu0 0
  %1193 = vmatpush.bf16.msra.mxu0 0
  %1194 = vmatpush.bf16.msra.mxu0 0
  %1195 = vmatpush.bf16.msra.mxu0 0
  %1196 = vmatpush.bf16.msra.mxu0 0
  %1197 = vmatpush.bf16.msra.mxu0 0
  %1198 = vmatpush.bf16.msra.mxu0 %v1063
  %1199 = vmatpush.bf16.msra.mxu0 %v1062
  %1200 = vmatmul.bf16.gmra.mxu0 %v1190
  %v1201 = vpop.f32.mrf.mxu0
  %v1202 = vadd.f32 %v1186, %v1201
  %v1203 = vpop.f32.mrf.mxu0
  %1204 = vdwg.mxu0
  %v1205 = vld [vmem:[#allocation2 + $0x20] sm:$0xff]
  %v1206 = vpack.c.bf16 %v1205, %v1205
  %v1208 = vsel %vm913, %v1206, 0
  %1210 = vmatpush.bf16.msra.mxu0 0
  %1211 = vmatpush.bf16.msra.mxu0 0
  %1212 = vmatpush.bf16.msra.mxu0 0
  %1213 = vmatpush.bf16.msra.mxu0 0
  %1214 = vmatpush.bf16.msra.mxu0 0
  %1215 = vmatpush.bf16.msra.mxu0 0
  %1216 = vmatpush.bf16.msra.mxu0 0
  %1217 = vmatpush.bf16.msra.mxu0 %v980
  %1218 = vmatmul.bf16.gmra.mxu0 %v1208
  %v1219 = vpop.f32.mrf.mxu0
  %v1220 = vadd.f32 0.0, %v1219
  %v1221 = vpop.f32.mrf.mxu0
  %1222 = vdwg.mxu0
  %1223 = vmatpush.bf16.msra.mxu0 0
  %1224 = vmatpush.bf16.msra.mxu0 0
  %1225 = vmatpush.bf16.msra.mxu0 0
  %1226 = vmatpush.bf16.msra.mxu0 0
  %1227 = vmatpush.bf16.msra.mxu0 0
  %1228 = vmatpush.bf16.msra.mxu0 0
  %1229 = vmatpush.bf16.msra.mxu0 0
  %1230 = vmatpush.bf16.msra.mxu0 %v1064
  %1231 = vmatmul.bf16.gmra.mxu0 %v1099
  %v1232 = vpop.f32.mrf.mxu0
  %v1233 = vadd.f32 %v1220, %v1232
  %v1234 = vpop.f32.mrf.mxu0
  %1235 = vdwg.mxu0
  %v1236 = vld [vmem:[#allocation2 + $0x28] sm:$0xff]
  %v1237 = vpack.c.bf16 %v1236, %v1236
  %v1239 = vsel %vm913, %v1237, 0
  %1241 = vmatpush.bf16.msra.mxu0 0
  %1242 = vmatpush.bf16.msra.mxu0 0
  %1243 = vmatpush.bf16.msra.mxu0 0
  %1244 = vmatpush.bf16.msra.mxu0 0
  %1245 = vmatpush.bf16.msra.mxu0 0
  %1246 = vmatpush.bf16.msra.mxu0 0
  %1247 = vmatpush.bf16.msra.mxu0 0
  %1248 = vmatpush.bf16.msra.mxu0 %v983
  %1249 = vmatmul.bf16.gmra.mxu0 %v1239
  %v1250 = vpop.f32.mrf.mxu0
  %v1251 = vadd.f32 0.0, %v1250
  %v1252 = vpop.f32.mrf.mxu0
  %1253 = vdwg.mxu0
  %v1254 = vadd.f32 %v1233, %v1251
  %1255 = vmatpush.bf16.msra.mxu0 0
  %1256 = vmatpush.bf16.msra.mxu0 0
  %1257 = vmatpush.bf16.msra.mxu0 0
  %1258 = vmatpush.bf16.msra.mxu0 0
  %1259 = vmatpush.bf16.msra.mxu0 0
  %1260 = vmatpush.bf16.msra.mxu0 0
  %1261 = vmatpush.bf16.msra.mxu0 0
  %1262 = vmatpush.bf16.msra.mxu0 %v1115
  %1263 = vmatmul.bf16.gmra.mxu0 %v1152
  %v1264 = vpop.f32.mrf.mxu0
  %v1265 = vadd.f32 0.0, %v1264
  %v1266 = vpop.f32.mrf.mxu0
  %1267 = vdwg.mxu0
  %v1268 = vadd.f32 %v1254, %v1265
  %v1269 = vld [vmem:[#allocation2 + $0x60] sm:$0xff]
  %v1270 = vpack.c.bf16 %v1269, %v1269
  %v1272 = vsel %vm913, %v1270, 0
  %1274 = vmatpush.bf16.msra.mxu0 0
  %1275 = vmatpush.bf16.msra.mxu0 0
  %1276 = vmatpush.bf16.msra.mxu0 0
  %1277 = vmatpush.bf16.msra.mxu0 0
  %1278 = vmatpush.bf16.msra.mxu0 0
  %1279 = vmatpush.bf16.msra.mxu0 0
  %1280 = vmatpush.bf16.msra.mxu0 0
  %1281 = vmatpush.bf16.msra.mxu0 %v1018
  %1282 = vmatmul.bf16.gmra.mxu0 %v1272
  %v1283 = vpop.f32.mrf.mxu0
  %v1284 = vadd.f32 0.0, %v1283
  %v1285 = vpop.f32.mrf.mxu0
  %1286 = vdwg.mxu0
  %v1287 = vadd.f32 %v1268, %v1284
  %v1288 = vld [vmem:[#allocation2 + $0x68] sm:$0xff]
  %v1289 = vpack.c.bf16 %v1288, %v1288
  %v1291 = vsel %vm913, %v1289, 0
  %1293 = vmatpush.bf16.msra.mxu0 0
  %1294 = vmatpush.bf16.msra.mxu0 0
  %1295 = vmatpush.bf16.msra.mxu0 0
  %1296 = vmatpush.bf16.msra.mxu0 0
  %1297 = vmatpush.bf16.msra.mxu0 0
  %1298 = vmatpush.bf16.msra.mxu0 0
  %1299 = vmatpush.bf16.msra.mxu0 0
  %1300 = vmatpush.bf16.msra.mxu0 %v1038
  %1301 = vmatmul.bf16.gmra.mxu0 %v1291
  %v1302 = vpop.f32.mrf.mxu0
  %v1303 = vadd.f32 0.0, %v1302
  %v1304 = vpop.f32.mrf.mxu0
  %1305 = vdwg.mxu0
  %v1306 = vadd.f32 %v1287, %v1303
  %v1307 = vadd.f32 %v1306, %v1057
  %v1308 = vmax.f32 %v1307, 0.0
  %v1309 = vpack.c.bf16 %v1308, %v1308
  %v1310 = vpack.c.bf16 %v106, %v105
  %v1311 = vpack.c.bf16 %v108, %v107
  %v1313 = vsel %vm220, %v1309, 0
  %1315 = vmatpush.bf16.msra.mxu0 0
  %1316 = vmatpush.bf16.msra.mxu0 0
  %1317 = vmatpush.bf16.msra.mxu0 0
  %1318 = vmatpush.bf16.msra.mxu0 0
  %1319 = vmatpush.bf16.msra.mxu0 0
  %1320 = vmatpush.bf16.msra.mxu0 0
  %1321 = vmatpush.bf16.msra.mxu0 %v1311
  %1322 = vmatpush.bf16.msra.mxu0 %v1310
  %1323 = vmatmul.bf16.gmra.mxu0 %v1313
  %v1324 = vpop.f32.mrf.mxu0
  %v1325 = vadd.f32 0.0, %v1324
  %v1326 = vpop.f32.mrf.mxu0
  %1327 = vdwg.mxu0
  %v1328 = vadd.f32 %v1202, %v1325
  %v1329 = vld [vmem:[#allocation2 + $0x30] sm:$0xff]
  %v1330 = vpack.c.bf16 %v1329, %v1329
  %v1332 = vsel %vm913, %v1330, 0
  %1334 = vmatpush.bf16.msra.mxu0 0
  %1335 = vmatpush.bf16.msra.mxu0 0
  %1336 = vmatpush.bf16.msra.mxu0 0
  %1337 = vmatpush.bf16.msra.mxu0 0
  %1338 = vmatpush.bf16.msra.mxu0 0
  %1339 = vmatpush.bf16.msra.mxu0 0
  %1340 = vmatpush.bf16.msra.mxu0 0
  %1341 = vmatpush.bf16.msra.mxu0 %v980
  %1342 = vmatmul.bf16.gmra.mxu0 %v1332
  %v1343 = vpop.f32.mrf.mxu0
  %v1344 = vadd.f32 0.0, %v1343
  %v1345 = vpop.f32.mrf.mxu0
  %1346 = vdwg.mxu0
  %1347 = vmatpush.bf16.msra.mxu0 0
  %1348 = vmatpush.bf16.msra.mxu0 0
  %1349 = vmatpush.bf16.msra.mxu0 0
  %1350 = vmatpush.bf16.msra.mxu0 0
  %1351 = vmatpush.bf16.msra.mxu0 0
  %1352 = vmatpush.bf16.msra.mxu0 0
  %1353 = vmatpush.bf16.msra.mxu0 0
  %1354 = vmatpush.bf16.msra.mxu0 %v1064
  %1355 = vmatmul.bf16.gmra.mxu0 %v1239
  %v1356 = vpop.f32.mrf.mxu0
  %v1357 = vadd.f32 %v1344, %v1356
  %v1358 = vpop.f32.mrf.mxu0
  %1359 = vdwg.mxu0
  %v1360 = vld [vmem:[#allocation2 + $0x38] sm:$0xff]
  %v1361 = vpack.c.bf16 %v1360, %v1360
  %v1363 = vsel %vm913, %v1361, 0
  %1365 = vmatpush.bf16.msra.mxu0 0
  %1366 = vmatpush.bf16.msra.mxu0 0
  %1367 = vmatpush.bf16.msra.mxu0 0
  %1368 = vmatpush.bf16.msra.mxu0 0
  %1369 = vmatpush.bf16.msra.mxu0 0
  %1370 = vmatpush.bf16.msra.mxu0 0
  %1371 = vmatpush.bf16.msra.mxu0 0
  %1372 = vmatpush.bf16.msra.mxu0 %v983
  %1373 = vmatmul.bf16.gmra.mxu0 %v1363
  %v1374 = vpop.f32.mrf.mxu0
  %v1375 = vadd.f32 0.0, %v1374
  %v1376 = vpop.f32.mrf.mxu0
  %1377 = vdwg.mxu0
  %v1378 = vadd.f32 %v1357, %v1375
  %1379 = vmatpush.bf16.msra.mxu0 0
  %1380 = vmatpush.bf16.msra.mxu0 0
  %1381 = vmatpush.bf16.msra.mxu0 0
  %1382 = vmatpush.bf16.msra.mxu0 0
  %1383 = vmatpush.bf16.msra.mxu0 0
  %1384 = vmatpush.bf16.msra.mxu0 0
  %1385 = vmatpush.bf16.msra.mxu0 0
  %1386 = vmatpush.bf16.msra.mxu0 %v1115
  %1387 = vmatmul.bf16.gmra.mxu0 %v1291
  %v1388 = vpop.f32.mrf.mxu0
  %v1389 = vadd.f32 0.0, %v1388
  %v1390 = vpop.f32.mrf.mxu0
  %1391 = vdwg.mxu0
  %v1392 = vadd.f32 %v1378, %v1389
  %v1393 = vld [vmem:[#allocation2 + $0x70] sm:$0xff]
  %v1394 = vpack.c.bf16 %v1393, %v1393
  %v1396 = vsel %vm913, %v1394, 0
  %1398 = vmatpush.bf16.msra.mxu0 0
  %1399 = vmatpush.bf16.msra.mxu0 0
  %1400 = vmatpush.bf16.msra.mxu0 0
  %1401 = vmatpush.bf16.msra.mxu0 0
  %1402 = vmatpush.bf16.msra.mxu0 0
  %1403 = vmatpush.bf16.msra.mxu0 0
  %1404 = vmatpush.bf16.msra.mxu0 0
  %1405 = vmatpush.bf16.msra.mxu0 %v1018
  %1406 = vmatmul.bf16.gmra.mxu0 %v1396
  %v1407 = vpop.f32.mrf.mxu0
  %v1408 = vadd.f32 0.0, %v1407
  %v1409 = vpop.f32.mrf.mxu0
  %1410 = vdwg.mxu0
  %v1411 = vadd.f32 %v1392, %v1408
  %v1412 = vld [vmem:[#allocation2 + $0x78] sm:$0xff]
  %v1413 = vpack.c.bf16 %v1412, %v1412
  %v1415 = vsel %vm913, %v1413, 0
  %1417 = vmatpush.bf16.msra.mxu0 0
  %1418 = vmatpush.bf16.msra.mxu0 0
  %1419 = vmatpush.bf16.msra.mxu0 0
  %1420 = vmatpush.bf16.msra.mxu0 0
  %1421 = vmatpush.bf16.msra.mxu0 0
  %1422 = vmatpush.bf16.msra.mxu0 0
  %1423 = vmatpush.bf16.msra.mxu0 0
  %1424 = vmatpush.bf16.msra.mxu0 %v1038
  %1425 = vmatmul.bf16.gmra.mxu0 %v1415
  %v1426 = vpop.f32.mrf.mxu0
  %v1427 = vadd.f32 0.0, %v1426
  %v1428 = vpop.f32.mrf.mxu0
  %1429 = vdwg.mxu0
  %v1430 = vadd.f32 %v1411, %v1427
  %v1431 = vadd.f32 %v1430, %v1057
  %v1432 = vmax.f32 %v1431, 0.0
  %v1433 = vpack.c.bf16 %v1432, %v1432
  %v1434 = vpack.c.bf16 %v110, %v109
  %v1435 = vpack.c.bf16 %v112, %v111
  %v1437 = vsel %vm220, %v1433, 0
  %1439 = vmatpush.bf16.msra.mxu0 0
  %1440 = vmatpush.bf16.msra.mxu0 0
  %1441 = vmatpush.bf16.msra.mxu0 0
  %1442 = vmatpush.bf16.msra.mxu0 0
  %1443 = vmatpush.bf16.msra.mxu0 0
  %1444 = vmatpush.bf16.msra.mxu0 0
  %1445 = vmatpush.bf16.msra.mxu0 %v1435
  %1446 = vmatpush.bf16.msra.mxu0 %v1434
  %1447 = vmatmul.bf16.gmra.mxu0 %v1437
  %v1448 = vpop.f32.mrf.mxu0
  %v1449 = vadd.f32 0.0, %v1448
  %v1450 = vpop.f32.mrf.mxu0
  %1451 = vdwg.mxu0
  %v1452 = vadd.f32 %v1328, %v1449
  %v1453 = vpack.c.bf16 %v81, %v80
  %v1454 = vpack.c.bf16 %v83, %v82
  %1455 = vmatpush.bf16.msra.mxu0 0
  %1456 = vmatpush.bf16.msra.mxu0 0
  %1457 = vmatpush.bf16.msra.mxu0 0
  %1458 = vmatpush.bf16.msra.mxu0 0
  %1459 = vmatpush.bf16.msra.mxu0 0
  %1460 = vmatpush.bf16.msra.mxu0 0
  %1461 = vmatpush.bf16.msra.mxu0 0
  %1462 = vmatpush.bf16.msra.mxu0 %v1454
  %1463 = vmatmul.bf16.gmra.mxu0 %v1040
  %v1464 = vpop.f32.mrf.mxu0
  %v1465 = vadd.f32 0.0, %v1464
  %v1466 = vpop.f32.mrf.mxu0
  %1467 = vdwg.mxu0
  %1468 = vmatpush.bf16.msra.mxu0 0
  %1469 = vmatpush.bf16.msra.mxu0 0
  %1470 = vmatpush.bf16.msra.mxu0 0
  %1471 = vmatpush.bf16.msra.mxu0 0
  %1472 = vmatpush.bf16.msra.mxu0 0
  %1473 = vmatpush.bf16.msra.mxu0 0
  %1474 = vmatpush.bf16.msra.mxu0 0
  %1475 = vmatpush.bf16.msra.mxu0 %v1453
  %1476 = vmatmul.bf16.gmra.mxu0 %v1020
  %v1477 = vpop.f32.mrf.mxu0
  %v1478 = vadd.f32 %v1465, %v1477
  %v1479 = vpop.f32.mrf.mxu0
  %1480 = vdwg.mxu0
  %v1481 = vld [vmem:[#allocation2 + $0x80] sm:$0xff]
  %v1482 = vpack.c.bf16 %v1481, %v1481
  %v1484 = vsel %vm913, %v1482, 0
  %1486 = vmatpush.bf16.msra.mxu0 0
  %1487 = vmatpush.bf16.msra.mxu0 0
  %1488 = vmatpush.bf16.msra.mxu0 0
  %1489 = vmatpush.bf16.msra.mxu0 0
  %1490 = vmatpush.bf16.msra.mxu0 0
  %1491 = vmatpush.bf16.msra.mxu0 0
  %1492 = vmatpush.bf16.msra.mxu0 0
  %1493 = vmatpush.bf16.msra.mxu0 %v980
  %1494 = vmatmul.bf16.gmra.mxu0 %v1484
  %v1495 = vpop.f32.mrf.mxu0
  %v1496 = vadd.f32 0.0, %v1495
  %v1497 = vpop.f32.mrf.mxu0
  %1498 = vdwg.mxu0
  %v1499 = vadd.f32 %v1478, %v1496
  %v1500 = vld [vmem:[#allocation2 + $0x88] sm:$0xff]
  %v1501 = vpack.c.bf16 %v1500, %v1500
  %v1503 = vsel %vm913, %v1501, 0
  %1505 = vmatpush.bf16.msra.mxu0 0
  %1506 = vmatpush.bf16.msra.mxu0 0
  %1507 = vmatpush.bf16.msra.mxu0 0
  %1508 = vmatpush.bf16.msra.mxu0 0
  %1509 = vmatpush.bf16.msra.mxu0 0
  %1510 = vmatpush.bf16.msra.mxu0 0
  %1511 = vmatpush.bf16.msra.mxu0 0
  %1512 = vmatpush.bf16.msra.mxu0 %v983
  %1513 = vmatmul.bf16.gmra.mxu0 %v1503
  %v1514 = vpop.f32.mrf.mxu0
  %v1515 = vadd.f32 0.0, %v1514
  %v1516 = vpop.f32.mrf.mxu0
  %1517 = vdwg.mxu0
  %v1518 = vadd.f32 %v1499, %v1515
  %v1519 = vld [vmem:[#allocation2 + $0xc0] sm:$0xff]
  %v1520 = vpack.c.bf16 %v1519, %v1519
  %v1522 = vsel %vm913, %v1520, 0
  %1524 = vmatpush.bf16.msra.mxu0 0
  %1525 = vmatpush.bf16.msra.mxu0 0
  %1526 = vmatpush.bf16.msra.mxu0 0
  %1527 = vmatpush.bf16.msra.mxu0 0
  %1528 = vmatpush.bf16.msra.mxu0 0
  %1529 = vmatpush.bf16.msra.mxu0 0
  %1530 = vmatpush.bf16.msra.mxu0 0
  %1531 = vmatpush.bf16.msra.mxu0 %v1018
  %1532 = vmatmul.bf16.gmra.mxu0 %v1522
  %v1533 = vpop.f32.mrf.mxu0
  %v1534 = vadd.f32 0.0, %v1533
  %v1535 = vpop.f32.mrf.mxu0
  %1536 = vdwg.mxu0
  %v1537 = vadd.f32 %v1518, %v1534
  %v1538 = vld [vmem:[#allocation2 + $0xc8] sm:$0xff]
  %v1539 = vpack.c.bf16 %v1538, %v1538
  %v1541 = vsel %vm913, %v1539, 0
  %1543 = vmatpush.bf16.msra.mxu0 0
  %1544 = vmatpush.bf16.msra.mxu0 0
  %1545 = vmatpush.bf16.msra.mxu0 0
  %1546 = vmatpush.bf16.msra.mxu0 0
  %1547 = vmatpush.bf16.msra.mxu0 0
  %1548 = vmatpush.bf16.msra.mxu0 0
  %1549 = vmatpush.bf16.msra.mxu0 0
  %1550 = vmatpush.bf16.msra.mxu0 %v1038
  %1551 = vmatmul.bf16.gmra.mxu0 %v1541
  %v1552 = vpop.f32.mrf.mxu0
  %v1553 = vadd.f32 0.0, %v1552
  %v1554 = vpop.f32.mrf.mxu0
  %1555 = vdwg.mxu0
  %v1556 = vadd.f32 %v1537, %v1553
  %v1557 = vadd.f32 %v1556, %v1057
  %v1558 = vmax.f32 %v1557, 0.0
  %v1559 = vpack.c.bf16 %v1558, %v1558
  %v1560 = vpack.c.bf16 %v114, %v113
  %v1561 = vpack.c.bf16 %v116, %v115
  %v1563 = vsel %vm220, %v1559, 0
  %1565 = vmatpush.bf16.msra.mxu0 0
  %1566 = vmatpush.bf16.msra.mxu0 0
  %1567 = vmatpush.bf16.msra.mxu0 0
  %1568 = vmatpush.bf16.msra.mxu0 0
  %1569 = vmatpush.bf16.msra.mxu0 0
  %1570 = vmatpush.bf16.msra.mxu0 0
  %1571 = vmatpush.bf16.msra.mxu0 %v1561
  %1572 = vmatpush.bf16.msra.mxu0 %v1560
  %1573 = vmatmul.bf16.gmra.mxu0 %v1563
  %v1574 = vpop.f32.mrf.mxu0
  %v1575 = vadd.f32 0.0, %v1574
  %v1576 = vpop.f32.mrf.mxu0
  %1577 = vdwg.mxu0
  %v1578 = vadd.f32 %v1452, %v1575
  %v1579 = vpack.c.bf16 %v79, %v78
  %1580 = vmatpush.bf16.msra.mxu0 0
  %1581 = vmatpush.bf16.msra.mxu0 0
  %1582 = vmatpush.bf16.msra.mxu0 0
  %1583 = vmatpush.bf16.msra.mxu0 0
  %1584 = vmatpush.bf16.msra.mxu0 0
  %1585 = vmatpush.bf16.msra.mxu0 0
  %1586 = vmatpush.bf16.msra.mxu0 0
  %1587 = vmatpush.bf16.msra.mxu0 %v1453
  %1588 = vmatmul.bf16.gmra.mxu0 %v1133
  %v1589 = vpop.f32.mrf.mxu0
  %v1590 = vadd.f32 0.0, %v1589
  %v1591 = vpop.f32.mrf.mxu0
  %1592 = vdwg.mxu0
  %1593 = vmatpush.bf16.msra.mxu0 0
  %1594 = vmatpush.bf16.msra.mxu0 0
  %1595 = vmatpush.bf16.msra.mxu0 0
  %1596 = vmatpush.bf16.msra.mxu0 0
  %1597 = vmatpush.bf16.msra.mxu0 0
  %1598 = vmatpush.bf16.msra.mxu0 0
  %1599 = vmatpush.bf16.msra.mxu0 0
  %1600 = vmatpush.bf16.msra.mxu0 %v1579
  %1601 = vmatmul.bf16.gmra.mxu0 %v1040
  %v1602 = vpop.f32.mrf.mxu0
  %v1603 = vadd.f32 %v1590, %v1602
  %v1604 = vpop.f32.mrf.mxu0
  %1605 = vdwg.mxu0
  %1606 = vmatpush.bf16.msra.mxu0 0
  %1607 = vmatpush.bf16.msra.mxu0 0
  %1608 = vmatpush.bf16.msra.mxu0 0
  %1609 = vmatpush.bf16.msra.mxu0 0
  %1610 = vmatpush.bf16.msra.mxu0 0
  %1611 = vmatpush.bf16.msra.mxu0 0
  %1612 = vmatpush.bf16.msra.mxu0 0
  %1613 = vmatpush.bf16.msra.mxu0 %v1454
  %1614 = vmatmul.bf16.gmra.mxu0 %v1152
  %v1615 = vpop.f32.mrf.mxu0
  %v1616 = vadd.f32 0.0, %v1615
  %v1617 = vpop.f32.mrf.mxu0
  %1618 = vdwg.mxu0
  %v1619 = vadd.f32 %v1603, %v1616
  %1620 = vmatpush.bf16.msra.mxu0 0
  %1621 = vmatpush.bf16.msra.mxu0 0
  %1622 = vmatpush.bf16.msra.mxu0 0
  %1623 = vmatpush.bf16.msra.mxu0 0
  %1624 = vmatpush.bf16.msra.mxu0 0
  %1625 = vmatpush.bf16.msra.mxu0 0
  %1626 = vmatpush.bf16.msra.mxu0 0
  %1627 = vmatpush.bf16.msra.mxu0 %v1064
  %1628 = vmatmul.bf16.gmra.mxu0 %v1503
  %v1629 = vpop.f32.mrf.mxu0
  %v1630 = vadd.f32 0.0, %v1629
  %v1631 = vpop.f32.mrf.mxu0
  %1632 = vdwg.mxu0
  %v1633 = vadd.f32 %v1619, %v1630
  %v1634 = vld [vmem:[#allocation2 + $0x90] sm:$0xff]
  %v1635 = vpack.c.bf16 %v1634, %v1634
  %v1637 = vsel %vm913, %v1635, 0
  %1639 = vmatpush.bf16.msra.mxu0 0
  %1640 = vmatpush.bf16.msra.mxu0 0
  %1641 = vmatpush.bf16.msra.mxu0 0
  %1642 = vmatpush.bf16.msra.mxu0 0
  %1643 = vmatpush.bf16.msra.mxu0 0
  %1644 = vmatpush.bf16.msra.mxu0 0
  %1645 = vmatpush.bf16.msra.mxu0 0
  %1646 = vmatpush.bf16.msra.mxu0 %v980
  %1647 = vmatmul.bf16.gmra.mxu0 %v1637
  %v1648 = vpop.f32.mrf.mxu0
  %v1649 = vadd.f32 0.0, %v1648
  %v1650 = vpop.f32.mrf.mxu0
  %1651 = vdwg.mxu0
  %v1652 = vadd.f32 %v1633, %v1649
  %v1653 = vld [vmem:[#allocation2 + $0x98] sm:$0xff]
  %v1654 = vpack.c.bf16 %v1653, %v1653
  %v1656 = vsel %vm913, %v1654, 0
  %1658 = vmatpush.bf16.msra.mxu0 0
  %1659 = vmatpush.bf16.msra.mxu0 0
  %1660 = vmatpush.bf16.msra.mxu0 0
  %1661 = vmatpush.bf16.msra.mxu0 0
  %1662 = vmatpush.bf16.msra.mxu0 0
  %1663 = vmatpush.bf16.msra.mxu0 0
  %1664 = vmatpush.bf16.msra.mxu0 0
  %1665 = vmatpush.bf16.msra.mxu0 %v983
  %1666 = vmatmul.bf16.gmra.mxu0 %v1656
  %v1667 = vpop.f32.mrf.mxu0
  %v1668 = vadd.f32 0.0, %v1667
  %v1669 = vpop.f32.mrf.mxu0
  %1670 = vdwg.mxu0
  %v1671 = vadd.f32 %v1652, %v1668
  %1672 = vmatpush.bf16.msra.mxu0 0
  %1673 = vmatpush.bf16.msra.mxu0 0
  %1674 = vmatpush.bf16.msra.mxu0 0
  %1675 = vmatpush.bf16.msra.mxu0 0
  %1676 = vmatpush.bf16.msra.mxu0 0
  %1677 = vmatpush.bf16.msra.mxu0 0
  %1678 = vmatpush.bf16.msra.mxu0 0
  %1679 = vmatpush.bf16.msra.mxu0 %v1115
  %1680 = vmatmul.bf16.gmra.mxu0 %v1541
  %v1681 = vpop.f32.mrf.mxu0
  %v1682 = vadd.f32 0.0, %v1681
  %v1683 = vpop.f32.mrf.mxu0
  %1684 = vdwg.mxu0
  %v1685 = vadd.f32 %v1671, %v1682
  %v1686 = vld [vmem:[#allocation2 + $0xd0] sm:$0xff]
  %v1687 = vpack.c.bf16 %v1686, %v1686
  %v1689 = vsel %vm913, %v1687, 0
  %1691 = vmatpush.bf16.msra.mxu0 0
  %1692 = vmatpush.bf16.msra.mxu0 0
  %1693 = vmatpush.bf16.msra.mxu0 0
  %1694 = vmatpush.bf16.msra.mxu0 0
  %1695 = vmatpush.bf16.msra.mxu0 0
  %1696 = vmatpush.bf16.msra.mxu0 0
  %1697 = vmatpush.bf16.msra.mxu0 0
  %1698 = vmatpush.bf16.msra.mxu0 %v1018
  %1699 = vmatmul.bf16.gmra.mxu0 %v1689
  %v1700 = vpop.f32.mrf.mxu0
  %v1701 = vadd.f32 0.0, %v1700
  %v1702 = vpop.f32.mrf.mxu0
  %1703 = vdwg.mxu0
  %v1704 = vadd.f32 %v1685, %v1701
  %v1705 = vld [vmem:[#allocation2 + $0xd8] sm:$0xff]
  %v1706 = vpack.c.bf16 %v1705, %v1705
  %v1708 = vsel %vm913, %v1706, 0
  %1710 = vmatpush.bf16.msra.mxu0 0
  %1711 = vmatpush.bf16.msra.mxu0 0
  %1712 = vmatpush.bf16.msra.mxu0 0
  %1713 = vmatpush.bf16.msra.mxu0 0
  %1714 = vmatpush.bf16.msra.mxu0 0
  %1715 = vmatpush.bf16.msra.mxu0 0
  %1716 = vmatpush.bf16.msra.mxu0 0
  %1717 = vmatpush.bf16.msra.mxu0 %v1038
  %1718 = vmatmul.bf16.gmra.mxu0 %v1708
  %v1719 = vpop.f32.mrf.mxu0
  %v1720 = vadd.f32 0.0, %v1719
  %v1721 = vpop.f32.mrf.mxu0
  %1722 = vdwg.mxu0
  %v1723 = vadd.f32 %v1704, %v1720
  %v1724 = vadd.f32 %v1723, %v1057
  %v1725 = vmax.f32 %v1724, 0.0
  %v1726 = vpack.c.bf16 %v1725, %v1725
  %v1727 = vpack.c.bf16 %v118, %v117
  %v1728 = vpack.c.bf16 %v120, %v119
  %v1730 = vsel %vm220, %v1726, 0
  %1732 = vmatpush.bf16.msra.mxu0 0
  %1733 = vmatpush.bf16.msra.mxu0 0
  %1734 = vmatpush.bf16.msra.mxu0 0
  %1735 = vmatpush.bf16.msra.mxu0 0
  %1736 = vmatpush.bf16.msra.mxu0 0
  %1737 = vmatpush.bf16.msra.mxu0 0
  %1738 = vmatpush.bf16.msra.mxu0 %v1728
  %1739 = vmatpush.bf16.msra.mxu0 %v1727
  %1740 = vmatmul.bf16.gmra.mxu0 %v1730
  %v1741 = vpop.f32.mrf.mxu0
  %v1742 = vadd.f32 0.0, %v1741
  %v1743 = vpop.f32.mrf.mxu0
  %1744 = vdwg.mxu0
  %v1745 = vadd.f32 %v1578, %v1742
  %1746 = vmatpush.bf16.msra.mxu0 0
  %1747 = vmatpush.bf16.msra.mxu0 0
  %1748 = vmatpush.bf16.msra.mxu0 0
  %1749 = vmatpush.bf16.msra.mxu0 0
  %1750 = vmatpush.bf16.msra.mxu0 0
  %1751 = vmatpush.bf16.msra.mxu0 0
  %1752 = vmatpush.bf16.msra.mxu0 0
  %1753 = vmatpush.bf16.msra.mxu0 %v1453
  %1754 = vmatmul.bf16.gmra.mxu0 %v1272
  %v1755 = vpop.f32.mrf.mxu0
  %v1756 = vadd.f32 0.0, %v1755
  %v1757 = vpop.f32.mrf.mxu0
  %1758 = vdwg.mxu0
  %1759 = vmatpush.bf16.msra.mxu0 0
  %1760 = vmatpush.bf16.msra.mxu0 0
  %1761 = vmatpush.bf16.msra.mxu0 0
  %1762 = vmatpush.bf16.msra.mxu0 0
  %1763 = vmatpush.bf16.msra.mxu0 0
  %1764 = vmatpush.bf16.msra.mxu0 0
  %1765 = vmatpush.bf16.msra.mxu0 0
  %1766 = vmatpush.bf16.msra.mxu0 %v1579
  %1767 = vmatmul.bf16.gmra.mxu0 %v1152
  %v1768 = vpop.f32.mrf.mxu0
  %v1769 = vadd.f32 %v1756, %v1768
  %v1770 = vpop.f32.mrf.mxu0
  %1771 = vdwg.mxu0
  %1772 = vmatpush.bf16.msra.mxu0 0
  %1773 = vmatpush.bf16.msra.mxu0 0
  %1774 = vmatpush.bf16.msra.mxu0 0
  %1775 = vmatpush.bf16.msra.mxu0 0
  %1776 = vmatpush.bf16.msra.mxu0 0
  %1777 = vmatpush.bf16.msra.mxu0 0
  %1778 = vmatpush.bf16.msra.mxu0 0
  %1779 = vmatpush.bf16.msra.mxu0 %v1454
  %1780 = vmatmul.bf16.gmra.mxu0 %v1291
  %v1781 = vpop.f32.mrf.mxu0
  %v1782 = vadd.f32 0.0, %v1781
  %v1783 = vpop.f32.mrf.mxu0
  %1784 = vdwg.mxu0
  %v1785 = vadd.f32 %v1769, %v1782
  %1786 = vmatpush.bf16.msra.mxu0 0
  %1787 = vmatpush.bf16.msra.mxu0 0
  %1788 = vmatpush.bf16.msra.mxu0 0
  %1789 = vmatpush.bf16.msra.mxu0 0
  %1790 = vmatpush.bf16.msra.mxu0 0
  %1791 = vmatpush.bf16.msra.mxu0 0
  %1792 = vmatpush.bf16.msra.mxu0 0
  %1793 = vmatpush.bf16.msra.mxu0 %v1064
  %1794 = vmatmul.bf16.gmra.mxu0 %v1656
  %v1795 = vpop.f32.mrf.mxu0
  %v1796 = vadd.f32 0.0, %v1795
  %v1797 = vpop.f32.mrf.mxu0
  %1798 = vdwg.mxu0
  %v1799 = vadd.f32 %v1785, %v1796
  %v1800 = vld [vmem:[#allocation2 + $0xa0] sm:$0xff]
  %v1801 = vpack.c.bf16 %v1800, %v1800
  %v1803 = vsel %vm913, %v1801, 0
  %1805 = vmatpush.bf16.msra.mxu0 0
  %1806 = vmatpush.bf16.msra.mxu0 0
  %1807 = vmatpush.bf16.msra.mxu0 0
  %1808 = vmatpush.bf16.msra.mxu0 0
  %1809 = vmatpush.bf16.msra.mxu0 0
  %1810 = vmatpush.bf16.msra.mxu0 0
  %1811 = vmatpush.bf16.msra.mxu0 0
  %1812 = vmatpush.bf16.msra.mxu0 %v980
  %1813 = vmatmul.bf16.gmra.mxu0 %v1803
  %v1814 = vpop.f32.mrf.mxu0
  %v1815 = vadd.f32 0.0, %v1814
  %v1816 = vpop.f32.mrf.mxu0
  %1817 = vdwg.mxu0
  %v1818 = vadd.f32 %v1799, %v1815
  %v1819 = vld [vmem:[#allocation2 + $0xa8] sm:$0xff]
  %v1820 = vpack.c.bf16 %v1819, %v1819
  %v1822 = vsel %vm913, %v1820, 0
  %1824 = vmatpush.bf16.msra.mxu0 0
  %1825 = vmatpush.bf16.msra.mxu0 0
  %1826 = vmatpush.bf16.msra.mxu0 0
  %1827 = vmatpush.bf16.msra.mxu0 0
  %1828 = vmatpush.bf16.msra.mxu0 0
  %1829 = vmatpush.bf16.msra.mxu0 0
  %1830 = vmatpush.bf16.msra.mxu0 0
  %1831 = vmatpush.bf16.msra.mxu0 %v983
  %1832 = vmatmul.bf16.gmra.mxu0 %v1822
  %v1833 = vpop.f32.mrf.mxu0
  %v1834 = vadd.f32 0.0, %v1833
  %v1835 = vpop.f32.mrf.mxu0
  %1836 = vdwg.mxu0
  %v1837 = vadd.f32 %v1818, %v1834
  %1838 = vmatpush.bf16.msra.mxu0 0
  %1839 = vmatpush.bf16.msra.mxu0 0
  %1840 = vmatpush.bf16.msra.mxu0 0
  %1841 = vmatpush.bf16.msra.mxu0 0
  %1842 = vmatpush.bf16.msra.mxu0 0
  %1843 = vmatpush.bf16.msra.mxu0 0
  %1844 = vmatpush.bf16.msra.mxu0 0
  %1845 = vmatpush.bf16.msra.mxu0 %v1115
  %1846 = vmatmul.bf16.gmra.mxu0 %v1708
  %v1847 = vpop.f32.mrf.mxu0
  %v1848 = vadd.f32 0.0, %v1847
  %v1849 = vpop.f32.mrf.mxu0
  %1850 = vdwg.mxu0
  %v1851 = vadd.f32 %v1837, %v1848
  %v1852 = vld [vmem:[#allocation2 + $0xe0] sm:$0xff]
  %v1853 = vpack.c.bf16 %v1852, %v1852
  %v1855 = vsel %vm913, %v1853, 0
  %1857 = vmatpush.bf16.msra.mxu0 0
  %1858 = vmatpush.bf16.msra.mxu0 0
  %1859 = vmatpush.bf16.msra.mxu0 0
  %1860 = vmatpush.bf16.msra.mxu0 0
  %1861 = vmatpush.bf16.msra.mxu0 0
  %1862 = vmatpush.bf16.msra.mxu0 0
  %1863 = vmatpush.bf16.msra.mxu0 0
  %1864 = vmatpush.bf16.msra.mxu0 %v1018
  %1865 = vmatmul.bf16.gmra.mxu0 %v1855
  %v1866 = vpop.f32.mrf.mxu0
  %v1867 = vadd.f32 0.0, %v1866
  %v1868 = vpop.f32.mrf.mxu0
  %1869 = vdwg.mxu0
  %v1870 = vadd.f32 %v1851, %v1867
  %v1871 = vld [vmem:[#allocation2 + $0xe8] sm:$0xff]
  %v1872 = vpack.c.bf16 %v1871, %v1871
  %v1874 = vsel %vm913, %v1872, 0
  %1876 = vmatpush.bf16.msra.mxu0 0
  %1877 = vmatpush.bf16.msra.mxu0 0
  %1878 = vmatpush.bf16.msra.mxu0 0
  %1879 = vmatpush.bf16.msra.mxu0 0
  %1880 = vmatpush.bf16.msra.mxu0 0
  %1881 = vmatpush.bf16.msra.mxu0 0
  %1882 = vmatpush.bf16.msra.mxu0 0
  %1883 = vmatpush.bf16.msra.mxu0 %v1038
  %1884 = vmatmul.bf16.gmra.mxu0 %v1874
  %v1885 = vpop.f32.mrf.mxu0
  %v1886 = vadd.f32 0.0, %v1885
  %v1887 = vpop.f32.mrf.mxu0
  %1888 = vdwg.mxu0
  %v1889 = vadd.f32 %v1870, %v1886
  %v1890 = vadd.f32 %v1889, %v1057
  %v1891 = vmax.f32 %v1890, 0.0
  %v1892 = vpack.c.bf16 %v1891, %v1891
  %v1893 = vpack.c.bf16 %v122, %v121
  %v1894 = vpack.c.bf16 %v124, %v123
  %v1896 = vsel %vm220, %v1892, 0
  %1898 = vmatpush.bf16.msra.mxu0 0
  %1899 = vmatpush.bf16.msra.mxu0 0
  %1900 = vmatpush.bf16.msra.mxu0 0
  %1901 = vmatpush.bf16.msra.mxu0 0
  %1902 = vmatpush.bf16.msra.mxu0 0
  %1903 = vmatpush.bf16.msra.mxu0 0
  %1904 = vmatpush.bf16.msra.mxu0 %v1894
  %1905 = vmatpush.bf16.msra.mxu0 %v1893
  %1906 = vmatmul.bf16.gmra.mxu0 %v1896
  %v1907 = vpop.f32.mrf.mxu0
  %v1908 = vadd.f32 0.0, %v1907
  %v1909 = vpop.f32.mrf.mxu0
  %1910 = vdwg.mxu0
  %v1911 = vadd.f32 %v1745, %v1908
  %1912 = vmatpush.bf16.msra.mxu0 0
  %1913 = vmatpush.bf16.msra.mxu0 0
  %1914 = vmatpush.bf16.msra.mxu0 0
  %1915 = vmatpush.bf16.msra.mxu0 0
  %1916 = vmatpush.bf16.msra.mxu0 0
  %1917 = vmatpush.bf16.msra.mxu0 0
  %1918 = vmatpush.bf16.msra.mxu0 0
  %1919 = vmatpush.bf16.msra.mxu0 %v1453
  %1920 = vmatmul.bf16.gmra.mxu0 %v1396
  %v1921 = vpop.f32.mrf.mxu0
  %v1922 = vadd.f32 0.0, %v1921
  %v1923 = vpop.f32.mrf.mxu0
  %1924 = vdwg.mxu0
  %1925 = vmatpush.bf16.msra.mxu0 0
  %1926 = vmatpush.bf16.msra.mxu0 0
  %1927 = vmatpush.bf16.msra.mxu0 0
  %1928 = vmatpush.bf16.msra.mxu0 0
  %1929 = vmatpush.bf16.msra.mxu0 0
  %1930 = vmatpush.bf16.msra.mxu0 0
  %1931 = vmatpush.bf16.msra.mxu0 0
  %1932 = vmatpush.bf16.msra.mxu0 %v1579
  %1933 = vmatmul.bf16.gmra.mxu0 %v1291
  %v1934 = vpop.f32.mrf.mxu0
  %v1935 = vadd.f32 %v1922, %v1934
  %v1936 = vpop.f32.mrf.mxu0
  %1937 = vdwg.mxu0
  %1938 = vmatpush.bf16.msra.mxu0 0
  %1939 = vmatpush.bf16.msra.mxu0 0
  %1940 = vmatpush.bf16.msra.mxu0 0
  %1941 = vmatpush.bf16.msra.mxu0 0
  %1942 = vmatpush.bf16.msra.mxu0 0
  %1943 = vmatpush.bf16.msra.mxu0 0
  %1944 = vmatpush.bf16.msra.mxu0 0
  %1945 = vmatpush.bf16.msra.mxu0 %v1454
  %1946 = vmatmul.bf16.gmra.mxu0 %v1415
  %v1947 = vpop.f32.mrf.mxu0
  %v1948 = vadd.f32 0.0, %v1947
  %v1949 = vpop.f32.mrf.mxu0
  %1950 = vdwg.mxu0
  %v1951 = vadd.f32 %v1935, %v1948
  %1952 = vmatpush.bf16.msra.mxu0 0
  %1953 = vmatpush.bf16.msra.mxu0 0
  %1954 = vmatpush.bf16.msra.mxu0 0
  %1955 = vmatpush.bf16.msra.mxu0 0
  %1956 = vmatpush.bf16.msra.mxu0 0
  %1957 = vmatpush.bf16.msra.mxu0 0
  %1958 = vmatpush.bf16.msra.mxu0 0
  %1959 = vmatpush.bf16.msra.mxu0 %v1064
  %1960 = vmatmul.bf16.gmra.mxu0 %v1822
  %v1961 = vpop.f32.mrf.mxu0
  %v1962 = vadd.f32 0.0, %v1961
  %v1963 = vpop.f32.mrf.mxu0
  %1964 = vdwg.mxu0
  %v1965 = vadd.f32 %v1951, %v1962
  %v1966 = vld [vmem:[#allocation2 + $0xb0] sm:$0xff]
  %v1967 = vpack.c.bf16 %v1966, %v1966
  %v1969 = vsel %vm913, %v1967, 0
  %1971 = vmatpush.bf16.msra.mxu0 0
  %1972 = vmatpush.bf16.msra.mxu0 0
  %1973 = vmatpush.bf16.msra.mxu0 0
  %1974 = vmatpush.bf16.msra.mxu0 0
  %1975 = vmatpush.bf16.msra.mxu0 0
  %1976 = vmatpush.bf16.msra.mxu0 0
  %1977 = vmatpush.bf16.msra.mxu0 0
  %1978 = vmatpush.bf16.msra.mxu0 %v980
  %1979 = vmatmul.bf16.gmra.mxu0 %v1969
  %v1980 = vpop.f32.mrf.mxu0
  %v1981 = vadd.f32 0.0, %v1980
  %v1982 = vpop.f32.mrf.mxu0
  %1983 = vdwg.mxu0
  %v1984 = vadd.f32 %v1965, %v1981
  %v1985 = vld [vmem:[#allocation2 + $0xb8] sm:$0xff]
  %v1986 = vpack.c.bf16 %v1985, %v1985
  %v1988 = vsel %vm913, %v1986, 0
  %1990 = vmatpush.bf16.msra.mxu0 0
  %1991 = vmatpush.bf16.msra.mxu0 0
  %1992 = vmatpush.bf16.msra.mxu0 0
  %1993 = vmatpush.bf16.msra.mxu0 0
  %1994 = vmatpush.bf16.msra.mxu0 0
  %1995 = vmatpush.bf16.msra.mxu0 0
  %1996 = vmatpush.bf16.msra.mxu0 0
  %1997 = vmatpush.bf16.msra.mxu0 %v983
  %1998 = vmatmul.bf16.gmra.mxu0 %v1988
  %v1999 = vpop.f32.mrf.mxu0
  %v2000 = vadd.f32 0.0, %v1999
  %v2001 = vpop.f32.mrf.mxu0
  %2002 = vdwg.mxu0
  %v2003 = vadd.f32 %v1984, %v2000
  %2004 = vmatpush.bf16.msra.mxu0 0
  %2005 = vmatpush.bf16.msra.mxu0 0
  %2006 = vmatpush.bf16.msra.mxu0 0
  %2007 = vmatpush.bf16.msra.mxu0 0
  %2008 = vmatpush.bf16.msra.mxu0 0
  %2009 = vmatpush.bf16.msra.mxu0 0
  %2010 = vmatpush.bf16.msra.mxu0 0
  %2011 = vmatpush.bf16.msra.mxu0 %v1115
  %2012 = vmatmul.bf16.gmra.mxu0 %v1874
  %v2013 = vpop.f32.mrf.mxu0
  %v2014 = vadd.f32 0.0, %v2013
  %v2015 = vpop.f32.mrf.mxu0
  %2016 = vdwg.mxu0
  %v2017 = vadd.f32 %v2003, %v2014
  %v2018 = vld [vmem:[#allocation2 + $0xf0] sm:$0xff]
  %v2019 = vpack.c.bf16 %v2018, %v2018
  %v2021 = vsel %vm913, %v2019, 0
  %2023 = vmatpush.bf16.msra.mxu0 0
  %2024 = vmatpush.bf16.msra.mxu0 0
  %2025 = vmatpush.bf16.msra.mxu0 0
  %2026 = vmatpush.bf16.msra.mxu0 0
  %2027 = vmatpush.bf16.msra.mxu0 0
  %2028 = vmatpush.bf16.msra.mxu0 0
  %2029 = vmatpush.bf16.msra.mxu0 0
  %2030 = vmatpush.bf16.msra.mxu0 %v1018
  %2031 = vmatmul.bf16.gmra.mxu0 %v2021
  %v2032 = vpop.f32.mrf.mxu0
  %v2033 = vadd.f32 0.0, %v2032
  %v2034 = vpop.f32.mrf.mxu0
  %2035 = vdwg.mxu0
  %v2036 = vadd.f32 %v2017, %v2033
  %v2037 = vld [vmem:[#allocation2 + $0xf8] sm:$0xff]
  %v2038 = vpack.c.bf16 %v2037, %v2037
  %v2040 = vsel %vm913, %v2038, 0
  %2042 = vmatpush.bf16.msra.mxu0 0
  %2043 = vmatpush.bf16.msra.mxu0 0
  %2044 = vmatpush.bf16.msra.mxu0 0
  %2045 = vmatpush.bf16.msra.mxu0 0
  %2046 = vmatpush.bf16.msra.mxu0 0
  %2047 = vmatpush.bf16.msra.mxu0 0
  %2048 = vmatpush.bf16.msra.mxu0 0
  %2049 = vmatpush.bf16.msra.mxu0 %v1038
  %2050 = vmatmul.bf16.gmra.mxu0 %v2040
  %v2051 = vpop.f32.mrf.mxu0
  %v2052 = vadd.f32 0.0, %v2051
  %v2053 = vpop.f32.mrf.mxu0
  %2054 = vdwg.mxu0
  %v2055 = vadd.f32 %v2036, %v2052
  %v2056 = vadd.f32 %v2055, %v1057
  %v2057 = vmax.f32 %v2056, 0.0
  %v2058 = vpack.c.bf16 %v2057, %v2057
  %v2059 = vpack.c.bf16 %v126, %v125
  %v2060 = vpack.c.bf16 %v128, %v127
  %v2062 = vsel %vm220, %v2058, 0
  %2064 = vmatpush.bf16.msra.mxu0 0
  %2065 = vmatpush.bf16.msra.mxu0 0
  %2066 = vmatpush.bf16.msra.mxu0 0
  %2067 = vmatpush.bf16.msra.mxu0 0
  %2068 = vmatpush.bf16.msra.mxu0 0
  %2069 = vmatpush.bf16.msra.mxu0 0
  %2070 = vmatpush.bf16.msra.mxu0 %v2060
  %2071 = vmatpush.bf16.msra.mxu0 %v2059
  %2072 = vmatmul.bf16.gmra.mxu0 %v2062
  %v2073 = vpop.f32.mrf.mxu0
  %v2074 = vadd.f32 0.0, %v2073
  %v2075 = vpop.f32.mrf.mxu0
  %2076 = vdwg.mxu0
  %v2077 = vadd.f32 %v1911, %v2074
  %2078 = vmatpush.bf16.msra.mxu0 0
  %2079 = vmatpush.bf16.msra.mxu0 0
  %2080 = vmatpush.bf16.msra.mxu0 0
  %2081 = vmatpush.bf16.msra.mxu0 0
  %2082 = vmatpush.bf16.msra.mxu0 0
  %2083 = vmatpush.bf16.msra.mxu0 0
  %2084 = vmatpush.bf16.msra.mxu0 0
  %2085 = vmatpush.bf16.msra.mxu0 %v1454
  %2086 = vmatmul.bf16.gmra.mxu0 %v1541
  %v2087 = vpop.f32.mrf.mxu0
  %v2088 = vadd.f32 0.0, %v2087
  %v2089 = vpop.f32.mrf.mxu0
  %2090 = vdwg.mxu0
  %2091 = vmatpush.bf16.msra.mxu0 0
  %2092 = vmatpush.bf16.msra.mxu0 0
  %2093 = vmatpush.bf16.msra.mxu0 0
  %2094 = vmatpush.bf16.msra.mxu0 0
  %2095 = vmatpush.bf16.msra.mxu0 0
  %2096 = vmatpush.bf16.msra.mxu0 0
  %2097 = vmatpush.bf16.msra.mxu0 0
  %2098 = vmatpush.bf16.msra.mxu0 %v1453
  %2099 = vmatmul.bf16.gmra.mxu0 %v1522
  %v2100 = vpop.f32.mrf.mxu0
  %v2101 = vadd.f32 %v2088, %v2100
  %v2102 = vpop.f32.mrf.mxu0
  %2103 = vdwg.mxu0
  %v2104 = vld [vmem:[#allocation2 + $0x100] sm:$0xff]
  %v2105 = vpack.c.bf16 %v2104, %v2104
  %v2107 = vsel %vm913, %v2105, 0
  %2109 = vmatpush.bf16.msra.mxu0 0
  %2110 = vmatpush.bf16.msra.mxu0 0
  %2111 = vmatpush.bf16.msra.mxu0 0
  %2112 = vmatpush.bf16.msra.mxu0 0
  %2113 = vmatpush.bf16.msra.mxu0 0
  %2114 = vmatpush.bf16.msra.mxu0 0
  %2115 = vmatpush.bf16.msra.mxu0 0
  %2116 = vmatpush.bf16.msra.mxu0 %v980
  %2117 = vmatmul.bf16.gmra.mxu0 %v2107
  %v2118 = vpop.f32.mrf.mxu0
  %v2119 = vadd.f32 0.0, %v2118
  %v2120 = vpop.f32.mrf.mxu0
  %2121 = vdwg.mxu0
  %v2122 = vadd.f32 %v2101, %v2119
  %v2123 = vld [vmem:[#allocation2 + $0x108] sm:$0xff]
  %v2124 = vpack.c.bf16 %v2123, %v2123
  %v2126 = vsel %vm913, %v2124, 0
  %2128 = vmatpush.bf16.msra.mxu0 0
  %2129 = vmatpush.bf16.msra.mxu0 0
  %2130 = vmatpush.bf16.msra.mxu0 0
  %2131 = vmatpush.bf16.msra.mxu0 0
  %2132 = vmatpush.bf16.msra.mxu0 0
  %2133 = vmatpush.bf16.msra.mxu0 0
  %2134 = vmatpush.bf16.msra.mxu0 0
  %2135 = vmatpush.bf16.msra.mxu0 %v983
  %2136 = vmatmul.bf16.gmra.mxu0 %v2126
  %v2137 = vpop.f32.mrf.mxu0
  %v2138 = vadd.f32 0.0, %v2137
  %v2139 = vpop.f32.mrf.mxu0
  %2140 = vdwg.mxu0
  %v2141 = vadd.f32 %v2122, %v2138
  %v2142 = vld [vmem:[#allocation2 + $0x140] sm:$0xff]
  %v2143 = vpack.c.bf16 %v2142, %v2142
  %v2145 = vsel %vm913, %v2143, 0
  %2147 = vmatpush.bf16.msra.mxu0 0
  %2148 = vmatpush.bf16.msra.mxu0 0
  %2149 = vmatpush.bf16.msra.mxu0 0
  %2150 = vmatpush.bf16.msra.mxu0 0
  %2151 = vmatpush.bf16.msra.mxu0 0
  %2152 = vmatpush.bf16.msra.mxu0 0
  %2153 = vmatpush.bf16.msra.mxu0 0
  %2154 = vmatpush.bf16.msra.mxu0 %v1018
  %2155 = vmatmul.bf16.gmra.mxu0 %v2145
  %v2156 = vpop.f32.mrf.mxu0
  %v2157 = vadd.f32 0.0, %v2156
  %v2158 = vpop.f32.mrf.mxu0
  %2159 = vdwg.mxu0
  %v2160 = vadd.f32 %v2141, %v2157
  %v2161 = vld [vmem:[#allocation2 + $0x148] sm:$0xff]
  %v2162 = vpack.c.bf16 %v2161, %v2161
  %v2164 = vsel %vm913, %v2162, 0
  %2166 = vmatpush.bf16.msra.mxu0 0
  %2167 = vmatpush.bf16.msra.mxu0 0
  %2168 = vmatpush.bf16.msra.mxu0 0
  %2169 = vmatpush.bf16.msra.mxu0 0
  %2170 = vmatpush.bf16.msra.mxu0 0
  %2171 = vmatpush.bf16.msra.mxu0 0
  %2172 = vmatpush.bf16.msra.mxu0 0
  %2173 = vmatpush.bf16.msra.mxu0 %v1038
  %2174 = vmatmul.bf16.gmra.mxu0 %v2164
  %v2175 = vpop.f32.mrf.mxu0
  %v2176 = vadd.f32 0.0, %v2175
  %v2177 = vpop.f32.mrf.mxu0
  %2178 = vdwg.mxu0
  %v2179 = vadd.f32 %v2160, %v2176
  %v2180 = vadd.f32 %v2179, %v1057
  %v2181 = vmax.f32 %v2180, 0.0
  %v2182 = vpack.c.bf16 %v2181, %v2181
  %v2183 = vpack.c.bf16 %v130, %v129
  %v2184 = vpack.c.bf16 %v132, %v131
  %v2186 = vsel %vm220, %v2182, 0
  %2188 = vmatpush.bf16.msra.mxu0 0
  %2189 = vmatpush.bf16.msra.mxu0 0
  %2190 = vmatpush.bf16.msra.mxu0 0
  %2191 = vmatpush.bf16.msra.mxu0 0
  %2192 = vmatpush.bf16.msra.mxu0 0
  %2193 = vmatpush.bf16.msra.mxu0 0
  %2194 = vmatpush.bf16.msra.mxu0 %v2184
  %2195 = vmatpush.bf16.msra.mxu0 %v2183
  %2196 = vmatmul.bf16.gmra.mxu0 %v2186
  %v2197 = vpop.f32.mrf.mxu0
  %v2198 = vadd.f32 0.0, %v2197
  %v2199 = vpop.f32.mrf.mxu0
  %2200 = vdwg.mxu0
  %v2201 = vadd.f32 %v2077, %v2198
  %2202 = vmatpush.bf16.msra.mxu0 0
  %2203 = vmatpush.bf16.msra.mxu0 0
  %2204 = vmatpush.bf16.msra.mxu0 0
  %2205 = vmatpush.bf16.msra.mxu0 0
  %2206 = vmatpush.bf16.msra.mxu0 0
  %2207 = vmatpush.bf16.msra.mxu0 0
  %2208 = vmatpush.bf16.msra.mxu0 0
  %2209 = vmatpush.bf16.msra.mxu0 %v1453
  %2210 = vmatmul.bf16.gmra.mxu0 %v1689
  %v2211 = vpop.f32.mrf.mxu0
  %v2212 = vadd.f32 0.0, %v2211
  %v2213 = vpop.f32.mrf.mxu0
  %2214 = vdwg.mxu0
  %2215 = vmatpush.bf16.msra.mxu0 0
  %2216 = vmatpush.bf16.msra.mxu0 0
  %2217 = vmatpush.bf16.msra.mxu0 0
  %2218 = vmatpush.bf16.msra.mxu0 0
  %2219 = vmatpush.bf16.msra.mxu0 0
  %2220 = vmatpush.bf16.msra.mxu0 0
  %2221 = vmatpush.bf16.msra.mxu0 0
  %2222 = vmatpush.bf16.msra.mxu0 %v1579
  %2223 = vmatmul.bf16.gmra.mxu0 %v1541
  %v2224 = vpop.f32.mrf.mxu0
  %v2225 = vadd.f32 %v2212, %v2224
  %v2226 = vpop.f32.mrf.mxu0
  %2227 = vdwg.mxu0
  %2228 = vmatpush.bf16.msra.mxu0 0
  %2229 = vmatpush.bf16.msra.mxu0 0
  %2230 = vmatpush.bf16.msra.mxu0 0
  %2231 = vmatpush.bf16.msra.mxu0 0
  %2232 = vmatpush.bf16.msra.mxu0 0
  %2233 = vmatpush.bf16.msra.mxu0 0
  %2234 = vmatpush.bf16.msra.mxu0 0
  %2235 = vmatpush.bf16.msra.mxu0 %v1454
  %2236 = vmatmul.bf16.gmra.mxu0 %v1708
  %v2237 = vpop.f32.mrf.mxu0
  %v2238 = vadd.f32 0.0, %v2237
  %v2239 = vpop.f32.mrf.mxu0
  %2240 = vdwg.mxu0
  %v2241 = vadd.f32 %v2225, %v2238
  %2242 = vmatpush.bf16.msra.mxu0 0
  %2243 = vmatpush.bf16.msra.mxu0 0
  %2244 = vmatpush.bf16.msra.mxu0 0
  %2245 = vmatpush.bf16.msra.mxu0 0
  %2246 = vmatpush.bf16.msra.mxu0 0
  %2247 = vmatpush.bf16.msra.mxu0 0
  %2248 = vmatpush.bf16.msra.mxu0 0
  %2249 = vmatpush.bf16.msra.mxu0 %v1064
  %2250 = vmatmul.bf16.gmra.mxu0 %v2126
  %v2251 = vpop.f32.mrf.mxu0
  %v2252 = vadd.f32 0.0, %v2251
  %v2253 = vpop.f32.mrf.mxu0
  %2254 = vdwg.mxu0
  %v2255 = vadd.f32 %v2241, %v2252
  %v2256 = vld [vmem:[#allocation2 + $0x110] sm:$0xff]
  %v2257 = vpack.c.bf16 %v2256, %v2256
  %v2259 = vsel %vm913, %v2257, 0
  %2261 = vmatpush.bf16.msra.mxu0 0
  %2262 = vmatpush.bf16.msra.mxu0 0
  %2263 = vmatpush.bf16.msra.mxu0 0
  %2264 = vmatpush.bf16.msra.mxu0 0
  %2265 = vmatpush.bf16.msra.mxu0 0
  %2266 = vmatpush.bf16.msra.mxu0 0
  %2267 = vmatpush.bf16.msra.mxu0 0
  %2268 = vmatpush.bf16.msra.mxu0 %v980
  %2269 = vmatmul.bf16.gmra.mxu0 %v2259
  %v2270 = vpop.f32.mrf.mxu0
  %v2271 = vadd.f32 0.0, %v2270
  %v2272 = vpop.f32.mrf.mxu0
  %2273 = vdwg.mxu0
  %v2274 = vadd.f32 %v2255, %v2271
  %v2275 = vld [vmem:[#allocation2 + $0x118] sm:$0xff]
  %v2276 = vpack.c.bf16 %v2275, %v2275
  %v2278 = vsel %vm913, %v2276, 0
  %2280 = vmatpush.bf16.msra.mxu0 0
  %2281 = vmatpush.bf16.msra.mxu0 0
  %2282 = vmatpush.bf16.msra.mxu0 0
  %2283 = vmatpush.bf16.msra.mxu0 0
  %2284 = vmatpush.bf16.msra.mxu0 0
  %2285 = vmatpush.bf16.msra.mxu0 0
  %2286 = vmatpush.bf16.msra.mxu0 0
  %2287 = vmatpush.bf16.msra.mxu0 %v983
  %2288 = vmatmul.bf16.gmra.mxu0 %v2278
  %v2289 = vpop.f32.mrf.mxu0
  %v2290 = vadd.f32 0.0, %v2289
  %v2291 = vpop.f32.mrf.mxu0
  %2292 = vdwg.mxu0
  %v2293 = vadd.f32 %v2274, %v2290
  %2294 = vmatpush.bf16.msra.mxu0 0
  %2295 = vmatpush.bf16.msra.mxu0 0
  %2296 = vmatpush.bf16.msra.mxu0 0
  %2297 = vmatpush.bf16.msra.mxu0 0
  %2298 = vmatpush.bf16.msra.mxu0 0
  %2299 = vmatpush.bf16.msra.mxu0 0
  %2300 = vmatpush.bf16.msra.mxu0 0
  %2301 = vmatpush.bf16.msra.mxu0 %v1115
  %2302 = vmatmul.bf16.gmra.mxu0 %v2164
  %v2303 = vpop.f32.mrf.mxu0
  %v2304 = vadd.f32 0.0, %v2303
  %v2305 = vpop.f32.mrf.mxu0
  %2306 = vdwg.mxu0
  %v2307 = vadd.f32 %v2293, %v2304
  %v2308 = vld [vmem:[#allocation2 + $0x150] sm:$0xff]
  %v2309 = vpack.c.bf16 %v2308, %v2308
  %v2311 = vsel %vm913, %v2309, 0
  %2313 = vmatpush.bf16.msra.mxu0 0
  %2314 = vmatpush.bf16.msra.mxu0 0
  %2315 = vmatpush.bf16.msra.mxu0 0
  %2316 = vmatpush.bf16.msra.mxu0 0
  %2317 = vmatpush.bf16.msra.mxu0 0
  %2318 = vmatpush.bf16.msra.mxu0 0
  %2319 = vmatpush.bf16.msra.mxu0 0
  %2320 = vmatpush.bf16.msra.mxu0 %v1018
  %2321 = vmatmul.bf16.gmra.mxu0 %v2311
  %v2322 = vpop.f32.mrf.mxu0
  %v2323 = vadd.f32 0.0, %v2322
  %v2324 = vpop.f32.mrf.mxu0
  %2325 = vdwg.mxu0
  %v2326 = vadd.f32 %v2307, %v2323
  %v2327 = vld [vmem:[#allocation2 + $0x158] sm:$0xff]
  %v2328 = vpack.c.bf16 %v2327, %v2327
  %v2330 = vsel %vm913, %v2328, 0
  %2332 = vmatpush.bf16.msra.mxu0 0
  %2333 = vmatpush.bf16.msra.mxu0 0
  %2334 = vmatpush.bf16.msra.mxu0 0
  %2335 = vmatpush.bf16.msra.mxu0 0
  %2336 = vmatpush.bf16.msra.mxu0 0
  %2337 = vmatpush.bf16.msra.mxu0 0
  %2338 = vmatpush.bf16.msra.mxu0 0
  %2339 = vmatpush.bf16.msra.mxu0 %v1038
  %2340 = vmatmul.bf16.gmra.mxu0 %v2330
  %v2341 = vpop.f32.mrf.mxu0
  %v2342 = vadd.f32 0.0, %v2341
  %v2343 = vpop.f32.mrf.mxu0
  %2344 = vdwg.mxu0
  %v2345 = vadd.f32 %v2326, %v2342
  %v2346 = vadd.f32 %v2345, %v1057
  %v2347 = vmax.f32 %v2346, 0.0
  %v2348 = vpack.c.bf16 %v2347, %v2347
  %v2349 = vpack.c.bf16 %v134, %v133
  %v2350 = vpack.c.bf16 %v136, %v135
  %v2352 = vsel %vm220, %v2348, 0
  %2354 = vmatpush.bf16.msra.mxu0 0
  %2355 = vmatpush.bf16.msra.mxu0 0
  %2356 = vmatpush.bf16.msra.mxu0 0
  %2357 = vmatpush.bf16.msra.mxu0 0
  %2358 = vmatpush.bf16.msra.mxu0 0
  %2359 = vmatpush.bf16.msra.mxu0 0
  %2360 = vmatpush.bf16.msra.mxu0 %v2350
  %2361 = vmatpush.bf16.msra.mxu0 %v2349
  %2362 = vmatmul.bf16.gmra.mxu0 %v2352
  %v2363 = vpop.f32.mrf.mxu0
  %v2364 = vadd.f32 0.0, %v2363
  %v2365 = vpop.f32.mrf.mxu0
  %2366 = vdwg.mxu0
  %v2367 = vadd.f32 %v2201, %v2364
  %2368 = vmatpush.bf16.msra.mxu0 0
  %2369 = vmatpush.bf16.msra.mxu0 0
  %2370 = vmatpush.bf16.msra.mxu0 0
  %2371 = vmatpush.bf16.msra.mxu0 0
  %2372 = vmatpush.bf16.msra.mxu0 0
  %2373 = vmatpush.bf16.msra.mxu0 0
  %2374 = vmatpush.bf16.msra.mxu0 0
  %2375 = vmatpush.bf16.msra.mxu0 %v1453
  %2376 = vmatmul.bf16.gmra.mxu0 %v1855
  %v2377 = vpop.f32.mrf.mxu0
  %v2378 = vadd.f32 0.0, %v2377
  %v2379 = vpop.f32.mrf.mxu0
  %2380 = vdwg.mxu0
  %2381 = vmatpush.bf16.msra.mxu0 0
  %2382 = vmatpush.bf16.msra.mxu0 0
  %2383 = vmatpush.bf16.msra.mxu0 0
  %2384 = vmatpush.bf16.msra.mxu0 0
  %2385 = vmatpush.bf16.msra.mxu0 0
  %2386 = vmatpush.bf16.msra.mxu0 0
  %2387 = vmatpush.bf16.msra.mxu0 0
  %2388 = vmatpush.bf16.msra.mxu0 %v1579
  %2389 = vmatmul.bf16.gmra.mxu0 %v1708
  %v2390 = vpop.f32.mrf.mxu0
  %v2391 = vadd.f32 %v2378, %v2390
  %v2392 = vpop.f32.mrf.mxu0
  %2393 = vdwg.mxu0
  %2394 = vmatpush.bf16.msra.mxu0 0
  %2395 = vmatpush.bf16.msra.mxu0 0
  %2396 = vmatpush.bf16.msra.mxu0 0
  %2397 = vmatpush.bf16.msra.mxu0 0
  %2398 = vmatpush.bf16.msra.mxu0 0
  %2399 = vmatpush.bf16.msra.mxu0 0
  %2400 = vmatpush.bf16.msra.mxu0 0
  %2401 = vmatpush.bf16.msra.mxu0 %v1454
  %2402 = vmatmul.bf16.gmra.mxu0 %v1874
  %v2403 = vpop.f32.mrf.mxu0
  %v2404 = vadd.f32 0.0, %v2403
  %v2405 = vpop.f32.mrf.mxu0
  %2406 = vdwg.mxu0
  %v2407 = vadd.f32 %v2391, %v2404
  %2408 = vmatpush.bf16.msra.mxu0 0
  %2409 = vmatpush.bf16.msra.mxu0 0
  %2410 = vmatpush.bf16.msra.mxu0 0
  %2411 = vmatpush.bf16.msra.mxu0 0
  %2412 = vmatpush.bf16.msra.mxu0 0
  %2413 = vmatpush.bf16.msra.mxu0 0
  %2414 = vmatpush.bf16.msra.mxu0 0
  %2415 = vmatpush.bf16.msra.mxu0 %v1064
  %2416 = vmatmul.bf16.gmra.mxu0 %v2278
  %v2417 = vpop.f32.mrf.mxu0
  %v2418 = vadd.f32 0.0, %v2417
  %v2419 = vpop.f32.mrf.mxu0
  %2420 = vdwg.mxu0
  %v2421 = vadd.f32 %v2407, %v2418
  %v2422 = vld [vmem:[#allocation2 + $0x120] sm:$0xff]
  %v2423 = vpack.c.bf16 %v2422, %v2422
  %v2425 = vsel %vm913, %v2423, 0
  %2427 = vmatpush.bf16.msra.mxu0 0
  %2428 = vmatpush.bf16.msra.mxu0 0
  %2429 = vmatpush.bf16.msra.mxu0 0
  %2430 = vmatpush.bf16.msra.mxu0 0
  %2431 = vmatpush.bf16.msra.mxu0 0
  %2432 = vmatpush.bf16.msra.mxu0 0
  %2433 = vmatpush.bf16.msra.mxu0 0
  %2434 = vmatpush.bf16.msra.mxu0 %v980
  %2435 = vmatmul.bf16.gmra.mxu0 %v2425
  %v2436 = vpop.f32.mrf.mxu0
  %v2437 = vadd.f32 0.0, %v2436
  %v2438 = vpop.f32.mrf.mxu0
  %2439 = vdwg.mxu0
  %v2440 = vadd.f32 %v2421, %v2437
  %v2441 = vld [vmem:[#allocation2 + $0x128] sm:$0xff]
  %v2442 = vpack.c.bf16 %v2441, %v2441
  %v2444 = vsel %vm913, %v2442, 0
  %2446 = vmatpush.bf16.msra.mxu0 0
  %2447 = vmatpush.bf16.msra.mxu0 0
  %2448 = vmatpush.bf16.msra.mxu0 0
  %2449 = vmatpush.bf16.msra.mxu0 0
  %2450 = vmatpush.bf16.msra.mxu0 0
  %2451 = vmatpush.bf16.msra.mxu0 0
  %2452 = vmatpush.bf16.msra.mxu0 0
  %2453 = vmatpush.bf16.msra.mxu0 %v983
  %2454 = vmatmul.bf16.gmra.mxu0 %v2444
  %v2455 = vpop.f32.mrf.mxu0
  %v2456 = vadd.f32 0.0, %v2455
  %v2457 = vpop.f32.mrf.mxu0
  %2458 = vdwg.mxu0
  %v2459 = vadd.f32 %v2440, %v2456
  %2460 = vmatpush.bf16.msra.mxu0 0
  %2461 = vmatpush.bf16.msra.mxu0 0
  %2462 = vmatpush.bf16.msra.mxu0 0
  %2463 = vmatpush.bf16.msra.mxu0 0
  %2464 = vmatpush.bf16.msra.mxu0 0
  %2465 = vmatpush.bf16.msra.mxu0 0
  %2466 = vmatpush.bf16.msra.mxu0 0
  %2467 = vmatpush.bf16.msra.mxu0 %v1115
  %2468 = vmatmul.bf16.gmra.mxu0 %v2330
  %v2469 = vpop.f32.mrf.mxu0
  %v2470 = vadd.f32 0.0, %v2469
  %v2471 = vpop.f32.mrf.mxu0
  %2472 = vdwg.mxu0
  %v2473 = vadd.f32 %v2459, %v2470
  %v2474 = vld [vmem:[#allocation2 + $0x160] sm:$0xff]
  %v2475 = vpack.c.bf16 %v2474, %v2474
  %v2477 = vsel %vm913, %v2475, 0
  %2479 = vmatpush.bf16.msra.mxu0 0
  %2480 = vmatpush.bf16.msra.mxu0 0
  %2481 = vmatpush.bf16.msra.mxu0 0
  %2482 = vmatpush.bf16.msra.mxu0 0
  %2483 = vmatpush.bf16.msra.mxu0 0
  %2484 = vmatpush.bf16.msra.mxu0 0
  %2485 = vmatpush.bf16.msra.mxu0 0
  %2486 = vmatpush.bf16.msra.mxu0 %v1018
  %2487 = vmatmul.bf16.gmra.mxu0 %v2477
  %v2488 = vpop.f32.mrf.mxu0
  %v2489 = vadd.f32 0.0, %v2488
  %v2490 = vpop.f32.mrf.mxu0
  %2491 = vdwg.mxu0
  %v2492 = vadd.f32 %v2473, %v2489
  %v2493 = vld [vmem:[#allocation2 + $0x168] sm:$0xff]
  %v2494 = vpack.c.bf16 %v2493, %v2493
  %v2496 = vsel %vm913, %v2494, 0
  %2498 = vmatpush.bf16.msra.mxu0 0
  %2499 = vmatpush.bf16.msra.mxu0 0
  %2500 = vmatpush.bf16.msra.mxu0 0
  %2501 = vmatpush.bf16.msra.mxu0 0
  %2502 = vmatpush.bf16.msra.mxu0 0
  %2503 = vmatpush.bf16.msra.mxu0 0
  %2504 = vmatpush.bf16.msra.mxu0 0
  %2505 = vmatpush.bf16.msra.mxu0 %v1038
  %2506 = vmatmul.bf16.gmra.mxu0 %v2496
  %v2507 = vpop.f32.mrf.mxu0
  %v2508 = vadd.f32 0.0, %v2507
  %v2509 = vpop.f32.mrf.mxu0
  %2510 = vdwg.mxu0
  %v2511 = vadd.f32 %v2492, %v2508
  %v2512 = vadd.f32 %v2511, %v1057
  %v2513 = vmax.f32 %v2512, 0.0
  %v2514 = vpack.c.bf16 %v2513, %v2513
  %v2515 = vpack.c.bf16 %v138, %v137
  %v2516 = vpack.c.bf16 %v140, %v139
  %v2518 = vsel %vm220, %v2514, 0
  %2520 = vmatpush.bf16.msra.mxu0 0
  %2521 = vmatpush.bf16.msra.mxu0 0
  %2522 = vmatpush.bf16.msra.mxu0 0
  %2523 = vmatpush.bf16.msra.mxu0 0
  %2524 = vmatpush.bf16.msra.mxu0 0
  %2525 = vmatpush.bf16.msra.mxu0 0
  %2526 = vmatpush.bf16.msra.mxu0 %v2516
  %2527 = vmatpush.bf16.msra.mxu0 %v2515
  %2528 = vmatmul.bf16.gmra.mxu0 %v2518
  %v2529 = vpop.f32.mrf.mxu0
  %v2530 = vadd.f32 0.0, %v2529
  %v2531 = vpop.f32.mrf.mxu0
  %2532 = vdwg.mxu0
  %v2533 = vadd.f32 %v2367, %v2530
  %2534 = vmatpush.bf16.msra.mxu0 0
  %2535 = vmatpush.bf16.msra.mxu0 0
  %2536 = vmatpush.bf16.msra.mxu0 0
  %2537 = vmatpush.bf16.msra.mxu0 0
  %2538 = vmatpush.bf16.msra.mxu0 0
  %2539 = vmatpush.bf16.msra.mxu0 0
  %2540 = vmatpush.bf16.msra.mxu0 0
  %2541 = vmatpush.bf16.msra.mxu0 %v1453
  %2542 = vmatmul.bf16.gmra.mxu0 %v2021
  %v2543 = vpop.f32.mrf.mxu0
  %v2544 = vadd.f32 0.0, %v2543
  %v2545 = vpop.f32.mrf.mxu0
  %2546 = vdwg.mxu0
  %2547 = vmatpush.bf16.msra.mxu0 0
  %2548 = vmatpush.bf16.msra.mxu0 0
  %2549 = vmatpush.bf16.msra.mxu0 0
  %2550 = vmatpush.bf16.msra.mxu0 0
  %2551 = vmatpush.bf16.msra.mxu0 0
  %2552 = vmatpush.bf16.msra.mxu0 0
  %2553 = vmatpush.bf16.msra.mxu0 0
  %2554 = vmatpush.bf16.msra.mxu0 %v1579
  %2555 = vmatmul.bf16.gmra.mxu0 %v1874
  %v2556 = vpop.f32.mrf.mxu0
  %v2557 = vadd.f32 %v2544, %v2556
  %v2558 = vpop.f32.mrf.mxu0
  %2559 = vdwg.mxu0
  %2560 = vmatpush.bf16.msra.mxu0 0
  %2561 = vmatpush.bf16.msra.mxu0 0
  %2562 = vmatpush.bf16.msra.mxu0 0
  %2563 = vmatpush.bf16.msra.mxu0 0
  %2564 = vmatpush.bf16.msra.mxu0 0
  %2565 = vmatpush.bf16.msra.mxu0 0
  %2566 = vmatpush.bf16.msra.mxu0 0
  %2567 = vmatpush.bf16.msra.mxu0 %v1454
  %2568 = vmatmul.bf16.gmra.mxu0 %v2040
  %v2569 = vpop.f32.mrf.mxu0
  %v2570 = vadd.f32 0.0, %v2569
  %v2571 = vpop.f32.mrf.mxu0
  %2572 = vdwg.mxu0
  %v2573 = vadd.f32 %v2557, %v2570
  %2574 = vmatpush.bf16.msra.mxu0 0
  %2575 = vmatpush.bf16.msra.mxu0 0
  %2576 = vmatpush.bf16.msra.mxu0 0
  %2577 = vmatpush.bf16.msra.mxu0 0
  %2578 = vmatpush.bf16.msra.mxu0 0
  %2579 = vmatpush.bf16.msra.mxu0 0
  %2580 = vmatpush.bf16.msra.mxu0 0
  %2581 = vmatpush.bf16.msra.mxu0 %v1064
  %2582 = vmatmul.bf16.gmra.mxu0 %v2444
  %v2583 = vpop.f32.mrf.mxu0
  %v2584 = vadd.f32 0.0, %v2583
  %v2585 = vpop.f32.mrf.mxu0
  %2586 = vdwg.mxu0
  %v2587 = vadd.f32 %v2573, %v2584
  %v2588 = vld [vmem:[#allocation2 + $0x130] sm:$0xff]
  %v2589 = vpack.c.bf16 %v2588, %v2588
  %v2591 = vsel %vm913, %v2589, 0
  %2593 = vmatpush.bf16.msra.mxu0 0
  %2594 = vmatpush.bf16.msra.mxu0 0
  %2595 = vmatpush.bf16.msra.mxu0 0
  %2596 = vmatpush.bf16.msra.mxu0 0
  %2597 = vmatpush.bf16.msra.mxu0 0
  %2598 = vmatpush.bf16.msra.mxu0 0
  %2599 = vmatpush.bf16.msra.mxu0 0
  %2600 = vmatpush.bf16.msra.mxu0 %v980
  %2601 = vmatmul.bf16.gmra.mxu0 %v2591
  %v2602 = vpop.f32.mrf.mxu0
  %v2603 = vadd.f32 0.0, %v2602
  %v2604 = vpop.f32.mrf.mxu0
  %2605 = vdwg.mxu0
  %v2606 = vadd.f32 %v2587, %v2603
  %v2607 = vld [vmem:[#allocation2 + $0x138] sm:$0xff]
  %v2608 = vpack.c.bf16 %v2607, %v2607
  %v2610 = vsel %vm913, %v2608, 0
  %2612 = vmatpush.bf16.msra.mxu0 0
  %2613 = vmatpush.bf16.msra.mxu0 0
  %2614 = vmatpush.bf16.msra.mxu0 0
  %2615 = vmatpush.bf16.msra.mxu0 0
  %2616 = vmatpush.bf16.msra.mxu0 0
  %2617 = vmatpush.bf16.msra.mxu0 0
  %2618 = vmatpush.bf16.msra.mxu0 0
  %2619 = vmatpush.bf16.msra.mxu0 %v983
  %2620 = vmatmul.bf16.gmra.mxu0 %v2610
  %v2621 = vpop.f32.mrf.mxu0
  %v2622 = vadd.f32 0.0, %v2621
  %v2623 = vpop.f32.mrf.mxu0
  %2624 = vdwg.mxu0
  %v2625 = vadd.f32 %v2606, %v2622
  %2626 = vmatpush.bf16.msra.mxu0 0
  %2627 = vmatpush.bf16.msra.mxu0 0
  %2628 = vmatpush.bf16.msra.mxu0 0
  %2629 = vmatpush.bf16.msra.mxu0 0
  %2630 = vmatpush.bf16.msra.mxu0 0
  %2631 = vmatpush.bf16.msra.mxu0 0
  %2632 = vmatpush.bf16.msra.mxu0 0
  %2633 = vmatpush.bf16.msra.mxu0 %v1115
  %2634 = vmatmul.bf16.gmra.mxu0 %v2496
  %v2635 = vpop.f32.mrf.mxu0
  %v2636 = vadd.f32 0.0, %v2635
  %v2637 = vpop.f32.mrf.mxu0
  %2638 = vdwg.mxu0
  %v2639 = vadd.f32 %v2625, %v2636
  %v2640 = vld [vmem:[#allocation2 + $0x170] sm:$0xff]
  %v2641 = vpack.c.bf16 %v2640, %v2640
  %v2643 = vsel %vm913, %v2641, 0
  %2645 = vmatpush.bf16.msra.mxu0 0
  %2646 = vmatpush.bf16.msra.mxu0 0
  %2647 = vmatpush.bf16.msra.mxu0 0
  %2648 = vmatpush.bf16.msra.mxu0 0
  %2649 = vmatpush.bf16.msra.mxu0 0
  %2650 = vmatpush.bf16.msra.mxu0 0
  %2651 = vmatpush.bf16.msra.mxu0 0
  %2652 = vmatpush.bf16.msra.mxu0 %v1018
  %2653 = vmatmul.bf16.gmra.mxu0 %v2643
  %v2654 = vpop.f32.mrf.mxu0
  %v2655 = vadd.f32 0.0, %v2654
  %v2656 = vpop.f32.mrf.mxu0
  %2657 = vdwg.mxu0
  %v2658 = vadd.f32 %v2639, %v2655
  %v2659 = vld [vmem:[#allocation2 + $0x178] sm:$0xff]
  %v2660 = vpack.c.bf16 %v2659, %v2659
  %v2662 = vsel %vm913, %v2660, 0
  %2664 = vmatpush.bf16.msra.mxu0 0
  %2665 = vmatpush.bf16.msra.mxu0 0
  %2666 = vmatpush.bf16.msra.mxu0 0
  %2667 = vmatpush.bf16.msra.mxu0 0
  %2668 = vmatpush.bf16.msra.mxu0 0
  %2669 = vmatpush.bf16.msra.mxu0 0
  %2670 = vmatpush.bf16.msra.mxu0 0
  %2671 = vmatpush.bf16.msra.mxu0 %v1038
  %2672 = vmatmul.bf16.gmra.mxu0 %v2662
  %v2673 = vpop.f32.mrf.mxu0
  %v2674 = vadd.f32 0.0, %v2673
  %v2675 = vpop.f32.mrf.mxu0
  %2676 = vdwg.mxu0
  %v2677 = vadd.f32 %v2658, %v2674
  %v2678 = vadd.f32 %v2677, %v1057
  %v2679 = vmax.f32 %v2678, 0.0
  %v2680 = vpack.c.bf16 %v2679, %v2679
  %v2681 = vpack.c.bf16 %v142, %v141
  %v2682 = vpack.c.bf16 %v144, %v143
  %v2684 = vsel %vm220, %v2680, 0
  %2686 = vmatpush.bf16.msra.mxu0 0
  %2687 = vmatpush.bf16.msra.mxu0 0
  %2688 = vmatpush.bf16.msra.mxu0 0
  %2689 = vmatpush.bf16.msra.mxu0 0
  %2690 = vmatpush.bf16.msra.mxu0 0
  %2691 = vmatpush.bf16.msra.mxu0 0
  %2692 = vmatpush.bf16.msra.mxu0 %v2682
  %2693 = vmatpush.bf16.msra.mxu0 %v2681
  %2694 = vmatmul.bf16.gmra.mxu0 %v2684
  %v2695 = vpop.f32.mrf.mxu0
  %v2696 = vadd.f32 0.0, %v2695
  %v2697 = vpop.f32.mrf.mxu0
  %2698 = vdwg.mxu0
  %v2699 = vadd.f32 %v2533, %v2696
  %2700 = vmatpush.bf16.msra.mxu0 0
  %2701 = vmatpush.bf16.msra.mxu0 0
  %2702 = vmatpush.bf16.msra.mxu0 0
  %2703 = vmatpush.bf16.msra.mxu0 0
  %2704 = vmatpush.bf16.msra.mxu0 0
  %2705 = vmatpush.bf16.msra.mxu0 0
  %2706 = vmatpush.bf16.msra.mxu0 0
  %2707 = vmatpush.bf16.msra.mxu0 %v1454
  %2708 = vmatmul.bf16.gmra.mxu0 %v2164
  %v2709 = vpop.f32.mrf.mxu0
  %v2710 = vadd.f32 0.0, %v2709
  %v2711 = vpop.f32.mrf.mxu0
  %2712 = vdwg.mxu0
  %2713 = vmatpush.bf16.msra.mxu0 0
  %2714 = vmatpush.bf16.msra.mxu0 0
  %2715 = vmatpush.bf16.msra.mxu0 0
  %2716 = vmatpush.bf16.msra.mxu0 0
  %2717 = vmatpush.bf16.msra.mxu0 0
  %2718 = vmatpush.bf16.msra.mxu0 0
  %2719 = vmatpush.bf16.msra.mxu0 0
  %2720 = vmatpush.bf16.msra.mxu0 %v1453
  %2721 = vmatmul.bf16.gmra.mxu0 %v2145
  %v2722 = vpop.f32.mrf.mxu0
  %v2723 = vadd.f32 %v2710, %v2722
  %v2724 = vpop.f32.mrf.mxu0
  %2725 = vdwg.mxu0
  %v2726 = vld [vmem:[#allocation2 + $0x180] sm:$0xff]
  %v2727 = vpack.c.bf16 %v2726, %v2726
  %v2729 = vsel %vm913, %v2727, 0
  %2731 = vmatpush.bf16.msra.mxu0 0
  %2732 = vmatpush.bf16.msra.mxu0 0
  %2733 = vmatpush.bf16.msra.mxu0 0
  %2734 = vmatpush.bf16.msra.mxu0 0
  %2735 = vmatpush.bf16.msra.mxu0 0
  %2736 = vmatpush.bf16.msra.mxu0 0
  %2737 = vmatpush.bf16.msra.mxu0 0
  %2738 = vmatpush.bf16.msra.mxu0 %v980
  %2739 = vmatmul.bf16.gmra.mxu0 %v2729
  %v2740 = vpop.f32.mrf.mxu0
  %v2741 = vadd.f32 0.0, %v2740
  %v2742 = vpop.f32.mrf.mxu0
  %2743 = vdwg.mxu0
  %v2744 = vadd.f32 %v2723, %v2741
  %v2745 = vld [vmem:[#allocation2 + $0x188] sm:$0xff]
  %v2746 = vpack.c.bf16 %v2745, %v2745
  %v2748 = vsel %vm913, %v2746, 0
  %2750 = vmatpush.bf16.msra.mxu0 0
  %2751 = vmatpush.bf16.msra.mxu0 0
  %2752 = vmatpush.bf16.msra.mxu0 0
  %2753 = vmatpush.bf16.msra.mxu0 0
  %2754 = vmatpush.bf16.msra.mxu0 0
  %2755 = vmatpush.bf16.msra.mxu0 0
  %2756 = vmatpush.bf16.msra.mxu0 0
  %2757 = vmatpush.bf16.msra.mxu0 %v983
  %2758 = vmatmul.bf16.gmra.mxu0 %v2748
  %v2759 = vpop.f32.mrf.mxu0
  %v2760 = vadd.f32 0.0, %v2759
  %v2761 = vpop.f32.mrf.mxu0
  %2762 = vdwg.mxu0
  %v2763 = vadd.f32 %v2744, %v2760
  %v2764 = vld [vmem:[#allocation2 + $0x1c0] sm:$0xff]
  %v2765 = vpack.c.bf16 %v2764, %v2764
  %v2767 = vsel %vm913, %v2765, 0
  %2769 = vmatpush.bf16.msra.mxu0 0
  %2770 = vmatpush.bf16.msra.mxu0 0
  %2771 = vmatpush.bf16.msra.mxu0 0
  %2772 = vmatpush.bf16.msra.mxu0 0
  %2773 = vmatpush.bf16.msra.mxu0 0
  %2774 = vmatpush.bf16.msra.mxu0 0
  %2775 = vmatpush.bf16.msra.mxu0 0
  %2776 = vmatpush.bf16.msra.mxu0 %v1018
  %2777 = vmatmul.bf16.gmra.mxu0 %v2767
  %v2778 = vpop.f32.mrf.mxu0
  %v2779 = vadd.f32 0.0, %v2778
  %v2780 = vpop.f32.mrf.mxu0
  %2781 = vdwg.mxu0
  %v2782 = vadd.f32 %v2763, %v2779
  %v2783 = vld [vmem:[#allocation2 + $0x1c8] sm:$0xff]
  %v2784 = vpack.c.bf16 %v2783, %v2783
  %v2786 = vsel %vm913, %v2784, 0
  %2788 = vmatpush.bf16.msra.mxu0 0
  %2789 = vmatpush.bf16.msra.mxu0 0
  %2790 = vmatpush.bf16.msra.mxu0 0
  %2791 = vmatpush.bf16.msra.mxu0 0
  %2792 = vmatpush.bf16.msra.mxu0 0
  %2793 = vmatpush.bf16.msra.mxu0 0
  %2794 = vmatpush.bf16.msra.mxu0 0
  %2795 = vmatpush.bf16.msra.mxu0 %v1038
  %2796 = vmatmul.bf16.gmra.mxu0 %v2786
  %v2797 = vpop.f32.mrf.mxu0
  %v2798 = vadd.f32 0.0, %v2797
  %v2799 = vpop.f32.mrf.mxu0
  %2800 = vdwg.mxu0
  %v2801 = vadd.f32 %v2782, %v2798
  %v2802 = vadd.f32 %v2801, %v1057
  %v2803 = vmax.f32 %v2802, 0.0
  %v2804 = vpack.c.bf16 %v2803, %v2803
  %v2805 = vpack.c.bf16 %v146, %v145
  %v2806 = vpack.c.bf16 %v148, %v147
  %v2808 = vsel %vm220, %v2804, 0
  %2810 = vmatpush.bf16.msra.mxu0 0
  %2811 = vmatpush.bf16.msra.mxu0 0
  %2812 = vmatpush.bf16.msra.mxu0 0
  %2813 = vmatpush.bf16.msra.mxu0 0
  %2814 = vmatpush.bf16.msra.mxu0 0
  %2815 = vmatpush.bf16.msra.mxu0 0
  %2816 = vmatpush.bf16.msra.mxu0 %v2806
  %2817 = vmatpush.bf16.msra.mxu0 %v2805
  %2818 = vmatmul.bf16.gmra.mxu0 %v2808
  %v2819 = vpop.f32.mrf.mxu0
  %v2820 = vadd.f32 0.0, %v2819
  %v2821 = vpop.f32.mrf.mxu0
  %2822 = vdwg.mxu0
  %v2823 = vadd.f32 %v2699, %v2820
  %2824 = vmatpush.bf16.msra.mxu0 0
  %2825 = vmatpush.bf16.msra.mxu0 0
  %2826 = vmatpush.bf16.msra.mxu0 0
  %2827 = vmatpush.bf16.msra.mxu0 0
  %2828 = vmatpush.bf16.msra.mxu0 0
  %2829 = vmatpush.bf16.msra.mxu0 0
  %2830 = vmatpush.bf16.msra.mxu0 0
  %2831 = vmatpush.bf16.msra.mxu0 %v1453
  %2832 = vmatmul.bf16.gmra.mxu0 %v2311
  %v2833 = vpop.f32.mrf.mxu0
  %v2834 = vadd.f32 0.0, %v2833
  %v2835 = vpop.f32.mrf.mxu0
  %2836 = vdwg.mxu0
  %2837 = vmatpush.bf16.msra.mxu0 0
  %2838 = vmatpush.bf16.msra.mxu0 0
  %2839 = vmatpush.bf16.msra.mxu0 0
  %2840 = vmatpush.bf16.msra.mxu0 0
  %2841 = vmatpush.bf16.msra.mxu0 0
  %2842 = vmatpush.bf16.msra.mxu0 0
  %2843 = vmatpush.bf16.msra.mxu0 0
  %2844 = vmatpush.bf16.msra.mxu0 %v1579
  %2845 = vmatmul.bf16.gmra.mxu0 %v2164
  %v2846 = vpop.f32.mrf.mxu0
  %v2847 = vadd.f32 %v2834, %v2846
  %v2848 = vpop.f32.mrf.mxu0
  %2849 = vdwg.mxu0
  %2850 = vmatpush.bf16.msra.mxu0 0
  %2851 = vmatpush.bf16.msra.mxu0 0
  %2852 = vmatpush.bf16.msra.mxu0 0
  %2853 = vmatpush.bf16.msra.mxu0 0
  %2854 = vmatpush.bf16.msra.mxu0 0
  %2855 = vmatpush.bf16.msra.mxu0 0
  %2856 = vmatpush.bf16.msra.mxu0 0
  %2857 = vmatpush.bf16.msra.mxu0 %v1454
  %2858 = vmatmul.bf16.gmra.mxu0 %v2330
  %v2859 = vpop.f32.mrf.mxu0
  %v2860 = vadd.f32 0.0, %v2859
  %v2861 = vpop.f32.mrf.mxu0
  %2862 = vdwg.mxu0
  %v2863 = vadd.f32 %v2847, %v2860
  %2864 = vmatpush.bf16.msra.mxu0 0
  %2865 = vmatpush.bf16.msra.mxu0 0
  %2866 = vmatpush.bf16.msra.mxu0 0
  %2867 = vmatpush.bf16.msra.mxu0 0
  %2868 = vmatpush.bf16.msra.mxu0 0
  %2869 = vmatpush.bf16.msra.mxu0 0
  %2870 = vmatpush.bf16.msra.mxu0 0
  %2871 = vmatpush.bf16.msra.mxu0 %v1064
  %2872 = vmatmul.bf16.gmra.mxu0 %v2748
  %v2873 = vpop.f32.mrf.mxu0
  %v2874 = vadd.f32 0.0, %v2873
  %v2875 = vpop.f32.mrf.mxu0
  %2876 = vdwg.mxu0
  %v2877 = vadd.f32 %v2863, %v2874
  %v2878 = vld [vmem:[#allocation2 + $0x190] sm:$0xff]
  %v2879 = vpack.c.bf16 %v2878, %v2878
  %v2881 = vsel %vm913, %v2879, 0
  %2883 = vmatpush.bf16.msra.mxu0 0
  %2884 = vmatpush.bf16.msra.mxu0 0
  %2885 = vmatpush.bf16.msra.mxu0 0
  %2886 = vmatpush.bf16.msra.mxu0 0
  %2887 = vmatpush.bf16.msra.mxu0 0
  %2888 = vmatpush.bf16.msra.mxu0 0
  %2889 = vmatpush.bf16.msra.mxu0 0
  %2890 = vmatpush.bf16.msra.mxu0 %v980
  %2891 = vmatmul.bf16.gmra.mxu0 %v2881
  %v2892 = vpop.f32.mrf.mxu0
  %v2893 = vadd.f32 0.0, %v2892
  %v2894 = vpop.f32.mrf.mxu0
  %2895 = vdwg.mxu0
  %v2896 = vadd.f32 %v2877, %v2893
  %v2897 = vld [vmem:[#allocation2 + $0x198] sm:$0xff]
  %v2898 = vpack.c.bf16 %v2897, %v2897
  %v2900 = vsel %vm913, %v2898, 0
  %2902 = vmatpush.bf16.msra.mxu0 0
  %2903 = vmatpush.bf16.msra.mxu0 0
  %2904 = vmatpush.bf16.msra.mxu0 0
  %2905 = vmatpush.bf16.msra.mxu0 0
  %2906 = vmatpush.bf16.msra.mxu0 0
  %2907 = vmatpush.bf16.msra.mxu0 0
  %2908 = vmatpush.bf16.msra.mxu0 0
  %2909 = vmatpush.bf16.msra.mxu0 %v983
  %2910 = vmatmul.bf16.gmra.mxu0 %v2900
  %v2911 = vpop.f32.mrf.mxu0
  %v2912 = vadd.f32 0.0, %v2911
  %v2913 = vpop.f32.mrf.mxu0
  %2914 = vdwg.mxu0
  %v2915 = vadd.f32 %v2896, %v2912
  %2916 = vmatpush.bf16.msra.mxu0 0
  %2917 = vmatpush.bf16.msra.mxu0 0
  %2918 = vmatpush.bf16.msra.mxu0 0
  %2919 = vmatpush.bf16.msra.mxu0 0
  %2920 = vmatpush.bf16.msra.mxu0 0
  %2921 = vmatpush.bf16.msra.mxu0 0
  %2922 = vmatpush.bf16.msra.mxu0 0
  %2923 = vmatpush.bf16.msra.mxu0 %v1115
  %2924 = vmatmul.bf16.gmra.mxu0 %v2786
  %v2925 = vpop.f32.mrf.mxu0
  %v2926 = vadd.f32 0.0, %v2925
  %v2927 = vpop.f32.mrf.mxu0
  %2928 = vdwg.mxu0
  %v2929 = vadd.f32 %v2915, %v2926
  %v2930 = vld [vmem:[#allocation2 + $0x1d0] sm:$0xff]
  %v2931 = vpack.c.bf16 %v2930, %v2930
  %v2933 = vsel %vm913, %v2931, 0
  %2935 = vmatpush.bf16.msra.mxu0 0
  %2936 = vmatpush.bf16.msra.mxu0 0
  %2937 = vmatpush.bf16.msra.mxu0 0
  %2938 = vmatpush.bf16.msra.mxu0 0
  %2939 = vmatpush.bf16.msra.mxu0 0
  %2940 = vmatpush.bf16.msra.mxu0 0
  %2941 = vmatpush.bf16.msra.mxu0 0
  %2942 = vmatpush.bf16.msra.mxu0 %v1018
  %2943 = vmatmul.bf16.gmra.mxu0 %v2933
  %v2944 = vpop.f32.mrf.mxu0
  %v2945 = vadd.f32 0.0, %v2944
  %v2946 = vpop.f32.mrf.mxu0
  %2947 = vdwg.mxu0
  %v2948 = vadd.f32 %v2929, %v2945
  %v2949 = vld [vmem:[#allocation2 + $0x1d8] sm:$0xff]
  %v2950 = vpack.c.bf16 %v2949, %v2949
  %v2952 = vsel %vm913, %v2950, 0
  %2954 = vmatpush.bf16.msra.mxu0 0
  %2955 = vmatpush.bf16.msra.mxu0 0
  %2956 = vmatpush.bf16.msra.mxu0 0
  %2957 = vmatpush.bf16.msra.mxu0 0
  %2958 = vmatpush.bf16.msra.mxu0 0
  %2959 = vmatpush.bf16.msra.mxu0 0
  %2960 = vmatpush.bf16.msra.mxu0 0
  %2961 = vmatpush.bf16.msra.mxu0 %v1038
  %2962 = vmatmul.bf16.gmra.mxu0 %v2952
  %v2963 = vpop.f32.mrf.mxu0
  %v2964 = vadd.f32 0.0, %v2963
  %v2965 = vpop.f32.mrf.mxu0
  %2966 = vdwg.mxu0
  %v2967 = vadd.f32 %v2948, %v2964
  %v2968 = vadd.f32 %v2967, %v1057
  %v2969 = vmax.f32 %v2968, 0.0
  %v2970 = vpack.c.bf16 %v2969, %v2969
  %v2971 = vpack.c.bf16 %v150, %v149
  %v2972 = vpack.c.bf16 %v152, %v151
  %v2974 = vsel %vm220, %v2970, 0
  %2976 = vmatpush.bf16.msra.mxu0 0
  %2977 = vmatpush.bf16.msra.mxu0 0
  %2978 = vmatpush.bf16.msra.mxu0 0
  %2979 = vmatpush.bf16.msra.mxu0 0
  %2980 = vmatpush.bf16.msra.mxu0 0
  %2981 = vmatpush.bf16.msra.mxu0 0
  %2982 = vmatpush.bf16.msra.mxu0 %v2972
  %2983 = vmatpush.bf16.msra.mxu0 %v2971
  %2984 = vmatmul.bf16.gmra.mxu0 %v2974
  %v2985 = vpop.f32.mrf.mxu0
  %v2986 = vadd.f32 0.0, %v2985
  %v2987 = vpop.f32.mrf.mxu0
  %2988 = vdwg.mxu0
  %v2989 = vadd.f32 %v2823, %v2986
  %2990 = vmatpush.bf16.msra.mxu0 0
  %2991 = vmatpush.bf16.msra.mxu0 0
  %2992 = vmatpush.bf16.msra.mxu0 0
  %2993 = vmatpush.bf16.msra.mxu0 0
  %2994 = vmatpush.bf16.msra.mxu0 0
  %2995 = vmatpush.bf16.msra.mxu0 0
  %2996 = vmatpush.bf16.msra.mxu0 0
  %2997 = vmatpush.bf16.msra.mxu0 %v1453
  %2998 = vmatmul.bf16.gmra.mxu0 %v2477
  %v2999 = vpop.f32.mrf.mxu0
  %v3000 = vadd.f32 0.0, %v2999
  %v3001 = vpop.f32.mrf.mxu0
  %3002 = vdwg.mxu0
  %3003 = vmatpush.bf16.msra.mxu0 0
  %3004 = vmatpush.bf16.msra.mxu0 0
  %3005 = vmatpush.bf16.msra.mxu0 0
  %3006 = vmatpush.bf16.msra.mxu0 0
  %3007 = vmatpush.bf16.msra.mxu0 0
  %3008 = vmatpush.bf16.msra.mxu0 0
  %3009 = vmatpush.bf16.msra.mxu0 0
  %3010 = vmatpush.bf16.msra.mxu0 %v1579
  %3011 = vmatmul.bf16.gmra.mxu0 %v2330
  %v3012 = vpop.f32.mrf.mxu0
  %v3013 = vadd.f32 %v3000, %v3012
  %v3014 = vpop.f32.mrf.mxu0
  %3015 = vdwg.mxu0
  %3016 = vmatpush.bf16.msra.mxu0 0
  %3017 = vmatpush.bf16.msra.mxu0 0
  %3018 = vmatpush.bf16.msra.mxu0 0
  %3019 = vmatpush.bf16.msra.mxu0 0
  %3020 = vmatpush.bf16.msra.mxu0 0
  %3021 = vmatpush.bf16.msra.mxu0 0
  %3022 = vmatpush.bf16.msra.mxu0 0
  %3023 = vmatpush.bf16.msra.mxu0 %v1454
  %3024 = vmatmul.bf16.gmra.mxu0 %v2496
  %v3025 = vpop.f32.mrf.mxu0
  %v3026 = vadd.f32 0.0, %v3025
  %v3027 = vpop.f32.mrf.mxu0
  %3028 = vdwg.mxu0
  %v3029 = vadd.f32 %v3013, %v3026
  %3030 = vmatpush.bf16.msra.mxu0 0
  %3031 = vmatpush.bf16.msra.mxu0 0
  %3032 = vmatpush.bf16.msra.mxu0 0
  %3033 = vmatpush.bf16.msra.mxu0 0
  %3034 = vmatpush.bf16.msra.mxu0 0
  %3035 = vmatpush.bf16.msra.mxu0 0
  %3036 = vmatpush.bf16.msra.mxu0 0
  %3037 = vmatpush.bf16.msra.mxu0 %v1064
  %3038 = vmatmul.bf16.gmra.mxu0 %v2900
  %v3039 = vpop.f32.mrf.mxu0
  %v3040 = vadd.f32 0.0, %v3039
  %v3041 = vpop.f32.mrf.mxu0
  %3042 = vdwg.mxu0
  %v3043 = vadd.f32 %v3029, %v3040
  %v3044 = vld [vmem:[#allocation2 + $0x1a0] sm:$0xff]
  %v3045 = vpack.c.bf16 %v3044, %v3044
  %v3047 = vsel %vm913, %v3045, 0
  %3049 = vmatpush.bf16.msra.mxu0 0
  %3050 = vmatpush.bf16.msra.mxu0 0
  %3051 = vmatpush.bf16.msra.mxu0 0
  %3052 = vmatpush.bf16.msra.mxu0 0
  %3053 = vmatpush.bf16.msra.mxu0 0
  %3054 = vmatpush.bf16.msra.mxu0 0
  %3055 = vmatpush.bf16.msra.mxu0 0
  %3056 = vmatpush.bf16.msra.mxu0 %v980
  %3057 = vmatmul.bf16.gmra.mxu0 %v3047
  %v3058 = vpop.f32.mrf.mxu0
  %v3059 = vadd.f32 0.0, %v3058
  %v3060 = vpop.f32.mrf.mxu0
  %3061 = vdwg.mxu0
  %v3062 = vadd.f32 %v3043, %v3059
  %v3063 = vld [vmem:[#allocation2 + $0x1a8] sm:$0xff]
  %v3064 = vpack.c.bf16 %v3063, %v3063
  %v3066 = vsel %vm913, %v3064, 0
  %3068 = vmatpush.bf16.msra.mxu0 0
  %3069 = vmatpush.bf16.msra.mxu0 0
  %3070 = vmatpush.bf16.msra.mxu0 0
  %3071 = vmatpush.bf16.msra.mxu0 0
  %3072 = vmatpush.bf16.msra.mxu0 0
  %3073 = vmatpush.bf16.msra.mxu0 0
  %3074 = vmatpush.bf16.msra.mxu0 0
  %3075 = vmatpush.bf16.msra.mxu0 %v983
  %3076 = vmatmul.bf16.gmra.mxu0 %v3066
  %v3077 = vpop.f32.mrf.mxu0
  %v3078 = vadd.f32 0.0, %v3077
  %v3079 = vpop.f32.mrf.mxu0
  %3080 = vdwg.mxu0
  %v3081 = vadd.f32 %v3062, %v3078
  %3082 = vmatpush.bf16.msra.mxu0 0
  %3083 = vmatpush.bf16.msra.mxu0 0
  %3084 = vmatpush.bf16.msra.mxu0 0
  %3085 = vmatpush.bf16.msra.mxu0 0
  %3086 = vmatpush.bf16.msra.mxu0 0
  %3087 = vmatpush.bf16.msra.mxu0 0
  %3088 = vmatpush.bf16.msra.mxu0 0
  %3089 = vmatpush.bf16.msra.mxu0 %v1115
  %3090 = vmatmul.bf16.gmra.mxu0 %v2952
  %v3091 = vpop.f32.mrf.mxu0
  %v3092 = vadd.f32 0.0, %v3091
  %v3093 = vpop.f32.mrf.mxu0
  %3094 = vdwg.mxu0
  %v3095 = vadd.f32 %v3081, %v3092
  %v3096 = vld [vmem:[#allocation2 + $0x1e0] sm:$0xff]
  %v3097 = vpack.c.bf16 %v3096, %v3096
  %v3099 = vsel %vm913, %v3097, 0
  %3101 = vmatpush.bf16.msra.mxu0 0
  %3102 = vmatpush.bf16.msra.mxu0 0
  %3103 = vmatpush.bf16.msra.mxu0 0
  %3104 = vmatpush.bf16.msra.mxu0 0
  %3105 = vmatpush.bf16.msra.mxu0 0
  %3106 = vmatpush.bf16.msra.mxu0 0
  %3107 = vmatpush.bf16.msra.mxu0 0
  %3108 = vmatpush.bf16.msra.mxu0 %v1018
  %3109 = vmatmul.bf16.gmra.mxu0 %v3099
  %v3110 = vpop.f32.mrf.mxu0
  %v3111 = vadd.f32 0.0, %v3110
  %v3112 = vpop.f32.mrf.mxu0
  %3113 = vdwg.mxu0
  %v3114 = vadd.f32 %v3095, %v3111
  %v3115 = vld [vmem:[#allocation2 + $0x1e8] sm:$0xff]
  %v3116 = vpack.c.bf16 %v3115, %v3115
  %v3118 = vsel %vm913, %v3116, 0
  %3120 = vmatpush.bf16.msra.mxu0 0
  %3121 = vmatpush.bf16.msra.mxu0 0
  %3122 = vmatpush.bf16.msra.mxu0 0
  %3123 = vmatpush.bf16.msra.mxu0 0
  %3124 = vmatpush.bf16.msra.mxu0 0
  %3125 = vmatpush.bf16.msra.mxu0 0
  %3126 = vmatpush.bf16.msra.mxu0 0
  %3127 = vmatpush.bf16.msra.mxu0 %v1038
  %3128 = vmatmul.bf16.gmra.mxu0 %v3118
  %v3129 = vpop.f32.mrf.mxu0
  %v3130 = vadd.f32 0.0, %v3129
  %v3131 = vpop.f32.mrf.mxu0
  %3132 = vdwg.mxu0
  %v3133 = vadd.f32 %v3114, %v3130
  %v3134 = vadd.f32 %v3133, %v1057
  %v3135 = vmax.f32 %v3134, 0.0
  %v3136 = vpack.c.bf16 %v3135, %v3135
  %v3137 = vpack.c.bf16 %v154, %v153
  %v3138 = vpack.c.bf16 %v156, %v155
  %v3140 = vsel %vm220, %v3136, 0
  %3142 = vmatpush.bf16.msra.mxu0 0
  %3143 = vmatpush.bf16.msra.mxu0 0
  %3144 = vmatpush.bf16.msra.mxu0 0
  %3145 = vmatpush.bf16.msra.mxu0 0
  %3146 = vmatpush.bf16.msra.mxu0 0
  %3147 = vmatpush.bf16.msra.mxu0 0
  %3148 = vmatpush.bf16.msra.mxu0 %v3138
  %3149 = vmatpush.bf16.msra.mxu0 %v3137
  %3150 = vmatmul.bf16.gmra.mxu0 %v3140
  %v3151 = vpop.f32.mrf.mxu0
  %v3152 = vadd.f32 0.0, %v3151
  %v3153 = vpop.f32.mrf.mxu0
  %3154 = vdwg.mxu0
  %v3155 = vadd.f32 %v2989, %v3152
  %3156 = vmatpush.bf16.msra.mxu0 0
  %3157 = vmatpush.bf16.msra.mxu0 0
  %3158 = vmatpush.bf16.msra.mxu0 0
  %3159 = vmatpush.bf16.msra.mxu0 0
  %3160 = vmatpush.bf16.msra.mxu0 0
  %3161 = vmatpush.bf16.msra.mxu0 0
  %3162 = vmatpush.bf16.msra.mxu0 0
  %3163 = vmatpush.bf16.msra.mxu0 %v1453
  %3164 = vmatmul.bf16.gmra.mxu0 %v2643
  %v3165 = vpop.f32.mrf.mxu0
  %v3166 = vadd.f32 0.0, %v3165
  %v3167 = vpop.f32.mrf.mxu0
  %3168 = vdwg.mxu0
  %3169 = vmatpush.bf16.msra.mxu0 0
  %3170 = vmatpush.bf16.msra.mxu0 0
  %3171 = vmatpush.bf16.msra.mxu0 0
  %3172 = vmatpush.bf16.msra.mxu0 0
  %3173 = vmatpush.bf16.msra.mxu0 0
  %3174 = vmatpush.bf16.msra.mxu0 0
  %3175 = vmatpush.bf16.msra.mxu0 0
  %3176 = vmatpush.bf16.msra.mxu0 %v1579
  %3177 = vmatmul.bf16.gmra.mxu0 %v2496
  %v3178 = vpop.f32.mrf.mxu0
  %v3179 = vadd.f32 %v3166, %v3178
  %v3180 = vpop.f32.mrf.mxu0
  %3181 = vdwg.mxu0
  %3182 = vmatpush.bf16.msra.mxu0 0
  %3183 = vmatpush.bf16.msra.mxu0 0
  %3184 = vmatpush.bf16.msra.mxu0 0
  %3185 = vmatpush.bf16.msra.mxu0 0
  %3186 = vmatpush.bf16.msra.mxu0 0
  %3187 = vmatpush.bf16.msra.mxu0 0
  %3188 = vmatpush.bf16.msra.mxu0 0
  %3189 = vmatpush.bf16.msra.mxu0 %v1454
  %3190 = vmatmul.bf16.gmra.mxu0 %v2662
  %v3191 = vpop.f32.mrf.mxu0
  %v3192 = vadd.f32 0.0, %v3191
  %v3193 = vpop.f32.mrf.mxu0
  %3194 = vdwg.mxu0
  %v3195 = vadd.f32 %v3179, %v3192
  %3196 = vmatpush.bf16.msra.mxu0 0
  %3197 = vmatpush.bf16.msra.mxu0 0
  %3198 = vmatpush.bf16.msra.mxu0 0
  %3199 = vmatpush.bf16.msra.mxu0 0
  %3200 = vmatpush.bf16.msra.mxu0 0
  %3201 = vmatpush.bf16.msra.mxu0 0
  %3202 = vmatpush.bf16.msra.mxu0 0
  %3203 = vmatpush.bf16.msra.mxu0 %v1064
  %3204 = vmatmul.bf16.gmra.mxu0 %v3066
  %v3205 = vpop.f32.mrf.mxu0
  %v3206 = vadd.f32 0.0, %v3205
  %v3207 = vpop.f32.mrf.mxu0
  %3208 = vdwg.mxu0
  %v3209 = vadd.f32 %v3195, %v3206
  %v3210 = vld [vmem:[#allocation2 + $0x1b0] sm:$0xff]
  %v3211 = vpack.c.bf16 %v3210, %v3210
  %v3213 = vsel %vm913, %v3211, 0
  %3215 = vmatpush.bf16.msra.mxu0 0
  %3216 = vmatpush.bf16.msra.mxu0 0
  %3217 = vmatpush.bf16.msra.mxu0 0
  %3218 = vmatpush.bf16.msra.mxu0 0
  %3219 = vmatpush.bf16.msra.mxu0 0
  %3220 = vmatpush.bf16.msra.mxu0 0
  %3221 = vmatpush.bf16.msra.mxu0 0
  %3222 = vmatpush.bf16.msra.mxu0 %v980
  %3223 = vmatmul.bf16.gmra.mxu0 %v3213
  %v3224 = vpop.f32.mrf.mxu0
  %v3225 = vadd.f32 0.0, %v3224
  %v3226 = vpop.f32.mrf.mxu0
  %3227 = vdwg.mxu0
  %v3228 = vadd.f32 %v3209, %v3225
  %v3229 = vld [vmem:[#allocation2 + $0x1b8] sm:$0xff]
  %v3230 = vpack.c.bf16 %v3229, %v3229
  %v3232 = vsel %vm913, %v3230, 0
  %3234 = vmatpush.bf16.msra.mxu0 0
  %3235 = vmatpush.bf16.msra.mxu0 0
  %3236 = vmatpush.bf16.msra.mxu0 0
  %3237 = vmatpush.bf16.msra.mxu0 0
  %3238 = vmatpush.bf16.msra.mxu0 0
  %3239 = vmatpush.bf16.msra.mxu0 0
  %3240 = vmatpush.bf16.msra.mxu0 0
  %3241 = vmatpush.bf16.msra.mxu0 %v983
  %3242 = vmatmul.bf16.gmra.mxu0 %v3232
  %v3243 = vpop.f32.mrf.mxu0
  %v3244 = vadd.f32 0.0, %v3243
  %v3245 = vpop.f32.mrf.mxu0
  %3246 = vdwg.mxu0
  %v3247 = vadd.f32 %v3228, %v3244
  %3248 = vmatpush.bf16.msra.mxu0 0
  %3249 = vmatpush.bf16.msra.mxu0 0
  %3250 = vmatpush.bf16.msra.mxu0 0
  %3251 = vmatpush.bf16.msra.mxu0 0
  %3252 = vmatpush.bf16.msra.mxu0 0
  %3253 = vmatpush.bf16.msra.mxu0 0
  %3254 = vmatpush.bf16.msra.mxu0 0
  %3255 = vmatpush.bf16.msra.mxu0 %v1115
  %3256 = vmatmul.bf16.gmra.mxu0 %v3118
  %v3257 = vpop.f32.mrf.mxu0
  %v3258 = vadd.f32 0.0, %v3257
  %v3259 = vpop.f32.mrf.mxu0
  %3260 = vdwg.mxu0
  %v3261 = vadd.f32 %v3247, %v3258
  %v3262 = vld [vmem:[#allocation2 + $0x1f0] sm:$0xff]
  %v3263 = vpack.c.bf16 %v3262, %v3262
  %v3265 = vsel %vm913, %v3263, 0
  %3267 = vmatpush.bf16.msra.mxu0 0
  %3268 = vmatpush.bf16.msra.mxu0 0
  %3269 = vmatpush.bf16.msra.mxu0 0
  %3270 = vmatpush.bf16.msra.mxu0 0
  %3271 = vmatpush.bf16.msra.mxu0 0
  %3272 = vmatpush.bf16.msra.mxu0 0
  %3273 = vmatpush.bf16.msra.mxu0 0
  %3274 = vmatpush.bf16.msra.mxu0 %v1018
  %3275 = vmatmul.bf16.gmra.mxu0 %v3265
  %v3276 = vpop.f32.mrf.mxu0
  %v3277 = vadd.f32 0.0, %v3276
  %v3278 = vpop.f32.mrf.mxu0
  %3279 = vdwg.mxu0
  %v3280 = vadd.f32 %v3261, %v3277
  %v3281 = vld [vmem:[#allocation2 + $0x1f8] sm:$0xff]
  %v3282 = vpack.c.bf16 %v3281, %v3281
  %v3284 = vsel %vm913, %v3282, 0
  %3286 = vmatpush.bf16.msra.mxu0 0
  %3287 = vmatpush.bf16.msra.mxu0 0
  %3288 = vmatpush.bf16.msra.mxu0 0
  %3289 = vmatpush.bf16.msra.mxu0 0
  %3290 = vmatpush.bf16.msra.mxu0 0
  %3291 = vmatpush.bf16.msra.mxu0 0
  %3292 = vmatpush.bf16.msra.mxu0 0
  %3293 = vmatpush.bf16.msra.mxu0 %v1038
  %3294 = vmatmul.bf16.gmra.mxu0 %v3284
  %v3295 = vpop.f32.mrf.mxu0
  %v3296 = vadd.f32 0.0, %v3295
  %v3297 = vpop.f32.mrf.mxu0
  %3298 = vdwg.mxu0
  %v3299 = vadd.f32 %v3280, %v3296
  %v3300 = vadd.f32 %v3299, %v1057
  %v3301 = vmax.f32 %v3300, 0.0
  %v3302 = vpack.c.bf16 %v3301, %v3301
  %v3303 = vpack.c.bf16 %v158, %v157
  %v3304 = vpack.c.bf16 %v160, %v159
  %v3306 = vsel %vm220, %v3302, 0
  %3308 = vmatpush.bf16.msra.mxu0 0
  %3309 = vmatpush.bf16.msra.mxu0 0
  %3310 = vmatpush.bf16.msra.mxu0 0
  %3311 = vmatpush.bf16.msra.mxu0 0
  %3312 = vmatpush.bf16.msra.mxu0 0
  %3313 = vmatpush.bf16.msra.mxu0 0
  %3314 = vmatpush.bf16.msra.mxu0 %v3304
  %3315 = vmatpush.bf16.msra.mxu0 %v3303
  %3316 = vmatmul.bf16.gmra.mxu0 %v3306
  %v3317 = vpop.f32.mrf.mxu0
  %v3318 = vadd.f32 0.0, %v3317
  %v3319 = vpop.f32.mrf.mxu0
  %3320 = vdwg.mxu0
  %v3321 = vadd.f32 %v3155, %v3318
  %v3323 = vperm.slane %v161, 0
  %v3325 = vadd.f32 %v3321, %v3323
  %v3326 = vpack.c.bf16 %v3325, %v3325
  %v3327 = vpack.c.bf16 %v178, %v177
  %v3328 = vpack.c.bf16 %v180, %v179
  %v3330 = vsel %vm220, %v3326, 0
  %3332 = vmatpush.bf16.msra.mxu0 0
  %3333 = vmatpush.bf16.msra.mxu0 0
  %3334 = vmatpush.bf16.msra.mxu0 0
  %3335 = vmatpush.bf16.msra.mxu0 0
  %3336 = vmatpush.bf16.msra.mxu0 0
  %3337 = vmatpush.bf16.msra.mxu0 0
  %3338 = vmatpush.bf16.msra.mxu0 %v3328
  %3339 = vmatpush.bf16.msra.mxu0 %v3327
  %3340 = vmatmul.bf16.gmra.mxu0 %v3330
  %v3341 = vpop.f32.mrf.mxu0
  %v3342 = vadd.f32 0.0, %v3341
  %v3343 = vpop.f32.mrf.mxu0
  %3344 = vdwg.mxu0
  %v3345 = vpack.c.bf16 %v162, %v162
  %v3347 = vperm.slane %v163, 0
  %v3350 = vrot.slane %v192, 3
  %v3352 = vsel %vm194, %v3350, 0
  %v3355 = vand.u32 %v3345, %v201
  %3357 = vmatpush.bf16.msra.mxu0 0
  %3358 = vmatpush.bf16.msra.mxu0 0
  %3359 = vmatpush.bf16.msra.mxu0 0
  %3360 = vmatpush.bf16.msra.mxu0 0
  %3361 = vmatpush.bf16.msra.mxu0 0
  %3362 = vmatpush.bf16.msra.mxu0 0
  %3363 = vmatpush.bf16.msra.mxu0 0
  %3364 = vmatpush.bf16.msra.mxu0 %v3355
  %3365 = vmatmul.bf16.gmra.mxu0 %v3352
  %v3366 = vpop.f32.mrf.mxu0
  %v3367 = vadd.f32 %v3347, %v3366
  %v3368 = vpop.f32.mrf.mxu0
  %3369 = vdwg.mxu0
  %v3370 = vmax.f32 %v3367, 0.0
  %v3371 = vpack.c.bf16 %v3370, %v3370
  %v3372 = vpack.c.bf16 %v165, %v164
  %v3373 = vpack.c.bf16 %v167, %v166
  %v3374 = vpack.c.bf16 %v169, %v168
  %v3375 = vpack.c.bf16 %v171, %v170
  %v3377 = vperm.slane %v172, 0
  %vm3379 = vcmask 523264
  %v3381 = vsel %vm3379, %v3371, 0
  %3383 = vmatpush.bf16.msra.mxu0 0
  %3384 = vmatpush.bf16.msra.mxu0 0
  %3385 = vmatpush.bf16.msra.mxu0 0
  %3386 = vmatpush.bf16.msra.mxu0 0
  %3387 = vmatpush.bf16.msra.mxu0 %v3375
  %3388 = vmatpush.bf16.msra.mxu0 %v3374
  %3389 = vmatpush.bf16.msra.mxu0 %v3373
  %3390 = vmatpush.bf16.msra.mxu0 %v3372
  %3391 = vmatmul.bf16.gmra.mxu0 %v3381
  %v3392 = vpop.f32.mrf.mxu0
  %v3393 = vadd.f32 %v3377, %v3392
  %v3394 = vpop.f32.mrf.mxu0
  %3395 = vdwg.mxu0
  %v3396 = vpack.c.bf16 %v3393, %v3393
  %v3397 = vpack.c.bf16 %v174, %v173
  %v3398 = vpack.c.bf16 %v176, %v175
  %v3400 = vsel %vm220, %v3396, 0
  %3402 = vmatpush.bf16.msra.mxu0 0
  %3403 = vmatpush.bf16.msra.mxu0 0
  %3404 = vmatpush.bf16.msra.mxu0 0
  %3405 = vmatpush.bf16.msra.mxu0 0
  %3406 = vmatpush.bf16.msra.mxu0 0
  %3407 = vmatpush.bf16.msra.mxu0 0
  %3408 = vmatpush.bf16.msra.mxu0 %v3398
  %3409 = vmatpush.bf16.msra.mxu0 %v3397
  %3410 = vmatmul.bf16.gmra.mxu0 %v3400
  %v3411 = vpop.f32.mrf.mxu0
  %v3412 = vadd.f32 %v3342, %v3411
  %v3413 = vpop.f32.mrf.mxu0
  %3414 = vdwg.mxu0
  %v3415 = vpack.c.bf16 %v475, %v475
  %v3416 = vpack.c.bf16 %v182, %v181
  %v3417 = vpack.c.bf16 %v184, %v183
  %v3419 = vrot.slane %v3415, 3
  %3420 = vrot.lane.b32.xlu0 %v3419, 32
  %v3421 = vpop.permute.xlu0 %3420
  %v3423 = vsel %vm220, %v3421, 0
  %3425 = vmatpush.bf16.msra.mxu0 0
  %3426 = vmatpush.bf16.msra.mxu0 0
  %3427 = vmatpush.bf16.msra.mxu0 0
  %3428 = vmatpush.bf16.msra.mxu0 0
  %3429 = vmatpush.bf16.msra.mxu0 0
  %3430 = vmatpush.bf16.msra.mxu0 0
  %3431 = vmatpush.bf16.msra.mxu0 %v3417
  %3432 = vmatpush.bf16.msra.mxu0 %v3416
  %3433 = vmatmul.bf16.gmra.mxu0 %v3423
  %v3434 = vpop.f32.mrf.mxu0
  %v3435 = vadd.f32 0.0, %v3434
  %v3436 = vpop.f32.mrf.mxu0
  %3437 = vdwg.mxu0
  %v3438 = vadd.f32 %v3412, %v3435
  %v3440 = vperm.slane %v185, 0
  %v3442 = vadd.f32 %v3438, %v3440
  %v3443 = vxor.u32 %v3442, 2147483648
  %v3444 = vmul.f32 %v3443, 1.442695
  %v3445 = vpow.pop %v3444
  %v3446 = vadd.f32 %v3445, 1.0
  %v3447 = vrcp.pop %v3446
  %v3448 = vmul.f32 %v3446, %v3447
  %v3449 = vsub.f32 1.0, %v3448
  %v3450 = vmul.f32 %v3447, %v3449
  %v3451 = vadd.f32 %v3447, %v3450
  %vm3452 = vweird.f32 %v3446
  %vm3453 = vweird.f32 %v3447
  %vm3454 = vmor %vm3452, %vm3453
  %v3455 = vsel %vm3454, %v3447, %v3451
  %v3456 = vand.u32 2147483647, %v3446
  %vm3457 = vcmp.eq.f32.partialorder %v3456, 8.507059e+37
  %v3458 = vand.u32 %v3446, 2147483648
  %v3459 = vor.u32 1.1754944e-38, %v3458
  %v3460 = vsel %vm3457, %v3459, %v3455
  %v3461 = vmul.f32 1.0, %v3460
  %v3462 = vtanh.pop %v3442
  %v3464 = vrot.slane %v469, 6
  %v3466 = vmul.f32 %v3461, %v3464
  %3468 = vrot.lane.b32.xlu0 %v3462, 64
  %v3469 = vpop.permute.xlu0 %3468
  %v3471 = vmul.f32 %v3461, %v3469
  %3473 = vrot.lane.b32.xlu0 %v3471, 32
  %v3474 = vpop.permute.xlu0 %3473
  %v3476 = vadd.f32 %v3466, %v3474
  %v3477 = vtanh.pop %v3476
  %3479 = vrot.lane.b32.xlu0 %v3477, 64
  %v3480 = vpop.permute.xlu0 %3479
  %v3482 = vmul.f32 %v3461, %v3480
  %v3483 = vpack.c.bf16 %v3482, %v3482
  %v3484 = vpack.c.bf16 %v187, %v186
  %v3485 = vpack.c.bf16 %v189, %v188
  %v3487 = vperm.slane %v190, 0
  %3490 = vrot.lane.b32.xlu0 %v3483, 32
  %v3491 = vpop.permute.xlu0 %3490
  %v3493 = vsel %vm220, %v3491, 0
  %3495 = vmatpush.bf16.msra.mxu0 0
  %3496 = vmatpush.bf16.msra.mxu0 0
  %3497 = vmatpush.bf16.msra.mxu0 0
  %3498 = vmatpush.bf16.msra.mxu0 0
  %3499 = vmatpush.bf16.msra.mxu0 0
  %3500 = vmatpush.bf16.msra.mxu0 0
  %3501 = vmatpush.bf16.msra.mxu0 %v3485
  %3502 = vmatpush.bf16.msra.mxu0 %v3484
  %3503 = vmatmul.bf16.gmra.mxu0 %v3493
  %v3504 = vpop.f32.mrf.mxu0
  %v3505 = vadd.f32 %v3487, %v3504
  %v3506 = vpop.f32.mrf.mxu0
  %3507 = vdwg.mxu0
  %v3509 = vrot.slane %v3505, 2
  %v3511 = vadd.f32 %v191, %v3509
  %vm3512 = vcmask 23558
  %3513 = vst.msk [vmem:[%s21 - $0x6] sm:$0xc0] %vm3512, %v3511
  %v3514 = vpack.c.bf16 %v3511, %v3511
  %v3516 = vrot.slane %v3514, 3
  %v3518 = vsel %vm194, %v3516, 0
  %3520 = vmatpush.bf16.msra.mxu0 0
  %3521 = vmatpush.bf16.msra.mxu0 0
  %3522 = vmatpush.bf16.msra.mxu0 0
  %3523 = vmatpush.bf16.msra.mxu0 0
  %3524 = vmatpush.bf16.msra.mxu0 0
  %3525 = vmatpush.bf16.msra.mxu0 0
  %3526 = vmatpush.bf16.msra.mxu0 0
  %3527 = vmatpush.bf16.msra.mxu0 %v3355
  %3528 = vmatmul.bf16.gmra.mxu0 %v3518
  %v3529 = vpop.f32.mrf.mxu0
  %v3530 = vadd.f32 %v3347, %v3529
  %v3531 = vpop.f32.mrf.mxu0
  %3532 = vdwg.mxu0
  %v3533 = vmax.f32 %v3530, 0.0
  %v3534 = vpack.c.bf16 %v3533, %v3533
  %v3536 = vsel %vm3379, %v3534, 0
  %3538 = vmatpush.bf16.msra.mxu0 0
  %3539 = vmatpush.bf16.msra.mxu0 0
  %3540 = vmatpush.bf16.msra.mxu0 0
  %3541 = vmatpush.bf16.msra.mxu0 0
  %3542 = vmatpush.bf16.msra.mxu0 %v3375
  %3543 = vmatpush.bf16.msra.mxu0 %v3374
  %3544 = vmatpush.bf16.msra.mxu0 %v3373
  %3545 = vmatpush.bf16.msra.mxu0 %v3372
  %3546 = vmatmul.bf16.gmra.mxu0 %v3536
  %v3547 = vpop.f32.mrf.mxu0
  %v3548 = vadd.f32 %v3377, %v3547
  %v3549 = vpop.f32.mrf.mxu0
  %3550 = vdwg.mxu0
  %v3551 = vpack.c.bf16 %v3548, %v3548
  %v3553 = vrot.slane %v3342, 2
  %v3556 = vsel %vm220, %v3551, 0
  %3558 = vmatpush.bf16.msra.mxu0 0
  %3559 = vmatpush.bf16.msra.mxu0 0
  %3560 = vmatpush.bf16.msra.mxu0 0
  %3561 = vmatpush.bf16.msra.mxu0 0
  %3562 = vmatpush.bf16.msra.mxu0 0
  %3563 = vmatpush.bf16.msra.mxu0 0
  %3564 = vmatpush.bf16.msra.mxu0 %v3398
  %3565 = vmatpush.bf16.msra.mxu0 %v3397
  %3566 = vmatmul.bf16.gmra.mxu0 %v3556
  %v3567 = vpop.f32.mrf.mxu0
  %v3568 = vadd.f32 %v3553, %v3567
  %v3569 = vpop.f32.mrf.mxu0
  %3570 = vdwg.mxu0
  %3571 = vmatpush.bf16.msra.mxu0 0
  %3572 = vmatpush.bf16.msra.mxu0 0
  %3573 = vmatpush.bf16.msra.mxu0 0
  %3574 = vmatpush.bf16.msra.mxu0 0
  %3575 = vmatpush.bf16.msra.mxu0 0
  %3576 = vmatpush.bf16.msra.mxu0 0
  %3577 = vmatpush.bf16.msra.mxu0 %v3417
  %3578 = vmatpush.bf16.msra.mxu0 %v3416
  %3579 = vmatmul.bf16.gmra.mxu0 %v3493
  %v3580 = vpop.f32.mrf.mxu0
  %v3581 = vadd.f32 0.0, %v3580
  %v3582 = vpop.f32.mrf.mxu0
  %3583 = vdwg.mxu0
  %v3584 = vadd.f32 %v3568, %v3581
  %v3585 = vadd.f32 %v3584, %v3440
  %v3586 = vxor.u32 %v3585, 2147483648
  %v3587 = vmul.f32 %v3586, 1.442695
  %v3588 = vpow.pop %v3587
  %v3589 = vadd.f32 %v3588, 1.0
  %v3590 = vrcp.pop %v3589
  %v3591 = vmul.f32 %v3589, %v3590
  %v3592 = vsub.f32 1.0, %v3591
  %v3593 = vmul.f32 %v3590, %v3592
  %v3594 = vadd.f32 %v3590, %v3593
  %vm3595 = vweird.f32 %v3589
  %vm3596 = vweird.f32 %v3590
  %vm3597 = vmor %vm3595, %vm3596
  %v3598 = vsel %vm3597, %v3590, %v3594
  %v3599 = vand.u32 2147483647, %v3589
  %vm3600 = vcmp.eq.f32.partialorder %v3599, 8.507059e+37
  %v3601 = vand.u32 %v3589, 2147483648
  %v3602 = vor.u32 1.1754944e-38, %v3601
  %v3603 = vsel %vm3600, %v3602, %v3598
  %v3604 = vmul.f32 1.0, %v3603
  %v3605 = vtanh.pop %v3585
  %v3606 = vmul.f32 %v3604, %v3476
  %3608 = vrot.lane.b32.xlu0 %v3605, 64
  %v3609 = vpop.permute.xlu0 %3608
  %v3611 = vmul.f32 %v3604, %v3609
  %3613 = vrot.lane.b32.xlu0 %v3611, 32
  %v3614 = vpop.permute.xlu0 %3613
  %v3616 = vadd.f32 %v3606, %v3614
  %v3617 = vtanh.pop %v3616
  %3619 = vrot.lane.b32.xlu0 %v3617, 64
  %v3620 = vpop.permute.xlu0 %3619
  %v3622 = vmul.f32 %v3604, %v3620
  %v3623 = vpack.c.bf16 %v3622, %v3622
  %3625 = vrot.lane.b32.xlu0 %v3623, 32
  %v3626 = vpop.permute.xlu0 %3625
  %v3628 = vsel %vm220, %v3626, 0
  %3630 = vmatpush.bf16.msra.mxu0 0
  %3631 = vmatpush.bf16.msra.mxu0 0
  %3632 = vmatpush.bf16.msra.mxu0 0
  %3633 = vmatpush.bf16.msra.mxu0 0
  %3634 = vmatpush.bf16.msra.mxu0 0
  %3635 = vmatpush.bf16.msra.mxu0 0
  %3636 = vmatpush.bf16.msra.mxu0 %v3485
  %3637 = vmatpush.bf16.msra.mxu0 %v3484
  %3638 = vmatmul.bf16.gmra.mxu0 %v3628
  %v3639 = vpop.f32.mrf.mxu0
  %v3640 = vadd.f32 %v3487, %v3639
  %v3641 = vpop.f32.mrf.mxu0
  %3642 = vdwg.mxu0
  %v3644 = vrot.slane %v3640, 2
  %v3646 = vadd.f32 %v3511, %v3644
  %s3647 = scalar_lea.vmem %s21, 2
  %3648 = vst.msk [vmem:[%s3647 - $0x6] sm:$0xc0] %vm3512, %v3646
  %v3649 = vpack.c.bf16 %v3646, %v3646
  %v3651 = vrot.slane %v3649, 3
  %v3653 = vsel %vm194, %v3651, 0
  %3655 = vmatpush.bf16.msra.mxu0 0
  %3656 = vmatpush.bf16.msra.mxu0 0
  %3657 = vmatpush.bf16.msra.mxu0 0
  %3658 = vmatpush.bf16.msra.mxu0 0
  %3659 = vmatpush.bf16.msra.mxu0 0
  %3660 = vmatpush.bf16.msra.mxu0 0
  %3661 = vmatpush.bf16.msra.mxu0 0
  %3662 = vmatpush.bf16.msra.mxu0 %v3355
  %3663 = vmatmul.bf16.gmra.mxu0 %v3653
  %v3664 = vpop.f32.mrf.mxu0
  %v3665 = vadd.f32 %v3347, %v3664
  %v3666 = vpop.f32.mrf.mxu0
  %3667 = vdwg.mxu0
  %v3668 = vmax.f32 %v3665, 0.0
  %v3669 = vpack.c.bf16 %v3668, %v3668
  %v3671 = vsel %vm3379, %v3669, 0
  %3673 = vmatpush.bf16.msra.mxu0 0
  %3674 = vmatpush.bf16.msra.mxu0 0
  %3675 = vmatpush.bf16.msra.mxu0 0
  %3676 = vmatpush.bf16.msra.mxu0 0
  %3677 = vmatpush.bf16.msra.mxu0 %v3375
  %3678 = vmatpush.bf16.msra.mxu0 %v3374
  %3679 = vmatpush.bf16.msra.mxu0 %v3373
  %3680 = vmatpush.bf16.msra.mxu0 %v3372
  %3681 = vmatmul.bf16.gmra.mxu0 %v3671
  %v3682 = vpop.f32.mrf.mxu0
  %v3683 = vadd.f32 %v3377, %v3682
  %v3684 = vpop.f32.mrf.mxu0
  %3685 = vdwg.mxu0
  %v3686 = vpack.c.bf16 %v3683, %v3683
  %v3687 = vrot.slane %v3342, 4
  %v3690 = vsel %vm220, %v3686, 0
  %3692 = vmatpush.bf16.msra.mxu0 0
  %3693 = vmatpush.bf16.msra.mxu0 0
  %3694 = vmatpush.bf16.msra.mxu0 0
  %3695 = vmatpush.bf16.msra.mxu0 0
  %3696 = vmatpush.bf16.msra.mxu0 0
  %3697 = vmatpush.bf16.msra.mxu0 0
  %3698 = vmatpush.bf16.msra.mxu0 %v3398
  %3699 = vmatpush.bf16.msra.mxu0 %v3397
  %3700 = vmatmul.bf16.gmra.mxu0 %v3690
  %v3701 = vpop.f32.mrf.mxu0
  %v3702 = vadd.f32 %v3687, %v3701
  %v3703 = vpop.f32.mrf.mxu0
  %3704 = vdwg.mxu0
  %3705 = vmatpush.bf16.msra.mxu0 0
  %3706 = vmatpush.bf16.msra.mxu0 0
  %3707 = vmatpush.bf16.msra.mxu0 0
  %3708 = vmatpush.bf16.msra.mxu0 0
  %3709 = vmatpush.bf16.msra.mxu0 0
  %3710 = vmatpush.bf16.msra.mxu0 0
  %3711 = vmatpush.bf16.msra.mxu0 %v3417
  %3712 = vmatpush.bf16.msra.mxu0 %v3416
  %3713 = vmatmul.bf16.gmra.mxu0 %v3628
  %v3714 = vpop.f32.mrf.mxu0
  %v3715 = vadd.f32 0.0, %v3714
  %v3716 = vpop.f32.mrf.mxu0
  %3717 = vdwg.mxu0
  %v3718 = vadd.f32 %v3702, %v3715
  %v3719 = vadd.f32 %v3718, %v3440
  %v3720 = vxor.u32 %v3719, 2147483648
  %v3721 = vmul.f32 %v3720, 1.442695
  %v3722 = vpow.pop %v3721
  %v3723 = vadd.f32 %v3722, 1.0
  %v3724 = vrcp.pop %v3723
  %v3725 = vmul.f32 %v3723, %v3724
  %v3726 = vsub.f32 1.0, %v3725
  %v3727 = vmul.f32 %v3724, %v3726
  %v3728 = vadd.f32 %v3724, %v3727
  %vm3729 = vweird.f32 %v3723
  %vm3730 = vweird.f32 %v3724
  %vm3731 = vmor %vm3729, %vm3730
  %v3732 = vsel %vm3731, %v3724, %v3728
  %v3733 = vand.u32 2147483647, %v3723
  %vm3734 = vcmp.eq.f32.partialorder %v3733, 8.507059e+37
  %v3735 = vand.u32 %v3723, 2147483648
  %v3736 = vor.u32 1.1754944e-38, %v3735
  %v3737 = vsel %vm3734, %v3736, %v3732
  %v3738 = vmul.f32 1.0, %v3737
  %v3739 = vtanh.pop %v3719
  %v3740 = vmul.f32 %v3738, %v3616
  %3742 = vrot.lane.b32.xlu0 %v3739, 64
  %v3743 = vpop.permute.xlu0 %3742
  %v3745 = vmul.f32 %v3738, %v3743
  %3747 = vrot.lane.b32.xlu0 %v3745, 32
  %v3748 = vpop.permute.xlu0 %3747
  %v3750 = vadd.f32 %v3740, %v3748
  %v3751 = vtanh.pop %v3750
  %3753 = vrot.lane.b32.xlu0 %v3751, 64
  %v3754 = vpop.permute.xlu0 %3753
  %v3756 = vmul.f32 %v3738, %v3754
  %v3757 = vpack.c.bf16 %v3756, %v3756
  %3759 = vrot.lane.b32.xlu0 %v3757, 32
  %v3760 = vpop.permute.xlu0 %3759
  %v3762 = vsel %vm220, %v3760, 0
  %3764 = vmatpush.bf16.msra.mxu0 0
  %3765 = vmatpush.bf16.msra.mxu0 0
  %3766 = vmatpush.bf16.msra.mxu0 0
  %3767 = vmatpush.bf16.msra.mxu0 0
  %3768 = vmatpush.bf16.msra.mxu0 0
  %3769 = vmatpush.bf16.msra.mxu0 0
  %3770 = vmatpush.bf16.msra.mxu0 %v3485
  %3771 = vmatpush.bf16.msra.mxu0 %v3484
  %3772 = vmatmul.bf16.gmra.mxu0 %v3762
  %v3773 = vpop.f32.mrf.mxu0
  %v3774 = vadd.f32 %v3487, %v3773
  %v3775 = vpop.f32.mrf.mxu0
  %3776 = vdwg.mxu0
  %v3778 = vrot.slane %v3774, 2
  %v3780 = vadd.f32 %v3646, %v3778
  %s3781 = scalar_lea.vmem %s21, 4
  %3782 = vst.msk [vmem:[%s3781 - $0x6] sm:$0xc0] %vm3512, %v3780
  %v3783 = vpack.c.bf16 %v3780, %v3780
  %v3785 = vrot.slane %v3783, 3
  %v3787 = vsel %vm194, %v3785, 0
  %3789 = vmatpush.bf16.msra.mxu0 0
  %3790 = vmatpush.bf16.msra.mxu0 0
  %3791 = vmatpush.bf16.msra.mxu0 0
  %3792 = vmatpush.bf16.msra.mxu0 0
  %3793 = vmatpush.bf16.msra.mxu0 0
  %3794 = vmatpush.bf16.msra.mxu0 0
  %3795 = vmatpush.bf16.msra.mxu0 0
  %3796 = vmatpush.bf16.msra.mxu0 %v3355
  %3797 = vmatmul.bf16.gmra.mxu0 %v3787
  %v3798 = vpop.f32.mrf.mxu0
  %v3799 = vadd.f32 %v3347, %v3798
  %v3800 = vpop.f32.mrf.mxu0
  %3801 = vdwg.mxu0
  %v3802 = vmax.f32 %v3799, 0.0
  %v3803 = vpack.c.bf16 %v3802, %v3802
  %v3805 = vsel %vm3379, %v3803, 0
  %3807 = vmatpush.bf16.msra.mxu0 0
  %3808 = vmatpush.bf16.msra.mxu0 0
  %3809 = vmatpush.bf16.msra.mxu0 0
  %3810 = vmatpush.bf16.msra.mxu0 0
  %3811 = vmatpush.bf16.msra.mxu0 %v3375
  %3812 = vmatpush.bf16.msra.mxu0 %v3374
  %3813 = vmatpush.bf16.msra.mxu0 %v3373
  %3814 = vmatpush.bf16.msra.mxu0 %v3372
  %3815 = vmatmul.bf16.gmra.mxu0 %v3805
  %v3816 = vpop.f32.mrf.mxu0
  %v3817 = vadd.f32 %v3377, %v3816
  %v3818 = vpop.f32.mrf.mxu0
  %3819 = vdwg.mxu0
  %v3820 = vpack.c.bf16 %v3817, %v3817
  %v3821 = vrot.slane %v3342, 6
  %v3824 = vsel %vm220, %v3820, 0
  %3826 = vmatpush.bf16.msra.mxu0 0
  %3827 = vmatpush.bf16.msra.mxu0 0
  %3828 = vmatpush.bf16.msra.mxu0 0
  %3829 = vmatpush.bf16.msra.mxu0 0
  %3830 = vmatpush.bf16.msra.mxu0 0
  %3831 = vmatpush.bf16.msra.mxu0 0
  %3832 = vmatpush.bf16.msra.mxu0 %v3398
  %3833 = vmatpush.bf16.msra.mxu0 %v3397
  %3834 = vmatmul.bf16.gmra.mxu0 %v3824
  %v3835 = vpop.f32.mrf.mxu0
  %v3836 = vadd.f32 %v3821, %v3835
  %v3837 = vpop.f32.mrf.mxu0
  %3838 = vdwg.mxu0
  %3839 = vmatpush.bf16.msra.mxu0 0
  %3840 = vmatpush.bf16.msra.mxu0 0
  %3841 = vmatpush.bf16.msra.mxu0 0
  %3842 = vmatpush.bf16.msra.mxu0 0
  %3843 = vmatpush.bf16.msra.mxu0 0
  %3844 = vmatpush.bf16.msra.mxu0 0
  %3845 = vmatpush.bf16.msra.mxu0 %v3417
  %3846 = vmatpush.bf16.msra.mxu0 %v3416
  %3847 = vmatmul.bf16.gmra.mxu0 %v3762
  %v3848 = vpop.f32.mrf.mxu0
  %v3849 = vadd.f32 0.0, %v3848
  %v3850 = vpop.f32.mrf.mxu0
  %3851 = vdwg.mxu0
  %v3852 = vadd.f32 %v3836, %v3849
  %v3853 = vadd.f32 %v3852, %v3440
  %v3854 = vxor.u32 %v3853, 2147483648
  %v3855 = vmul.f32 %v3854, 1.442695
  %v3856 = vpow.pop %v3855
  %v3857 = vadd.f32 %v3856, 1.0
  %v3858 = vrcp.pop %v3857
  %v3859 = vmul.f32 %v3857, %v3858
  %v3860 = vsub.f32 1.0, %v3859
  %v3861 = vmul.f32 %v3858, %v3860
  %v3862 = vadd.f32 %v3858, %v3861
  %vm3863 = vweird.f32 %v3857
  %vm3864 = vweird.f32 %v3858
  %vm3865 = vmor %vm3863, %vm3864
  %v3866 = vsel %vm3865, %v3858, %v3862
  %v3867 = vand.u32 2147483647, %v3857
  %vm3868 = vcmp.eq.f32.partialorder %v3867, 8.507059e+37
  %v3869 = vand.u32 %v3857, 2147483648
  %v3870 = vor.u32 1.1754944e-38, %v3869
  %v3871 = vsel %vm3868, %v3870, %v3866
  %v3872 = vmul.f32 1.0, %v3871
  %v3873 = vtanh.pop %v3853
  %v3874 = vmul.f32 %v3872, %v3750
  %3876 = vrot.lane.b32.xlu0 %v3873, 64
  %v3877 = vpop.permute.xlu0 %3876
  %v3879 = vmul.f32 %v3872, %v3877
  %3881 = vrot.lane.b32.xlu0 %v3879, 32
  %v3882 = vpop.permute.xlu0 %3881
  %v3884 = vadd.f32 %v3874, %v3882
  %v3885 = vtanh.pop %v3884
  %3887 = vrot.lane.b32.xlu0 %v3885, 64
  %v3888 = vpop.permute.xlu0 %3887
  %v3890 = vmul.f32 %v3872, %v3888
  %v3891 = vpack.c.bf16 %v3890, %v3890
  %3893 = vrot.lane.b32.xlu0 %v3891, 32
  %v3894 = vpop.permute.xlu0 %3893
  %v3896 = vsel %vm220, %v3894, 0
  %3898 = vmatpush.bf16.msra.mxu0 0
  %3899 = vmatpush.bf16.msra.mxu0 0
  %3900 = vmatpush.bf16.msra.mxu0 0
  %3901 = vmatpush.bf16.msra.mxu0 0
  %3902 = vmatpush.bf16.msra.mxu0 0
  %3903 = vmatpush.bf16.msra.mxu0 0
  %3904 = vmatpush.bf16.msra.mxu0 %v3485
  %3905 = vmatpush.bf16.msra.mxu0 %v3484
  %3906 = vmatmul.bf16.gmra.mxu0 %v3896
  %v3907 = vpop.f32.mrf.mxu0
  %v3908 = vadd.f32 %v3487, %v3907
  %v3909 = vpop.f32.mrf.mxu0
  %3910 = vdwg.mxu0
  %v3912 = vrot.slane %v3908, 2
  %v3914 = vadd.f32 %v3780, %v3912
  %s3915 = scalar_lea.vmem %s21, 6
  %3916 = vst.msk [vmem:[%s3915 - $0x6] sm:$0xc0] %vm3512, %v3914
  // Predicated region
  $region86: #{viewpoint_forward.1} parent=0 // pred_check
    _
  $region87: #{viewpoint_forward.1} parent=0 // pred_check_branch
    %3918 = sbr.rel (0) target = $region89
  $region88: #{viewpoint_forward.1} parent=0 // pred_region
    _
  $region89: #{viewpoint_forward.1} parent=0 // pred_fallthru
    _
  // Predicated region
  $region90: #{viewpoint_forward.1} parent=0 // pred_check
    _
  $region91: #{viewpoint_forward.1} parent=0 // pred_check_branch
    %3920 = sbr.rel (0) target = $region93
  $region92: #{viewpoint_forward.1} parent=0 // pred_region
    _
  $region93: #{viewpoint_forward.1} parent=0 // pred_fallthru
    _

</llo_original>
